<compile_context>
chip_gen: v6e
topology: v6e:2x2x1
jax: 0.10.0
libtpu: 0.0.40
codegen_flags: <defaults>
</compile_context>

<pallas_src>
import functools

import jax
import jax.numpy as jnp
from jax.experimental import pallas as pl
from jax.experimental.pallas import tpu as pltpu

EPS = 1e-8          # self.epsilon in GLiClassBaseModel
NEG_MASK = -1000.0  # masked-logit fill value


def _l2_normalize(x, eps=EPS):
    # torch F.normalize(p=2, dim=-1, eps): x / max(||x||_2, eps)
    # == x * rsqrt(max(||x||^2, eps^2))   (sqrt is monotone)  -> EUP rsqrt.
    ssq = jnp.sum(x * x, axis=-1, keepdims=True)
    return x * jax.lax.rsqrt(jnp.maximum(ssq, eps * eps))


# --------------------------------------------------------------------------
# Kernel A: text path
#   per-token-tile: encoder dense (stand-in backbone, bf16 MXU) -> tanh ->
#   accumulate pooled sum in VMEM scratch.
#   finalize: mean -> text_projector MLP -> dropout(identity) -> L2 normalize.
# --------------------------------------------------------------------------
def text_path_kernel(tok_ref, wenc_ref, benc_ref, w1_ref, b1_ref, w2_ref, b2_ref,
                     out_ref, acc_ref, *, inv_len):
    s = pl.program_id(1)

    @pl.when(s == 0)
    def _init():
        acc_ref[...] = jnp.zeros_like(acc_ref)

    tok = tok_ref[...]                                     # [TB, TS, H] bf16
    tb, ts, h_dim = tok.shape
    h = jnp.dot(tok.reshape(tb * ts, h_dim), wenc_ref[...],
                preferred_element_type=jnp.float32)        # bf16 MXU, f32 acc
    h = jnp.tanh(h + benc_ref[...])                        # f32 epilogue (EUP)
    acc_ref[...] += jnp.sum(h.reshape(tb, ts, h_dim), axis=1)

    @pl.when(s == pl.num_programs(1) - 1)
    def _finalize():
        pooled = acc_ref[...] * inv_len                    # mean pooler (once/row)
        p = jnp.dot(pooled.astype(jnp.bfloat16), w1_ref[...],
                    preferred_element_type=jnp.float32) + b1_ref[...]
        p = jnp.maximum(p, 0.0)                            # FeaturesProjector
        p = jnp.dot(p.astype(jnp.bfloat16), w2_ref[...],
                    preferred_element_type=jnp.float32) + b2_ref[...]
        # dropout -> identity in eval mode
        out_ref[...] = _l2_normalize(p)                    # [TB, H] f32


# --------------------------------------------------------------------------
# Kernel B: class path
#   per-token-tile: label-encoder dense -> tanh -> accumulate pooled sum.
#   finalize: mean -> zero unselected classes (labels_mask zeros+scatter
#   semantics) -> BiEncoderProjector -> classes_projector MLP -> L2 normalize.
# --------------------------------------------------------------------------
def class_path_kernel(tok_ref, mask_ref, wlenc_ref, blenc_ref, wbp_ref, bbp_ref,
                      w1_ref, b1_ref, w2_ref, b2_ref, out_ref, acc_ref, *, inv_len):
    k = pl.program_id(1)

    @pl.when(k == 0)
    def _init():
        acc_ref[...] = jnp.zeros_like(acc_ref)

    tok = tok_ref[...]                                     # [TBC, TCS, L] bf16
    tbc, tcs, l_dim = tok.shape
    h = jnp.dot(tok.reshape(tbc * tcs, l_dim), wlenc_ref[...],
                preferred_element_type=jnp.float32)
    h = jnp.tanh(h + blenc_ref[...])
    acc_ref[...] += jnp.sum(h.reshape(tbc, tcs, l_dim), axis=1)

    @pl.when(k == pl.num_programs(1) - 1)
    def _finalize():
        # labels_mask == 0 rows -> pooled stays zero (torch zeros + scatter);
        # projectors still run on those zero rows.
        pooled = acc_ref[...] * inv_len * mask_ref[...]    # [TBC, L] f32
        bi = jnp.dot(pooled.astype(jnp.bfloat16), wbp_ref[...],
                     preferred_element_type=jnp.float32) + bbp_ref[...]
        p = jnp.dot(bi.astype(jnp.bfloat16), w1_ref[...],
                    preferred_element_type=jnp.float32) + b1_ref[...]
        p = jnp.maximum(p, 0.0)                            # classes FeaturesProjector
        p = jnp.dot(p.astype(jnp.bfloat16), w2_ref[...],
                    preferred_element_type=jnp.float32) + b2_ref[...]
        out_ref[...] = _l2_normalize(p)                    # [TBC, H] f32


# --------------------------------------------------------------------------
# Kernel C: dot scorer * logit_scale, then labels_mask -> -1000.0
#   (tiny tensors; whole-array blocks.  TODO(synk): fuse into the class-path
#   finalize / pad C to 128 for a lane-dense store at large C.)
# --------------------------------------------------------------------------
def scorer_kernel(scale_ref, text_ref, class_ref, mask_ref, out_ref):
    text = text_ref[...]                                   # [B, H]
    cls = class_ref[...]                                   # [B, C, H]
    logits = jnp.sum(text[:, None, :] * cls, axis=-1)      # 'dot' scorer -> [B, C]
    logits = logits * scale_ref[0, 0]                      # logit_scale
    out_ref[...] = jnp.where(mask_ref[...] == 0, NEG_MASK, logits)


# --------------------------------------------------------------------------
# Tiling helpers.
# --------------------------------------------------------------------------
def _pick_token_tile(n, max_tile=64):
    """Largest tile <= max_tile dividing n, preferring multiples of 16 (bf16 sublane pack)."""
    for t in range(min(n, max_tile), 0, -1):
        if n % t == 0 and (t % 16 == 0 or t == n):
            return t
    return n


def _pick_row_tile(n, max_tile=32):
    """Row tile for (rows, feature) output blocks: multiple of 8, else full."""
    if n % 8 == 0:
        t = (min(n, max_tile) // 8) * 8
        while t >= 8:
            if n % t == 0:
                return t
            t -= 8
    return n


def _const_spec(shape):
    # Full-array block, constant index -> weight stays resident across the grid.
    return pl.BlockSpec(shape, lambda *_: (0,) * len(shape))


# --------------------------------------------------------------------------
# Parameter construction (deterministic, synthetic).  Feature dims should be
# multiples of 128 (lane / MXU alignment); weights stored in bf16.
# --------------------------------------------------------------------------
def make_params(key, vocab, label_vocab, H, L, P):
    ks = jax.random.split(key, 18)
    w = lambda k, shape: (0.02 * jax.random.normal(k, shape, jnp.float32)).astype(jnp.bfloat16)
    b = lambda k, shape: 0.02 * jax.random.normal(k, shape, jnp.float32)
    params = {
        # text encoder stand-in
        "emb_text": w(ks[0], (vocab, H)),
        "W_enc": w(ks[1], (H, H)), "b_enc": b(ks[2], (1, H)),
        # text_projector (FeaturesProjector)
        "W_t1": w(ks[3], (H, P)), "b_t1": b(ks[4], (1, P)),
        "W_t2": w(ks[5], (P, H)), "b_t2": b(ks[6], (1, H)),
        # label encoder stand-in
        "emb_label": w(ks[7], (label_vocab, L)),
        "W_lenc": w(ks[8], (L, L)), "b_lenc": b(ks[9], (1, L)),
        # biencoder_projector: label hidden -> encoder hidden
        "W_bp": w(ks[10], (L, H)), "b_bp": b(ks[11], (1, H)),
        # classes_projector (FeaturesProjector)
        "W_c1": w(ks[12], (H, P)), "b_c1": b(ks[13], (1, P)),
        "W_c2": w(ks[14], (P, H)), "b_c2": b(ks[15], (1, H)),
        # logit scale parameter (logit_scale_init_value)
        "logit_scale": jnp.full((1, 1), 2.5, jnp.float32),
    }
    return params


# --------------------------------------------------------------------------
# Forward wrapper (glue: squeezes, embedding lookups, reshapes, pallas_calls).
# --------------------------------------------------------------------------
def gliclass_biencoder_forward(params, input_ids, attention_mask,
                               class_input_ids, class_attention_mask,
                               labels_mask):
    # Mean pooler over the full sequence (matches the synthetic-backbone ref).
    # TODO(synk): masked mean pooling for padded real inputs.
    del attention_mask, class_attention_mask
    B = input_ids.shape[0]
    ids = input_ids.reshape(B, -1)                         # .squeeze(1)
    S = ids.shape[-1]
    C, CS = class_input_ids.shape[1], class_input_ids.shape[2]
    H = params["W_enc"].shape[-1]
    L = params["W_lenc"].shape[-1]
    P = params["W_t1"].shape[-1]
    BC = B * C

    # Embedding lookups stay in the wrapper; bf16 tables halve the HBM traffic
    # of the gathered activations the kernels re-read.
    # TODO(synk): in-kernel row gather via PrefetchScalarGridSpec to remove the
    #             extra HBM round trip entirely.
    tok_emb = params["emb_text"][ids]                                  # [B, S, H] bf16
    class_tok_emb = params["emb_label"][class_input_ids].reshape(BC, CS, L)
    mask_col = labels_mask.astype(jnp.float32).reshape(BC, 1)

    TB = _pick_row_tile(B, max_tile=8)
    TS = _pick_token_tile(S)
    TBC = _pick_row_tile(BC, max_tile=32)
    TCS = _pick_token_tile(CS)

    cparams = pltpu.CompilerParams(
        dimension_semantics=("parallel", "arbitrary"),     # row axis across TCs (v7x)
        vmem_limit_bytes=32 * 1024 * 1024)                 # fits v5e/v6e/v7x budgets

    text_emb = pl.pallas_call(
        functools.partial(text_path_kernel, inv_len=1.0 / S),
        out_shape=jax.ShapeDtypeStruct((B, H), jnp.float32),
        grid_spec=pltpu.PrefetchScalarGridSpec(
            num_scalar_prefetch=0,
            grid=(B // TB, S // TS),
            in_specs=[
                pl.BlockSpec((TB, TS, H), lambda b, s: (b, s, 0)),
                _const_spec((H, H)), _const_spec((1, H)),
                _const_spec((H, P)), _const_spec((1, P)),
                _const_spec((P, H)), _const_spec((1, H)),
            ],
            out_specs=pl.BlockSpec((TB, H), lambda b, s: (b, 0)),
            scratch_shapes=[pltpu.VMEM((TB, H), jnp.float32)],
        ),
        compiler_params=cparams,
    )(tok_emb, params["W_enc"], params["b_enc"],
      params["W_t1"], params["b_t1"], params["W_t2"], params["b_t2"])

    class_emb_flat = pl.pallas_call(
        functools.partial(class_path_kernel, inv_len=1.0 / CS),
        out_shape=jax.ShapeDtypeStruct((BC, H), jnp.float32),
        grid_spec=pltpu.PrefetchScalarGridSpec(
            num_scalar_prefetch=0,
            grid=(BC // TBC, CS // TCS),
            in_specs=[
                pl.BlockSpec((TBC, TCS, L), lambda i, k: (i, k, 0)),
                pl.BlockSpec((TBC, 1), lambda i, k: (i, 0)),
                _const_spec((L, L)), _const_spec((1, L)),
                _const_spec((L, H)), _const_spec((1, H)),
                _const_spec((H, P)), _const_spec((1, P)),
                _const_spec((P, H)), _const_spec((1, H)),
            ],
            out_specs=pl.BlockSpec((TBC, H), lambda i, k: (i, 0)),
            scratch_shapes=[pltpu.VMEM((TBC, L), jnp.float32)],
        ),
        compiler_params=cparams,
    )(class_tok_emb, mask_col, params["W_lenc"], params["b_lenc"],
      params["W_bp"], params["b_bp"],
      params["W_c1"], params["b_c1"], params["W_c2"], params["b_c2"])

    class_emb = class_emb_flat.reshape(B, C, H)

    logits = pl.pallas_call(
        scorer_kernel,
        out_shape=jax.ShapeDtypeStruct((B, C), jnp.float32),
        in_specs=[pl.BlockSpec(memory_space=pltpu.MemorySpace.SMEM),
                  pl.BlockSpec(memory_space=pltpu.MemorySpace.VMEM),
                  pl.BlockSpec(memory_space=pltpu.MemorySpace.VMEM),
                  pl.BlockSpec(memory_space=pltpu.MemorySpace.VMEM)],
        out_specs=pl.BlockSpec(memory_space=pltpu.MemorySpace.VMEM),
    )(params["logit_scale"], text_emb, class_emb, labels_mask.astype(jnp.int32))

    return logits, text_emb, class_emb


# --------------------------------------------------------------------------
# Pure-JAX reference (same math, same bf16 matmul / f32 accumulation recipe).
# --------------------------------------------------------------------------
def reference_forward(params, input_ids, attention_mask,
                      class_input_ids, class_attention_mask, labels_mask):
    del attention_mask, class_attention_mask
    f32, bf16 = jnp.float32, jnp.bfloat16
    B = input_ids.shape[0]
    ids = input_ids.reshape(B, -1)

    tok = params["emb_text"][ids]                                      # bf16 [B,S,H]
    h = jnp.tanh(jnp.dot(tok, params["W_enc"], preferred_element_type=f32)
                 + params["b_enc"][0])
    pooled = h.mean(axis=1)
    t = jnp.dot(pooled.astype(bf16), params["W_t1"], preferred_element_type=f32) \
        + params["b_t1"][0]
    t = jnp.maximum(t, 0.0)
    t = jnp.dot(t.astype(bf16), params["W_t2"], preferred_element_type=f32) \
        + params["b_t2"][0]
    t = _l2_normalize(t)

    ctok = params["emb_label"][class_input_ids]                        # [B,C,CS,L] bf16
    ch = jnp.tanh(jnp.dot(ctok, params["W_lenc"], preferred_element_type=f32)
                  + params["b_lenc"][0])
    cpooled = ch.mean(axis=2) * labels_mask[..., None].astype(f32)
    bi = jnp.dot(cpooled.astype(bf16), params["W_bp"], preferred_element_type=f32) \
         + params["b_bp"][0]
    c = jnp.dot(bi.astype(bf16), params["W_c1"], preferred_element_type=f32) \
        + params["b_c1"][0]
    c = jnp.maximum(c, 0.0)
    c = jnp.dot(c.astype(bf16), params["W_c2"], preferred_element_type=f32) \
        + params["b_c2"][0]
    c = _l2_normalize(c)

    logits = jnp.einsum("bd,bcd->bc", t, c) * params["logit_scale"][0, 0]
    logits = jnp.where(labels_mask == 0, NEG_MASK, logits)
    return logits, t, c


if __name__ == "__main__":
    B, S, C, CS = 8, 256, 16, 128
    H, L, P = 128, 128, 256            # lane/MXU aligned feature dims
    VOCAB, LABEL_VOCAB = 1000, 1000

    key = jax.random.PRNGKey(0)
    kp, k1, k2, k3 = jax.random.split(key, 4)
    params = make_params(kp, VOCAB, LABEL_VOCAB, H, L, P)

    input_ids = jax.random.randint(k1, (B, 1, S), 0, VOCAB, dtype=jnp.int32)
    attention_mask = jnp.ones((B, 1, S), jnp.int32)
    class_input_ids = jax.random.randint(k2, (B, C, CS), 0, LABEL_VOCAB, dtype=jnp.int32)
    class_attention_mask = jnp.ones((B, C, CS), jnp.int32)
    labels_mask = jax.random.bernoulli(k3, 0.7, (B, C)).astype(jnp.int32)

    fwd = jax.jit(gliclass_biencoder_forward)
    logits, text_emb, class_emb = fwd(params, input_ids, attention_mask,
                                      class_input_ids, class_attention_mask,
                                      labels_mask)
    jax.block_until_ready(logits)

    ref_logits, ref_t, ref_c = reference_forward(
        params, input_ids, attention_mask, class_input_ids,
        class_attention_mask, labels_mask)

    assert jnp.allclose(text_emb, ref_t, atol=2e-3, rtol=2e-3)
    assert jnp.allclose(class_emb, ref_c, atol=2e-3, rtol=2e-3)
    assert jnp.allclose(logits, ref_logits, atol=2e-3, rtol=2e-3)

    print("KERNEL_OK")
</pallas_src>

<mosaic_0001>
module attributes {stable_mosaic.version = 11 : i64} {
  func.func @class_path_kernel(%arg0: i32, %arg1: i32, %arg2: memref<32x64x128xbf16, #tpu.memory_space<vmem>>, %arg3: memref<32x1xf32, #tpu.memory_space<vmem>>, %arg4: memref<128x128xbf16, #tpu.memory_space<vmem>>, %arg5: memref<1x128xf32, #tpu.memory_space<vmem>>, %arg6: memref<128x128xbf16, #tpu.memory_space<vmem>>, %arg7: memref<1x128xf32, #tpu.memory_space<vmem>>, %arg8: memref<128x256xbf16, #tpu.memory_space<vmem>>, %arg9: memref<1x256xf32, #tpu.memory_space<vmem>>, %arg10: memref<256x128xbf16, #tpu.memory_space<vmem>>, %arg11: memref<1x128xf32, #tpu.memory_space<vmem>>, %arg12: memref<32x128xf32, #tpu.memory_space<vmem>>, %arg13: memref<32x128xf32, #tpu.memory_space<vmem>>) attributes {dimension_semantics = [#tpu.dimension_semantics<parallel>, #tpu.dimension_semantics<arbitrary>], iteration_bounds = array<i64: 4, 2>, scalar_prefetch = 0 : i64, scratch_operands = 1 : i64, tpu.core_type = #tpu.core_type<tc>, window_params = [{transform_indices = @transform_0, window_bounds = array<i64: 32, 64, 128>}, {transform_indices = @transform_1, window_bounds = array<i64: 32, 1>}, {pipeline_mode = #tpu.pipeline_mode<synchronous>, transform_indices = @transform_2, window_bounds = array<i64: 128, 128>}, {pipeline_mode = #tpu.pipeline_mode<synchronous>, transform_indices = @transform_3, window_bounds = array<i64: 1, 128>}, {pipeline_mode = #tpu.pipeline_mode<synchronous>, transform_indices = @transform_4, window_bounds = array<i64: 128, 128>}, {pipeline_mode = #tpu.pipeline_mode<synchronous>, transform_indices = @transform_5, window_bounds = array<i64: 1, 128>}, {pipeline_mode = #tpu.pipeline_mode<synchronous>, transform_indices = @transform_6, window_bounds = array<i64: 128, 256>}, {pipeline_mode = #tpu.pipeline_mode<synchronous>, transform_indices = @transform_7, window_bounds = array<i64: 1, 256>}, {pipeline_mode = #tpu.pipeline_mode<synchronous>, transform_indices = @transform_8, window_bounds = array<i64: 256, 128>}, {pipeline_mode = #tpu.pipeline_mode<synchronous>, transform_indices = @transform_9, window_bounds = array<i64: 1, 128>}, {transform_indices = @transform_10, window_bounds = array<i64: 32, 128>}]} {
    %c0_i32 = arith.constant 0 : i32
    %0 = arith.cmpi eq, %arg1, %c0_i32 : i32
    %1 = arith.extui %0 : i1 to i32
    %c0_i32_0 = arith.constant 0 : i32
    %2 = arith.cmpi ne, %1, %c0_i32_0 : i32
    scf.if %2 {
      %cst_13 = arith.constant 0.000000e+00 : f32
      %19 = vector.broadcast %cst_13 : f32 to vector<32x128xf32>
      %c0_14 = arith.constant 0 : index
      %c0_15 = arith.constant 0 : index
      %20 = vector.load %arg13[%c0_14, %c0_15] : memref<32x128xf32, #tpu.memory_space<vmem>>, vector<32x128xf32>
      tpu.vector_store %arg13[%c0_14, %c0_15], %19 {strides = array<i32>} : memref<32x128xf32, #tpu.memory_space<vmem>>, vector<32x128xf32>,
    } else {
    }
    %c0 = arith.constant 0 : index
    %c0_1 = arith.constant 0 : index
    %c0_2 = arith.constant 0 : index
    %3 = vector.load %arg2[%c0, %c0_1, %c0_2] : memref<32x64x128xbf16, #tpu.memory_space<vmem>>, vector<32x64x128xbf16>
    %4 = vector.shape_cast %3 : vector<32x64x128xbf16> to vector<2048x128xbf16>
    %c0_3 = arith.constant 0 : index
    %c0_4 = arith.constant 0 : index
    %5 = vector.load %arg4[%c0_3, %c0_4] : memref<128x128xbf16, #tpu.memory_space<vmem>>, vector<128x128xbf16>
    %cst = arith.constant dense<0.000000e+00> : vector<2048x128xf32>
    %6 = tpu.matmul %4, %5, %cst {dimension_numbers = #tpu.dot_dimension_numbers<[1], [0], [0], [1], [0, 0, 1, 1], [], []>} : vector<2048x128xbf16>, vector<128x128xbf16>, vector<2048x128xf32> -> vector<2048x128xf32>
    %c0_5 = arith.constant 0 : index
    %c0_6 = arith.constant 0 : index
    %7 = vector.load %arg5[%c0_5, %c0_6] : memref<1x128xf32, #tpu.memory_space<vmem>>, vector<1x128xf32>
    %8 = vector.broadcast %7 : vector<1x128xf32> to vector<2048x128xf32>
    %9 = arith.addf %6, %8 : vector<2048x128xf32>
    %10 = math.tanh %9 : vector<2048x128xf32>
    %c0_7 = arith.constant 0 : index
    %c0_8 = arith.constant 0 : index
    %11 = vector.load %arg13[%c0_7, %c0_8] : memref<32x128xf32, #tpu.memory_space<vmem>>, vector<32x128xf32>
    %12 = vector.shape_cast %10 : vector<2048x128xf32> to vector<32x64x128xf32>
    %cst_9 = arith.constant dense<0.000000e+00> : vector<32x128xf32>
    %13 = vector.multi_reduction <add>, %12, %cst_9 [1] : vector<32x64x128xf32> to vector<32x128xf32>
    %14 = arith.addf %11, %13 : vector<32x128xf32>
    %c0_10 = arith.constant 0 : index
    %c0_11 = arith.constant 0 : index
    %15 = vector.load %arg13[%c0_10, %c0_11] : memref<32x128xf32, #tpu.memory_space<vmem>>, vector<32x128xf32>
    tpu.vector_store %arg13[%c0_10, %c0_11], %14 {strides = array<i32>} : memref<32x128xf32, #tpu.memory_space<vmem>>, vector<32x128xf32>,
    %c1_i32 = arith.constant 1 : i32
    %16 = arith.cmpi eq, %arg1, %c1_i32 : i32
    %17 = arith.extui %16 : i1 to i32
    %c0_i32_12 = arith.constant 0 : i32
    %18 = arith.cmpi ne, %17, %c0_i32_12 : i32
    scf.if %18 {
      %c0_13 = arith.constant 0 : index
      %c0_14 = arith.constant 0 : index
      %19 = vector.load %arg13[%c0_13, %c0_14] : memref<32x128xf32, #tpu.memory_space<vmem>>, vector<32x128xf32>
      %cst_15 = arith.constant 7.812500e-03 : f32
      %20 = vector.broadcast %cst_15 : f32 to vector<32x128xf32>
      %21 = arith.mulf %19, %20 : vector<32x128xf32>
      %c0_16 = arith.constant 0 : index
      %c0_17 = arith.constant 0 : index
      %22 = vector.load %arg3[%c0_16, %c0_17] : memref<32x1xf32, #tpu.memory_space<vmem>>, vector<32x1xf32>
      %23 = vector.broadcast %22 : vector<32x1xf32> to vector<32x128xf32>
      %24 = arith.mulf %21, %23 : vector<32x128xf32>
      %25 = arith.truncf %24 : vector<32x128xf32> to vector<32x128xbf16>
      %c0_18 = arith.constant 0 : index
      %c0_19 = arith.constant 0 : index
      %26 = vector.load %arg6[%c0_18, %c0_19] : memref<128x128xbf16, #tpu.memory_space<vmem>>, vector<128x128xbf16>
      %cst_20 = arith.constant dense<0.000000e+00> : vector<32x128xf32>
      %27 = tpu.matmul %25, %26, %cst_20 {dimension_numbers = #tpu.dot_dimension_numbers<[1], [0], [0], [1], [0, 0, 1, 1], [], []>} : vector<32x128xbf16>, vector<128x128xbf16>, vector<32x128xf32> -> vector<32x128xf32>
      %c0_21 = arith.constant 0 : index
      %c0_22 = arith.constant 0 : index
      %28 = vector.load %arg7[%c0_21, %c0_22] : memref<1x128xf32, #tpu.memory_space<vmem>>, vector<1x128xf32>
      %29 = vector.broadcast %28 : vector<1x128xf32> to vector<32x128xf32>
      %30 = arith.addf %27, %29 : vector<32x128xf32>
      %31 = arith.truncf %30 : vector<32x128xf32> to vector<32x128xbf16>
      %c0_23 = arith.constant 0 : index
      %c0_24 = arith.constant 0 : index
      %32 = vector.load %arg8[%c0_23, %c0_24] : memref<128x256xbf16, #tpu.memory_space<vmem>>, vector<128x256xbf16>
      %cst_25 = arith.constant dense<0.000000e+00> : vector<32x256xf32>
      %33 = tpu.matmul %31, %32, %cst_25 {dimension_numbers = #tpu.dot_dimension_numbers<[1], [0], [0], [1], [0, 0, 1, 1], [], []>} : vector<32x128xbf16>, vector<128x256xbf16>, vector<32x256xf32> -> vector<32x256xf32>
      %c0_26 = arith.constant 0 : index
      %c0_27 = arith.constant 0 : index
      %34 = vector.load %arg9[%c0_26, %c0_27] : memref<1x256xf32, #tpu.memory_space<vmem>>, vector<1x256xf32>
      %35 = vector.broadcast %34 : vector<1x256xf32> to vector<32x256xf32>
      %36 = arith.addf %33, %35 : vector<32x256xf32>
      %cst_28 = arith.constant 0.000000e+00 : f32
      %37 = vector.broadcast %cst_28 : f32 to vector<32x256xf32>
      %38 = arith.maximumf %36, %37 : vector<32x256xf32>
      %39 = arith.truncf %38 : vector<32x256xf32> to vector<32x256xbf16>
      %c0_29 = arith.constant 0 : index
      %c0_30 = arith.constant 0 : index
      %40 = vector.load %arg10[%c0_29, %c0_30] : memref<256x128xbf16, #tpu.memory_space<vmem>>, vector<256x128xbf16>
      %cst_31 = arith.constant dense<0.000000e+00> : vector<32x128xf32>
      %41 = tpu.matmul %39, %40, %cst_31 {dimension_numbers = #tpu.dot_dimension_numbers<[1], [0], [0], [1], [0, 0, 1, 1], [], []>} : vector<32x256xbf16>, vector<256x128xbf16>, vector<32x128xf32> -> vector<32x128xf32>
      %c0_32 = arith.constant 0 : index
      %c0_33 = arith.constant 0 : index
      %42 = vector.load %arg11[%c0_32, %c0_33] : memref<1x128xf32, #tpu.memory_space<vmem>>, vector<1x128xf32>
      %43 = vector.broadcast %42 : vector<1x128xf32> to vector<32x128xf32>
      %44 = arith.addf %41, %43 : vector<32x128xf32>
      %45 = arith.mulf %44, %44 : vector<32x128xf32>
      %cst_34 = arith.constant dense<0.000000e+00> : vector<32xf32>
      %46 = vector.multi_reduction <add>, %45, %cst_34 [1] : vector<32x128xf32> to vector<32xf32>
      %47 = vector.shape_cast %46 : vector<32xf32> to vector<32x1xf32>
      %cst_35 = arith.constant 1.000000e-16 : f32
      %48 = vector.broadcast %cst_35 : f32 to vector<32x1xf32>
      %49 = arith.maximumf %47, %48 : vector<32x1xf32>
      %50 = math.rsqrt %49 : vector<32x1xf32>
      %51 = vector.broadcast %50 : vector<32x1xf32> to vector<32x128xf32>
      %52 = arith.mulf %44, %51 : vector<32x128xf32>
      %c0_36 = arith.constant 0 : index
      %c0_37 = arith.constant 0 : index
      %53 = vector.load %arg12[%c0_36, %c0_37] : memref<32x128xf32, #tpu.memory_space<vmem>>, vector<32x128xf32>
      tpu.vector_store %arg12[%c0_36, %c0_37], %52 {strides = array<i32>} : memref<32x128xf32, #tpu.memory_space<vmem>>, vector<32x128xf32>,
    } else {
    }
    return
  }
  func.func @transform_0(%arg0: i32, %arg1: i32) -> (i32, i32, i32) {
    %c0_i32 = arith.constant 0 : i32
    %c0_i32_0 = arith.constant 0 : i32
    return %arg0, %arg1, %c0_i32 : i32, i32, i32
  }
  func.func @transform_1(%arg0: i32, %arg1: i32) -> (i32, i32) {
    %c0_i32 = arith.constant 0 : i32
    %c0_i32_0 = arith.constant 0 : i32
    return %arg0, %c0_i32 : i32, i32
  }
  func.func @transform_2(%arg0: i32, %arg1: i32) -> (i32, i32) {
    %c0_i32 = arith.constant 0 : i32
    %c0_i32_0 = arith.constant 0 : i32
    %c0_i32_1 = arith.constant 0 : i32
    return %c0_i32, %c0_i32_0 : i32, i32
  }
  func.func @transform_3(%arg0: i32, %arg1: i32) -> (i32, i32) {
    %c0_i32 = arith.constant 0 : i32
    %c0_i32_0 = arith.constant 0 : i32
    %c0_i32_1 = arith.constant 0 : i32
    return %c0_i32, %c0_i32_0 : i32, i32
  }
  func.func @transform_4(%arg0: i32, %arg1: i32) -> (i32, i32) {
    %c0_i32 = arith.constant 0 : i32
    %c0_i32_0 = arith.constant 0 : i32
    %c0_i32_1 = arith.constant 0 : i32
    return %c0_i32, %c0_i32_0 : i32, i32
  }
  func.func @transform_5(%arg0: i32, %arg1: i32) -> (i32, i32) {
    %c0_i32 = arith.constant 0 : i32
    %c0_i32_0 = arith.constant 0 : i32
    %c0_i32_1 = arith.constant 0 : i32
    return %c0_i32, %c0_i32_0 : i32, i32
  }
  func.func @transform_6(%arg0: i32, %arg1: i32) -> (i32, i32) {
    %c0_i32 = arith.constant 0 : i32
    %c0_i32_0 = arith.constant 0 : i32
    %c0_i32_1 = arith.constant 0 : i32
    return %c0_i32, %c0_i32_0 : i32, i32
  }
  func.func @transform_7(%arg0: i32, %arg1: i32) -> (i32, i32) {
    %c0_i32 = arith.constant 0 : i32
    %c0_i32_0 = arith.constant 0 : i32
    %c0_i32_1 = arith.constant 0 : i32
    return %c0_i32, %c0_i32_0 : i32, i32
  }
  func.func @transform_8(%arg0: i32, %arg1: i32) -> (i32, i32) {
    %c0_i32 = arith.constant 0 : i32
    %c0_i32_0 = arith.constant 0 : i32
    %c0_i32_1 = arith.constant 0 : i32
    return %c0_i32, %c0_i32_0 : i32, i32
  }
  func.func @transform_9(%arg0: i32, %arg1: i32) -> (i32, i32) {
    %c0_i32 = arith.constant 0 : i32
    %c0_i32_0 = arith.constant 0 : i32
    %c0_i32_1 = arith.constant 0 : i32
    return %c0_i32, %c0_i32_0 : i32, i32
  }
  func.func @transform_10(%arg0: i32, %arg1: i32) -> (i32, i32) {
    %c0_i32 = arith.constant 0 : i32
    %c0_i32_0 = arith.constant 0 : i32
    return %arg0, %c0_i32 : i32, i32
  }
}

module attributes {stable_mosaic.version = 11 : i64} {
  func.func @scorer_kernel(%arg0: memref<1x1xf32, #tpu.memory_space<smem>>, %arg1: memref<8x128xf32, #tpu.memory_space<vmem>>, %arg2: memref<8x16x128xf32, #tpu.memory_space<vmem>>, %arg3: memref<8x16xi32, #tpu.memory_space<vmem>>, %arg4: memref<8x16xf32, #tpu.memory_space<vmem>>) attributes {dimension_semantics = [], scalar_prefetch = 0 : i64, scratch_operands = 0 : i64, tpu.core_type = #tpu.core_type<tc>} {
    %c0 = arith.constant 0 : index
    %c0_0 = arith.constant 0 : index
    %0 = vector.load %arg1[%c0, %c0_0] : memref<8x128xf32, #tpu.memory_space<vmem>>, vector<8x128xf32>
    %c0_1 = arith.constant 0 : index
    %c0_2 = arith.constant 0 : index
    %c0_3 = arith.constant 0 : index
    %1 = vector.load %arg2[%c0_1, %c0_2, %c0_3] : memref<8x16x128xf32, #tpu.memory_space<vmem>>, vector<8x16x128xf32>
    %2 = vector.shape_cast %0 : vector<8x128xf32> to vector<8x1x128xf32>
    %3 = vector.broadcast %2 : vector<8x1x128xf32> to vector<8x16x128xf32>
    %4 = arith.mulf %3, %1 : vector<8x16x128xf32>
    %cst = arith.constant dense<0.000000e+00> : vector<8x16xf32>
    %5 = vector.multi_reduction <add>, %4, %cst [2] : vector<8x16x128xf32> to vector<8x16xf32>
    %c0_4 = arith.constant 0 : index
    %c0_5 = arith.constant 0 : index
    %6 = memref.load %arg0[%c0_4, %c0_5] : memref<1x1xf32, #tpu.memory_space<smem>>
    %7 = vector.broadcast %6 : f32 to vector<8x16xf32>
    %8 = arith.mulf %5, %7 : vector<8x16xf32>
    %c0_6 = arith.constant 0 : index
    %c0_7 = arith.constant 0 : index
    %9 = vector.load %arg3[%c0_6, %c0_7] : memref<8x16xi32, #tpu.memory_space<vmem>>, vector<8x16xi32>
    %c0_i32 = arith.constant 0 : i32
    %10 = vector.broadcast %c0_i32 : i32 to vector<8x16xi32>
    %11 = arith.cmpi eq, %9, %10 : vector<8x16xi32>
    %cst_8 = arith.constant -1.000000e+03 : f32
    %12 = vector.broadcast %cst_8 : f32 to vector<8x16xf32>
    %13 = arith.select %11, %12, %8 : vector<8x16xi1>, vector<8x16xf32>
    %c0_9 = arith.constant 0 : index
    %c0_10 = arith.constant 0 : index
    %14 = vector.load %arg4[%c0_9, %c0_10] : memref<8x16xf32, #tpu.memory_space<vmem>>, vector<8x16xf32>
    tpu.vector_store %arg4[%c0_9, %c0_10], %13 {strides = array<i32>} : memref<8x16xf32, #tpu.memory_space<vmem>>, vector<8x16xf32>,
    return
  }
}

module attributes {stable_mosaic.version = 11 : i64} {
  func.func @text_path_kernel(%arg0: i32, %arg1: i32, %arg2: memref<8x64x128xbf16, #tpu.memory_space<vmem>>, %arg3: memref<128x128xbf16, #tpu.memory_space<vmem>>, %arg4: memref<1x128xf32, #tpu.memory_space<vmem>>, %arg5: memref<128x256xbf16, #tpu.memory_space<vmem>>, %arg6: memref<1x256xf32, #tpu.memory_space<vmem>>, %arg7: memref<256x128xbf16, #tpu.memory_space<vmem>>, %arg8: memref<1x128xf32, #tpu.memory_space<vmem>>, %arg9: memref<8x128xf32, #tpu.memory_space<vmem>>, %arg10: memref<8x128xf32, #tpu.memory_space<vmem>>) attributes {dimension_semantics = [#tpu.dimension_semantics<parallel>, #tpu.dimension_semantics<arbitrary>], iteration_bounds = array<i64: 1, 4>, scalar_prefetch = 0 : i64, scratch_operands = 1 : i64, tpu.core_type = #tpu.core_type<tc>, window_params = [{transform_indices = @transform_0, window_bounds = array<i64: 8, 64, 128>}, {pipeline_mode = #tpu.pipeline_mode<synchronous>, transform_indices = @transform_1, window_bounds = array<i64: 128, 128>}, {pipeline_mode = #tpu.pipeline_mode<synchronous>, transform_indices = @transform_2, window_bounds = array<i64: 1, 128>}, {pipeline_mode = #tpu.pipeline_mode<synchronous>, transform_indices = @transform_3, window_bounds = array<i64: 128, 256>}, {pipeline_mode = #tpu.pipeline_mode<synchronous>, transform_indices = @transform_4, window_bounds = array<i64: 1, 256>}, {pipeline_mode = #tpu.pipeline_mode<synchronous>, transform_indices = @transform_5, window_bounds = array<i64: 256, 128>}, {pipeline_mode = #tpu.pipeline_mode<synchronous>, transform_indices = @transform_6, window_bounds = array<i64: 1, 128>}, {transform_indices = @transform_7, window_bounds = array<i64: 8, 128>}]} {
    %c0_i32 = arith.constant 0 : i32
    %0 = arith.cmpi eq, %arg1, %c0_i32 : i32
    %1 = arith.extui %0 : i1 to i32
    %c0_i32_0 = arith.constant 0 : i32
    %2 = arith.cmpi ne, %1, %c0_i32_0 : i32
    scf.if %2 {
      %cst_13 = arith.constant 0.000000e+00 : f32
      %19 = vector.broadcast %cst_13 : f32 to vector<8x128xf32>
      %c0_14 = arith.constant 0 : index
      %c0_15 = arith.constant 0 : index
      %20 = vector.load %arg10[%c0_14, %c0_15] : memref<8x128xf32, #tpu.memory_space<vmem>>, vector<8x128xf32>
      tpu.vector_store %arg10[%c0_14, %c0_15], %19 {strides = array<i32>} : memref<8x128xf32, #tpu.memory_space<vmem>>, vector<8x128xf32>,
    } else {
    }
    %c0 = arith.constant 0 : index
    %c0_1 = arith.constant 0 : index
    %c0_2 = arith.constant 0 : index
    %3 = vector.load %arg2[%c0, %c0_1, %c0_2] : memref<8x64x128xbf16, #tpu.memory_space<vmem>>, vector<8x64x128xbf16>
    %4 = vector.shape_cast %3 : vector<8x64x128xbf16> to vector<512x128xbf16>
    %c0_3 = arith.constant 0 : index
    %c0_4 = arith.constant 0 : index
    %5 = vector.load %arg3[%c0_3, %c0_4] : memref<128x128xbf16, #tpu.memory_space<vmem>>, vector<128x128xbf16>
    %cst = arith.constant dense<0.000000e+00> : vector<512x128xf32>
    %6 = tpu.matmul %4, %5, %cst {dimension_numbers = #tpu.dot_dimension_numbers<[1], [0], [0], [1], [0, 0, 1, 1], [], []>} : vector<512x128xbf16>, vector<128x128xbf16>, vector<512x128xf32> -> vector<512x128xf32>
    %c0_5 = arith.constant 0 : index
    %c0_6 = arith.constant 0 : index
    %7 = vector.load %arg4[%c0_5, %c0_6] : memref<1x128xf32, #tpu.memory_space<vmem>>, vector<1x128xf32>
    %8 = vector.broadcast %7 : vector<1x128xf32> to vector<512x128xf32>
    %9 = arith.addf %6, %8 : vector<512x128xf32>
    %10 = math.tanh %9 : vector<512x128xf32>
    %c0_7 = arith.constant 0 : index
    %c0_8 = arith.constant 0 : index
    %11 = vector.load %arg10[%c0_7, %c0_8] : memref<8x128xf32, #tpu.memory_space<vmem>>, vector<8x128xf32>
    %12 = vector.shape_cast %10 : vector<512x128xf32> to vector<8x64x128xf32>
    %cst_9 = arith.constant dense<0.000000e+00> : vector<8x128xf32>
    %13 = vector.multi_reduction <add>, %12, %cst_9 [1] : vector<8x64x128xf32> to vector<8x128xf32>
    %14 = arith.addf %11, %13 : vector<8x128xf32>
    %c0_10 = arith.constant 0 : index
    %c0_11 = arith.constant 0 : index
    %15 = vector.load %arg10[%c0_10, %c0_11] : memref<8x128xf32, #tpu.memory_space<vmem>>, vector<8x128xf32>
    tpu.vector_store %arg10[%c0_10, %c0_11], %14 {strides = array<i32>} : memref<8x128xf32, #tpu.memory_space<vmem>>, vector<8x128xf32>,
    %c3_i32 = arith.constant 3 : i32
    %16 = arith.cmpi eq, %arg1, %c3_i32 : i32
    %17 = arith.extui %16 : i1 to i32
    %c0_i32_12 = arith.constant 0 : i32
    %18 = arith.cmpi ne, %17, %c0_i32_12 : i32
    scf.if %18 {
      %c0_13 = arith.constant 0 : index
      %c0_14 = arith.constant 0 : index
      %19 = vector.load %arg10[%c0_13, %c0_14] : memref<8x128xf32, #tpu.memory_space<vmem>>, vector<8x128xf32>
      %cst_15 = arith.constant 3.906250e-03 : f32
      %20 = vector.broadcast %cst_15 : f32 to vector<8x128xf32>
      %21 = arith.mulf %19, %20 : vector<8x128xf32>
      %22 = arith.truncf %21 : vector<8x128xf32> to vector<8x128xbf16>
      %c0_16 = arith.constant 0 : index
      %c0_17 = arith.constant 0 : index
      %23 = vector.load %arg5[%c0_16, %c0_17] : memref<128x256xbf16, #tpu.memory_space<vmem>>, vector<128x256xbf16>
      %cst_18 = arith.constant dense<0.000000e+00> : vector<8x256xf32>
      %24 = tpu.matmul %22, %23, %cst_18 {dimension_numbers = #tpu.dot_dimension_numbers<[1], [0], [0], [1], [0, 0, 1, 1], [], []>} : vector<8x128xbf16>, vector<128x256xbf16>, vector<8x256xf32> -> vector<8x256xf32>
      %c0_19 = arith.constant 0 : index
      %c0_20 = arith.constant 0 : index
      %25 = vector.load %arg6[%c0_19, %c0_20] : memref<1x256xf32, #tpu.memory_space<vmem>>, vector<1x256xf32>
      %26 = vector.broadcast %25 : vector<1x256xf32> to vector<8x256xf32>
      %27 = arith.addf %24, %26 : vector<8x256xf32>
      %cst_21 = arith.constant 0.000000e+00 : f32
      %28 = vector.broadcast %cst_21 : f32 to vector<8x256xf32>
      %29 = arith.maximumf %27, %28 : vector<8x256xf32>
      %30 = arith.truncf %29 : vector<8x256xf32> to vector<8x256xbf16>
      %c0_22 = arith.constant 0 : index
      %c0_23 = arith.constant 0 : index
      %31 = vector.load %arg7[%c0_22, %c0_23] : memref<256x128xbf16, #tpu.memory_space<vmem>>, vector<256x128xbf16>
      %cst_24 = arith.constant dense<0.000000e+00> : vector<8x128xf32>
      %32 = tpu.matmul %30, %31, %cst_24 {dimension_numbers = #tpu.dot_dimension_numbers<[1], [0], [0], [1], [0, 0, 1, 1], [], []>} : vector<8x256xbf16>, vector<256x128xbf16>, vector<8x128xf32> -> vector<8x128xf32>
      %c0_25 = arith.constant 0 : index
      %c0_26 = arith.constant 0 : index
      %33 = vector.load %arg8[%c0_25, %c0_26] : memref<1x128xf32, #tpu.memory_space<vmem>>, vector<1x128xf32>
      %34 = vector.broadcast %33 : vector<1x128xf32> to vector<8x128xf32>
      %35 = arith.addf %32, %34 : vector<8x128xf32>
      %36 = arith.mulf %35, %35 : vector<8x128xf32>
      %cst_27 = arith.constant dense<0.000000e+00> : vector<8xf32>
      %37 = vector.multi_reduction <add>, %36, %cst_27 [1] : vector<8x128xf32> to vector<8xf32>
      %38 = vector.shape_cast %37 : vector<8xf32> to vector<8x1xf32>
      %cst_28 = arith.constant 1.000000e-16 : f32
      %39 = vector.broadcast %cst_28 : f32 to vector<8x1xf32>
      %40 = arith.maximumf %38, %39 : vector<8x1xf32>
      %41 = math.rsqrt %40 : vector<8x1xf32>
      %42 = vector.broadcast %41 : vector<8x1xf32> to vector<8x128xf32>
      %43 = arith.mulf %35, %42 : vector<8x128xf32>
      %c0_29 = arith.constant 0 : index
      %c0_30 = arith.constant 0 : index
      %44 = vector.load %arg9[%c0_29, %c0_30] : memref<8x128xf32, #tpu.memory_space<vmem>>, vector<8x128xf32>
      tpu.vector_store %arg9[%c0_29, %c0_30], %43 {strides = array<i32>} : memref<8x128xf32, #tpu.memory_space<vmem>>, vector<8x128xf32>,
    } else {
    }
    return
  }
  func.func @transform_0(%arg0: i32, %arg1: i32) -> (i32, i32, i32) {
    %c0_i32 = arith.constant 0 : i32
    %c0_i32_0 = arith.constant 0 : i32
    return %arg0, %arg1, %c0_i32 : i32, i32, i32
  }
  func.func @transform_1(%arg0: i32, %arg1: i32) -> (i32, i32) {
    %c0_i32 = arith.constant 0 : i32
    %c0_i32_0 = arith.constant 0 : i32
    %c0_i32_1 = arith.constant 0 : i32
    return %c0_i32, %c0_i32_0 : i32, i32
  }
  func.func @transform_2(%arg0: i32, %arg1: i32) -> (i32, i32) {
    %c0_i32 = arith.constant 0 : i32
    %c0_i32_0 = arith.constant 0 : i32
    %c0_i32_1 = arith.constant 0 : i32
    return %c0_i32, %c0_i32_0 : i32, i32
  }
  func.func @transform_3(%arg0: i32, %arg1: i32) -> (i32, i32) {
    %c0_i32 = arith.constant 0 : i32
    %c0_i32_0 = arith.constant 0 : i32
    %c0_i32_1 = arith.constant 0 : i32
    return %c0_i32, %c0_i32_0 : i32, i32
  }
  func.func @transform_4(%arg0: i32, %arg1: i32) -> (i32, i32) {
    %c0_i32 = arith.constant 0 : i32
    %c0_i32_0 = arith.constant 0 : i32
    %c0_i32_1 = arith.constant 0 : i32
    return %c0_i32, %c0_i32_0 : i32, i32
  }
  func.func @transform_5(%arg0: i32, %arg1: i32) -> (i32, i32) {
    %c0_i32 = arith.constant 0 : i32
    %c0_i32_0 = arith.constant 0 : i32
    %c0_i32_1 = arith.constant 0 : i32
    return %c0_i32, %c0_i32_0 : i32, i32
  }
  func.func @transform_6(%arg0: i32, %arg1: i32) -> (i32, i32) {
    %c0_i32 = arith.constant 0 : i32
    %c0_i32_0 = arith.constant 0 : i32
    %c0_i32_1 = arith.constant 0 : i32
    return %c0_i32, %c0_i32_0 : i32, i32
  }
  func.func @transform_7(%arg0: i32, %arg1: i32) -> (i32, i32) {
    %c0_i32 = arith.constant 0 : i32
    %c0_i32_0 = arith.constant 0 : i32
    return %arg0, %c0_i32 : i32, i32
  }
}

</mosaic_0001>

<llo_original>
// kernel: gliclass_biencoder_forward.5
$region0: #{gliclass_biencoder_forward.5}
  #allocation0 [shape = 'u32[]', space=smem, size = 0x4, offset = 0x4, fixed_abs, tag = 'smem constant byte address 0x4 - core index']
  #allocation1 [shape = 'u32[144,128]{1,0:T(1,128)}', space=vmem, size = 0x12000, scoped, tag = 'internal scratch']
  #allocation2 [shape = 'f32[1,1]{1,0:T(1,128)S(6)}', space=smem, size = 0x200, scoped, tag = 'scoped memory for gliclass_biencoder_forward.5']
  %s0 = inlined_call_operand.<no memory space> [shape: f32[1,1], index: 0, kind: input, shape index: {}]
  %s1 = inlined_call_operand.vmem [shape: f32[8,128], index: 1, kind: input, shape index: {}]
  %s2 = inlined_call_operand.vmem [shape: f32[8,16,128], index: 2, kind: input, shape index: {}]
  %s3 = inlined_call_operand.vmem [shape: s32[8,16], index: 3, kind: input, shape index: {}]
  %s4 = inlined_call_operand.hbm [shape: f32[8,16], index: 4, kind: output, shape index: {}]
  %s5 = sld [smem:[#allocation0]]
  $region26: #{gliclass_biencoder_forward.5} parent=0
    _
  %s7 = ssub.s32 1, %s5
  %s8 = scalar_select 0, %s7, %s5
  %9 = sst [smem:[#allocation2]] %s0
  $region1: #{gliclass_biencoder_forward.5} parent=0
    #allocation3 [shape = 'u8[4096]{0}', space=vmem, size = 0x1000, scoped, tag = 'output window, operand 0, single buffered']
    #allocation4 [shape = 's32[1]{0}', space=sflag, size = 0x4, scoped, tag = 'scoped memory for gliclass_biencoder_forward.5']
    %10 = vsyncpa [#allocation4], 0
    // Predicated region
    $region2: #{gliclass_biencoder_forward.5} parent=1 // pred_check
      _
    $region3: #{gliclass_biencoder_forward.5} parent=1 // pred_check_branch
      %12 = sbr.rel (0) target = $region5
    $region4: #{gliclass_biencoder_forward.5} parent=1 // pred_region
      _
    $region5: #{gliclass_biencoder_forward.5} parent=1 // pred_fallthru
      _
    // Predicated region
    $region6: #{gliclass_biencoder_forward.5} parent=1 // pred_check
      _
    $region7: #{gliclass_biencoder_forward.5} parent=1 // pred_check_branch
      %14 = sbr.rel (0) target = $region9
    $region8: #{gliclass_biencoder_forward.5} parent=1 // pred_region
      _
    $region9: #{gliclass_biencoder_forward.5} parent=1 // pred_fallthru
      _
    // Predicated region
    $region10: #{gliclass_biencoder_forward.5} parent=1 // pred_check
      _
    $region11: #{gliclass_biencoder_forward.5} parent=1 // pred_check_branch
      %16 = sbr.rel (0) target = $region13
    $region12: #{gliclass_biencoder_forward.5} parent=1 // pred_region
      _
    $region13: #{gliclass_biencoder_forward.5} parent=1 // pred_fallthru
      _
    // Predicated region
    $region14: #{gliclass_biencoder_forward.5} parent=1 // pred_check
      _
    $region15: #{gliclass_biencoder_forward.5} parent=1 // pred_check_branch
      %18 = sbr.rel (0) target = $region17
    $region16: #{gliclass_biencoder_forward.5} parent=1 // pred_region
      _
    $region17: #{gliclass_biencoder_forward.5} parent=1 // pred_fallthru
      _
    %v19 = vld [vmem:[%s1] sm:$0xff]
    %v20 = vld [vmem:[%s2] sm:$0xff]
    %v21 = vld [vmem:[%s2 + $0x8] sm:$0xff]
    %v22 = vld [vmem:[%s2 + $0x10] sm:$0xff]
    %v23 = vld [vmem:[%s2 + $0x18] sm:$0xff]
    %v24 = vld [vmem:[%s2 + $0x20] sm:$0xff]
    %v25 = vld [vmem:[%s2 + $0x28] sm:$0xff]
    %v26 = vld [vmem:[%s2 + $0x30] sm:$0xff]
    %v27 = vld [vmem:[%s2 + $0x38] sm:$0xff]
    %v28 = vld [vmem:[%s2 + $0x40] sm:$0xff]
    %v29 = vld [vmem:[%s2 + $0x48] sm:$0xff]
    %v30 = vld [vmem:[%s2 + $0x50] sm:$0xff]
    %v31 = vld [vmem:[%s2 + $0x58] sm:$0xff]
    %v32 = vld [vmem:[%s2 + $0x60] sm:$0xff]
    %v33 = vld [vmem:[%s2 + $0x68] sm:$0xff]
    %v34 = vld [vmem:[%s2 + $0x70] sm:$0xff]
    %v35 = vld [vmem:[%s2 + $0x78] sm:$0xff]
    %v37 = vcombine.high %v19, %v19
    %v39 = vunpack.c.l.s4 1966171168
    %v40 = vunpack.c.0.s8 %v39
    %v41 = vlaneseq
    %v42 = vshrl.u32 %v41, 7
    %v43 = vsub.s32 %v40, %v42
    %v44 = vrot.slane %v19, %v43
    %v46 = vunpack.c.l.s4 1966171168
    %v47 = vunpack.c.0.s8 %v46
    %v48 = vlaneseq
    %v49 = vshrl.u32 %v48, 7
    %v50 = vsub.s32 %v47, %v49
    %v51 = vrot.slane %v37, %v50
    %v52 = vcombine.high %v44, %v44
    %v53 = vcombine.high %v51, %v51
    %v55 = vunpack.c.l.s4 1966171168
    %v56 = vunpack.c.0.s8 %v55
    %v57 = vlaneseq
    %v58 = vshrl.u32 %v57, 7
    %v59 = vsub.s32 %v56, %v58
    %v60 = vrot.slane %v44, %v59
    %v62 = vunpack.c.l.s4 1966171168
    %v63 = vunpack.c.0.s8 %v62
    %v64 = vlaneseq
    %v65 = vshrl.u32 %v64, 7
    %v66 = vsub.s32 %v63, %v65
    %v67 = vrot.slane %v51, %v66
    %v69 = vunpack.c.l.s4 1966171168
    %v70 = vunpack.c.0.s8 %v69
    %v71 = vlaneseq
    %v72 = vshrl.u32 %v71, 7
    %v73 = vsub.s32 %v70, %v72
    %v74 = vrot.slane %v52, %v73
    %v76 = vunpack.c.l.s4 1966171168
    %v77 = vunpack.c.0.s8 %v76
    %v78 = vlaneseq
    %v79 = vshrl.u32 %v78, 7
    %v80 = vsub.s32 %v77, %v79
    %v81 = vrot.slane %v53, %v80
    %v82 = vcombine.high %v60, %v60
    %v83 = vcombine.high %v67, %v67
    %v84 = vcombine.high %v74, %v74
    %v85 = vcombine.high %v81, %v81
    %v86 = vlaneseq
    %v87 = vshrl.u32 %v86, 7
    %v88 = vsub.s32 0, %v87
    %v89 = vrot.slane %v60, %v88
    %v90 = vlaneseq
    %v91 = vshrl.u32 %v90, 7
    %v92 = vsub.s32 0, %v91
    %v93 = vrot.slane %v74, %v92
    %v94 = vlaneseq
    %v95 = vshrl.u32 %v94, 7
    %v96 = vsub.s32 0, %v95
    %v97 = vrot.slane %v82, %v96
    %v98 = vlaneseq
    %v99 = vshrl.u32 %v98, 7
    %v100 = vsub.s32 0, %v99
    %v101 = vrot.slane %v84, %v100
    %v102 = vlaneseq
    %v103 = vshrl.u32 %v102, 7
    %v104 = vsub.s32 0, %v103
    %v105 = vrot.slane %v67, %v104
    %v106 = vlaneseq
    %v107 = vshrl.u32 %v106, 7
    %v108 = vsub.s32 0, %v107
    %v109 = vrot.slane %v81, %v108
    %v110 = vlaneseq
    %v111 = vshrl.u32 %v110, 7
    %v112 = vsub.s32 0, %v111
    %v113 = vrot.slane %v83, %v112
    %v114 = vlaneseq
    %v115 = vshrl.u32 %v114, 7
    %v116 = vsub.s32 0, %v115
    %v117 = vrot.slane %v85, %v116
    %v126 = vmul.f32 %v89, %v20
    %v127 = vmul.f32 %v89, %v21
    %v128 = vmul.f32 %v93, %v22
    %v129 = vmul.f32 %v93, %v23
    %v130 = vmul.f32 %v97, %v24
    %v131 = vmul.f32 %v97, %v25
    %v132 = vmul.f32 %v101, %v26
    %v133 = vmul.f32 %v101, %v27
    %v134 = vmul.f32 %v105, %v28
    %v135 = vmul.f32 %v105, %v29
    %v136 = vmul.f32 %v109, %v30
    %v137 = vmul.f32 %v109, %v31
    %v138 = vmul.f32 %v113, %v32
    %v139 = vmul.f32 %v113, %v33
    %v140 = vmul.f32 %v117, %v34
    %v141 = vmul.f32 %v117, %v35
    %142 = vadd.xlane.f32.xlu0 %v126
    %v143 = vpop.xlane.xlu0 %142
    %144 = vadd.xlane.f32.xlu0 %v127
    %v145 = vpop.xlane.xlu0 %144
    %146 = vadd.xlane.f32.xlu0 %v128
    %v147 = vpop.xlane.xlu0 %146
    %148 = vadd.xlane.f32.xlu0 %v129
    %v149 = vpop.xlane.xlu0 %148
    %150 = vadd.xlane.f32.xlu0 %v130
    %v151 = vpop.xlane.xlu0 %150
    %152 = vadd.xlane.f32.xlu0 %v131
    %v153 = vpop.xlane.xlu0 %152
    %154 = vadd.xlane.f32.xlu0 %v132
    %v155 = vpop.xlane.xlu0 %154
    %156 = vadd.xlane.f32.xlu0 %v133
    %v157 = vpop.xlane.xlu0 %156
    %158 = vadd.xlane.f32.xlu0 %v134
    %v159 = vpop.xlane.xlu0 %158
    %160 = vadd.xlane.f32.xlu0 %v135
    %v161 = vpop.xlane.xlu0 %160
    %162 = vadd.xlane.f32.xlu0 %v136
    %v163 = vpop.xlane.xlu0 %162
    %164 = vadd.xlane.f32.xlu0 %v137
    %v165 = vpop.xlane.xlu0 %164
    %166 = vadd.xlane.f32.xlu0 %v138
    %v167 = vpop.xlane.xlu0 %166
    %168 = vadd.xlane.f32.xlu0 %v139
    %v169 = vpop.xlane.xlu0 %168
    %170 = vadd.xlane.f32.xlu0 %v140
    %v171 = vpop.xlane.xlu0 %170
    %172 = vadd.xlane.f32.xlu0 %v141
    %v173 = vpop.xlane.xlu0 %172
    %s174 = sld [smem:[#allocation2]]
    %v175 = vstv %s174
    %v176 = vmul.f32 %v143, %v175
    %v177 = vmul.f32 %v145, %v175
    %v178 = vmul.f32 %v147, %v175
    %v179 = vmul.f32 %v149, %v175
    %v180 = vmul.f32 %v151, %v175
    %v181 = vmul.f32 %v153, %v175
    %v182 = vmul.f32 %v155, %v175
    %v183 = vmul.f32 %v157, %v175
    %v184 = vmul.f32 %v159, %v175
    %v185 = vmul.f32 %v161, %v175
    %v186 = vmul.f32 %v163, %v175
    %v187 = vmul.f32 %v165, %v175
    %v188 = vmul.f32 %v167, %v175
    %v189 = vmul.f32 %v169, %v175
    %v190 = vmul.f32 %v171, %v175
    %v191 = vmul.f32 %v173, %v175
    %v192 = vld [vmem:[%s3] sm:$0xff]
    %vm193 = vcmp.eq.s32.totalorder %v192, 0
    %v210 = vlaneseq
    %v211 = vand.u32 %v210, 127
    %v212 = vlaneseq
    %v213 = vshrl.u32 %v212, 7
    %v214 = vsub.s32 %v211, %v213
    %v215 = vrot.slane %v176, %v214
    %v216 = vadd.s32 %v211, 4294967288
    %v217 = vlaneseq
    %v218 = vshrl.u32 %v217, 7
    %v219 = vsub.s32 %v216, %v218
    %v220 = vrot.slane %v177, %v219
    %vm221 = vcmask 130112
    %v222 = vsel %vm221, %v220, %v215
    %v223 = vlaneseq
    %v224 = vshrl.u32 %v223, 7
    %v225 = vsub.s32 %v211, %v224
    %v226 = vrot.slane %v178, %v225
    %v227 = vlaneseq
    %v228 = vshrl.u32 %v227, 7
    %v229 = vsub.s32 %v216, %v228
    %v230 = vrot.slane %v179, %v229
    %v231 = vsel %vm221, %v230, %v226
    %v232 = vlaneseq
    %v233 = vshrl.u32 %v232, 7
    %v234 = vsub.s32 %v211, %v233
    %v235 = vrot.slane %v180, %v234
    %v236 = vlaneseq
    %v237 = vshrl.u32 %v236, 7
    %v238 = vsub.s32 %v216, %v237
    %v239 = vrot.slane %v181, %v238
    %v240 = vsel %vm221, %v239, %v235
    %v241 = vlaneseq
    %v242 = vshrl.u32 %v241, 7
    %v243 = vsub.s32 %v211, %v242
    %v244 = vrot.slane %v182, %v243
    %v245 = vlaneseq
    %v246 = vshrl.u32 %v245, 7
    %v247 = vsub.s32 %v216, %v246
    %v248 = vrot.slane %v183, %v247
    %v249 = vsel %vm221, %v248, %v244
    %v250 = vlaneseq
    %v251 = vshrl.u32 %v250, 7
    %v252 = vsub.s32 %v211, %v251
    %v253 = vrot.slane %v184, %v252
    %v254 = vlaneseq
    %v255 = vshrl.u32 %v254, 7
    %v256 = vsub.s32 %v216, %v255
    %v257 = vrot.slane %v185, %v256
    %v258 = vsel %vm221, %v257, %v253
    %v259 = vlaneseq
    %v260 = vshrl.u32 %v259, 7
    %v261 = vsub.s32 %v211, %v260
    %v262 = vrot.slane %v186, %v261
    %v263 = vlaneseq
    %v264 = vshrl.u32 %v263, 7
    %v265 = vsub.s32 %v216, %v264
    %v266 = vrot.slane %v187, %v265
    %v267 = vsel %vm221, %v266, %v262
    %v268 = vlaneseq
    %v269 = vshrl.u32 %v268, 7
    %v270 = vsub.s32 %v211, %v269
    %v271 = vrot.slane %v188, %v270
    %v272 = vlaneseq
    %v273 = vshrl.u32 %v272, 7
    %v274 = vsub.s32 %v216, %v273
    %v275 = vrot.slane %v189, %v274
    %v276 = vsel %vm221, %v275, %v271
    %v277 = vlaneseq
    %v278 = vshrl.u32 %v277, 7
    %v279 = vsub.s32 %v211, %v278
    %v280 = vrot.slane %v190, %v279
    %v281 = vlaneseq
    %v282 = vshrl.u32 %v281, 7
    %v283 = vsub.s32 %v216, %v282
    %v284 = vrot.slane %v191, %v283
    %v285 = vsel %vm221, %v284, %v280
    %vm286 = vcmask 1041409
    %v287 = vsel %vm286, %v231, %v222
    %vm288 = vcmask 1042434
    %v289 = vsel %vm288, %v240, %v287
    %vm290 = vcmask 1043459
    %v291 = vsel %vm290, %v249, %v289
    %vm292 = vcmask 1044484
    %v293 = vsel %vm292, %v258, %v291
    %vm294 = vcmask 1045509
    %v295 = vsel %vm294, %v267, %v293
    %vm296 = vcmask 1046534
    %v297 = vsel %vm296, %v276, %v295
    %vm298 = vcmask 1047559
    %v299 = vsel %vm298, %v285, %v297
    %v301 = vsel %vm193, -1000.0, %v299
    %vm302 = vcmask 130048
    %303 = vst.msk [vmem:[#allocation3] sm:$0xff] %vm302, %v301
    // Predicated region
    $region18: #{gliclass_biencoder_forward.5} parent=1 // pred_check
      _
    $region19: #{gliclass_biencoder_forward.5} parent=1 // pred_check_branch
      %305 = sbr.rel (0) target = $region21
    $region20: #{gliclass_biencoder_forward.5} parent=1 // pred_region
      %s307 = ssub.s32 128, 128
      %308 = vsyncadd [#allocation4], %s307
      %s310 = sshll.u32 [#allocation3], 4
      %s311 = int_to_ptr.vmem [resolvable:$true] %s310
      %313 = dma.vmem_to_hbm [thread:$0]  %s311, 128, %s4, [#allocation4]
    $region21: #{gliclass_biencoder_forward.5} parent=1 // pred_fallthru
      _
    // Predicated region
    $region22: #{gliclass_biencoder_forward.5} parent=1 // pred_check
      _
    $region23: #{gliclass_biencoder_forward.5} parent=1 // pred_check_branch
      %315 = sbr.rel (0) target = $region25
    $region24: #{gliclass_biencoder_forward.5} parent=1 // pred_region
      %316 = dma.done [#allocation4], 128
    $region25: #{gliclass_biencoder_forward.5} parent=1 // pred_fallthru
      _
    %317 = vsyncpa [#allocation4], 1

// kernel: gliclass_biencoder_forward.3
$region0: #{gliclass_biencoder_forward.3}
  #allocation0 [shape = 'u32[]', space=smem, size = 0x4, offset = 0x4, fixed_abs, tag = 'smem constant byte address 0x4 - core index']
  #allocation1 [shape = 'u32[144,128]{1,0:T(1,128)}', space=vmem, size = 0x12000, scoped, tag = 'internal scratch']
  #allocation2 [shape = 'f32[8,128]{1,0:T(8,128)}', space=vmem, size = 0x1000, scoped, tag = 'scratch operand']
  %s0 = inlined_call_operand.vmem [shape: bf16[8,256,128], index: 0, kind: input, shape index: {}]
  %s1 = inlined_call_operand.vmem [shape: bf16[128,128], index: 1, kind: input, shape index: {}]
  %s2 = inlined_call_operand.vmem [shape: f32[1,128], index: 2, kind: input, shape index: {}]
  %s3 = inlined_call_operand.vmem [shape: bf16[128,256], index: 3, kind: input, shape index: {}]
  %s4 = inlined_call_operand.vmem [shape: f32[1,256], index: 4, kind: input, shape index: {}]
  %s5 = inlined_call_operand.vmem [shape: bf16[256,128], index: 5, kind: input, shape index: {}]
  %s6 = inlined_call_operand.vmem [shape: f32[1,128], index: 6, kind: input, shape index: {}]
  %s7 = inlined_call_operand.vmem [shape: f32[8,128], index: 7, kind: output, shape index: {}]
  %s8 = sld [smem:[#allocation0]]
  $region110: #{gliclass_biencoder_forward.3} parent=0
    _
  %s10 = ssub.s32 1, %s8
  %s11 = scalar_select 0, %s10, %s8
  $region1: #{gliclass_biencoder_forward.3} parent=0
    #allocation3 [shape = 'u8[262144]{0}', space=vmem, size = 0x40000, scoped, tag = 'input window, operand 0']
    loop: start=0, step=1, limit=6
    $region2: #{gliclass_biencoder_forward.3} parent=1 // loop_pre_header
      _
    $region3: #{gliclass_biencoder_forward.3} parent=1 // loop_header
      %s13 = sphi 0, %s17
      %p14 = scmp.ge.s32.totalorder %s13, 6
      %s20 = sphi 0, %s32
      %s21 = sphi 0, %s28
      %s22 = sphi 0, %s20
      %s23 = sphi 0, %s21
      %s24 = sphi 0, %s22
      %s25 = sphi 0, %s23
      %s37 = sphi 0, %s39
      %s40 = sphi 0, %s37
      %s41 = sphi 0, %s40
      %s57 = sphi 0, %s41
      %s61 = sphi 0, %s61
      %s63 = sphi 0, %s61
      %s64 = sphi 0, %s63
      %s78 = sphi 0, %s64
      %s82 = sphi 0, %s82
      %s84 = sphi 0, %s82
      %s85 = sphi 0, %s84
      %s99 = sphi 0, %s85
      %s103 = sphi 0, %s103
      %s105 = sphi 0, %s103
      %s106 = sphi 0, %s105
      %s120 = sphi 0, %s106
      %s124 = sphi 0, %s124
      %s126 = sphi 0, %s124
      %s127 = sphi 0, %s126
      %s141 = sphi 0, %s127
      %s145 = sphi 0, %s145
      %s147 = sphi 0, %s145
      %s148 = sphi 0, %s147
      %s162 = sphi 0, %s148
      %s166 = sphi 0, %s166
      %s168 = sphi 0, %s166
      %s169 = sphi 0, %s168
      %s183 = sphi 0, %s169
      %s189 = sphi 0, %s191
      %s192 = sphi 0, %s189
      %s193 = sphi 0, %s192
      %s209 = sphi 0, %s193
    $region4: #{gliclass_biencoder_forward.3} parent=1 // loop_header_branch
      %16 = sbr.rel (%p14) target = $region8
    $region5: #{gliclass_biencoder_forward.3} parent=1 // loop_body
      %s18 = ssub.s32 %s13, 1
      %s19 = ssub.s32 %s13, 2
      %s26 = sadd.s32 1, %s21
      %p27 = scmp.ge.s32.totalorder %s26, 4
      %s28 = scalar_select %p27, 0, %s26
      %s29 = sadd.s32 1, %s20
      %s30 = scalar_select %p27, %s29, %s20
      %p31 = scmp.ge.s32.totalorder %s30, 1
      %s32 = scalar_select %p31, 0, %s30
      %s33 = ssub.s32 %s20, %s32
      %s34 = ssub.s32 %s21, %s28
      %s35 = sor.u32 %s33, %s34
      %p36 = scmp.eq.s32.totalorder %s35, 0
      %s38 = sadd.s32 %s37, 1
      %s39 = scalar_select %p36, %s37, %s38
      %p42 = pneg %p36
      %p43 = scmp.eq.s32.totalorder %s13, 3
      %p44 = por %p42, %p43
      %p45 = scmp.ne.s32.totalorder %s37, %s40
      %p46 = scmp.eq.s32.totalorder %s13, 0
      %p47 = por %p45, %p46
      %p48 = scmp.ne.s32.totalorder %s37, %s40
      %p49 = scmp.eq.s32.totalorder %s18, 3
      %p50 = por %p48, %p49
      %p51 = scmp.ne.s32.totalorder %s40, %s41
      %p52 = scmp.eq.s32.totalorder %s18, 0
      %p53 = por %p51, %p52
      %p54 = scmp.ne.s32.totalorder %s40, %s41
      %p55 = scmp.eq.s32.totalorder %s19, 3
      %p56 = por %p54, %p55
      %p58 = scmp.ne.s32.totalorder %s41, %s57
      %p59 = scmp.eq.s32.totalorder %s19, 0
      %p60 = por %p58, %p59
      %s62 = sadd.s32 %s61, 1
      %p65 = scmp.eq.s32.totalorder %s13, 3
      %p66 = scmp.ne.s32.totalorder %s61, %s63
      %p67 = scmp.eq.s32.totalorder %s13, 0
      %p68 = por %p66, %p67
      %p69 = scmp.ne.s32.totalorder %s61, %s63
      %p70 = scmp.eq.s32.totalorder %s18, 3
      %p71 = por %p69, %p70
      %p72 = scmp.ne.s32.totalorder %s63, %s64
      %p73 = scmp.eq.s32.totalorder %s18, 0
      %p74 = por %p72, %p73
      %p75 = scmp.ne.s32.totalorder %s63, %s64
      %p76 = scmp.eq.s32.totalorder %s19, 3
      %p77 = por %p75, %p76
      %p79 = scmp.ne.s32.totalorder %s64, %s78
      %p80 = scmp.eq.s32.totalorder %s19, 0
      %p81 = por %p79, %p80
      %s83 = sadd.s32 %s82, 1
      %p86 = scmp.eq.s32.totalorder %s13, 3
      %p87 = scmp.ne.s32.totalorder %s82, %s84
      %p88 = scmp.eq.s32.totalorder %s13, 0
      %p89 = por %p87, %p88
      %p90 = scmp.ne.s32.totalorder %s82, %s84
      %p91 = scmp.eq.s32.totalorder %s18, 3
      %p92 = por %p90, %p91
      %p93 = scmp.ne.s32.totalorder %s84, %s85
      %p94 = scmp.eq.s32.totalorder %s18, 0
      %p95 = por %p93, %p94
      %p96 = scmp.ne.s32.totalorder %s84, %s85
      %p97 = scmp.eq.s32.totalorder %s19, 3
      %p98 = por %p96, %p97
      %p100 = scmp.ne.s32.totalorder %s85, %s99
      %p101 = scmp.eq.s32.totalorder %s19, 0
      %p102 = por %p100, %p101
      %s104 = sadd.s32 %s103, 1
      %p107 = scmp.eq.s32.totalorder %s13, 3
      %p108 = scmp.ne.s32.totalorder %s103, %s105
      %p109 = scmp.eq.s32.totalorder %s13, 0
      %p110 = por %p108, %p109
      %p111 = scmp.ne.s32.totalorder %s103, %s105
      %p112 = scmp.eq.s32.totalorder %s18, 3
      %p113 = por %p111, %p112
      %p114 = scmp.ne.s32.totalorder %s105, %s106
      %p115 = scmp.eq.s32.totalorder %s18, 0
      %p116 = por %p114, %p115
      %p117 = scmp.ne.s32.totalorder %s105, %s106
      %p118 = scmp.eq.s32.totalorder %s19, 3
      %p119 = por %p117, %p118
      %p121 = scmp.ne.s32.totalorder %s106, %s120
      %p122 = scmp.eq.s32.totalorder %s19, 0
      %p123 = por %p121, %p122
      %s125 = sadd.s32 %s124, 1
      %p128 = scmp.eq.s32.totalorder %s13, 3
      %p129 = scmp.ne.s32.totalorder %s124, %s126
      %p130 = scmp.eq.s32.totalorder %s13, 0
      %p131 = por %p129, %p130
      %p132 = scmp.ne.s32.totalorder %s124, %s126
      %p133 = scmp.eq.s32.totalorder %s18, 3
      %p134 = por %p132, %p133
      %p135 = scmp.ne.s32.totalorder %s126, %s127
      %p136 = scmp.eq.s32.totalorder %s18, 0
      %p137 = por %p135, %p136
      %p138 = scmp.ne.s32.totalorder %s126, %s127
      %p139 = scmp.eq.s32.totalorder %s19, 3
      %p140 = por %p138, %p139
      %p142 = scmp.ne.s32.totalorder %s127, %s141
      %p143 = scmp.eq.s32.totalorder %s19, 0
      %p144 = por %p142, %p143
      %s146 = sadd.s32 %s145, 1
      %p149 = scmp.eq.s32.totalorder %s13, 3
      %p150 = scmp.ne.s32.totalorder %s145, %s147
      %p151 = scmp.eq.s32.totalorder %s13, 0
      %p152 = por %p150, %p151
      %p153 = scmp.ne.s32.totalorder %s145, %s147
      %p154 = scmp.eq.s32.totalorder %s18, 3
      %p155 = por %p153, %p154
      %p156 = scmp.ne.s32.totalorder %s147, %s148
      %p157 = scmp.eq.s32.totalorder %s18, 0
      %p158 = por %p156, %p157
      %p159 = scmp.ne.s32.totalorder %s147, %s148
      %p160 = scmp.eq.s32.totalorder %s19, 3
      %p161 = por %p159, %p160
      %p163 = scmp.ne.s32.totalorder %s148, %s162
      %p164 = scmp.eq.s32.totalorder %s19, 0
      %p165 = por %p163, %p164
      %s167 = sadd.s32 %s166, 1
      %p170 = scmp.eq.s32.totalorder %s13, 3
      %p171 = scmp.ne.s32.totalorder %s166, %s168
      %p172 = scmp.eq.s32.totalorder %s13, 0
      %p173 = por %p171, %p172
      %p174 = scmp.ne.s32.totalorder %s166, %s168
      %p175 = scmp.eq.s32.totalorder %s18, 3
      %p176 = por %p174, %p175
      %p177 = scmp.ne.s32.totalorder %s168, %s169
      %p178 = scmp.eq.s32.totalorder %s18, 0
      %p179 = por %p177, %p178
      %p180 = scmp.ne.s32.totalorder %s168, %s169
      %p181 = scmp.eq.s32.totalorder %s19, 3
      %p182 = por %p180, %p181
      %p184 = scmp.ne.s32.totalorder %s169, %s183
      %p185 = scmp.eq.s32.totalorder %s19, 0
      %p186 = por %p184, %p185
      %s187 = ssub.s32 %s20, %s32
      %p188 = scmp.eq.s32.totalorder %s187, 0
      %s190 = sadd.s32 %s189, 1
      %s191 = scalar_select %p188, %s189, %s190
      %p194 = pneg %p188
      %p195 = scmp.eq.s32.totalorder %s13, 3
      %p196 = por %p194, %p195
      %p197 = scmp.ne.s32.totalorder %s189, %s192
      %p198 = scmp.eq.s32.totalorder %s13, 0
      %p199 = por %p197, %p198
      %p200 = scmp.ne.s32.totalorder %s189, %s192
      %p201 = scmp.eq.s32.totalorder %s18, 3
      %p202 = por %p200, %p201
      %p203 = scmp.ne.s32.totalorder %s192, %s193
      %p204 = scmp.eq.s32.totalorder %s18, 0
      %p205 = por %p203, %p204
      %p206 = scmp.ne.s32.totalorder %s192, %s193
      %p207 = scmp.eq.s32.totalorder %s19, 3
      %p208 = por %p206, %p207
      %p210 = scmp.ne.s32.totalorder %s193, %s209
      %p211 = scmp.eq.s32.totalorder %s19, 0
      %p212 = por %p210, %p211
      %p213 = scmp.le.s32.totalorder 1, %s13
      %p214 = scmp.lt.s32.totalorder %s13, 5
      %p215 = pnand %p213, %p214
      %p216 = pneg %p215
      // Predicated region
      $region9: #{gliclass_biencoder_forward.3} parent=5 // pred_check
        _
      $region10: #{gliclass_biencoder_forward.3} parent=5 // pred_check_branch
        %218 = sbr.rel (%p215) target = $region12
      $region11: #{gliclass_biencoder_forward.3} parent=5 // pred_region
        %s219 = ssub.s32 %s13, 1
        // Predicated region
        $region13: #{gliclass_biencoder_forward.3} parent=11 // pred_check
          %p220 = pneg %p74
        $region14: #{gliclass_biencoder_forward.3} parent=11 // pred_check_branch
          %222 = sbr.rel (%p220) target = $region16
        $region15: #{gliclass_biencoder_forward.3} parent=11 // pred_region
          _
        $region16: #{gliclass_biencoder_forward.3} parent=11 // pred_fallthru
          _
        // Predicated region
        $region17: #{gliclass_biencoder_forward.3} parent=11 // pred_check
          %p223 = pneg %p95
        $region18: #{gliclass_biencoder_forward.3} parent=11 // pred_check_branch
          %225 = sbr.rel (%p223) target = $region20
        $region19: #{gliclass_biencoder_forward.3} parent=11 // pred_region
          _
        $region20: #{gliclass_biencoder_forward.3} parent=11 // pred_fallthru
          _
        // Predicated region
        $region21: #{gliclass_biencoder_forward.3} parent=11 // pred_check
          %p226 = pneg %p116
        $region22: #{gliclass_biencoder_forward.3} parent=11 // pred_check_branch
          %228 = sbr.rel (%p226) target = $region24
        $region23: #{gliclass_biencoder_forward.3} parent=11 // pred_region
          _
        $region24: #{gliclass_biencoder_forward.3} parent=11 // pred_fallthru
          _
        // Predicated region
        $region25: #{gliclass_biencoder_forward.3} parent=11 // pred_check
          %p229 = pneg %p137
        $region26: #{gliclass_biencoder_forward.3} parent=11 // pred_check_branch
          %231 = sbr.rel (%p229) target = $region28
        $region27: #{gliclass_biencoder_forward.3} parent=11 // pred_region
          _
        $region28: #{gliclass_biencoder_forward.3} parent=11 // pred_fallthru
          _
        // Predicated region
        $region29: #{gliclass_biencoder_forward.3} parent=11 // pred_check
          %p232 = pneg %p158
        $region30: #{gliclass_biencoder_forward.3} parent=11 // pred_check_branch
          %234 = sbr.rel (%p232) target = $region32
        $region31: #{gliclass_biencoder_forward.3} parent=11 // pred_region
          _
        $region32: #{gliclass_biencoder_forward.3} parent=11 // pred_fallthru
          _
        // Predicated region
        $region33: #{gliclass_biencoder_forward.3} parent=11 // pred_check
          %p235 = pneg %p179
        $region34: #{gliclass_biencoder_forward.3} parent=11 // pred_check_branch
          %237 = sbr.rel (%p235) target = $region36
        $region35: #{gliclass_biencoder_forward.3} parent=11 // pred_region
          _
        $region36: #{gliclass_biencoder_forward.3} parent=11 // pred_fallthru
          _
      $region12: #{gliclass_biencoder_forward.3} parent=5 // pred_fallthru
        _
      %p238 = scmp.lt.s32.totalorder %s13, 4
      // Predicated region
      $region37: #{gliclass_biencoder_forward.3} parent=5 // pred_check
        %p239 = pneg %p238
      $region38: #{gliclass_biencoder_forward.3} parent=5 // pred_check_branch
        %241 = sbr.rel (%p239) target = $region40
      $region39: #{gliclass_biencoder_forward.3} parent=5 // pred_region
        // Predicated region
        $region41: #{gliclass_biencoder_forward.3} parent=39 // pred_check
          %p242 = pneg %p47
        $region42: #{gliclass_biencoder_forward.3} parent=39 // pred_check_branch
          %244 = sbr.rel (%p242) target = $region44
        $region43: #{gliclass_biencoder_forward.3} parent=39 // pred_region
          %s245 = sand.u32 %s37, 1
          %s246 = sand.u32 %s37, 1
          %s247 = smul.addr %s246, 256
          %s248 = scalar_lea.vmem [#allocation3], %s247
          %s249 = smul.u32 8, %s20
          %s250 = smul.u32 8, %s21
          %s251 = smul.addr %s249, 32
          %s252 = sadd.s32 %s250, %s251
          %s253 = smul.addr %s252, 4
          %s254 = scalar_lea.vmem %s0, %s253
          // Predicated region
          $region45: #{gliclass_biencoder_forward.3} parent=43 // pred_check
            _
          $region46: #{gliclass_biencoder_forward.3} parent=43 // pred_check_branch
            %256 = sbr.rel (0) target = $region48
          $region47: #{gliclass_biencoder_forward.3} parent=43 // pred_region
            // Predicated region
            $region49: #{gliclass_biencoder_forward.3} parent=47 // pred_check
              _
            $region50: #{gliclass_biencoder_forward.3} parent=47 // pred_check_branch
              %258 = sbr.rel target = $region52
            $region51: #{gliclass_biencoder_forward.3} parent=47 // pred_region
              // Predicated region
              $region64: #{gliclass_biencoder_forward.3} parent=51 // pred_check
                _
              $region65: #{gliclass_biencoder_forward.3} parent=51 // pred_check_branch
                %400 = sbr.rel (0) target = $region67
              $region66: #{gliclass_biencoder_forward.3} parent=51 // pred_region
                loop: start=0, step=1, limit=1
                $region68: #{gliclass_biencoder_forward.3} parent=66 // loop_pre_header
                  _
                $region69: #{gliclass_biencoder_forward.3} parent=66 // loop_header
                  %s402 = sphi 0, %s406
                  %p403 = scmp.ge.s32.totalorder %s402, 1
                  %s407 = sphi %s254, %s254
                  %s408 = sphi %s248, %s248
                $region70: #{gliclass_biencoder_forward.3} parent=66 // loop_header_branch
                  %405 = sbr.rel (%p403) target = $region74
                $region71: #{gliclass_biencoder_forward.3} parent=66 // loop_body
                  _
                $region72: #{gliclass_biencoder_forward.3} parent=66 // loop_footer
                  %s406 = sadd.s32 1, %s402
                $region73: #{gliclass_biencoder_forward.3} parent=66 // loop_footer_branch
                  %401 = sbr.rel target = $region69
                $region74: #{gliclass_biencoder_forward.3} parent=66 // loop_exit
                  _
                %s410 = ssub.s32 16, 1
                loop: start=0, step=1, limit=1
                $region75: #{gliclass_biencoder_forward.3} parent=66 // loop_pre_header
                  _
                $region76: #{gliclass_biencoder_forward.3} parent=66 // loop_header
                  %s412 = sphi 0, %s416
                  %p413 = scmp.ge.s32.totalorder %s412, 1
                  %s417 = sphi %s254, %s254
                  %s418 = sphi %s248, %s248
                $region77: #{gliclass_biencoder_forward.3} parent=66 // loop_header_branch
                  %415 = sbr.rel (%p413) target = $region81
                $region78: #{gliclass_biencoder_forward.3} parent=66 // loop_body
                  %v419 = vld [vmem:[%s417] sm:%s410]
                  %420 = vst [vmem:[%s418] sm:%s410] %v419
                  %v421 = vld [vmem:[%s417 + $0x4] sm:%s410]
                  %422 = vst [vmem:[%s418 + $0x4] sm:%s410] %v421
                  %v423 = vld [vmem:[%s417 + $0x8] sm:%s410]
                  %424 = vst [vmem:[%s418 + $0x8] sm:%s410] %v423
                  %v425 = vld [vmem:[%s417 + $0xc] sm:%s410]
                  %426 = vst [vmem:[%s418 + $0xc] sm:%s410] %v425
                  %v427 = vld [vmem:[%s417 + $0x10] sm:%s410]
                  %428 = vst [vmem:[%s418 + $0x10] sm:%s410] %v427
                  %v429 = vld [vmem:[%s417 + $0x14] sm:%s410]
                  %430 = vst [vmem:[%s418 + $0x14] sm:%s410] %v429
                  %v431 = vld [vmem:[%s417 + $0x18] sm:%s410]
                  %432 = vst [vmem:[%s418 + $0x18] sm:%s410] %v431
                  %v433 = vld [vmem:[%s417 + $0x1c] sm:%s410]
                  %434 = vst [vmem:[%s418 + $0x1c] sm:%s410] %v433
                  %v435 = vld [vmem:[%s417 + $0x80] sm:%s410]
                  %436 = vst [vmem:[%s418 + $0x20] sm:%s410] %v435
                  %v437 = vld [vmem:[%s417 + $0x84] sm:%s410]
                  %438 = vst [vmem:[%s418 + $0x24] sm:%s410] %v437
                  %v439 = vld [vmem:[%s417 + $0x88] sm:%s410]
                  %440 = vst [vmem:[%s418 + $0x28] sm:%s410] %v439
                  %v441 = vld [vmem:[%s417 + $0x8c] sm:%s410]
                  %442 = vst [vmem:[%s418 + $0x2c] sm:%s410] %v441
                  %v443 = vld [vmem:[%s417 + $0x90] sm:%s410]
                  %444 = vst [vmem:[%s418 + $0x30] sm:%s410] %v443
                  %v445 = vld [vmem:[%s417 + $0x94] sm:%s410]
                  %446 = vst [vmem:[%s418 + $0x34] sm:%s410] %v445
                  %v447 = vld [vmem:[%s417 + $0x98] sm:%s410]
                  %448 = vst [vmem:[%s418 + $0x38] sm:%s410] %v447
                  %v449 = vld [vmem:[%s417 + $0x9c] sm:%s410]
                  %450 = vst [vmem:[%s418 + $0x3c] sm:%s410] %v449
                  %v451 = vld [vmem:[%s417 + $0x100] sm:%s410]
                  %452 = vst [vmem:[%s418 + $0x40] sm:%s410] %v451
                  %v453 = vld [vmem:[%s417 + $0x104] sm:%s410]
                  %454 = vst [vmem:[%s418 + $0x44] sm:%s410] %v453
                  %v455 = vld [vmem:[%s417 + $0x108] sm:%s410]
                  %456 = vst [vmem:[%s418 + $0x48] sm:%s410] %v455
                  %v457 = vld [vmem:[%s417 + $0x10c] sm:%s410]
                  %458 = vst [vmem:[%s418 + $0x4c] sm:%s410] %v457
                  %v459 = vld [vmem:[%s417 + $0x110] sm:%s410]
                  %460 = vst [vmem:[%s418 + $0x50] sm:%s410] %v459
                  %v461 = vld [vmem:[%s417 + $0x114] sm:%s410]
                  %462 = vst [vmem:[%s418 + $0x54] sm:%s410] %v461
                  %v463 = vld [vmem:[%s417 + $0x118] sm:%s410]
                  %464 = vst [vmem:[%s418 + $0x58] sm:%s410] %v463
                  %v465 = vld [vmem:[%s417 + $0x11c] sm:%s410]
                  %466 = vst [vmem:[%s418 + $0x5c] sm:%s410] %v465
                  %v467 = vld [vmem:[%s417 + $0x180] sm:%s410]
                  %468 = vst [vmem:[%s418 + $0x60] sm:%s410] %v467
                  %v469 = vld [vmem:[%s417 + $0x184] sm:%s410]
                  %470 = vst [vmem:[%s418 + $0x64] sm:%s410] %v469
                  %v471 = vld [vmem:[%s417 + $0x188] sm:%s410]
                  %472 = vst [vmem:[%s418 + $0x68] sm:%s410] %v471
                  %v473 = vld [vmem:[%s417 + $0x18c] sm:%s410]
                  %474 = vst [vmem:[%s418 + $0x6c] sm:%s410] %v473
                  %v475 = vld [vmem:[%s417 + $0x190] sm:%s410]
                  %476 = vst [vmem:[%s418 + $0x70] sm:%s410] %v475
                  %v477 = vld [vmem:[%s417 + $0x194] sm:%s410]
                  %478 = vst [vmem:[%s418 + $0x74] sm:%s410] %v477
                  %v479 = vld [vmem:[%s417 + $0x198] sm:%s410]
                  %480 = vst [vmem:[%s418 + $0x78] sm:%s410] %v479
                  %v481 = vld [vmem:[%s417 + $0x19c] sm:%s410]
                  %482 = vst [vmem:[%s418 + $0x7c] sm:%s410] %v481
                  %v483 = vld [vmem:[%s417 + $0x200] sm:%s410]
                  %484 = vst [vmem:[%s418 + $0x80] sm:%s410] %v483
                  %v485 = vld [vmem:[%s417 + $0x204] sm:%s410]
                  %486 = vst [vmem:[%s418 + $0x84] sm:%s410] %v485
                  %v487 = vld [vmem:[%s417 + $0x208] sm:%s410]
                  %488 = vst [vmem:[%s418 + $0x88] sm:%s410] %v487
                  %v489 = vld [vmem:[%s417 + $0x20c] sm:%s410]
                  %490 = vst [vmem:[%s418 + $0x8c] sm:%s410] %v489
                  %v491 = vld [vmem:[%s417 + $0x210] sm:%s410]
                  %492 = vst [vmem:[%s418 + $0x90] sm:%s410] %v491
                  %v493 = vld [vmem:[%s417 + $0x214] sm:%s410]
                  %494 = vst [vmem:[%s418 + $0x94] sm:%s410] %v493
                  %v495 = vld [vmem:[%s417 + $0x218] sm:%s410]
                  %496 = vst [vmem:[%s418 + $0x98] sm:%s410] %v495
                  %v497 = vld [vmem:[%s417 + $0x21c] sm:%s410]
                  %498 = vst [vmem:[%s418 + $0x9c] sm:%s410] %v497
                  %v499 = vld [vmem:[%s417 + $0x280] sm:%s410]
                  %500 = vst [vmem:[%s418 + $0xa0] sm:%s410] %v499
                  %v501 = vld [vmem:[%s417 + $0x284] sm:%s410]
                  %502 = vst [vmem:[%s418 + $0xa4] sm:%s410] %v501
                  %v503 = vld [vmem:[%s417 + $0x288] sm:%s410]
                  %504 = vst [vmem:[%s418 + $0xa8] sm:%s410] %v503
                  %v505 = vld [vmem:[%s417 + $0x28c] sm:%s410]
                  %506 = vst [vmem:[%s418 + $0xac] sm:%s410] %v505
                  %v507 = vld [vmem:[%s417 + $0x290] sm:%s410]
                  %508 = vst [vmem:[%s418 + $0xb0] sm:%s410] %v507
                  %v509 = vld [vmem:[%s417 + $0x294] sm:%s410]
                  %510 = vst [vmem:[%s418 + $0xb4] sm:%s410] %v509
                  %v511 = vld [vmem:[%s417 + $0x298] sm:%s410]
                  %512 = vst [vmem:[%s418 + $0xb8] sm:%s410] %v511
                  %v513 = vld [vmem:[%s417 + $0x29c] sm:%s410]
                  %514 = vst [vmem:[%s418 + $0xbc] sm:%s410] %v513
                  %v515 = vld [vmem:[%s417 + $0x300] sm:%s410]
                  %516 = vst [vmem:[%s418 + $0xc0] sm:%s410] %v515
                  %v517 = vld [vmem:[%s417 + $0x304] sm:%s410]
                  %518 = vst [vmem:[%s418 + $0xc4] sm:%s410] %v517
                  %v519 = vld [vmem:[%s417 + $0x308] sm:%s410]
                  %520 = vst [vmem:[%s418 + $0xc8] sm:%s410] %v519
                  %v521 = vld [vmem:[%s417 + $0x30c] sm:%s410]
                  %522 = vst [vmem:[%s418 + $0xcc] sm:%s410] %v521
                  %v523 = vld [vmem:[%s417 + $0x310] sm:%s410]
                  %524 = vst [vmem:[%s418 + $0xd0] sm:%s410] %v523
                  %v525 = vld [vmem:[%s417 + $0x314] sm:%s410]
                  %526 = vst [vmem:[%s418 + $0xd4] sm:%s410] %v525
                  %v527 = vld [vmem:[%s417 + $0x318] sm:%s410]
                  %528 = vst [vmem:[%s418 + $0xd8] sm:%s410] %v527
                  %v529 = vld [vmem:[%s417 + $0x31c] sm:%s410]
                  %530 = vst [vmem:[%s418 + $0xdc] sm:%s410] %v529
                  %v531 = vld [vmem:[%s417 + $0x380] sm:%s410]
                  %532 = vst [vmem:[%s418 + $0xe0] sm:%s410] %v531
                  %v533 = vld [vmem:[%s417 + $0x384] sm:%s410]
                  %534 = vst [vmem:[%s418 + $0xe4] sm:%s410] %v533
                  %v535 = vld [vmem:[%s417 + $0x388] sm:%s410]
                  %536 = vst [vmem:[%s418 + $0xe8] sm:%s410] %v535
                  %v537 = vld [vmem:[%s417 + $0x38c] sm:%s410]
                  %538 = vst [vmem:[%s418 + $0xec] sm:%s410] %v537
                  %v539 = vld [vmem:[%s417 + $0x390] sm:%s410]
                  %540 = vst [vmem:[%s418 + $0xf0] sm:%s410] %v539
                  %v541 = vld [vmem:[%s417 + $0x394] sm:%s410]
                  %542 = vst [vmem:[%s418 + $0xf4] sm:%s410] %v541
                  %v543 = vld [vmem:[%s417 + $0x398] sm:%s410]
                  %544 = vst [vmem:[%s418 + $0xf8] sm:%s410] %v543
                  %v545 = vld [vmem:[%s417 + $0x39c] sm:%s410]
                  %546 = vst [vmem:[%s418 + $0xfc] sm:%s410] %v545
                $region79: #{gliclass_biencoder_forward.3} parent=66 // loop_footer
                  %s416 = sadd.s32 1, %s412
                $region80: #{gliclass_biencoder_forward.3} parent=66 // loop_footer_branch
                  %411 = sbr.rel target = $region76
                $region81: #{gliclass_biencoder_forward.3} parent=66 // loop_exit
                  _
              $region67: #{gliclass_biencoder_forward.3} parent=51 // pred_fallthru
                _
            $region52: #{gliclass_biencoder_forward.3} parent=47 // pred_fallthru
              _
            // Predicated region
            $region53: #{gliclass_biencoder_forward.3} parent=47 // pred_check
              _
            $region54: #{gliclass_biencoder_forward.3} parent=47 // pred_check_branch
              %260 = sbr.rel (0) target = $region56
            $region55: #{gliclass_biencoder_forward.3} parent=47 // pred_region
              %s262 = ssub.s32 16, 1
              loop: start=0, step=1, limit=1
              $region57: #{gliclass_biencoder_forward.3} parent=55 // loop_pre_header
                _
              $region58: #{gliclass_biencoder_forward.3} parent=55 // loop_header
                %s264 = sphi 0, %s268
                %p265 = scmp.ge.s32.totalorder %s264, 1
                %s269 = sphi %s254, %s254
                %s270 = sphi %s248, %s248
              $region59: #{gliclass_biencoder_forward.3} parent=55 // loop_header_branch
                %267 = sbr.rel (%p265) target = $region63
              $region60: #{gliclass_biencoder_forward.3} parent=55 // loop_body
                %v271 = vld [vmem:[%s269] sm:%s262]
                %272 = vst [vmem:[%s270] sm:%s262] %v271
                %v273 = vld [vmem:[%s269 + $0x4] sm:%s262]
                %274 = vst [vmem:[%s270 + $0x4] sm:%s262] %v273
                %v275 = vld [vmem:[%s269 + $0x8] sm:%s262]
                %276 = vst [vmem:[%s270 + $0x8] sm:%s262] %v275
                %v277 = vld [vmem:[%s269 + $0xc] sm:%s262]
                %278 = vst [vmem:[%s270 + $0xc] sm:%s262] %v277
                %v279 = vld [vmem:[%s269 + $0x10] sm:%s262]
                %280 = vst [vmem:[%s270 + $0x10] sm:%s262] %v279
                %v281 = vld [vmem:[%s269 + $0x14] sm:%s262]
                %282 = vst [vmem:[%s270 + $0x14] sm:%s262] %v281
                %v283 = vld [vmem:[%s269 + $0x18] sm:%s262]
                %284 = vst [vmem:[%s270 + $0x18] sm:%s262] %v283
                %v285 = vld [vmem:[%s269 + $0x1c] sm:%s262]
                %286 = vst [vmem:[%s270 + $0x1c] sm:%s262] %v285
                %v287 = vld [vmem:[%s269 + $0x80] sm:%s262]
                %288 = vst [vmem:[%s270 + $0x20] sm:%s262] %v287
                %v289 = vld [vmem:[%s269 + $0x84] sm:%s262]
                %290 = vst [vmem:[%s270 + $0x24] sm:%s262] %v289
                %v291 = vld [vmem:[%s269 + $0x88] sm:%s262]
                %292 = vst [vmem:[%s270 + $0x28] sm:%s262] %v291
                %v293 = vld [vmem:[%s269 + $0x8c] sm:%s262]
                %294 = vst [vmem:[%s270 + $0x2c] sm:%s262] %v293
                %v295 = vld [vmem:[%s269 + $0x90] sm:%s262]
                %296 = vst [vmem:[%s270 + $0x30] sm:%s262] %v295
                %v297 = vld [vmem:[%s269 + $0x94] sm:%s262]
                %298 = vst [vmem:[%s270 + $0x34] sm:%s262] %v297
                %v299 = vld [vmem:[%s269 + $0x98] sm:%s262]
                %300 = vst [vmem:[%s270 + $0x38] sm:%s262] %v299
                %v301 = vld [vmem:[%s269 + $0x9c] sm:%s262]
                %302 = vst [vmem:[%s270 + $0x3c] sm:%s262] %v301
                %v303 = vld [vmem:[%s269 + $0x100] sm:%s262]
                %304 = vst [vmem:[%s270 + $0x40] sm:%s262] %v303
                %v305 = vld [vmem:[%s269 + $0x104] sm:%s262]
                %306 = vst [vmem:[%s270 + $0x44] sm:%s262] %v305
                %v307 = vld [vmem:[%s269 + $0x108] sm:%s262]
                %308 = vst [vmem:[%s270 + $0x48] sm:%s262] %v307
                %v309 = vld [vmem:[%s269 + $0x10c] sm:%s262]
                %310 = vst [vmem:[%s270 + $0x4c] sm:%s262] %v309
                %v311 = vld [vmem:[%s269 + $0x110] sm:%s262]
                %312 = vst [vmem:[%s270 + $0x50] sm:%s262] %v311
                %v313 = vld [vmem:[%s269 + $0x114] sm:%s262]
                %314 = vst [vmem:[%s270 + $0x54] sm:%s262] %v313
                %v315 = vld [vmem:[%s269 + $0x118] sm:%s262]
                %316 = vst [vmem:[%s270 + $0x58] sm:%s262] %v315
                %v317 = vld [vmem:[%s269 + $0x11c] sm:%s262]
                %318 = vst [vmem:[%s270 + $0x5c] sm:%s262] %v317
                %v319 = vld [vmem:[%s269 + $0x180] sm:%s262]
                %320 = vst [vmem:[%s270 + $0x60] sm:%s262] %v319
                %v321 = vld [vmem:[%s269 + $0x184] sm:%s262]
                %322 = vst [vmem:[%s270 + $0x64] sm:%s262] %v321
                %v323 = vld [vmem:[%s269 + $0x188] sm:%s262]
                %324 = vst [vmem:[%s270 + $0x68] sm:%s262] %v323
                %v325 = vld [vmem:[%s269 + $0x18c] sm:%s262]
                %326 = vst [vmem:[%s270 + $0x6c] sm:%s262] %v325
                %v327 = vld [vmem:[%s269 + $0x190] sm:%s262]
                %328 = vst [vmem:[%s270 + $0x70] sm:%s262] %v327
                %v329 = vld [vmem:[%s269 + $0x194] sm:%s262]
                %330 = vst [vmem:[%s270 + $0x74] sm:%s262] %v329
                %v331 = vld [vmem:[%s269 + $0x198] sm:%s262]
                %332 = vst [vmem:[%s270 + $0x78] sm:%s262] %v331
                %v333 = vld [vmem:[%s269 + $0x19c] sm:%s262]
                %334 = vst [vmem:[%s270 + $0x7c] sm:%s262] %v333
                %v335 = vld [vmem:[%s269 + $0x200] sm:%s262]
                %336 = vst [vmem:[%s270 + $0x80] sm:%s262] %v335
                %v337 = vld [vmem:[%s269 + $0x204] sm:%s262]
                %338 = vst [vmem:[%s270 + $0x84] sm:%s262] %v337
                %v339 = vld [vmem:[%s269 + $0x208] sm:%s262]
                %340 = vst [vmem:[%s270 + $0x88] sm:%s262] %v339
                %v341 = vld [vmem:[%s269 + $0x20c] sm:%s262]
                %342 = vst [vmem:[%s270 + $0x8c] sm:%s262] %v341
                %v343 = vld [vmem:[%s269 + $0x210] sm:%s262]
                %344 = vst [vmem:[%s270 + $0x90] sm:%s262] %v343
                %v345 = vld [vmem:[%s269 + $0x214] sm:%s262]
                %346 = vst [vmem:[%s270 + $0x94] sm:%s262] %v345
                %v347 = vld [vmem:[%s269 + $0x218] sm:%s262]
                %348 = vst [vmem:[%s270 + $0x98] sm:%s262] %v347
                %v349 = vld [vmem:[%s269 + $0x21c] sm:%s262]
                %350 = vst [vmem:[%s270 + $0x9c] sm:%s262] %v349
                %v351 = vld [vmem:[%s269 + $0x280] sm:%s262]
                %352 = vst [vmem:[%s270 + $0xa0] sm:%s262] %v351
                %v353 = vld [vmem:[%s269 + $0x284] sm:%s262]
                %354 = vst [vmem:[%s270 + $0xa4] sm:%s262] %v353
                %v355 = vld [vmem:[%s269 + $0x288] sm:%s262]
                %356 = vst [vmem:[%s270 + $0xa8] sm:%s262] %v355
                %v357 = vld [vmem:[%s269 + $0x28c] sm:%s262]
                %358 = vst [vmem:[%s270 + $0xac] sm:%s262] %v357
                %v359 = vld [vmem:[%s269 + $0x290] sm:%s262]
                %360 = vst [vmem:[%s270 + $0xb0] sm:%s262] %v359
                %v361 = vld [vmem:[%s269 + $0x294] sm:%s262]
                %362 = vst [vmem:[%s270 + $0xb4] sm:%s262] %v361
                %v363 = vld [vmem:[%s269 + $0x298] sm:%s262]
                %364 = vst [vmem:[%s270 + $0xb8] sm:%s262] %v363
                %v365 = vld [vmem:[%s269 + $0x29c] sm:%s262]
                %366 = vst [vmem:[%s270 + $0xbc] sm:%s262] %v365
                %v367 = vld [vmem:[%s269 + $0x300] sm:%s262]
                %368 = vst [vmem:[%s270 + $0xc0] sm:%s262] %v367
                %v369 = vld [vmem:[%s269 + $0x304] sm:%s262]
                %370 = vst [vmem:[%s270 + $0xc4] sm:%s262] %v369
                %v371 = vld [vmem:[%s269 + $0x308] sm:%s262]
                %372 = vst [vmem:[%s270 + $0xc8] sm:%s262] %v371
                %v373 = vld [vmem:[%s269 + $0x30c] sm:%s262]
                %374 = vst [vmem:[%s270 + $0xcc] sm:%s262] %v373
                %v375 = vld [vmem:[%s269 + $0x310] sm:%s262]
                %376 = vst [vmem:[%s270 + $0xd0] sm:%s262] %v375
                %v377 = vld [vmem:[%s269 + $0x314] sm:%s262]
                %378 = vst [vmem:[%s270 + $0xd4] sm:%s262] %v377
                %v379 = vld [vmem:[%s269 + $0x318] sm:%s262]
                %380 = vst [vmem:[%s270 + $0xd8] sm:%s262] %v379
                %v381 = vld [vmem:[%s269 + $0x31c] sm:%s262]
                %382 = vst [vmem:[%s270 + $0xdc] sm:%s262] %v381
                %v383 = vld [vmem:[%s269 + $0x380] sm:%s262]
                %384 = vst [vmem:[%s270 + $0xe0] sm:%s262] %v383
                %v385 = vld [vmem:[%s269 + $0x384] sm:%s262]
                %386 = vst [vmem:[%s270 + $0xe4] sm:%s262] %v385
                %v387 = vld [vmem:[%s269 + $0x388] sm:%s262]
                %388 = vst [vmem:[%s270 + $0xe8] sm:%s262] %v387
                %v389 = vld [vmem:[%s269 + $0x38c] sm:%s262]
                %390 = vst [vmem:[%s270 + $0xec] sm:%s262] %v389
                %v391 = vld [vmem:[%s269 + $0x390] sm:%s262]
                %392 = vst [vmem:[%s270 + $0xf0] sm:%s262] %v391
                %v393 = vld [vmem:[%s269 + $0x394] sm:%s262]
                %394 = vst [vmem:[%s270 + $0xf4] sm:%s262] %v393
                %v395 = vld [vmem:[%s269 + $0x398] sm:%s262]
                %396 = vst [vmem:[%s270 + $0xf8] sm:%s262] %v395
                %v397 = vld [vmem:[%s269 + $0x39c] sm:%s262]
                %398 = vst [vmem:[%s270 + $0xfc] sm:%s262] %v397
              $region61: #{gliclass_biencoder_forward.3} parent=55 // loop_footer
                %s268 = sadd.s32 1, %s264
              $region62: #{gliclass_biencoder_forward.3} parent=55 // loop_footer_branch
                %263 = sbr.rel target = $region58
              $region63: #{gliclass_biencoder_forward.3} parent=55 // loop_exit
                _
            $region56: #{gliclass_biencoder_forward.3} parent=47 // pred_fallthru
              _
          $region48: #{gliclass_biencoder_forward.3} parent=43 // pred_fallthru
            _
          %547 = vnop
        $region44: #{gliclass_biencoder_forward.3} parent=39 // pred_fallthru
          _
      $region40: #{gliclass_biencoder_forward.3} parent=5 // pred_fallthru
        _
      %p548 = scmp.le.s32.totalorder 1, %s13
      %p549 = scmp.lt.s32.totalorder %s13, 5
      %p550 = pnand %p548, %p549
      %p551 = pneg %p550
      // Predicated region
      $region82: #{gliclass_biencoder_forward.3} parent=5 // pred_check
        _
      $region83: #{gliclass_biencoder_forward.3} parent=5 // pred_check_branch
        %553 = sbr.rel (%p550) target = $region85
      $region84: #{gliclass_biencoder_forward.3} parent=5 // pred_region
        %s554 = ssub.s32 %s13, 1
        %s555 = sand.u32 %s40, 1
        %s556 = sand.u32 %s40, 1
        %s557 = smul.addr %s556, 256
        %s558 = scalar_lea.vmem [#allocation3], %s557
        // Predicated region
        $region86: #{gliclass_biencoder_forward.3} parent=84 // pred_check
          %p559 = pneg %p53
        $region87: #{gliclass_biencoder_forward.3} parent=84 // pred_check_branch
          %561 = sbr.rel (%p559) target = $region89
        $region88: #{gliclass_biencoder_forward.3} parent=84 // pred_region
          _
        $region89: #{gliclass_biencoder_forward.3} parent=84 // pred_fallthru
          _
        %s562 = sand.u32 %s40, 1
        %s563 = sand.u32 %s40, 1
        %s564 = smul.addr %s563, 256
        %s565 = scalar_lea.vmem [#allocation3], %s564
        %p566 = pneg %p53
        %p567 = pneg %p50
        %p568 = pneg %p74
        %p569 = pneg %p71
        %p570 = pneg %p95
        %p571 = pneg %p92
        %p572 = pneg %p116
        %p573 = pneg %p113
        %p574 = pneg %p137
        %p575 = pneg %p134
        %p576 = pneg %p158
        %p577 = pneg %p155
        %p578 = pneg %p179
        %p579 = pneg %p176
        %p580 = pneg %p205
        %p581 = pneg %p202
        %p582 = scmp.lt.s32.totalorder %s22, 0
        %s583 = scalar_select %p582, %s22, 0
        %s584 = smul.addr %s583, 8
        %s585 = scalar_lea.vmem %s7, %s584
        %s586 = smul.u32 8, %s22
        %s587 = smul.u32 8, %s23
        %p588 = scmp.lt.s32.totalorder %s22, 0
        %s589 = scalar_select %p588, %s22, 0
        %s590 = smul.addr %s589, 8
        %s591 = scalar_lea.vmem %s7, %s590
        %p593 = scmp.eq.s32.totalorder %s23, 0
        // Predicated region
        $region90: #{gliclass_biencoder_forward.3} parent=84 // pred_check
          %p594 = pneg %p593
        $region91: #{gliclass_biencoder_forward.3} parent=84 // pred_check_branch
          %596 = sbr.rel (%p594) target = $region93
        $region92: #{gliclass_biencoder_forward.3} parent=84 // pred_region
          %597 = vst [vmem:[#allocation2] sm:$0xff] 0.0
        $region93: #{gliclass_biencoder_forward.3} parent=84 // pred_fallthru
          _
        %v598 = vld [vmem:[%s558] sm:$0xf]
        %v599 = vld [vmem:[%s558 + $0x4] sm:$0xf]
        %v600 = vld [vmem:[%s558 + $0x8] sm:$0xf]
        %v601 = vld [vmem:[%s558 + $0xc] sm:$0xf]
        %v602 = vld [vmem:[%s558 + $0x10] sm:$0xf]
        %v603 = vld [vmem:[%s558 + $0x14] sm:$0xf]
        %v604 = vld [vmem:[%s558 + $0x18] sm:$0xf]
        %v605 = vld [vmem:[%s558 + $0x1c] sm:$0xf]
        %v606 = vld [vmem:[%s558 + $0x20] sm:$0xf]
        %v607 = vld [vmem:[%s558 + $0x24] sm:$0xf]
        %v608 = vld [vmem:[%s558 + $0x28] sm:$0xf]
        %v609 = vld [vmem:[%s558 + $0x2c] sm:$0xf]
        %v610 = vld [vmem:[%s558 + $0x30] sm:$0xf]
        %v611 = vld [vmem:[%s558 + $0x34] sm:$0xf]
        %v612 = vld [vmem:[%s558 + $0x38] sm:$0xf]
        %v613 = vld [vmem:[%s558 + $0x3c] sm:$0xf]
        %v614 = vld [vmem:[%s558 + $0x40] sm:$0xf]
        %v615 = vld [vmem:[%s558 + $0x44] sm:$0xf]
        %v616 = vld [vmem:[%s558 + $0x48] sm:$0xf]
        %v617 = vld [vmem:[%s558 + $0x4c] sm:$0xf]
        %v618 = vld [vmem:[%s558 + $0x50] sm:$0xf]
        %v619 = vld [vmem:[%s558 + $0x54] sm:$0xf]
        %v620 = vld [vmem:[%s558 + $0x58] sm:$0xf]
        %v621 = vld [vmem:[%s558 + $0x5c] sm:$0xf]
        %v622 = vld [vmem:[%s558 + $0x60] sm:$0xf]
        %v623 = vld [vmem:[%s558 + $0x64] sm:$0xf]
        %v624 = vld [vmem:[%s558 + $0x68] sm:$0xf]
        %v625 = vld [vmem:[%s558 + $0x6c] sm:$0xf]
        %v626 = vld [vmem:[%s558 + $0x70] sm:$0xf]
        %v627 = vld [vmem:[%s558 + $0x74] sm:$0xf]
        %v628 = vld [vmem:[%s558 + $0x78] sm:$0xf]
        %v629 = vld [vmem:[%s558 + $0x7c] sm:$0xf]
        %v630 = vld [vmem:[%s558 + $0x80] sm:$0xf]
        %v631 = vld [vmem:[%s558 + $0x84] sm:$0xf]
        %v632 = vld [vmem:[%s558 + $0x88] sm:$0xf]
        %v633 = vld [vmem:[%s558 + $0x8c] sm:$0xf]
        %v634 = vld [vmem:[%s558 + $0x90] sm:$0xf]
        %v635 = vld [vmem:[%s558 + $0x94] sm:$0xf]
        %v636 = vld [vmem:[%s558 + $0x98] sm:$0xf]
        %v637 = vld [vmem:[%s558 + $0x9c] sm:$0xf]
        %v638 = vld [vmem:[%s558 + $0xa0] sm:$0xf]
        %v639 = vld [vmem:[%s558 + $0xa4] sm:$0xf]
        %v640 = vld [vmem:[%s558 + $0xa8] sm:$0xf]
        %v641 = vld [vmem:[%s558 + $0xac] sm:$0xf]
        %v642 = vld [vmem:[%s558 + $0xb0] sm:$0xf]
        %v643 = vld [vmem:[%s558 + $0xb4] sm:$0xf]
        %v644 = vld [vmem:[%s558 + $0xb8] sm:$0xf]
        %v645 = vld [vmem:[%s558 + $0xbc] sm:$0xf]
        %v646 = vld [vmem:[%s558 + $0xc0] sm:$0xf]
        %v647 = vld [vmem:[%s558 + $0xc4] sm:$0xf]
        %v648 = vld [vmem:[%s558 + $0xc8] sm:$0xf]
        %v649 = vld [vmem:[%s558 + $0xcc] sm:$0xf]
        %v650 = vld [vmem:[%s558 + $0xd0] sm:$0xf]
        %v651 = vld [vmem:[%s558 + $0xd4] sm:$0xf]
        %v652 = vld [vmem:[%s558 + $0xd8] sm:$0xf]
        %v653 = vld [vmem:[%s558 + $0xdc] sm:$0xf]
        %v654 = vld [vmem:[%s558 + $0xe0] sm:$0xf]
        %v655 = vld [vmem:[%s558 + $0xe4] sm:$0xf]
        %v656 = vld [vmem:[%s558 + $0xe8] sm:$0xf]
        %v657 = vld [vmem:[%s558 + $0xec] sm:$0xf]
        %v658 = vld [vmem:[%s558 + $0xf0] sm:$0xf]
        %v659 = vld [vmem:[%s558 + $0xf4] sm:$0xf]
        %v660 = vld [vmem:[%s558 + $0xf8] sm:$0xf]
        %v661 = vld [vmem:[%s558 + $0xfc] sm:$0xf]
        %v662 = vld [vmem:[%s1] sm:$0xf]
        %v663 = vld [vmem:[%s1 + $0x4] sm:$0xf]
        %v664 = vld [vmem:[%s1 + $0x8] sm:$0xf]
        %v665 = vld [vmem:[%s1 + $0xc] sm:$0xf]
        %v666 = vld [vmem:[%s1 + $0x10] sm:$0xf]
        %v667 = vld [vmem:[%s1 + $0x14] sm:$0xf]
        %v668 = vld [vmem:[%s1 + $0x18] sm:$0xf]
        %v669 = vld [vmem:[%s1 + $0x1c] sm:$0xf]
        %v670 = vld [vmem:[%s1 + $0x20] sm:$0xf]
        %v671 = vld [vmem:[%s1 + $0x24] sm:$0xf]
        %v672 = vld [vmem:[%s1 + $0x28] sm:$0xf]
        %v673 = vld [vmem:[%s1 + $0x2c] sm:$0xf]
        %v674 = vld [vmem:[%s1 + $0x30] sm:$0xf]
        %v675 = vld [vmem:[%s1 + $0x34] sm:$0xf]
        %v676 = vld [vmem:[%s1 + $0x38] sm:$0xf]
        %v677 = vld [vmem:[%s1 + $0x3c] sm:$0xf]
        %v678 = vld [vmem:[%s2] sm:$0x1]
        %v680 = vlaneseq
        %v681 = vshrl.u32 %v680, 7
        %v682 = vsub.s32 0, %v681
        %v683 = vrot.slane %v678, %v682
        %v749 = vunpack.c.l.b16 %v598
        %v750 = vunpack.c.l.b16 %v599
        %v751 = vunpack.c.l.b16 %v600
        %v752 = vunpack.c.l.b16 %v601
        %v753 = vunpack.c.l.b16 %v602
        %v754 = vunpack.c.l.b16 %v603
        %v755 = vunpack.c.l.b16 %v604
        %v756 = vunpack.c.l.b16 %v605
        %v757 = vunpack.c.l.b16 %v606
        %v758 = vunpack.c.l.b16 %v607
        %v759 = vunpack.c.l.b16 %v608
        %v760 = vunpack.c.l.b16 %v609
        %v761 = vunpack.c.l.b16 %v610
        %v762 = vunpack.c.l.b16 %v611
        %v763 = vunpack.c.l.b16 %v612
        %v764 = vunpack.c.l.b16 %v613
        %v765 = vunpack.c.l.b16 %v614
        %v766 = vunpack.c.l.b16 %v615
        %v767 = vunpack.c.l.b16 %v616
        %v768 = vunpack.c.l.b16 %v617
        %v769 = vunpack.c.l.b16 %v618
        %v770 = vunpack.c.l.b16 %v619
        %v771 = vunpack.c.l.b16 %v620
        %v772 = vunpack.c.l.b16 %v621
        %v773 = vunpack.c.l.b16 %v622
        %v774 = vunpack.c.l.b16 %v623
        %v775 = vunpack.c.l.b16 %v624
        %v776 = vunpack.c.l.b16 %v625
        %v777 = vunpack.c.l.b16 %v626
        %v778 = vunpack.c.l.b16 %v627
        %v779 = vunpack.c.l.b16 %v628
        %v780 = vunpack.c.l.b16 %v629
        %v781 = vunpack.c.l.b16 %v630
        %v782 = vunpack.c.l.b16 %v631
        %v783 = vunpack.c.l.b16 %v632
        %v784 = vunpack.c.l.b16 %v633
        %v785 = vunpack.c.l.b16 %v634
        %v786 = vunpack.c.l.b16 %v635
        %v787 = vunpack.c.l.b16 %v636
        %v788 = vunpack.c.l.b16 %v637
        %v789 = vunpack.c.l.b16 %v638
        %v790 = vunpack.c.l.b16 %v639
        %v791 = vunpack.c.l.b16 %v640
        %v792 = vunpack.c.l.b16 %v641
        %v793 = vunpack.c.l.b16 %v642
        %v794 = vunpack.c.l.b16 %v643
        %v795 = vunpack.c.l.b16 %v644
        %v796 = vunpack.c.l.b16 %v645
        %v797 = vunpack.c.l.b16 %v646
        %v798 = vunpack.c.l.b16 %v647
        %v799 = vunpack.c.l.b16 %v648
        %v800 = vunpack.c.l.b16 %v649
        %v801 = vunpack.c.l.b16 %v650
        %v802 = vunpack.c.l.b16 %v651
        %v803 = vunpack.c.l.b16 %v652
        %v804 = vunpack.c.l.b16 %v653
        %v805 = vunpack.c.l.b16 %v654
        %v806 = vunpack.c.l.b16 %v655
        %v807 = vunpack.c.l.b16 %v656
        %v808 = vunpack.c.l.b16 %v657
        %v809 = vunpack.c.l.b16 %v658
        %v810 = vunpack.c.l.b16 %v659
        %v811 = vunpack.c.l.b16 %v660
        %v812 = vunpack.c.l.b16 %v661
        %v813 = vpack.c.b16 %v750, %v749
        %v814 = vpack.c.b16 %v752, %v751
        %v815 = vpack.c.b16 %v754, %v753
        %v816 = vpack.c.b16 %v756, %v755
        %v817 = vpack.c.b16 %v758, %v757
        %v818 = vpack.c.b16 %v760, %v759
        %v819 = vpack.c.b16 %v762, %v761
        %v820 = vpack.c.b16 %v764, %v763
        %v821 = vpack.c.b16 %v766, %v765
        %v822 = vpack.c.b16 %v768, %v767
        %v823 = vpack.c.b16 %v770, %v769
        %v824 = vpack.c.b16 %v772, %v771
        %v825 = vpack.c.b16 %v774, %v773
        %v826 = vpack.c.b16 %v776, %v775
        %v827 = vpack.c.b16 %v778, %v777
        %v828 = vpack.c.b16 %v780, %v779
        %v829 = vpack.c.b16 %v782, %v781
        %v830 = vpack.c.b16 %v784, %v783
        %v831 = vpack.c.b16 %v786, %v785
        %v832 = vpack.c.b16 %v788, %v787
        %v833 = vpack.c.b16 %v790, %v789
        %v834 = vpack.c.b16 %v792, %v791
        %v835 = vpack.c.b16 %v794, %v793
        %v836 = vpack.c.b16 %v796, %v795
        %v837 = vpack.c.b16 %v798, %v797
        %v838 = vpack.c.b16 %v800, %v799
        %v839 = vpack.c.b16 %v802, %v801
        %v840 = vpack.c.b16 %v804, %v803
        %v841 = vpack.c.b16 %v806, %v805
        %v842 = vpack.c.b16 %v808, %v807
        %v843 = vpack.c.b16 %v810, %v809
        %v844 = vpack.c.b16 %v812, %v811
        %v893 = vunpack.c.l.b16 %v662
        %v894 = vunpack.c.l.b16 %v663
        %v895 = vunpack.c.l.b16 %v664
        %v896 = vunpack.c.l.b16 %v665
        %v897 = vunpack.c.l.b16 %v666
        %v898 = vunpack.c.l.b16 %v667
        %v899 = vunpack.c.l.b16 %v668
        %v900 = vunpack.c.l.b16 %v669
        %v901 = vunpack.c.l.b16 %v670
        %v902 = vunpack.c.l.b16 %v671
        %v903 = vunpack.c.l.b16 %v672
        %v904 = vunpack.c.l.b16 %v673
        %v905 = vunpack.c.l.b16 %v674
        %v906 = vunpack.c.l.b16 %v675
        %v907 = vunpack.c.l.b16 %v676
        %v908 = vunpack.c.l.b16 %v677
        %v909 = vpack.c.b16 %v894, %v893
        %v910 = vpack.c.b16 %v896, %v895
        %v911 = vpack.c.b16 %v898, %v897
        %v912 = vpack.c.b16 %v900, %v899
        %v913 = vpack.c.b16 %v902, %v901
        %v914 = vpack.c.b16 %v904, %v903
        %v915 = vpack.c.b16 %v906, %v905
        %v916 = vpack.c.b16 %v908, %v907
        %925 = vmatprep.subr.bf16.mxu0 0
        %926 = vmatpush1.bf16.msra.mxu0 %v916
        %927 = vmatprep.subr.bf16.mxu0 0
        %928 = vmatpush1.bf16.msra.mxu0 %v915
        %929 = vmatprep.subr.bf16.mxu0 0
        %930 = vmatpush1.bf16.msra.mxu0 %v914
        %931 = vmatprep.subr.bf16.mxu0 0
        %932 = vmatpush1.bf16.msra.mxu0 %v913
        %933 = vmatprep.subr.bf16.mxu0 0
        %934 = vmatpush1.bf16.msra.mxu0 %v912
        %935 = vmatprep.subr.bf16.mxu0 0
        %936 = vmatpush1.bf16.msra.mxu0 %v911
        %937 = vmatprep.subr.bf16.mxu0 0
        %938 = vmatpush1.bf16.msra.mxu0 %v910
        %939 = vmatprep.subr.bf16.mxu0 0
        %940 = vmatpush1.bf16.msra.mxu0 %v909
        %941 = vmatprep.subr.bf16.mxu0 0
        %942 = vmatpush2.bf16.msra.mxu0 0
        %943 = vmatprep.subr.bf16.mxu0 0
        %944 = vmatpush2.bf16.msra.mxu0 0
        %945 = vmatprep.subr.bf16.mxu0 0
        %946 = vmatpush2.bf16.msra.mxu0 0
        %947 = vmatprep.subr.bf16.mxu0 0
        %948 = vmatpush2.bf16.msra.mxu0 0
        %949 = vmatprep.subr.bf16.mxu0 0
        %950 = vmatpush2.bf16.msra.mxu0 0
        %951 = vmatprep.subr.bf16.mxu0 0
        %952 = vmatpush2.bf16.msra.mxu0 0
        %953 = vmatprep.subr.bf16.mxu0 0
        %954 = vmatpush2.bf16.msra.mxu0 0
        %955 = vmatprep.subr.bf16.mxu0 0
        %956 = vmatpush2.bf16.msra.mxu0 0
        %957 = vmatprep.mubr.bf16.mxu0 0
        %958 = vmatmul.mubr.bf16.gmra.mxu0 %v813
        %v959 = vpop.f32.mrf.mxu0
        %v960 = vadd.f32 %v683, %v959
        %v961 = vpop.f32.mrf.mxu0
        %v962 = vpop.f32.mrf.mxu0
        %v963 = vadd.f32 %v683, %v962
        %v964 = vpop.f32.mrf.mxu0
        %965 = vmatprep.mubr.bf16.mxu0 0
        %966 = vmatmul.mubr.bf16.gmra.mxu0 %v814
        %v967 = vpop.f32.mrf.mxu0
        %v968 = vadd.f32 %v683, %v967
        %v969 = vpop.f32.mrf.mxu0
        %v970 = vpop.f32.mrf.mxu0
        %v971 = vadd.f32 %v683, %v970
        %v972 = vpop.f32.mrf.mxu0
        %973 = vmatprep.mubr.bf16.mxu0 0
        %974 = vmatmul.mubr.bf16.gmra.mxu0 %v815
        %v975 = vpop.f32.mrf.mxu0
        %v976 = vadd.f32 %v683, %v975
        %v977 = vpop.f32.mrf.mxu0
        %v978 = vpop.f32.mrf.mxu0
        %v979 = vadd.f32 %v683, %v978
        %v980 = vpop.f32.mrf.mxu0
        %981 = vmatprep.mubr.bf16.mxu0 0
        %982 = vmatmul.mubr.bf16.gmra.mxu0 %v816
        %v983 = vpop.f32.mrf.mxu0
        %v984 = vadd.f32 %v683, %v983
        %v985 = vpop.f32.mrf.mxu0
        %v986 = vpop.f32.mrf.mxu0
        %v987 = vadd.f32 %v683, %v986
        %v988 = vpop.f32.mrf.mxu0
        %989 = vmatprep.mubr.bf16.mxu0 0
        %990 = vmatmul.mubr.bf16.gmra.mxu0 %v817
        %v991 = vpop.f32.mrf.mxu0
        %v992 = vadd.f32 %v683, %v991
        %v993 = vpop.f32.mrf.mxu0
        %v994 = vpop.f32.mrf.mxu0
        %v995 = vadd.f32 %v683, %v994
        %v996 = vpop.f32.mrf.mxu0
        %997 = vmatprep.mubr.bf16.mxu0 0
        %998 = vmatmul.mubr.bf16.gmra.mxu0 %v818
        %v999 = vpop.f32.mrf.mxu0
        %v1000 = vadd.f32 %v683, %v999
        %v1001 = vpop.f32.mrf.mxu0
        %v1002 = vpop.f32.mrf.mxu0
        %v1003 = vadd.f32 %v683, %v1002
        %v1004 = vpop.f32.mrf.mxu0
        %1005 = vmatprep.mubr.bf16.mxu0 0
        %1006 = vmatmul.mubr.bf16.gmra.mxu0 %v819
        %v1007 = vpop.f32.mrf.mxu0
        %v1008 = vadd.f32 %v683, %v1007
        %v1009 = vpop.f32.mrf.mxu0
        %v1010 = vpop.f32.mrf.mxu0
        %v1011 = vadd.f32 %v683, %v1010
        %v1012 = vpop.f32.mrf.mxu0
        %1013 = vmatprep.mubr.bf16.mxu0 0
        %1014 = vmatmul.mubr.bf16.gmra.mxu0 %v820
        %v1015 = vpop.f32.mrf.mxu0
        %v1016 = vadd.f32 %v683, %v1015
        %v1017 = vpop.f32.mrf.mxu0
        %v1018 = vpop.f32.mrf.mxu0
        %v1019 = vadd.f32 %v683, %v1018
        %v1020 = vpop.f32.mrf.mxu0
        %1021 = vmatprep.mubr.bf16.mxu0 0
        %1022 = vmatmul.mubr.bf16.gmra.mxu0 %v821
        %v1023 = vpop.f32.mrf.mxu0
        %v1024 = vadd.f32 %v683, %v1023
        %v1025 = vpop.f32.mrf.mxu0
        %v1026 = vpop.f32.mrf.mxu0
        %v1027 = vadd.f32 %v683, %v1026
        %v1028 = vpop.f32.mrf.mxu0
        %1029 = vmatprep.mubr.bf16.mxu0 0
        %1030 = vmatmul.mubr.bf16.gmra.mxu0 %v822
        %v1031 = vpop.f32.mrf.mxu0
        %v1032 = vadd.f32 %v683, %v1031
        %v1033 = vpop.f32.mrf.mxu0
        %v1034 = vpop.f32.mrf.mxu0
        %v1035 = vadd.f32 %v683, %v1034
        %v1036 = vpop.f32.mrf.mxu0
        %1037 = vmatprep.mubr.bf16.mxu0 0
        %1038 = vmatmul.mubr.bf16.gmra.mxu0 %v823
        %v1039 = vpop.f32.mrf.mxu0
        %v1040 = vadd.f32 %v683, %v1039
        %v1041 = vpop.f32.mrf.mxu0
        %v1042 = vpop.f32.mrf.mxu0
        %v1043 = vadd.f32 %v683, %v1042
        %v1044 = vpop.f32.mrf.mxu0
        %1045 = vmatprep.mubr.bf16.mxu0 0
        %1046 = vmatmul.mubr.bf16.gmra.mxu0 %v824
        %v1047 = vpop.f32.mrf.mxu0
        %v1048 = vadd.f32 %v683, %v1047
        %v1049 = vpop.f32.mrf.mxu0
        %v1050 = vpop.f32.mrf.mxu0
        %v1051 = vadd.f32 %v683, %v1050
        %v1052 = vpop.f32.mrf.mxu0
        %1053 = vmatprep.mubr.bf16.mxu0 0
        %1054 = vmatmul.mubr.bf16.gmra.mxu0 %v825
        %v1055 = vpop.f32.mrf.mxu0
        %v1056 = vadd.f32 %v683, %v1055
        %v1057 = vpop.f32.mrf.mxu0
        %v1058 = vpop.f32.mrf.mxu0
        %v1059 = vadd.f32 %v683, %v1058
        %v1060 = vpop.f32.mrf.mxu0
        %1061 = vmatprep.mubr.bf16.mxu0 0
        %1062 = vmatmul.mubr.bf16.gmra.mxu0 %v826
        %v1063 = vpop.f32.mrf.mxu0
        %v1064 = vadd.f32 %v683, %v1063
        %v1065 = vpop.f32.mrf.mxu0
        %v1066 = vpop.f32.mrf.mxu0
        %v1067 = vadd.f32 %v683, %v1066
        %v1068 = vpop.f32.mrf.mxu0
        %1069 = vmatprep.mubr.bf16.mxu0 0
        %1070 = vmatmul.mubr.bf16.gmra.mxu0 %v827
        %v1071 = vpop.f32.mrf.mxu0
        %v1072 = vadd.f32 %v683, %v1071
        %v1073 = vpop.f32.mrf.mxu0
        %v1074 = vpop.f32.mrf.mxu0
        %v1075 = vadd.f32 %v683, %v1074
        %v1076 = vpop.f32.mrf.mxu0
        %1077 = vmatprep.mubr.bf16.mxu0 0
        %1078 = vmatmul.mubr.bf16.gmra.mxu0 %v828
        %v1079 = vpop.f32.mrf.mxu0
        %v1080 = vadd.f32 %v683, %v1079
        %v1081 = vpop.f32.mrf.mxu0
        %v1082 = vpop.f32.mrf.mxu0
        %v1083 = vadd.f32 %v683, %v1082
        %v1084 = vpop.f32.mrf.mxu0
        %1085 = vmatprep.mubr.bf16.mxu0 0
        %1086 = vmatmul.mubr.bf16.gmra.mxu0 %v829
        %v1087 = vpop.f32.mrf.mxu0
        %v1088 = vadd.f32 %v683, %v1087
        %v1089 = vpop.f32.mrf.mxu0
        %v1090 = vpop.f32.mrf.mxu0
        %v1091 = vadd.f32 %v683, %v1090
        %v1092 = vpop.f32.mrf.mxu0
        %1093 = vmatprep.mubr.bf16.mxu0 0
        %1094 = vmatmul.mubr.bf16.gmra.mxu0 %v830
        %v1095 = vpop.f32.mrf.mxu0
        %v1096 = vadd.f32 %v683, %v1095
        %v1097 = vpop.f32.mrf.mxu0
        %v1098 = vpop.f32.mrf.mxu0
        %v1099 = vadd.f32 %v683, %v1098
        %v1100 = vpop.f32.mrf.mxu0
        %1101 = vmatprep.mubr.bf16.mxu0 0
        %1102 = vmatmul.mubr.bf16.gmra.mxu0 %v831
        %v1103 = vpop.f32.mrf.mxu0
        %v1104 = vadd.f32 %v683, %v1103
        %v1105 = vpop.f32.mrf.mxu0
        %v1106 = vpop.f32.mrf.mxu0
        %v1107 = vadd.f32 %v683, %v1106
        %v1108 = vpop.f32.mrf.mxu0
        %1109 = vmatprep.mubr.bf16.mxu0 0
        %1110 = vmatmul.mubr.bf16.gmra.mxu0 %v832
        %v1111 = vpop.f32.mrf.mxu0
        %v1112 = vadd.f32 %v683, %v1111
        %v1113 = vpop.f32.mrf.mxu0
        %v1114 = vpop.f32.mrf.mxu0
        %v1115 = vadd.f32 %v683, %v1114
        %v1116 = vpop.f32.mrf.mxu0
        %1117 = vmatprep.mubr.bf16.mxu0 0
        %1118 = vmatmul.mubr.bf16.gmra.mxu0 %v833
        %v1119 = vpop.f32.mrf.mxu0
        %v1120 = vadd.f32 %v683, %v1119
        %v1121 = vpop.f32.mrf.mxu0
        %v1122 = vpop.f32.mrf.mxu0
        %v1123 = vadd.f32 %v683, %v1122
        %v1124 = vpop.f32.mrf.mxu0
        %1125 = vmatprep.mubr.bf16.mxu0 0
        %1126 = vmatmul.mubr.bf16.gmra.mxu0 %v834
        %v1127 = vpop.f32.mrf.mxu0
        %v1128 = vadd.f32 %v683, %v1127
        %v1129 = vpop.f32.mrf.mxu0
        %v1130 = vpop.f32.mrf.mxu0
        %v1131 = vadd.f32 %v683, %v1130
        %v1132 = vpop.f32.mrf.mxu0
        %1133 = vmatprep.mubr.bf16.mxu0 0
        %1134 = vmatmul.mubr.bf16.gmra.mxu0 %v835
        %v1135 = vpop.f32.mrf.mxu0
        %v1136 = vadd.f32 %v683, %v1135
        %v1137 = vpop.f32.mrf.mxu0
        %v1138 = vpop.f32.mrf.mxu0
        %v1139 = vadd.f32 %v683, %v1138
        %v1140 = vpop.f32.mrf.mxu0
        %1141 = vmatprep.mubr.bf16.mxu0 0
        %1142 = vmatmul.mubr.bf16.gmra.mxu0 %v836
        %v1143 = vpop.f32.mrf.mxu0
        %v1144 = vadd.f32 %v683, %v1143
        %v1145 = vpop.f32.mrf.mxu0
        %v1146 = vpop.f32.mrf.mxu0
        %v1147 = vadd.f32 %v683, %v1146
        %v1148 = vpop.f32.mrf.mxu0
        %1149 = vmatprep.mubr.bf16.mxu0 0
        %1150 = vmatmul.mubr.bf16.gmra.mxu0 %v837
        %v1151 = vpop.f32.mrf.mxu0
        %v1152 = vadd.f32 %v683, %v1151
        %v1153 = vpop.f32.mrf.mxu0
        %v1154 = vpop.f32.mrf.mxu0
        %v1155 = vadd.f32 %v683, %v1154
        %v1156 = vpop.f32.mrf.mxu0
        %1157 = vmatprep.mubr.bf16.mxu0 0
        %1158 = vmatmul.mubr.bf16.gmra.mxu0 %v838
        %v1159 = vpop.f32.mrf.mxu0
        %v1160 = vadd.f32 %v683, %v1159
        %v1161 = vpop.f32.mrf.mxu0
        %v1162 = vpop.f32.mrf.mxu0
        %v1163 = vadd.f32 %v683, %v1162
        %v1164 = vpop.f32.mrf.mxu0
        %1165 = vmatprep.mubr.bf16.mxu0 0
        %1166 = vmatmul.mubr.bf16.gmra.mxu0 %v839
        %v1167 = vpop.f32.mrf.mxu0
        %v1168 = vadd.f32 %v683, %v1167
        %v1169 = vpop.f32.mrf.mxu0
        %v1170 = vpop.f32.mrf.mxu0
        %v1171 = vadd.f32 %v683, %v1170
        %v1172 = vpop.f32.mrf.mxu0
        %1173 = vmatprep.mubr.bf16.mxu0 0
        %1174 = vmatmul.mubr.bf16.gmra.mxu0 %v840
        %v1175 = vpop.f32.mrf.mxu0
        %v1176 = vadd.f32 %v683, %v1175
        %v1177 = vpop.f32.mrf.mxu0
        %v1178 = vpop.f32.mrf.mxu0
        %v1179 = vadd.f32 %v683, %v1178
        %v1180 = vpop.f32.mrf.mxu0
        %1181 = vmatprep.mubr.bf16.mxu0 0
        %1182 = vmatmul.mubr.bf16.gmra.mxu0 %v841
        %v1183 = vpop.f32.mrf.mxu0
        %v1184 = vadd.f32 %v683, %v1183
        %v1185 = vpop.f32.mrf.mxu0
        %v1186 = vpop.f32.mrf.mxu0
        %v1187 = vadd.f32 %v683, %v1186
        %v1188 = vpop.f32.mrf.mxu0
        %1189 = vmatprep.mubr.bf16.mxu0 0
        %1190 = vmatmul.mubr.bf16.gmra.mxu0 %v842
        %v1191 = vpop.f32.mrf.mxu0
        %v1192 = vadd.f32 %v683, %v1191
        %v1193 = vpop.f32.mrf.mxu0
        %v1194 = vpop.f32.mrf.mxu0
        %v1195 = vadd.f32 %v683, %v1194
        %v1196 = vpop.f32.mrf.mxu0
        %1197 = vmatprep.mubr.bf16.mxu0 0
        %1198 = vmatmul.mubr.bf16.gmra.mxu0 %v843
        %v1199 = vpop.f32.mrf.mxu0
        %v1200 = vadd.f32 %v683, %v1199
        %v1201 = vpop.f32.mrf.mxu0
        %v1202 = vpop.f32.mrf.mxu0
        %v1203 = vadd.f32 %v683, %v1202
        %v1204 = vpop.f32.mrf.mxu0
        %1205 = vmatprep.mubr.bf16.mxu0 0
        %1206 = vmatmul.mubr.bf16.gmra.mxu0 %v844
        %v1207 = vpop.f32.mrf.mxu0
        %v1208 = vadd.f32 %v683, %v1207
        %v1209 = vpop.f32.mrf.mxu0
        %v1210 = vpop.f32.mrf.mxu0
        %v1211 = vadd.f32 %v683, %v1210
        %v1212 = vpop.f32.mrf.mxu0
        %1213 = vdwg.mxu0
        %v1214 = vtanh.pop %v960
        %v1215 = vtanh.pop %v963
        %v1216 = vtanh.pop %v968
        %v1217 = vtanh.pop %v971
        %v1218 = vtanh.pop %v976
        %v1219 = vtanh.pop %v979
        %v1220 = vtanh.pop %v984
        %v1221 = vtanh.pop %v987
        %v1222 = vtanh.pop %v992
        %v1223 = vtanh.pop %v995
        %v1224 = vtanh.pop %v1000
        %v1225 = vtanh.pop %v1003
        %v1226 = vtanh.pop %v1008
        %v1227 = vtanh.pop %v1011
        %v1228 = vtanh.pop %v1016
        %v1229 = vtanh.pop %v1019
        %v1230 = vtanh.pop %v1024
        %v1231 = vtanh.pop %v1027
        %v1232 = vtanh.pop %v1032
        %v1233 = vtanh.pop %v1035
        %v1234 = vtanh.pop %v1040
        %v1235 = vtanh.pop %v1043
        %v1236 = vtanh.pop %v1048
        %v1237 = vtanh.pop %v1051
        %v1238 = vtanh.pop %v1056
        %v1239 = vtanh.pop %v1059
        %v1240 = vtanh.pop %v1064
        %v1241 = vtanh.pop %v1067
        %v1242 = vtanh.pop %v1072
        %v1243 = vtanh.pop %v1075
        %v1244 = vtanh.pop %v1080
        %v1245 = vtanh.pop %v1083
        %v1246 = vtanh.pop %v1088
        %v1247 = vtanh.pop %v1091
        %v1248 = vtanh.pop %v1096
        %v1249 = vtanh.pop %v1099
        %v1250 = vtanh.pop %v1104
        %v1251 = vtanh.pop %v1107
        %v1252 = vtanh.pop %v1112
        %v1253 = vtanh.pop %v1115
        %v1254 = vtanh.pop %v1120
        %v1255 = vtanh.pop %v1123
        %v1256 = vtanh.pop %v1128
        %v1257 = vtanh.pop %v1131
        %v1258 = vtanh.pop %v1136
        %v1259 = vtanh.pop %v1139
        %v1260 = vtanh.pop %v1144
        %v1261 = vtanh.pop %v1147
        %v1262 = vtanh.pop %v1152
        %v1263 = vtanh.pop %v1155
        %v1264 = vtanh.pop %v1160
        %v1265 = vtanh.pop %v1163
        %v1266 = vtanh.pop %v1168
        %v1267 = vtanh.pop %v1171
        %v1268 = vtanh.pop %v1176
        %v1269 = vtanh.pop %v1179
        %v1270 = vtanh.pop %v1184
        %v1271 = vtanh.pop %v1187
        %v1272 = vtanh.pop %v1192
        %v1273 = vtanh.pop %v1195
        %v1274 = vtanh.pop %v1200
        %v1275 = vtanh.pop %v1203
        %v1276 = vtanh.pop %v1208
        %v1277 = vtanh.pop %v1211
        %v1278 = vld [vmem:[#allocation2] sm:$0xff]
        %v1279 = vadd.f32 %v1214, %v1215
        %v1280 = vadd.f32 %v1279, %v1216
        %v1281 = vadd.f32 %v1280, %v1217
        %v1282 = vadd.f32 %v1281, %v1218
        %v1283 = vadd.f32 %v1282, %v1219
        %v1284 = vadd.f32 %v1283, %v1220
        %v1285 = vadd.f32 %v1284, %v1221
        %v1286 = vrot.slane %v1285, 4
        %v1287 = vadd.f32 %v1285, %v1286
        %v1288 = vrot.slane %v1287, 2
        %v1289 = vadd.f32 %v1287, %v1288
        %v1290 = vrot.slane %v1289, 1
        %v1291 = vadd.f32 %v1289, %v1290
        %v1292 = vadd.f32 %v1222, %v1223
        %v1293 = vadd.f32 %v1292, %v1224
        %v1294 = vadd.f32 %v1293, %v1225
        %v1295 = vadd.f32 %v1294, %v1226
        %v1296 = vadd.f32 %v1295, %v1227
        %v1297 = vadd.f32 %v1296, %v1228
        %v1298 = vadd.f32 %v1297, %v1229
        %v1299 = vrot.slane %v1298, 4
        %v1300 = vadd.f32 %v1298, %v1299
        %v1301 = vrot.slane %v1300, 2
        %v1302 = vadd.f32 %v1300, %v1301
        %v1303 = vrot.slane %v1302, 1
        %v1304 = vadd.f32 %v1302, %v1303
        %v1305 = vadd.f32 %v1230, %v1231
        %v1306 = vadd.f32 %v1305, %v1232
        %v1307 = vadd.f32 %v1306, %v1233
        %v1308 = vadd.f32 %v1307, %v1234
        %v1309 = vadd.f32 %v1308, %v1235
        %v1310 = vadd.f32 %v1309, %v1236
        %v1311 = vadd.f32 %v1310, %v1237
        %v1312 = vrot.slane %v1311, 4
        %v1313 = vadd.f32 %v1311, %v1312
        %v1314 = vrot.slane %v1313, 2
        %v1315 = vadd.f32 %v1313, %v1314
        %v1316 = vrot.slane %v1315, 1
        %v1317 = vadd.f32 %v1315, %v1316
        %v1318 = vadd.f32 %v1238, %v1239
        %v1319 = vadd.f32 %v1318, %v1240
        %v1320 = vadd.f32 %v1319, %v1241
        %v1321 = vadd.f32 %v1320, %v1242
        %v1322 = vadd.f32 %v1321, %v1243
        %v1323 = vadd.f32 %v1322, %v1244
        %v1324 = vadd.f32 %v1323, %v1245
        %v1325 = vrot.slane %v1324, 4
        %v1326 = vadd.f32 %v1324, %v1325
        %v1327 = vrot.slane %v1326, 2
        %v1328 = vadd.f32 %v1326, %v1327
        %v1329 = vrot.slane %v1328, 1
        %v1330 = vadd.f32 %v1328, %v1329
        %v1331 = vadd.f32 %v1246, %v1247
        %v1332 = vadd.f32 %v1331, %v1248
        %v1333 = vadd.f32 %v1332, %v1249
        %v1334 = vadd.f32 %v1333, %v1250
        %v1335 = vadd.f32 %v1334, %v1251
        %v1336 = vadd.f32 %v1335, %v1252
        %v1337 = vadd.f32 %v1336, %v1253
        %v1338 = vrot.slane %v1337, 4
        %v1339 = vadd.f32 %v1337, %v1338
        %v1340 = vrot.slane %v1339, 2
        %v1341 = vadd.f32 %v1339, %v1340
        %v1342 = vrot.slane %v1341, 1
        %v1343 = vadd.f32 %v1341, %v1342
        %v1344 = vadd.f32 %v1254, %v1255
        %v1345 = vadd.f32 %v1344, %v1256
        %v1346 = vadd.f32 %v1345, %v1257
        %v1347 = vadd.f32 %v1346, %v1258
        %v1348 = vadd.f32 %v1347, %v1259
        %v1349 = vadd.f32 %v1348, %v1260
        %v1350 = vadd.f32 %v1349, %v1261
        %v1351 = vrot.slane %v1350, 4
        %v1352 = vadd.f32 %v1350, %v1351
        %v1353 = vrot.slane %v1352, 2
        %v1354 = vadd.f32 %v1352, %v1353
        %v1355 = vrot.slane %v1354, 1
        %v1356 = vadd.f32 %v1354, %v1355
        %v1357 = vadd.f32 %v1262, %v1263
        %v1358 = vadd.f32 %v1357, %v1264
        %v1359 = vadd.f32 %v1358, %v1265
        %v1360 = vadd.f32 %v1359, %v1266
        %v1361 = vadd.f32 %v1360, %v1267
        %v1362 = vadd.f32 %v1361, %v1268
        %v1363 = vadd.f32 %v1362, %v1269
        %v1364 = vrot.slane %v1363, 4
        %v1365 = vadd.f32 %v1363, %v1364
        %v1366 = vrot.slane %v1365, 2
        %v1367 = vadd.f32 %v1365, %v1366
        %v1368 = vrot.slane %v1367, 1
        %v1369 = vadd.f32 %v1367, %v1368
        %v1370 = vadd.f32 %v1270, %v1271
        %v1371 = vadd.f32 %v1370, %v1272
        %v1372 = vadd.f32 %v1371, %v1273
        %v1373 = vadd.f32 %v1372, %v1274
        %v1374 = vadd.f32 %v1373, %v1275
        %v1375 = vadd.f32 %v1374, %v1276
        %v1376 = vadd.f32 %v1375, %v1277
        %v1377 = vrot.slane %v1376, 4
        %v1378 = vadd.f32 %v1376, %v1377
        %v1379 = vrot.slane %v1378, 2
        %v1380 = vadd.f32 %v1378, %v1379
        %v1381 = vrot.slane %v1380, 1
        %v1382 = vadd.f32 %v1380, %v1381
        %vm1391 = vcmask 1041409
        %v1392 = vsel %vm1391, %v1304, %v1291
        %vm1393 = vcmask 1042434
        %v1394 = vsel %vm1393, %v1317, %v1392
        %vm1395 = vcmask 1043459
        %v1396 = vsel %vm1395, %v1330, %v1394
        %vm1397 = vcmask 1044484
        %v1398 = vsel %vm1397, %v1343, %v1396
        %vm1399 = vcmask 1045509
        %v1400 = vsel %vm1399, %v1356, %v1398
        %vm1401 = vcmask 1046534
        %v1402 = vsel %vm1401, %v1369, %v1400
        %vm1403 = vcmask 1047559
        %v1404 = vsel %vm1403, %v1382, %v1402
        %v1406 = vadd.f32 %v1278, %v1404
        %1407 = vst [vmem:[#allocation2] sm:$0xff] %v1406
        %p1408 = scmp.eq.s32.totalorder %s23, 3
        // Predicated region
        $region94: #{gliclass_biencoder_forward.3} parent=84 // pred_check
          %p1409 = pneg %p1408
        $region95: #{gliclass_biencoder_forward.3} parent=84 // pred_check_branch
          %1411 = sbr.rel (%p1409) target = $region97
        $region96: #{gliclass_biencoder_forward.3} parent=84 // pred_region
          %v1412 = vld [vmem:[#allocation2] sm:$0xff]
          %v1413 = vmul.f32 %v1412, 0.00390625
          %v1414 = vpack.c.bf16 %v1413, %v1413
          %v1415 = vld [vmem:[%s3] sm:$0xff]
          %v1416 = vld [vmem:[%s3 + $0x8] sm:$0xff]
          %v1417 = vld [vmem:[%s3 + $0x10] sm:$0xff]
          %v1418 = vld [vmem:[%s3 + $0x18] sm:$0xff]
          %v1419 = vld [vmem:[%s3 + $0x20] sm:$0xff]
          %v1420 = vld [vmem:[%s3 + $0x28] sm:$0xff]
          %v1421 = vld [vmem:[%s3 + $0x30] sm:$0xff]
          %v1422 = vld [vmem:[%s3 + $0x38] sm:$0xff]
          %v1423 = vld [vmem:[%s3 + $0x40] sm:$0xff]
          %v1424 = vld [vmem:[%s3 + $0x48] sm:$0xff]
          %v1425 = vld [vmem:[%s3 + $0x50] sm:$0xff]
          %v1426 = vld [vmem:[%s3 + $0x58] sm:$0xff]
          %v1427 = vld [vmem:[%s3 + $0x60] sm:$0xff]
          %v1428 = vld [vmem:[%s3 + $0x68] sm:$0xff]
          %v1429 = vld [vmem:[%s3 + $0x70] sm:$0xff]
          %v1430 = vld [vmem:[%s3 + $0x78] sm:$0xff]
          %v1431 = vld [vmem:[%s4] sm:$0x3]
          %v1433 = vlaneseq
          %v1434 = vshrl.u32 %v1433, 7
          %v1435 = vsub.s32 0, %v1434
          %v1436 = vrot.slane %v1431, %v1435
          %v1437 = vlaneseq
          %v1438 = vshrl.u32 %v1437, 7
          %v1439 = vsub.s32 1, %v1438
          %v1440 = vrot.slane %v1431, %v1439
          %v1459 = vunpack.c.l.b16 %v1415
          %v1460 = vunpack.c.h.b16 %v1415
          %v1461 = vunpack.c.l.b16 %v1416
          %v1462 = vunpack.c.h.b16 %v1416
          %v1463 = vunpack.c.l.b16 %v1417
          %v1464 = vunpack.c.h.b16 %v1417
          %v1465 = vunpack.c.l.b16 %v1418
          %v1466 = vunpack.c.h.b16 %v1418
          %v1467 = vunpack.c.l.b16 %v1419
          %v1468 = vunpack.c.h.b16 %v1419
          %v1469 = vunpack.c.l.b16 %v1420
          %v1470 = vunpack.c.h.b16 %v1420
          %v1471 = vunpack.c.l.b16 %v1421
          %v1472 = vunpack.c.h.b16 %v1421
          %v1473 = vunpack.c.l.b16 %v1422
          %v1474 = vunpack.c.h.b16 %v1422
          %v1475 = vunpack.c.l.b16 %v1423
          %v1476 = vunpack.c.h.b16 %v1423
          %v1477 = vunpack.c.l.b16 %v1424
          %v1478 = vunpack.c.h.b16 %v1424
          %v1479 = vunpack.c.l.b16 %v1425
          %v1480 = vunpack.c.h.b16 %v1425
          %v1481 = vunpack.c.l.b16 %v1426
          %v1482 = vunpack.c.h.b16 %v1426
          %v1483 = vunpack.c.l.b16 %v1427
          %v1484 = vunpack.c.h.b16 %v1427
          %v1485 = vunpack.c.l.b16 %v1428
          %v1486 = vunpack.c.h.b16 %v1428
          %v1487 = vunpack.c.l.b16 %v1429
          %v1488 = vunpack.c.h.b16 %v1429
          %v1489 = vunpack.c.l.b16 %v1430
          %v1490 = vunpack.c.h.b16 %v1430
          %v1491 = vpack.c.b16 %v1461, %v1459
          %v1492 = vpack.c.b16 %v1462, %v1460
          %v1493 = vpack.c.b16 %v1465, %v1463
          %v1494 = vpack.c.b16 %v1466, %v1464
          %v1495 = vpack.c.b16 %v1469, %v1467
          %v1496 = vpack.c.b16 %v1470, %v1468
          %v1497 = vpack.c.b16 %v1473, %v1471
          %v1498 = vpack.c.b16 %v1474, %v1472
          %v1499 = vpack.c.b16 %v1477, %v1475
          %v1500 = vpack.c.b16 %v1478, %v1476
          %v1501 = vpack.c.b16 %v1481, %v1479
          %v1502 = vpack.c.b16 %v1482, %v1480
          %v1503 = vpack.c.b16 %v1485, %v1483
          %v1504 = vpack.c.b16 %v1486, %v1484
          %v1505 = vpack.c.b16 %v1489, %v1487
          %v1506 = vpack.c.b16 %v1490, %v1488
          %1523 = vmatprep.subr.bf16.mxu0 %v1506
          %1524 = vmatpush1.bf16.msra.mxu0 %v1505
          %1525 = vmatprep.subr.bf16.mxu0 %v1504
          %1526 = vmatpush1.bf16.msra.mxu0 %v1503
          %1527 = vmatprep.subr.bf16.mxu0 %v1502
          %1528 = vmatpush1.bf16.msra.mxu0 %v1501
          %1529 = vmatprep.subr.bf16.mxu0 %v1500
          %1530 = vmatpush1.bf16.msra.mxu0 %v1499
          %1531 = vmatprep.subr.bf16.mxu0 %v1498
          %1532 = vmatpush1.bf16.msra.mxu0 %v1497
          %1533 = vmatprep.subr.bf16.mxu0 %v1496
          %1534 = vmatpush1.bf16.msra.mxu0 %v1495
          %1535 = vmatprep.subr.bf16.mxu0 %v1494
          %1536 = vmatpush1.bf16.msra.mxu0 %v1493
          %1537 = vmatprep.subr.bf16.mxu0 %v1492
          %1538 = vmatpush1.bf16.msra.mxu0 %v1491
          %1539 = vmatprep.subr.bf16.mxu0 0
          %1540 = vmatpush2.bf16.msra.mxu0 0
          %1541 = vmatprep.subr.bf16.mxu0 0
          %1542 = vmatpush2.bf16.msra.mxu0 0
          %1543 = vmatprep.subr.bf16.mxu0 0
          %1544 = vmatpush2.bf16.msra.mxu0 0
          %1545 = vmatprep.subr.bf16.mxu0 0
          %1546 = vmatpush2.bf16.msra.mxu0 0
          %1547 = vmatprep.subr.bf16.mxu0 0
          %1548 = vmatpush2.bf16.msra.mxu0 0
          %1549 = vmatprep.subr.bf16.mxu0 0
          %1550 = vmatpush2.bf16.msra.mxu0 0
          %1551 = vmatprep.subr.bf16.mxu0 0
          %1552 = vmatpush2.bf16.msra.mxu0 0
          %1553 = vmatprep.subr.bf16.mxu0 0
          %1554 = vmatpush2.bf16.msra.mxu0 0
          %1555 = vmatprep.mubr.bf16.mxu0 0
          %1556 = vmatmul.mubr.bf16.gmra.mxu0 %v1414
          %v1557 = vpop.f32.mrf.mxu0
          %v1558 = vadd.f32 %v1436, %v1557
          %v1559 = vpop.f32.mrf.mxu0
          %v1560 = vadd.f32 %v1440, %v1559
          %v1561 = vpop.f32.mrf.mxu0
          %v1562 = vpop.f32.mrf.mxu0
          %1563 = vdwg.mxu0
          %v1564 = vmax.f32 %v1558, 0.0
          %v1565 = vmax.f32 %v1560, 0.0
          %v1566 = vpack.c.bf16 %v1564, %v1564
          %v1567 = vpack.c.bf16 %v1565, %v1565
          %v1568 = vld [vmem:[%s5] sm:$0xf]
          %v1569 = vld [vmem:[%s5 + $0x4] sm:$0xf]
          %v1570 = vld [vmem:[%s5 + $0x8] sm:$0xf]
          %v1571 = vld [vmem:[%s5 + $0xc] sm:$0xf]
          %v1572 = vld [vmem:[%s5 + $0x10] sm:$0xf]
          %v1573 = vld [vmem:[%s5 + $0x14] sm:$0xf]
          %v1574 = vld [vmem:[%s5 + $0x18] sm:$0xf]
          %v1575 = vld [vmem:[%s5 + $0x1c] sm:$0xf]
          %v1576 = vld [vmem:[%s5 + $0x20] sm:$0xf]
          %v1577 = vld [vmem:[%s5 + $0x24] sm:$0xf]
          %v1578 = vld [vmem:[%s5 + $0x28] sm:$0xf]
          %v1579 = vld [vmem:[%s5 + $0x2c] sm:$0xf]
          %v1580 = vld [vmem:[%s5 + $0x30] sm:$0xf]
          %v1581 = vld [vmem:[%s5 + $0x34] sm:$0xf]
          %v1582 = vld [vmem:[%s5 + $0x38] sm:$0xf]
          %v1583 = vld [vmem:[%s5 + $0x3c] sm:$0xf]
          %v1584 = vld [vmem:[%s5 + $0x40] sm:$0xf]
          %v1585 = vld [vmem:[%s5 + $0x44] sm:$0xf]
          %v1586 = vld [vmem:[%s5 + $0x48] sm:$0xf]
          %v1587 = vld [vmem:[%s5 + $0x4c] sm:$0xf]
          %v1588 = vld [vmem:[%s5 + $0x50] sm:$0xf]
          %v1589 = vld [vmem:[%s5 + $0x54] sm:$0xf]
          %v1590 = vld [vmem:[%s5 + $0x58] sm:$0xf]
          %v1591 = vld [vmem:[%s5 + $0x5c] sm:$0xf]
          %v1592 = vld [vmem:[%s5 + $0x60] sm:$0xf]
          %v1593 = vld [vmem:[%s5 + $0x64] sm:$0xf]
          %v1594 = vld [vmem:[%s5 + $0x68] sm:$0xf]
          %v1595 = vld [vmem:[%s5 + $0x6c] sm:$0xf]
          %v1596 = vld [vmem:[%s5 + $0x70] sm:$0xf]
          %v1597 = vld [vmem:[%s5 + $0x74] sm:$0xf]
          %v1598 = vld [vmem:[%s5 + $0x78] sm:$0xf]
          %v1599 = vld [vmem:[%s5 + $0x7c] sm:$0xf]
          %v1600 = vld [vmem:[%s6] sm:$0x1]
          %v1602 = vlaneseq
          %v1603 = vshrl.u32 %v1602, 7
          %v1604 = vsub.s32 0, %v1603
          %v1605 = vrot.slane %v1600, %v1604
          %v1639 = vunpack.c.l.b16 %v1568
          %v1640 = vunpack.c.l.b16 %v1569
          %v1641 = vunpack.c.l.b16 %v1570
          %v1642 = vunpack.c.l.b16 %v1571
          %v1643 = vunpack.c.l.b16 %v1572
          %v1644 = vunpack.c.l.b16 %v1573
          %v1645 = vunpack.c.l.b16 %v1574
          %v1646 = vunpack.c.l.b16 %v1575
          %v1647 = vunpack.c.l.b16 %v1576
          %v1648 = vunpack.c.l.b16 %v1577
          %v1649 = vunpack.c.l.b16 %v1578
          %v1650 = vunpack.c.l.b16 %v1579
          %v1651 = vunpack.c.l.b16 %v1580
          %v1652 = vunpack.c.l.b16 %v1581
          %v1653 = vunpack.c.l.b16 %v1582
          %v1654 = vunpack.c.l.b16 %v1583
          %v1655 = vunpack.c.l.b16 %v1584
          %v1656 = vunpack.c.l.b16 %v1585
          %v1657 = vunpack.c.l.b16 %v1586
          %v1658 = vunpack.c.l.b16 %v1587
          %v1659 = vunpack.c.l.b16 %v1588
          %v1660 = vunpack.c.l.b16 %v1589
          %v1661 = vunpack.c.l.b16 %v1590
          %v1662 = vunpack.c.l.b16 %v1591
          %v1663 = vunpack.c.l.b16 %v1592
          %v1664 = vunpack.c.l.b16 %v1593
          %v1665 = vunpack.c.l.b16 %v1594
          %v1666 = vunpack.c.l.b16 %v1595
          %v1667 = vunpack.c.l.b16 %v1596
          %v1668 = vunpack.c.l.b16 %v1597
          %v1669 = vunpack.c.l.b16 %v1598
          %v1670 = vunpack.c.l.b16 %v1599
          %v1671 = vpack.c.b16 %v1640, %v1639
          %v1672 = vpack.c.b16 %v1642, %v1641
          %v1673 = vpack.c.b16 %v1644, %v1643
          %v1674 = vpack.c.b16 %v1646, %v1645
          %v1675 = vpack.c.b16 %v1648, %v1647
          %v1676 = vpack.c.b16 %v1650, %v1649
          %v1677 = vpack.c.b16 %v1652, %v1651
          %v1678 = vpack.c.b16 %v1654, %v1653
          %v1679 = vpack.c.b16 %v1656, %v1655
          %v1680 = vpack.c.b16 %v1658, %v1657
          %v1681 = vpack.c.b16 %v1660, %v1659
          %v1682 = vpack.c.b16 %v1662, %v1661
          %v1683 = vpack.c.b16 %v1664, %v1663
          %v1684 = vpack.c.b16 %v1666, %v1665
          %v1685 = vpack.c.b16 %v1668, %v1667
          %v1686 = vpack.c.b16 %v1670, %v1669
          %1703 = vmatprep.subr.bf16.mxu0 0
          %1704 = vmatpush1.bf16.msra.mxu0 %v1678
          %1705 = vmatprep.subr.bf16.mxu0 0
          %1706 = vmatpush1.bf16.msra.mxu0 %v1677
          %1707 = vmatprep.subr.bf16.mxu0 0
          %1708 = vmatpush1.bf16.msra.mxu0 %v1676
          %1709 = vmatprep.subr.bf16.mxu0 0
          %1710 = vmatpush1.bf16.msra.mxu0 %v1675
          %1711 = vmatprep.subr.bf16.mxu0 0
          %1712 = vmatpush1.bf16.msra.mxu0 %v1674
          %1713 = vmatprep.subr.bf16.mxu0 0
          %1714 = vmatpush1.bf16.msra.mxu0 %v1673
          %1715 = vmatprep.subr.bf16.mxu0 0
          %1716 = vmatpush1.bf16.msra.mxu0 %v1672
          %1717 = vmatprep.subr.bf16.mxu0 0
          %1718 = vmatpush1.bf16.msra.mxu0 %v1671
          %1719 = vmatprep.subr.bf16.mxu0 0
          %1720 = vmatpush2.bf16.msra.mxu0 %v1686
          %1721 = vmatprep.subr.bf16.mxu0 0
          %1722 = vmatpush2.bf16.msra.mxu0 %v1685
          %1723 = vmatprep.subr.bf16.mxu0 0
          %1724 = vmatpush2.bf16.msra.mxu0 %v1684
          %1725 = vmatprep.subr.bf16.mxu0 0
          %1726 = vmatpush2.bf16.msra.mxu0 %v1683
          %1727 = vmatprep.subr.bf16.mxu0 0
          %1728 = vmatpush2.bf16.msra.mxu0 %v1682
          %1729 = vmatprep.subr.bf16.mxu0 0
          %1730 = vmatpush2.bf16.msra.mxu0 %v1681
          %1731 = vmatprep.subr.bf16.mxu0 0
          %1732 = vmatpush2.bf16.msra.mxu0 %v1680
          %1733 = vmatprep.subr.bf16.mxu0 0
          %1734 = vmatpush2.bf16.msra.mxu0 %v1679
          %1735 = vmatprep.mubr.bf16.mxu0 %v1567
          %1736 = vmatmul.mubr.bf16.gmra.mxu0 %v1566
          %v1737 = vpop.f32.mrf.mxu0
          %v1738 = vadd.f32 %v1605, %v1737
          %v1739 = vpop.f32.mrf.mxu0
          %v1740 = vpop.f32.mrf.mxu0
          %v1741 = vpop.f32.mrf.mxu0
          %1742 = vdwg.mxu0
          %v1743 = vmul.f32 %v1738, %v1738
          %1744 = vadd.xlane.f32.xlu0 %v1743
          %v1745 = vpop.xlane.xlu0 %1744
          %v1746 = vmax.f32 %v1745, 1e-16
          %v1747 = vrsqrt.pop %v1746
          %v1748 = vmul.f32 %v1738, %v1747
          %1749 = vst [vmem:[%s591] sm:$0xff] %v1748
        $region97: #{gliclass_biencoder_forward.3} parent=84 // pred_fallthru
          _
        %p1750 = scmp.lt.s32.totalorder %s22, 0
        %s1751 = scalar_select %p1750, %s22, 0
        %s1752 = smul.addr %s1751, 8
        %s1753 = scalar_lea.vmem %s7, %s1752
        // Predicated region
        $region98: #{gliclass_biencoder_forward.3} parent=84 // pred_check
          %p1754 = pneg %p202
        $region99: #{gliclass_biencoder_forward.3} parent=84 // pred_check_branch
          %1756 = sbr.rel (%p1754) target = $region101
        $region100: #{gliclass_biencoder_forward.3} parent=84 // pred_region
          _
        $region101: #{gliclass_biencoder_forward.3} parent=84 // pred_fallthru
          _
        // Predicated region
        $region102: #{gliclass_biencoder_forward.3} parent=84 // pred_check
          %p1757 = pneg %p202
        $region103: #{gliclass_biencoder_forward.3} parent=84 // pred_check_branch
          %1759 = sbr.rel (%p1757) target = $region105
        $region104: #{gliclass_biencoder_forward.3} parent=84 // pred_region
          %p1760 = scmp.lt.s32.totalorder %s22, 0
          %s1761 = scalar_select %p1760, %s22, 0
          %s1762 = smul.addr %s1761, 8
          %s1763 = scalar_lea.vmem %s7, %s1762
        $region105: #{gliclass_biencoder_forward.3} parent=84 // pred_fallthru
          _
      $region85: #{gliclass_biencoder_forward.3} parent=5 // pred_fallthru
        _
      %p1764 = scmp.le.s32.totalorder 2, %s13
      // Predicated region
      $region106: #{gliclass_biencoder_forward.3} parent=5 // pred_check
        %p1765 = pneg %p1764
      $region107: #{gliclass_biencoder_forward.3} parent=5 // pred_check_branch
        %1767 = sbr.rel (%p1765) target = $region109
      $region108: #{gliclass_biencoder_forward.3} parent=5 // pred_region
        %s1768 = ssub.s32 %s13, 2
      $region109: #{gliclass_biencoder_forward.3} parent=5 // pred_fallthru
        _
    $region6: #{gliclass_biencoder_forward.3} parent=1 // loop_footer
      %s17 = sadd.s32 1, %s13
    $region7: #{gliclass_biencoder_forward.3} parent=1 // loop_footer_branch
      %12 = sbr.rel target = $region3
    $region8: #{gliclass_biencoder_forward.3} parent=1 // loop_exit
      _

// kernel: gliclass_biencoder_forward.4
$region0: #{gliclass_biencoder_forward.4}
  #allocation0 [shape = 'u32[]', space=smem, size = 0x4, offset = 0x4, fixed_abs, tag = 'smem constant byte address 0x4 - core index']
  #allocation1 [shape = 'u32[144,128]{1,0:T(1,128)}', space=vmem, size = 0x12000, scoped, tag = 'internal scratch']
  #allocation2 [shape = 'f32[32,128]{1,0:T(8,128)}', space=vmem, size = 0x4000, scoped, tag = 'scratch operand']
  %s0 = inlined_call_operand.vmem [shape: bf16[128,128,128], index: 0, kind: input, shape index: {}]
  %s1 = inlined_call_operand.vmem [shape: f32[128,1], index: 1, kind: input, shape index: {}]
  %s2 = inlined_call_operand.vmem [shape: bf16[128,128], index: 2, kind: input, shape index: {}]
  %s3 = inlined_call_operand.vmem [shape: f32[1,128], index: 3, kind: input, shape index: {}]
  %s4 = inlined_call_operand.vmem [shape: bf16[128,128], index: 4, kind: input, shape index: {}]
  %s5 = inlined_call_operand.vmem [shape: f32[1,128], index: 5, kind: input, shape index: {}]
  %s6 = inlined_call_operand.vmem [shape: bf16[128,256], index: 6, kind: input, shape index: {}]
  %s7 = inlined_call_operand.vmem [shape: f32[1,256], index: 7, kind: input, shape index: {}]
  %s8 = inlined_call_operand.vmem [shape: bf16[256,128], index: 8, kind: input, shape index: {}]
  %s9 = inlined_call_operand.vmem [shape: f32[1,128], index: 9, kind: input, shape index: {}]
  %s10 = inlined_call_operand.vmem [shape: f32[128,128], index: 10, kind: output, shape index: {}]
  %s11 = sld [smem:[#allocation0]]
  $region122: #{gliclass_biencoder_forward.4} parent=0
    _
  %s13 = ssub.s32 1, %s11
  %s14 = scalar_select 0, %s13, %s11
  $region1: #{gliclass_biencoder_forward.4} parent=0
    #allocation3 [shape = 'u8[1048576]{0}', space=vmem, size = 0x100000, scoped, tag = 'input window, operand 0']
    loop: start=0, step=1, limit=10
    $region2: #{gliclass_biencoder_forward.4} parent=1 // loop_pre_header
      _
    $region3: #{gliclass_biencoder_forward.4} parent=1 // loop_header
      %s16 = sphi 0, %s20
      %p17 = scmp.ge.s32.totalorder %s16, 10
      %s23 = sphi 0, %s35
      %s24 = sphi 0, %s31
      %s25 = sphi 0, %s23
      %s26 = sphi 0, %s24
      %s27 = sphi 0, %s25
      %s28 = sphi 0, %s26
      %s40 = sphi 0, %s42
      %s43 = sphi 0, %s40
      %s44 = sphi 0, %s43
      %s60 = sphi 0, %s44
      %s66 = sphi 0, %s68
      %s69 = sphi 0, %s66
      %s70 = sphi 0, %s69
      %s86 = sphi 0, %s70
      %s90 = sphi 0, %s90
      %s92 = sphi 0, %s90
      %s93 = sphi 0, %s92
      %s107 = sphi 0, %s93
      %s111 = sphi 0, %s111
      %s113 = sphi 0, %s111
      %s114 = sphi 0, %s113
      %s128 = sphi 0, %s114
      %s132 = sphi 0, %s132
      %s134 = sphi 0, %s132
      %s135 = sphi 0, %s134
      %s149 = sphi 0, %s135
      %s153 = sphi 0, %s153
      %s155 = sphi 0, %s153
      %s156 = sphi 0, %s155
      %s170 = sphi 0, %s156
      %s174 = sphi 0, %s174
      %s176 = sphi 0, %s174
      %s177 = sphi 0, %s176
      %s191 = sphi 0, %s177
      %s195 = sphi 0, %s195
      %s197 = sphi 0, %s195
      %s198 = sphi 0, %s197
      %s212 = sphi 0, %s198
      %s216 = sphi 0, %s216
      %s218 = sphi 0, %s216
      %s219 = sphi 0, %s218
      %s233 = sphi 0, %s219
      %s237 = sphi 0, %s237
      %s239 = sphi 0, %s237
      %s240 = sphi 0, %s239
      %s254 = sphi 0, %s240
      %s260 = sphi 0, %s262
      %s263 = sphi 0, %s260
      %s264 = sphi 0, %s263
      %s280 = sphi 0, %s264
    $region4: #{gliclass_biencoder_forward.4} parent=1 // loop_header_branch
      %19 = sbr.rel (%p17) target = $region8
    $region5: #{gliclass_biencoder_forward.4} parent=1 // loop_body
      %s21 = ssub.s32 %s16, 1
      %s22 = ssub.s32 %s16, 2
      %s29 = sadd.s32 1, %s24
      %p30 = scmp.ge.s32.totalorder %s29, 2
      %s31 = scalar_select %p30, 0, %s29
      %s32 = sadd.s32 1, %s23
      %s33 = scalar_select %p30, %s32, %s23
      %p34 = scmp.ge.s32.totalorder %s33, 4
      %s35 = scalar_select %p34, 0, %s33
      %s36 = ssub.s32 %s23, %s35
      %s37 = ssub.s32 %s24, %s31
      %s38 = sor.u32 %s36, %s37
      %p39 = scmp.eq.s32.totalorder %s38, 0
      %s41 = sadd.s32 %s40, 1
      %s42 = scalar_select %p39, %s40, %s41
      %p45 = pneg %p39
      %p46 = scmp.eq.s32.totalorder %s16, 7
      %p47 = por %p45, %p46
      %p48 = scmp.ne.s32.totalorder %s40, %s43
      %p49 = scmp.eq.s32.totalorder %s16, 0
      %p50 = por %p48, %p49
      %p51 = scmp.ne.s32.totalorder %s40, %s43
      %p52 = scmp.eq.s32.totalorder %s21, 7
      %p53 = por %p51, %p52
      %p54 = scmp.ne.s32.totalorder %s43, %s44
      %p55 = scmp.eq.s32.totalorder %s21, 0
      %p56 = por %p54, %p55
      %p57 = scmp.ne.s32.totalorder %s43, %s44
      %p58 = scmp.eq.s32.totalorder %s22, 7
      %p59 = por %p57, %p58
      %p61 = scmp.ne.s32.totalorder %s44, %s60
      %p62 = scmp.eq.s32.totalorder %s22, 0
      %p63 = por %p61, %p62
      %s64 = ssub.s32 %s23, %s35
      %p65 = scmp.eq.s32.totalorder %s64, 0
      %s67 = sadd.s32 %s66, 1
      %s68 = scalar_select %p65, %s66, %s67
      %p71 = pneg %p65
      %p72 = scmp.eq.s32.totalorder %s16, 7
      %p73 = por %p71, %p72
      %p74 = scmp.ne.s32.totalorder %s66, %s69
      %p75 = scmp.eq.s32.totalorder %s16, 0
      %p76 = por %p74, %p75
      %p77 = scmp.ne.s32.totalorder %s66, %s69
      %p78 = scmp.eq.s32.totalorder %s21, 7
      %p79 = por %p77, %p78
      %p80 = scmp.ne.s32.totalorder %s69, %s70
      %p81 = scmp.eq.s32.totalorder %s21, 0
      %p82 = por %p80, %p81
      %p83 = scmp.ne.s32.totalorder %s69, %s70
      %p84 = scmp.eq.s32.totalorder %s22, 7
      %p85 = por %p83, %p84
      %p87 = scmp.ne.s32.totalorder %s70, %s86
      %p88 = scmp.eq.s32.totalorder %s22, 0
      %p89 = por %p87, %p88
      %s91 = sadd.s32 %s90, 1
      %p94 = scmp.eq.s32.totalorder %s16, 7
      %p95 = scmp.ne.s32.totalorder %s90, %s92
      %p96 = scmp.eq.s32.totalorder %s16, 0
      %p97 = por %p95, %p96
      %p98 = scmp.ne.s32.totalorder %s90, %s92
      %p99 = scmp.eq.s32.totalorder %s21, 7
      %p100 = por %p98, %p99
      %p101 = scmp.ne.s32.totalorder %s92, %s93
      %p102 = scmp.eq.s32.totalorder %s21, 0
      %p103 = por %p101, %p102
      %p104 = scmp.ne.s32.totalorder %s92, %s93
      %p105 = scmp.eq.s32.totalorder %s22, 7
      %p106 = por %p104, %p105
      %p108 = scmp.ne.s32.totalorder %s93, %s107
      %p109 = scmp.eq.s32.totalorder %s22, 0
      %p110 = por %p108, %p109
      %s112 = sadd.s32 %s111, 1
      %p115 = scmp.eq.s32.totalorder %s16, 7
      %p116 = scmp.ne.s32.totalorder %s111, %s113
      %p117 = scmp.eq.s32.totalorder %s16, 0
      %p118 = por %p116, %p117
      %p119 = scmp.ne.s32.totalorder %s111, %s113
      %p120 = scmp.eq.s32.totalorder %s21, 7
      %p121 = por %p119, %p120
      %p122 = scmp.ne.s32.totalorder %s113, %s114
      %p123 = scmp.eq.s32.totalorder %s21, 0
      %p124 = por %p122, %p123
      %p125 = scmp.ne.s32.totalorder %s113, %s114
      %p126 = scmp.eq.s32.totalorder %s22, 7
      %p127 = por %p125, %p126
      %p129 = scmp.ne.s32.totalorder %s114, %s128
      %p130 = scmp.eq.s32.totalorder %s22, 0
      %p131 = por %p129, %p130
      %s133 = sadd.s32 %s132, 1
      %p136 = scmp.eq.s32.totalorder %s16, 7
      %p137 = scmp.ne.s32.totalorder %s132, %s134
      %p138 = scmp.eq.s32.totalorder %s16, 0
      %p139 = por %p137, %p138
      %p140 = scmp.ne.s32.totalorder %s132, %s134
      %p141 = scmp.eq.s32.totalorder %s21, 7
      %p142 = por %p140, %p141
      %p143 = scmp.ne.s32.totalorder %s134, %s135
      %p144 = scmp.eq.s32.totalorder %s21, 0
      %p145 = por %p143, %p144
      %p146 = scmp.ne.s32.totalorder %s134, %s135
      %p147 = scmp.eq.s32.totalorder %s22, 7
      %p148 = por %p146, %p147
      %p150 = scmp.ne.s32.totalorder %s135, %s149
      %p151 = scmp.eq.s32.totalorder %s22, 0
      %p152 = por %p150, %p151
      %s154 = sadd.s32 %s153, 1
      %p157 = scmp.eq.s32.totalorder %s16, 7
      %p158 = scmp.ne.s32.totalorder %s153, %s155
      %p159 = scmp.eq.s32.totalorder %s16, 0
      %p160 = por %p158, %p159
      %p161 = scmp.ne.s32.totalorder %s153, %s155
      %p162 = scmp.eq.s32.totalorder %s21, 7
      %p163 = por %p161, %p162
      %p164 = scmp.ne.s32.totalorder %s155, %s156
      %p165 = scmp.eq.s32.totalorder %s21, 0
      %p166 = por %p164, %p165
      %p167 = scmp.ne.s32.totalorder %s155, %s156
      %p168 = scmp.eq.s32.totalorder %s22, 7
      %p169 = por %p167, %p168
      %p171 = scmp.ne.s32.totalorder %s156, %s170
      %p172 = scmp.eq.s32.totalorder %s22, 0
      %p173 = por %p171, %p172
      %s175 = sadd.s32 %s174, 1
      %p178 = scmp.eq.s32.totalorder %s16, 7
      %p179 = scmp.ne.s32.totalorder %s174, %s176
      %p180 = scmp.eq.s32.totalorder %s16, 0
      %p181 = por %p179, %p180
      %p182 = scmp.ne.s32.totalorder %s174, %s176
      %p183 = scmp.eq.s32.totalorder %s21, 7
      %p184 = por %p182, %p183
      %p185 = scmp.ne.s32.totalorder %s176, %s177
      %p186 = scmp.eq.s32.totalorder %s21, 0
      %p187 = por %p185, %p186
      %p188 = scmp.ne.s32.totalorder %s176, %s177
      %p189 = scmp.eq.s32.totalorder %s22, 7
      %p190 = por %p188, %p189
      %p192 = scmp.ne.s32.totalorder %s177, %s191
      %p193 = scmp.eq.s32.totalorder %s22, 0
      %p194 = por %p192, %p193
      %s196 = sadd.s32 %s195, 1
      %p199 = scmp.eq.s32.totalorder %s16, 7
      %p200 = scmp.ne.s32.totalorder %s195, %s197
      %p201 = scmp.eq.s32.totalorder %s16, 0
      %p202 = por %p200, %p201
      %p203 = scmp.ne.s32.totalorder %s195, %s197
      %p204 = scmp.eq.s32.totalorder %s21, 7
      %p205 = por %p203, %p204
      %p206 = scmp.ne.s32.totalorder %s197, %s198
      %p207 = scmp.eq.s32.totalorder %s21, 0
      %p208 = por %p206, %p207
      %p209 = scmp.ne.s32.totalorder %s197, %s198
      %p210 = scmp.eq.s32.totalorder %s22, 7
      %p211 = por %p209, %p210
      %p213 = scmp.ne.s32.totalorder %s198, %s212
      %p214 = scmp.eq.s32.totalorder %s22, 0
      %p215 = por %p213, %p214
      %s217 = sadd.s32 %s216, 1
      %p220 = scmp.eq.s32.totalorder %s16, 7
      %p221 = scmp.ne.s32.totalorder %s216, %s218
      %p222 = scmp.eq.s32.totalorder %s16, 0
      %p223 = por %p221, %p222
      %p224 = scmp.ne.s32.totalorder %s216, %s218
      %p225 = scmp.eq.s32.totalorder %s21, 7
      %p226 = por %p224, %p225
      %p227 = scmp.ne.s32.totalorder %s218, %s219
      %p228 = scmp.eq.s32.totalorder %s21, 0
      %p229 = por %p227, %p228
      %p230 = scmp.ne.s32.totalorder %s218, %s219
      %p231 = scmp.eq.s32.totalorder %s22, 7
      %p232 = por %p230, %p231
      %p234 = scmp.ne.s32.totalorder %s219, %s233
      %p235 = scmp.eq.s32.totalorder %s22, 0
      %p236 = por %p234, %p235
      %s238 = sadd.s32 %s237, 1
      %p241 = scmp.eq.s32.totalorder %s16, 7
      %p242 = scmp.ne.s32.totalorder %s237, %s239
      %p243 = scmp.eq.s32.totalorder %s16, 0
      %p244 = por %p242, %p243
      %p245 = scmp.ne.s32.totalorder %s237, %s239
      %p246 = scmp.eq.s32.totalorder %s21, 7
      %p247 = por %p245, %p246
      %p248 = scmp.ne.s32.totalorder %s239, %s240
      %p249 = scmp.eq.s32.totalorder %s21, 0
      %p250 = por %p248, %p249
      %p251 = scmp.ne.s32.totalorder %s239, %s240
      %p252 = scmp.eq.s32.totalorder %s22, 7
      %p253 = por %p251, %p252
      %p255 = scmp.ne.s32.totalorder %s240, %s254
      %p256 = scmp.eq.s32.totalorder %s22, 0
      %p257 = por %p255, %p256
      %s258 = ssub.s32 %s23, %s35
      %p259 = scmp.eq.s32.totalorder %s258, 0
      %s261 = sadd.s32 %s260, 1
      %s262 = scalar_select %p259, %s260, %s261
      %p265 = pneg %p259
      %p266 = scmp.eq.s32.totalorder %s16, 7
      %p267 = por %p265, %p266
      %p268 = scmp.ne.s32.totalorder %s260, %s263
      %p269 = scmp.eq.s32.totalorder %s16, 0
      %p270 = por %p268, %p269
      %p271 = scmp.ne.s32.totalorder %s260, %s263
      %p272 = scmp.eq.s32.totalorder %s21, 7
      %p273 = por %p271, %p272
      %p274 = scmp.ne.s32.totalorder %s263, %s264
      %p275 = scmp.eq.s32.totalorder %s21, 0
      %p276 = por %p274, %p275
      %p277 = scmp.ne.s32.totalorder %s263, %s264
      %p278 = scmp.eq.s32.totalorder %s22, 7
      %p279 = por %p277, %p278
      %p281 = scmp.ne.s32.totalorder %s264, %s280
      %p282 = scmp.eq.s32.totalorder %s22, 0
      %p283 = por %p281, %p282
      %p284 = scmp.le.s32.totalorder 1, %s16
      %p285 = scmp.lt.s32.totalorder %s16, 9
      %p286 = pnand %p284, %p285
      %p287 = pneg %p286
      // Predicated region
      $region9: #{gliclass_biencoder_forward.4} parent=5 // pred_check
        _
      $region10: #{gliclass_biencoder_forward.4} parent=5 // pred_check_branch
        %289 = sbr.rel (%p286) target = $region12
      $region11: #{gliclass_biencoder_forward.4} parent=5 // pred_region
        %s290 = ssub.s32 %s16, 1
        // Predicated region
        $region13: #{gliclass_biencoder_forward.4} parent=11 // pred_check
          %p291 = pneg %p103
        $region14: #{gliclass_biencoder_forward.4} parent=11 // pred_check_branch
          %293 = sbr.rel (%p291) target = $region16
        $region15: #{gliclass_biencoder_forward.4} parent=11 // pred_region
          _
        $region16: #{gliclass_biencoder_forward.4} parent=11 // pred_fallthru
          _
        // Predicated region
        $region17: #{gliclass_biencoder_forward.4} parent=11 // pred_check
          %p294 = pneg %p124
        $region18: #{gliclass_biencoder_forward.4} parent=11 // pred_check_branch
          %296 = sbr.rel (%p294) target = $region20
        $region19: #{gliclass_biencoder_forward.4} parent=11 // pred_region
          _
        $region20: #{gliclass_biencoder_forward.4} parent=11 // pred_fallthru
          _
        // Predicated region
        $region21: #{gliclass_biencoder_forward.4} parent=11 // pred_check
          %p297 = pneg %p145
        $region22: #{gliclass_biencoder_forward.4} parent=11 // pred_check_branch
          %299 = sbr.rel (%p297) target = $region24
        $region23: #{gliclass_biencoder_forward.4} parent=11 // pred_region
          _
        $region24: #{gliclass_biencoder_forward.4} parent=11 // pred_fallthru
          _
        // Predicated region
        $region25: #{gliclass_biencoder_forward.4} parent=11 // pred_check
          %p300 = pneg %p166
        $region26: #{gliclass_biencoder_forward.4} parent=11 // pred_check_branch
          %302 = sbr.rel (%p300) target = $region28
        $region27: #{gliclass_biencoder_forward.4} parent=11 // pred_region
          _
        $region28: #{gliclass_biencoder_forward.4} parent=11 // pred_fallthru
          _
        // Predicated region
        $region29: #{gliclass_biencoder_forward.4} parent=11 // pred_check
          %p303 = pneg %p187
        $region30: #{gliclass_biencoder_forward.4} parent=11 // pred_check_branch
          %305 = sbr.rel (%p303) target = $region32
        $region31: #{gliclass_biencoder_forward.4} parent=11 // pred_region
          _
        $region32: #{gliclass_biencoder_forward.4} parent=11 // pred_fallthru
          _
        // Predicated region
        $region33: #{gliclass_biencoder_forward.4} parent=11 // pred_check
          %p306 = pneg %p208
        $region34: #{gliclass_biencoder_forward.4} parent=11 // pred_check_branch
          %308 = sbr.rel (%p306) target = $region36
        $region35: #{gliclass_biencoder_forward.4} parent=11 // pred_region
          _
        $region36: #{gliclass_biencoder_forward.4} parent=11 // pred_fallthru
          _
        // Predicated region
        $region37: #{gliclass_biencoder_forward.4} parent=11 // pred_check
          %p309 = pneg %p229
        $region38: #{gliclass_biencoder_forward.4} parent=11 // pred_check_branch
          %311 = sbr.rel (%p309) target = $region40
        $region39: #{gliclass_biencoder_forward.4} parent=11 // pred_region
          _
        $region40: #{gliclass_biencoder_forward.4} parent=11 // pred_fallthru
          _
        // Predicated region
        $region41: #{gliclass_biencoder_forward.4} parent=11 // pred_check
          %p312 = pneg %p250
        $region42: #{gliclass_biencoder_forward.4} parent=11 // pred_check_branch
          %314 = sbr.rel (%p312) target = $region44
        $region43: #{gliclass_biencoder_forward.4} parent=11 // pred_region
          _
        $region44: #{gliclass_biencoder_forward.4} parent=11 // pred_fallthru
          _
      $region12: #{gliclass_biencoder_forward.4} parent=5 // pred_fallthru
        _
      %p315 = scmp.lt.s32.totalorder %s16, 8
      // Predicated region
      $region45: #{gliclass_biencoder_forward.4} parent=5 // pred_check
        %p316 = pneg %p315
      $region46: #{gliclass_biencoder_forward.4} parent=5 // pred_check_branch
        %318 = sbr.rel (%p316) target = $region48
      $region47: #{gliclass_biencoder_forward.4} parent=5 // pred_region
        // Predicated region
        $region49: #{gliclass_biencoder_forward.4} parent=47 // pred_check
          %p319 = pneg %p50
        $region50: #{gliclass_biencoder_forward.4} parent=47 // pred_check_branch
          %321 = sbr.rel (%p319) target = $region52
        $region51: #{gliclass_biencoder_forward.4} parent=47 // pred_region
          %s322 = sand.u32 %s40, 1
          %s323 = sand.u32 %s40, 1
          %s324 = smul.addr %s323, 1024
          %s325 = scalar_lea.vmem [#allocation3], %s324
          %s326 = smul.u32 32, %s23
          %s327 = smul.u32 8, %s24
          %s328 = smul.addr %s326, 16
          %s329 = sadd.s32 %s327, %s328
          %s330 = smul.addr %s329, 4
          %s331 = scalar_lea.vmem %s0, %s330
          // Predicated region
          $region53: #{gliclass_biencoder_forward.4} parent=51 // pred_check
            _
          $region54: #{gliclass_biencoder_forward.4} parent=51 // pred_check_branch
            %333 = sbr.rel (0) target = $region56
          $region55: #{gliclass_biencoder_forward.4} parent=51 // pred_region
            // Predicated region
            $region57: #{gliclass_biencoder_forward.4} parent=55 // pred_check
              _
            $region58: #{gliclass_biencoder_forward.4} parent=55 // pred_check_branch
              %335 = sbr.rel target = $region60
            $region59: #{gliclass_biencoder_forward.4} parent=55 // pred_region
              // Predicated region
              $region72: #{gliclass_biencoder_forward.4} parent=59 // pred_check
                _
              $region73: #{gliclass_biencoder_forward.4} parent=59 // pred_check_branch
                %861 = sbr.rel (0) target = $region75
              $region74: #{gliclass_biencoder_forward.4} parent=59 // pred_region
                loop: start=0, step=1, limit=1
                $region76: #{gliclass_biencoder_forward.4} parent=74 // loop_pre_header
                  _
                $region77: #{gliclass_biencoder_forward.4} parent=74 // loop_header
                  %s863 = sphi 0, %s867
                  %p864 = scmp.ge.s32.totalorder %s863, 1
                  %s868 = sphi %s331, %s331
                  %s869 = sphi %s325, %s325
                $region78: #{gliclass_biencoder_forward.4} parent=74 // loop_header_branch
                  %866 = sbr.rel (%p864) target = $region82
                $region79: #{gliclass_biencoder_forward.4} parent=74 // loop_body
                  _
                $region80: #{gliclass_biencoder_forward.4} parent=74 // loop_footer
                  %s867 = sadd.s32 1, %s863
                $region81: #{gliclass_biencoder_forward.4} parent=74 // loop_footer_branch
                  %862 = sbr.rel target = $region77
                $region82: #{gliclass_biencoder_forward.4} parent=74 // loop_exit
                  _
                %s871 = ssub.s32 16, 1
                loop: start=0, step=1, limit=1
                $region83: #{gliclass_biencoder_forward.4} parent=74 // loop_pre_header
                  _
                $region84: #{gliclass_biencoder_forward.4} parent=74 // loop_header
                  %s873 = sphi 0, %s877
                  %p874 = scmp.ge.s32.totalorder %s873, 1
                  %s878 = sphi %s331, %s331
                  %s879 = sphi %s325, %s325
                $region85: #{gliclass_biencoder_forward.4} parent=74 // loop_header_branch
                  %876 = sbr.rel (%p874) target = $region89
                $region86: #{gliclass_biencoder_forward.4} parent=74 // loop_body
                  %v880 = vld [vmem:[%s878] sm:%s871]
                  %881 = vst [vmem:[%s879] sm:%s871] %v880
                  %v882 = vld [vmem:[%s878 + $0x4] sm:%s871]
                  %883 = vst [vmem:[%s879 + $0x4] sm:%s871] %v882
                  %v884 = vld [vmem:[%s878 + $0x8] sm:%s871]
                  %885 = vst [vmem:[%s879 + $0x8] sm:%s871] %v884
                  %v886 = vld [vmem:[%s878 + $0xc] sm:%s871]
                  %887 = vst [vmem:[%s879 + $0xc] sm:%s871] %v886
                  %v888 = vld [vmem:[%s878 + $0x10] sm:%s871]
                  %889 = vst [vmem:[%s879 + $0x10] sm:%s871] %v888
                  %v890 = vld [vmem:[%s878 + $0x14] sm:%s871]
                  %891 = vst [vmem:[%s879 + $0x14] sm:%s871] %v890
                  %v892 = vld [vmem:[%s878 + $0x18] sm:%s871]
                  %893 = vst [vmem:[%s879 + $0x18] sm:%s871] %v892
                  %v894 = vld [vmem:[%s878 + $0x1c] sm:%s871]
                  %895 = vst [vmem:[%s879 + $0x1c] sm:%s871] %v894
                  %v896 = vld [vmem:[%s878 + $0x40] sm:%s871]
                  %897 = vst [vmem:[%s879 + $0x20] sm:%s871] %v896
                  %v898 = vld [vmem:[%s878 + $0x44] sm:%s871]
                  %899 = vst [vmem:[%s879 + $0x24] sm:%s871] %v898
                  %v900 = vld [vmem:[%s878 + $0x48] sm:%s871]
                  %901 = vst [vmem:[%s879 + $0x28] sm:%s871] %v900
                  %v902 = vld [vmem:[%s878 + $0x4c] sm:%s871]
                  %903 = vst [vmem:[%s879 + $0x2c] sm:%s871] %v902
                  %v904 = vld [vmem:[%s878 + $0x50] sm:%s871]
                  %905 = vst [vmem:[%s879 + $0x30] sm:%s871] %v904
                  %v906 = vld [vmem:[%s878 + $0x54] sm:%s871]
                  %907 = vst [vmem:[%s879 + $0x34] sm:%s871] %v906
                  %v908 = vld [vmem:[%s878 + $0x58] sm:%s871]
                  %909 = vst [vmem:[%s879 + $0x38] sm:%s871] %v908
                  %v910 = vld [vmem:[%s878 + $0x5c] sm:%s871]
                  %911 = vst [vmem:[%s879 + $0x3c] sm:%s871] %v910
                  %v912 = vld [vmem:[%s878 + $0x80] sm:%s871]
                  %913 = vst [vmem:[%s879 + $0x40] sm:%s871] %v912
                  %v914 = vld [vmem:[%s878 + $0x84] sm:%s871]
                  %915 = vst [vmem:[%s879 + $0x44] sm:%s871] %v914
                  %v916 = vld [vmem:[%s878 + $0x88] sm:%s871]
                  %917 = vst [vmem:[%s879 + $0x48] sm:%s871] %v916
                  %v918 = vld [vmem:[%s878 + $0x8c] sm:%s871]
                  %919 = vst [vmem:[%s879 + $0x4c] sm:%s871] %v918
                  %v920 = vld [vmem:[%s878 + $0x90] sm:%s871]
                  %921 = vst [vmem:[%s879 + $0x50] sm:%s871] %v920
                  %v922 = vld [vmem:[%s878 + $0x94] sm:%s871]
                  %923 = vst [vmem:[%s879 + $0x54] sm:%s871] %v922
                  %v924 = vld [vmem:[%s878 + $0x98] sm:%s871]
                  %925 = vst [vmem:[%s879 + $0x58] sm:%s871] %v924
                  %v926 = vld [vmem:[%s878 + $0x9c] sm:%s871]
                  %927 = vst [vmem:[%s879 + $0x5c] sm:%s871] %v926
                  %v928 = vld [vmem:[%s878 + $0xc0] sm:%s871]
                  %929 = vst [vmem:[%s879 + $0x60] sm:%s871] %v928
                  %v930 = vld [vmem:[%s878 + $0xc4] sm:%s871]
                  %931 = vst [vmem:[%s879 + $0x64] sm:%s871] %v930
                  %v932 = vld [vmem:[%s878 + $0xc8] sm:%s871]
                  %933 = vst [vmem:[%s879 + $0x68] sm:%s871] %v932
                  %v934 = vld [vmem:[%s878 + $0xcc] sm:%s871]
                  %935 = vst [vmem:[%s879 + $0x6c] sm:%s871] %v934
                  %v936 = vld [vmem:[%s878 + $0xd0] sm:%s871]
                  %937 = vst [vmem:[%s879 + $0x70] sm:%s871] %v936
                  %v938 = vld [vmem:[%s878 + $0xd4] sm:%s871]
                  %939 = vst [vmem:[%s879 + $0x74] sm:%s871] %v938
                  %v940 = vld [vmem:[%s878 + $0xd8] sm:%s871]
                  %941 = vst [vmem:[%s879 + $0x78] sm:%s871] %v940
                  %v942 = vld [vmem:[%s878 + $0xdc] sm:%s871]
                  %943 = vst [vmem:[%s879 + $0x7c] sm:%s871] %v942
                  %v944 = vld [vmem:[%s878 + $0x100] sm:%s871]
                  %945 = vst [vmem:[%s879 + $0x80] sm:%s871] %v944
                  %v946 = vld [vmem:[%s878 + $0x104] sm:%s871]
                  %947 = vst [vmem:[%s879 + $0x84] sm:%s871] %v946
                  %v948 = vld [vmem:[%s878 + $0x108] sm:%s871]
                  %949 = vst [vmem:[%s879 + $0x88] sm:%s871] %v948
                  %v950 = vld [vmem:[%s878 + $0x10c] sm:%s871]
                  %951 = vst [vmem:[%s879 + $0x8c] sm:%s871] %v950
                  %v952 = vld [vmem:[%s878 + $0x110] sm:%s871]
                  %953 = vst [vmem:[%s879 + $0x90] sm:%s871] %v952
                  %v954 = vld [vmem:[%s878 + $0x114] sm:%s871]
                  %955 = vst [vmem:[%s879 + $0x94] sm:%s871] %v954
                  %v956 = vld [vmem:[%s878 + $0x118] sm:%s871]
                  %957 = vst [vmem:[%s879 + $0x98] sm:%s871] %v956
                  %v958 = vld [vmem:[%s878 + $0x11c] sm:%s871]
                  %959 = vst [vmem:[%s879 + $0x9c] sm:%s871] %v958
                  %v960 = vld [vmem:[%s878 + $0x140] sm:%s871]
                  %961 = vst [vmem:[%s879 + $0xa0] sm:%s871] %v960
                  %v962 = vld [vmem:[%s878 + $0x144] sm:%s871]
                  %963 = vst [vmem:[%s879 + $0xa4] sm:%s871] %v962
                  %v964 = vld [vmem:[%s878 + $0x148] sm:%s871]
                  %965 = vst [vmem:[%s879 + $0xa8] sm:%s871] %v964
                  %v966 = vld [vmem:[%s878 + $0x14c] sm:%s871]
                  %967 = vst [vmem:[%s879 + $0xac] sm:%s871] %v966
                  %v968 = vld [vmem:[%s878 + $0x150] sm:%s871]
                  %969 = vst [vmem:[%s879 + $0xb0] sm:%s871] %v968
                  %v970 = vld [vmem:[%s878 + $0x154] sm:%s871]
                  %971 = vst [vmem:[%s879 + $0xb4] sm:%s871] %v970
                  %v972 = vld [vmem:[%s878 + $0x158] sm:%s871]
                  %973 = vst [vmem:[%s879 + $0xb8] sm:%s871] %v972
                  %v974 = vld [vmem:[%s878 + $0x15c] sm:%s871]
                  %975 = vst [vmem:[%s879 + $0xbc] sm:%s871] %v974
                  %v976 = vld [vmem:[%s878 + $0x180] sm:%s871]
                  %977 = vst [vmem:[%s879 + $0xc0] sm:%s871] %v976
                  %v978 = vld [vmem:[%s878 + $0x184] sm:%s871]
                  %979 = vst [vmem:[%s879 + $0xc4] sm:%s871] %v978
                  %v980 = vld [vmem:[%s878 + $0x188] sm:%s871]
                  %981 = vst [vmem:[%s879 + $0xc8] sm:%s871] %v980
                  %v982 = vld [vmem:[%s878 + $0x18c] sm:%s871]
                  %983 = vst [vmem:[%s879 + $0xcc] sm:%s871] %v982
                  %v984 = vld [vmem:[%s878 + $0x190] sm:%s871]
                  %985 = vst [vmem:[%s879 + $0xd0] sm:%s871] %v984
                  %v986 = vld [vmem:[%s878 + $0x194] sm:%s871]
                  %987 = vst [vmem:[%s879 + $0xd4] sm:%s871] %v986
                  %v988 = vld [vmem:[%s878 + $0x198] sm:%s871]
                  %989 = vst [vmem:[%s879 + $0xd8] sm:%s871] %v988
                  %v990 = vld [vmem:[%s878 + $0x19c] sm:%s871]
                  %991 = vst [vmem:[%s879 + $0xdc] sm:%s871] %v990
                  %v992 = vld [vmem:[%s878 + $0x1c0] sm:%s871]
                  %993 = vst [vmem:[%s879 + $0xe0] sm:%s871] %v992
                  %v994 = vld [vmem:[%s878 + $0x1c4] sm:%s871]
                  %995 = vst [vmem:[%s879 + $0xe4] sm:%s871] %v994
                  %v996 = vld [vmem:[%s878 + $0x1c8] sm:%s871]
                  %997 = vst [vmem:[%s879 + $0xe8] sm:%s871] %v996
                  %v998 = vld [vmem:[%s878 + $0x1cc] sm:%s871]
                  %999 = vst [vmem:[%s879 + $0xec] sm:%s871] %v998
                  %v1000 = vld [vmem:[%s878 + $0x1d0] sm:%s871]
                  %1001 = vst [vmem:[%s879 + $0xf0] sm:%s871] %v1000
                  %v1002 = vld [vmem:[%s878 + $0x1d4] sm:%s871]
                  %1003 = vst [vmem:[%s879 + $0xf4] sm:%s871] %v1002
                  %v1004 = vld [vmem:[%s878 + $0x1d8] sm:%s871]
                  %1005 = vst [vmem:[%s879 + $0xf8] sm:%s871] %v1004
                  %v1006 = vld [vmem:[%s878 + $0x1dc] sm:%s871]
                  %1007 = vst [vmem:[%s879 + $0xfc] sm:%s871] %v1006
                  %v1008 = vld [vmem:[%s878 + $0x200] sm:%s871]
                  %1009 = vst [vmem:[%s879 + $0x100] sm:%s871] %v1008
                  %v1010 = vld [vmem:[%s878 + $0x204] sm:%s871]
                  %1011 = vst [vmem:[%s879 + $0x104] sm:%s871] %v1010
                  %v1012 = vld [vmem:[%s878 + $0x208] sm:%s871]
                  %1013 = vst [vmem:[%s879 + $0x108] sm:%s871] %v1012
                  %v1014 = vld [vmem:[%s878 + $0x20c] sm:%s871]
                  %1015 = vst [vmem:[%s879 + $0x10c] sm:%s871] %v1014
                  %v1016 = vld [vmem:[%s878 + $0x210] sm:%s871]
                  %1017 = vst [vmem:[%s879 + $0x110] sm:%s871] %v1016
                  %v1018 = vld [vmem:[%s878 + $0x214] sm:%s871]
                  %1019 = vst [vmem:[%s879 + $0x114] sm:%s871] %v1018
                  %v1020 = vld [vmem:[%s878 + $0x218] sm:%s871]
                  %1021 = vst [vmem:[%s879 + $0x118] sm:%s871] %v1020
                  %v1022 = vld [vmem:[%s878 + $0x21c] sm:%s871]
                  %1023 = vst [vmem:[%s879 + $0x11c] sm:%s871] %v1022
                  %v1024 = vld [vmem:[%s878 + $0x240] sm:%s871]
                  %1025 = vst [vmem:[%s879 + $0x120] sm:%s871] %v1024
                  %v1026 = vld [vmem:[%s878 + $0x244] sm:%s871]
                  %1027 = vst [vmem:[%s879 + $0x124] sm:%s871] %v1026
                  %v1028 = vld [vmem:[%s878 + $0x248] sm:%s871]
                  %1029 = vst [vmem:[%s879 + $0x128] sm:%s871] %v1028
                  %v1030 = vld [vmem:[%s878 + $0x24c] sm:%s871]
                  %1031 = vst [vmem:[%s879 + $0x12c] sm:%s871] %v1030
                  %v1032 = vld [vmem:[%s878 + $0x250] sm:%s871]
                  %1033 = vst [vmem:[%s879 + $0x130] sm:%s871] %v1032
                  %v1034 = vld [vmem:[%s878 + $0x254] sm:%s871]
                  %1035 = vst [vmem:[%s879 + $0x134] sm:%s871] %v1034
                  %v1036 = vld [vmem:[%s878 + $0x258] sm:%s871]
                  %1037 = vst [vmem:[%s879 + $0x138] sm:%s871] %v1036
                  %v1038 = vld [vmem:[%s878 + $0x25c] sm:%s871]
                  %1039 = vst [vmem:[%s879 + $0x13c] sm:%s871] %v1038
                  %v1040 = vld [vmem:[%s878 + $0x280] sm:%s871]
                  %1041 = vst [vmem:[%s879 + $0x140] sm:%s871] %v1040
                  %v1042 = vld [vmem:[%s878 + $0x284] sm:%s871]
                  %1043 = vst [vmem:[%s879 + $0x144] sm:%s871] %v1042
                  %v1044 = vld [vmem:[%s878 + $0x288] sm:%s871]
                  %1045 = vst [vmem:[%s879 + $0x148] sm:%s871] %v1044
                  %v1046 = vld [vmem:[%s878 + $0x28c] sm:%s871]
                  %1047 = vst [vmem:[%s879 + $0x14c] sm:%s871] %v1046
                  %v1048 = vld [vmem:[%s878 + $0x290] sm:%s871]
                  %1049 = vst [vmem:[%s879 + $0x150] sm:%s871] %v1048
                  %v1050 = vld [vmem:[%s878 + $0x294] sm:%s871]
                  %1051 = vst [vmem:[%s879 + $0x154] sm:%s871] %v1050
                  %v1052 = vld [vmem:[%s878 + $0x298] sm:%s871]
                  %1053 = vst [vmem:[%s879 + $0x158] sm:%s871] %v1052
                  %v1054 = vld [vmem:[%s878 + $0x29c] sm:%s871]
                  %1055 = vst [vmem:[%s879 + $0x15c] sm:%s871] %v1054
                  %v1056 = vld [vmem:[%s878 + $0x2c0] sm:%s871]
                  %1057 = vst [vmem:[%s879 + $0x160] sm:%s871] %v1056
                  %v1058 = vld [vmem:[%s878 + $0x2c4] sm:%s871]
                  %1059 = vst [vmem:[%s879 + $0x164] sm:%s871] %v1058
                  %v1060 = vld [vmem:[%s878 + $0x2c8] sm:%s871]
                  %1061 = vst [vmem:[%s879 + $0x168] sm:%s871] %v1060
                  %v1062 = vld [vmem:[%s878 + $0x2cc] sm:%s871]
                  %1063 = vst [vmem:[%s879 + $0x16c] sm:%s871] %v1062
                  %v1064 = vld [vmem:[%s878 + $0x2d0] sm:%s871]
                  %1065 = vst [vmem:[%s879 + $0x170] sm:%s871] %v1064
                  %v1066 = vld [vmem:[%s878 + $0x2d4] sm:%s871]
                  %1067 = vst [vmem:[%s879 + $0x174] sm:%s871] %v1066
                  %v1068 = vld [vmem:[%s878 + $0x2d8] sm:%s871]
                  %1069 = vst [vmem:[%s879 + $0x178] sm:%s871] %v1068
                  %v1070 = vld [vmem:[%s878 + $0x2dc] sm:%s871]
                  %1071 = vst [vmem:[%s879 + $0x17c] sm:%s871] %v1070
                  %v1072 = vld [vmem:[%s878 + $0x300] sm:%s871]
                  %1073 = vst [vmem:[%s879 + $0x180] sm:%s871] %v1072
                  %v1074 = vld [vmem:[%s878 + $0x304] sm:%s871]
                  %1075 = vst [vmem:[%s879 + $0x184] sm:%s871] %v1074
                  %v1076 = vld [vmem:[%s878 + $0x308] sm:%s871]
                  %1077 = vst [vmem:[%s879 + $0x188] sm:%s871] %v1076
                  %v1078 = vld [vmem:[%s878 + $0x30c] sm:%s871]
                  %1079 = vst [vmem:[%s879 + $0x18c] sm:%s871] %v1078
                  %v1080 = vld [vmem:[%s878 + $0x310] sm:%s871]
                  %1081 = vst [vmem:[%s879 + $0x190] sm:%s871] %v1080
                  %v1082 = vld [vmem:[%s878 + $0x314] sm:%s871]
                  %1083 = vst [vmem:[%s879 + $0x194] sm:%s871] %v1082
                  %v1084 = vld [vmem:[%s878 + $0x318] sm:%s871]
                  %1085 = vst [vmem:[%s879 + $0x198] sm:%s871] %v1084
                  %v1086 = vld [vmem:[%s878 + $0x31c] sm:%s871]
                  %1087 = vst [vmem:[%s879 + $0x19c] sm:%s871] %v1086
                  %v1088 = vld [vmem:[%s878 + $0x340] sm:%s871]
                  %1089 = vst [vmem:[%s879 + $0x1a0] sm:%s871] %v1088
                  %v1090 = vld [vmem:[%s878 + $0x344] sm:%s871]
                  %1091 = vst [vmem:[%s879 + $0x1a4] sm:%s871] %v1090
                  %v1092 = vld [vmem:[%s878 + $0x348] sm:%s871]
                  %1093 = vst [vmem:[%s879 + $0x1a8] sm:%s871] %v1092
                  %v1094 = vld [vmem:[%s878 + $0x34c] sm:%s871]
                  %1095 = vst [vmem:[%s879 + $0x1ac] sm:%s871] %v1094
                  %v1096 = vld [vmem:[%s878 + $0x350] sm:%s871]
                  %1097 = vst [vmem:[%s879 + $0x1b0] sm:%s871] %v1096
                  %v1098 = vld [vmem:[%s878 + $0x354] sm:%s871]
                  %1099 = vst [vmem:[%s879 + $0x1b4] sm:%s871] %v1098
                  %v1100 = vld [vmem:[%s878 + $0x358] sm:%s871]
                  %1101 = vst [vmem:[%s879 + $0x1b8] sm:%s871] %v1100
                  %v1102 = vld [vmem:[%s878 + $0x35c] sm:%s871]
                  %1103 = vst [vmem:[%s879 + $0x1bc] sm:%s871] %v1102
                  %v1104 = vld [vmem:[%s878 + $0x380] sm:%s871]
                  %1105 = vst [vmem:[%s879 + $0x1c0] sm:%s871] %v1104
                  %v1106 = vld [vmem:[%s878 + $0x384] sm:%s871]
                  %1107 = vst [vmem:[%s879 + $0x1c4] sm:%s871] %v1106
                  %v1108 = vld [vmem:[%s878 + $0x388] sm:%s871]
                  %1109 = vst [vmem:[%s879 + $0x1c8] sm:%s871] %v1108
                  %v1110 = vld [vmem:[%s878 + $0x38c] sm:%s871]
                  %1111 = vst [vmem:[%s879 + $0x1cc] sm:%s871] %v1110
                  %v1112 = vld [vmem:[%s878 + $0x390] sm:%s871]
                  %1113 = vst [vmem:[%s879 + $0x1d0] sm:%s871] %v1112
                  %v1114 = vld [vmem:[%s878 + $0x394] sm:%s871]
                  %1115 = vst [vmem:[%s879 + $0x1d4] sm:%s871] %v1114
                  %v1116 = vld [vmem:[%s878 + $0x398] sm:%s871]
                  %1117 = vst [vmem:[%s879 + $0x1d8] sm:%s871] %v1116
                  %v1118 = vld [vmem:[%s878 + $0x39c] sm:%s871]
                  %1119 = vst [vmem:[%s879 + $0x1dc] sm:%s871] %v1118
                  %v1120 = vld [vmem:[%s878 + $0x3c0] sm:%s871]
                  %1121 = vst [vmem:[%s879 + $0x1e0] sm:%s871] %v1120
                  %v1122 = vld [vmem:[%s878 + $0x3c4] sm:%s871]
                  %1123 = vst [vmem:[%s879 + $0x1e4] sm:%s871] %v1122
                  %v1124 = vld [vmem:[%s878 + $0x3c8] sm:%s871]
                  %1125 = vst [vmem:[%s879 + $0x1e8] sm:%s871] %v1124
                  %v1126 = vld [vmem:[%s878 + $0x3cc] sm:%s871]
                  %1127 = vst [vmem:[%s879 + $0x1ec] sm:%s871] %v1126
                  %v1128 = vld [vmem:[%s878 + $0x3d0] sm:%s871]
                  %1129 = vst [vmem:[%s879 + $0x1f0] sm:%s871] %v1128
                  %v1130 = vld [vmem:[%s878 + $0x3d4] sm:%s871]
                  %1131 = vst [vmem:[%s879 + $0x1f4] sm:%s871] %v1130
                  %v1132 = vld [vmem:[%s878 + $0x3d8] sm:%s871]
                  %1133 = vst [vmem:[%s879 + $0x1f8] sm:%s871] %v1132
                  %v1134 = vld [vmem:[%s878 + $0x3dc] sm:%s871]
                  %1135 = vst [vmem:[%s879 + $0x1fc] sm:%s871] %v1134
                  %v1136 = vld [vmem:[%s878 + $0x400] sm:%s871]
                  %1137 = vst [vmem:[%s879 + $0x200] sm:%s871] %v1136
                  %v1138 = vld [vmem:[%s878 + $0x404] sm:%s871]
                  %1139 = vst [vmem:[%s879 + $0x204] sm:%s871] %v1138
                  %v1140 = vld [vmem:[%s878 + $0x408] sm:%s871]
                  %1141 = vst [vmem:[%s879 + $0x208] sm:%s871] %v1140
                  %v1142 = vld [vmem:[%s878 + $0x40c] sm:%s871]
                  %1143 = vst [vmem:[%s879 + $0x20c] sm:%s871] %v1142
                  %v1144 = vld [vmem:[%s878 + $0x410] sm:%s871]
                  %1145 = vst [vmem:[%s879 + $0x210] sm:%s871] %v1144
                  %v1146 = vld [vmem:[%s878 + $0x414] sm:%s871]
                  %1147 = vst [vmem:[%s879 + $0x214] sm:%s871] %v1146
                  %v1148 = vld [vmem:[%s878 + $0x418] sm:%s871]
                  %1149 = vst [vmem:[%s879 + $0x218] sm:%s871] %v1148
                  %v1150 = vld [vmem:[%s878 + $0x41c] sm:%s871]
                  %1151 = vst [vmem:[%s879 + $0x21c] sm:%s871] %v1150
                  %v1152 = vld [vmem:[%s878 + $0x440] sm:%s871]
                  %1153 = vst [vmem:[%s879 + $0x220] sm:%s871] %v1152
                  %v1154 = vld [vmem:[%s878 + $0x444] sm:%s871]
                  %1155 = vst [vmem:[%s879 + $0x224] sm:%s871] %v1154
                  %v1156 = vld [vmem:[%s878 + $0x448] sm:%s871]
                  %1157 = vst [vmem:[%s879 + $0x228] sm:%s871] %v1156
                  %v1158 = vld [vmem:[%s878 + $0x44c] sm:%s871]
                  %1159 = vst [vmem:[%s879 + $0x22c] sm:%s871] %v1158
                  %v1160 = vld [vmem:[%s878 + $0x450] sm:%s871]
                  %1161 = vst [vmem:[%s879 + $0x230] sm:%s871] %v1160
                  %v1162 = vld [vmem:[%s878 + $0x454] sm:%s871]
                  %1163 = vst [vmem:[%s879 + $0x234] sm:%s871] %v1162
                  %v1164 = vld [vmem:[%s878 + $0x458] sm:%s871]
                  %1165 = vst [vmem:[%s879 + $0x238] sm:%s871] %v1164
                  %v1166 = vld [vmem:[%s878 + $0x45c] sm:%s871]
                  %1167 = vst [vmem:[%s879 + $0x23c] sm:%s871] %v1166
                  %v1168 = vld [vmem:[%s878 + $0x480] sm:%s871]
                  %1169 = vst [vmem:[%s879 + $0x240] sm:%s871] %v1168
                  %v1170 = vld [vmem:[%s878 + $0x484] sm:%s871]
                  %1171 = vst [vmem:[%s879 + $0x244] sm:%s871] %v1170
                  %v1172 = vld [vmem:[%s878 + $0x488] sm:%s871]
                  %1173 = vst [vmem:[%s879 + $0x248] sm:%s871] %v1172
                  %v1174 = vld [vmem:[%s878 + $0x48c] sm:%s871]
                  %1175 = vst [vmem:[%s879 + $0x24c] sm:%s871] %v1174
                  %v1176 = vld [vmem:[%s878 + $0x490] sm:%s871]
                  %1177 = vst [vmem:[%s879 + $0x250] sm:%s871] %v1176
                  %v1178 = vld [vmem:[%s878 + $0x494] sm:%s871]
                  %1179 = vst [vmem:[%s879 + $0x254] sm:%s871] %v1178
                  %v1180 = vld [vmem:[%s878 + $0x498] sm:%s871]
                  %1181 = vst [vmem:[%s879 + $0x258] sm:%s871] %v1180
                  %v1182 = vld [vmem:[%s878 + $0x49c] sm:%s871]
                  %1183 = vst [vmem:[%s879 + $0x25c] sm:%s871] %v1182
                  %v1184 = vld [vmem:[%s878 + $0x4c0] sm:%s871]
                  %1185 = vst [vmem:[%s879 + $0x260] sm:%s871] %v1184
                  %v1186 = vld [vmem:[%s878 + $0x4c4] sm:%s871]
                  %1187 = vst [vmem:[%s879 + $0x264] sm:%s871] %v1186
                  %v1188 = vld [vmem:[%s878 + $0x4c8] sm:%s871]
                  %1189 = vst [vmem:[%s879 + $0x268] sm:%s871] %v1188
                  %v1190 = vld [vmem:[%s878 + $0x4cc] sm:%s871]
                  %1191 = vst [vmem:[%s879 + $0x26c] sm:%s871] %v1190
                  %v1192 = vld [vmem:[%s878 + $0x4d0] sm:%s871]
                  %1193 = vst [vmem:[%s879 + $0x270] sm:%s871] %v1192
                  %v1194 = vld [vmem:[%s878 + $0x4d4] sm:%s871]
                  %1195 = vst [vmem:[%s879 + $0x274] sm:%s871] %v1194
                  %v1196 = vld [vmem:[%s878 + $0x4d8] sm:%s871]
                  %1197 = vst [vmem:[%s879 + $0x278] sm:%s871] %v1196
                  %v1198 = vld [vmem:[%s878 + $0x4dc] sm:%s871]
                  %1199 = vst [vmem:[%s879 + $0x27c] sm:%s871] %v1198
                  %v1200 = vld [vmem:[%s878 + $0x500] sm:%s871]
                  %1201 = vst [vmem:[%s879 + $0x280] sm:%s871] %v1200
                  %v1202 = vld [vmem:[%s878 + $0x504] sm:%s871]
                  %1203 = vst [vmem:[%s879 + $0x284] sm:%s871] %v1202
                  %v1204 = vld [vmem:[%s878 + $0x508] sm:%s871]
                  %1205 = vst [vmem:[%s879 + $0x288] sm:%s871] %v1204
                  %v1206 = vld [vmem:[%s878 + $0x50c] sm:%s871]
                  %1207 = vst [vmem:[%s879 + $0x28c] sm:%s871] %v1206
                  %v1208 = vld [vmem:[%s878 + $0x510] sm:%s871]
                  %1209 = vst [vmem:[%s879 + $0x290] sm:%s871] %v1208
                  %v1210 = vld [vmem:[%s878 + $0x514] sm:%s871]
                  %1211 = vst [vmem:[%s879 + $0x294] sm:%s871] %v1210
                  %v1212 = vld [vmem:[%s878 + $0x518] sm:%s871]
                  %1213 = vst [vmem:[%s879 + $0x298] sm:%s871] %v1212
                  %v1214 = vld [vmem:[%s878 + $0x51c] sm:%s871]
                  %1215 = vst [vmem:[%s879 + $0x29c] sm:%s871] %v1214
                  %v1216 = vld [vmem:[%s878 + $0x540] sm:%s871]
                  %1217 = vst [vmem:[%s879 + $0x2a0] sm:%s871] %v1216
                  %v1218 = vld [vmem:[%s878 + $0x544] sm:%s871]
                  %1219 = vst [vmem:[%s879 + $0x2a4] sm:%s871] %v1218
                  %v1220 = vld [vmem:[%s878 + $0x548] sm:%s871]
                  %1221 = vst [vmem:[%s879 + $0x2a8] sm:%s871] %v1220
                  %v1222 = vld [vmem:[%s878 + $0x54c] sm:%s871]
                  %1223 = vst [vmem:[%s879 + $0x2ac] sm:%s871] %v1222
                  %v1224 = vld [vmem:[%s878 + $0x550] sm:%s871]
                  %1225 = vst [vmem:[%s879 + $0x2b0] sm:%s871] %v1224
                  %v1226 = vld [vmem:[%s878 + $0x554] sm:%s871]
                  %1227 = vst [vmem:[%s879 + $0x2b4] sm:%s871] %v1226
                  %v1228 = vld [vmem:[%s878 + $0x558] sm:%s871]
                  %1229 = vst [vmem:[%s879 + $0x2b8] sm:%s871] %v1228
                  %v1230 = vld [vmem:[%s878 + $0x55c] sm:%s871]
                  %1231 = vst [vmem:[%s879 + $0x2bc] sm:%s871] %v1230
                  %v1232 = vld [vmem:[%s878 + $0x580] sm:%s871]
                  %1233 = vst [vmem:[%s879 + $0x2c0] sm:%s871] %v1232
                  %v1234 = vld [vmem:[%s878 + $0x584] sm:%s871]
                  %1235 = vst [vmem:[%s879 + $0x2c4] sm:%s871] %v1234
                  %v1236 = vld [vmem:[%s878 + $0x588] sm:%s871]
                  %1237 = vst [vmem:[%s879 + $0x2c8] sm:%s871] %v1236
                  %v1238 = vld [vmem:[%s878 + $0x58c] sm:%s871]
                  %1239 = vst [vmem:[%s879 + $0x2cc] sm:%s871] %v1238
                  %v1240 = vld [vmem:[%s878 + $0x590] sm:%s871]
                  %1241 = vst [vmem:[%s879 + $0x2d0] sm:%s871] %v1240
                  %v1242 = vld [vmem:[%s878 + $0x594] sm:%s871]
                  %1243 = vst [vmem:[%s879 + $0x2d4] sm:%s871] %v1242
                  %v1244 = vld [vmem:[%s878 + $0x598] sm:%s871]
                  %1245 = vst [vmem:[%s879 + $0x2d8] sm:%s871] %v1244
                  %v1246 = vld [vmem:[%s878 + $0x59c] sm:%s871]
                  %1247 = vst [vmem:[%s879 + $0x2dc] sm:%s871] %v1246
                  %v1248 = vld [vmem:[%s878 + $0x5c0] sm:%s871]
                  %1249 = vst [vmem:[%s879 + $0x2e0] sm:%s871] %v1248
                  %v1250 = vld [vmem:[%s878 + $0x5c4] sm:%s871]
                  %1251 = vst [vmem:[%s879 + $0x2e4] sm:%s871] %v1250
                  %v1252 = vld [vmem:[%s878 + $0x5c8] sm:%s871]
                  %1253 = vst [vmem:[%s879 + $0x2e8] sm:%s871] %v1252
                  %v1254 = vld [vmem:[%s878 + $0x5cc] sm:%s871]
                  %1255 = vst [vmem:[%s879 + $0x2ec] sm:%s871] %v1254
                  %v1256 = vld [vmem:[%s878 + $0x5d0] sm:%s871]
                  %1257 = vst [vmem:[%s879 + $0x2f0] sm:%s871] %v1256
                  %v1258 = vld [vmem:[%s878 + $0x5d4] sm:%s871]
                  %1259 = vst [vmem:[%s879 + $0x2f4] sm:%s871] %v1258
                  %v1260 = vld [vmem:[%s878 + $0x5d8] sm:%s871]
                  %1261 = vst [vmem:[%s879 + $0x2f8] sm:%s871] %v1260
                  %v1262 = vld [vmem:[%s878 + $0x5dc] sm:%s871]
                  %1263 = vst [vmem:[%s879 + $0x2fc] sm:%s871] %v1262
                  %v1264 = vld [vmem:[%s878 + $0x600] sm:%s871]
                  %1265 = vst [vmem:[%s879 + $0x300] sm:%s871] %v1264
                  %v1266 = vld [vmem:[%s878 + $0x604] sm:%s871]
                  %1267 = vst [vmem:[%s879 + $0x304] sm:%s871] %v1266
                  %v1268 = vld [vmem:[%s878 + $0x608] sm:%s871]
                  %1269 = vst [vmem:[%s879 + $0x308] sm:%s871] %v1268
                  %v1270 = vld [vmem:[%s878 + $0x60c] sm:%s871]
                  %1271 = vst [vmem:[%s879 + $0x30c] sm:%s871] %v1270
                  %v1272 = vld [vmem:[%s878 + $0x610] sm:%s871]
                  %1273 = vst [vmem:[%s879 + $0x310] sm:%s871] %v1272
                  %v1274 = vld [vmem:[%s878 + $0x614] sm:%s871]
                  %1275 = vst [vmem:[%s879 + $0x314] sm:%s871] %v1274
                  %v1276 = vld [vmem:[%s878 + $0x618] sm:%s871]
                  %1277 = vst [vmem:[%s879 + $0x318] sm:%s871] %v1276
                  %v1278 = vld [vmem:[%s878 + $0x61c] sm:%s871]
                  %1279 = vst [vmem:[%s879 + $0x31c] sm:%s871] %v1278
                  %v1280 = vld [vmem:[%s878 + $0x640] sm:%s871]
                  %1281 = vst [vmem:[%s879 + $0x320] sm:%s871] %v1280
                  %v1282 = vld [vmem:[%s878 + $0x644] sm:%s871]
                  %1283 = vst [vmem:[%s879 + $0x324] sm:%s871] %v1282
                  %v1284 = vld [vmem:[%s878 + $0x648] sm:%s871]
                  %1285 = vst [vmem:[%s879 + $0x328] sm:%s871] %v1284
                  %v1286 = vld [vmem:[%s878 + $0x64c] sm:%s871]
                  %1287 = vst [vmem:[%s879 + $0x32c] sm:%s871] %v1286
                  %v1288 = vld [vmem:[%s878 + $0x650] sm:%s871]
                  %1289 = vst [vmem:[%s879 + $0x330] sm:%s871] %v1288
                  %v1290 = vld [vmem:[%s878 + $0x654] sm:%s871]
                  %1291 = vst [vmem:[%s879 + $0x334] sm:%s871] %v1290
                  %v1292 = vld [vmem:[%s878 + $0x658] sm:%s871]
                  %1293 = vst [vmem:[%s879 + $0x338] sm:%s871] %v1292
                  %v1294 = vld [vmem:[%s878 + $0x65c] sm:%s871]
                  %1295 = vst [vmem:[%s879 + $0x33c] sm:%s871] %v1294
                  %v1296 = vld [vmem:[%s878 + $0x680] sm:%s871]
                  %1297 = vst [vmem:[%s879 + $0x340] sm:%s871] %v1296
                  %v1298 = vld [vmem:[%s878 + $0x684] sm:%s871]
                  %1299 = vst [vmem:[%s879 + $0x344] sm:%s871] %v1298
                  %v1300 = vld [vmem:[%s878 + $0x688] sm:%s871]
                  %1301 = vst [vmem:[%s879 + $0x348] sm:%s871] %v1300
                  %v1302 = vld [vmem:[%s878 + $0x68c] sm:%s871]
                  %1303 = vst [vmem:[%s879 + $0x34c] sm:%s871] %v1302
                  %v1304 = vld [vmem:[%s878 + $0x690] sm:%s871]
                  %1305 = vst [vmem:[%s879 + $0x350] sm:%s871] %v1304
                  %v1306 = vld [vmem:[%s878 + $0x694] sm:%s871]
                  %1307 = vst [vmem:[%s879 + $0x354] sm:%s871] %v1306
                  %v1308 = vld [vmem:[%s878 + $0x698] sm:%s871]
                  %1309 = vst [vmem:[%s879 + $0x358] sm:%s871] %v1308
                  %v1310 = vld [vmem:[%s878 + $0x69c] sm:%s871]
                  %1311 = vst [vmem:[%s879 + $0x35c] sm:%s871] %v1310
                  %v1312 = vld [vmem:[%s878 + $0x6c0] sm:%s871]
                  %1313 = vst [vmem:[%s879 + $0x360] sm:%s871] %v1312
                  %v1314 = vld [vmem:[%s878 + $0x6c4] sm:%s871]
                  %1315 = vst [vmem:[%s879 + $0x364] sm:%s871] %v1314
                  %v1316 = vld [vmem:[%s878 + $0x6c8] sm:%s871]
                  %1317 = vst [vmem:[%s879 + $0x368] sm:%s871] %v1316
                  %v1318 = vld [vmem:[%s878 + $0x6cc] sm:%s871]
                  %1319 = vst [vmem:[%s879 + $0x36c] sm:%s871] %v1318
                  %v1320 = vld [vmem:[%s878 + $0x6d0] sm:%s871]
                  %1321 = vst [vmem:[%s879 + $0x370] sm:%s871] %v1320
                  %v1322 = vld [vmem:[%s878 + $0x6d4] sm:%s871]
                  %1323 = vst [vmem:[%s879 + $0x374] sm:%s871] %v1322
                  %v1324 = vld [vmem:[%s878 + $0x6d8] sm:%s871]
                  %1325 = vst [vmem:[%s879 + $0x378] sm:%s871] %v1324
                  %v1326 = vld [vmem:[%s878 + $0x6dc] sm:%s871]
                  %1327 = vst [vmem:[%s879 + $0x37c] sm:%s871] %v1326
                  %v1328 = vld [vmem:[%s878 + $0x700] sm:%s871]
                  %1329 = vst [vmem:[%s879 + $0x380] sm:%s871] %v1328
                  %v1330 = vld [vmem:[%s878 + $0x704] sm:%s871]
                  %1331 = vst [vmem:[%s879 + $0x384] sm:%s871] %v1330
                  %v1332 = vld [vmem:[%s878 + $0x708] sm:%s871]
                  %1333 = vst [vmem:[%s879 + $0x388] sm:%s871] %v1332
                  %v1334 = vld [vmem:[%s878 + $0x70c] sm:%s871]
                  %1335 = vst [vmem:[%s879 + $0x38c] sm:%s871] %v1334
                  %v1336 = vld [vmem:[%s878 + $0x710] sm:%s871]
                  %1337 = vst [vmem:[%s879 + $0x390] sm:%s871] %v1336
                  %v1338 = vld [vmem:[%s878 + $0x714] sm:%s871]
                  %1339 = vst [vmem:[%s879 + $0x394] sm:%s871] %v1338
                  %v1340 = vld [vmem:[%s878 + $0x718] sm:%s871]
                  %1341 = vst [vmem:[%s879 + $0x398] sm:%s871] %v1340
                  %v1342 = vld [vmem:[%s878 + $0x71c] sm:%s871]
                  %1343 = vst [vmem:[%s879 + $0x39c] sm:%s871] %v1342
                  %v1344 = vld [vmem:[%s878 + $0x740] sm:%s871]
                  %1345 = vst [vmem:[%s879 + $0x3a0] sm:%s871] %v1344
                  %v1346 = vld [vmem:[%s878 + $0x744] sm:%s871]
                  %1347 = vst [vmem:[%s879 + $0x3a4] sm:%s871] %v1346
                  %v1348 = vld [vmem:[%s878 + $0x748] sm:%s871]
                  %1349 = vst [vmem:[%s879 + $0x3a8] sm:%s871] %v1348
                  %v1350 = vld [vmem:[%s878 + $0x74c] sm:%s871]
                  %1351 = vst [vmem:[%s879 + $0x3ac] sm:%s871] %v1350
                  %v1352 = vld [vmem:[%s878 + $0x750] sm:%s871]
                  %1353 = vst [vmem:[%s879 + $0x3b0] sm:%s871] %v1352
                  %v1354 = vld [vmem:[%s878 + $0x754] sm:%s871]
                  %1355 = vst [vmem:[%s879 + $0x3b4] sm:%s871] %v1354
                  %v1356 = vld [vmem:[%s878 + $0x758] sm:%s871]
                  %1357 = vst [vmem:[%s879 + $0x3b8] sm:%s871] %v1356
                  %v1358 = vld [vmem:[%s878 + $0x75c] sm:%s871]
                  %1359 = vst [vmem:[%s879 + $0x3bc] sm:%s871] %v1358
                  %v1360 = vld [vmem:[%s878 + $0x780] sm:%s871]
                  %1361 = vst [vmem:[%s879 + $0x3c0] sm:%s871] %v1360
                  %v1362 = vld [vmem:[%s878 + $0x784] sm:%s871]
                  %1363 = vst [vmem:[%s879 + $0x3c4] sm:%s871] %v1362
                  %v1364 = vld [vmem:[%s878 + $0x788] sm:%s871]
                  %1365 = vst [vmem:[%s879 + $0x3c8] sm:%s871] %v1364
                  %v1366 = vld [vmem:[%s878 + $0x78c] sm:%s871]
                  %1367 = vst [vmem:[%s879 + $0x3cc] sm:%s871] %v1366
                  %v1368 = vld [vmem:[%s878 + $0x790] sm:%s871]
                  %1369 = vst [vmem:[%s879 + $0x3d0] sm:%s871] %v1368
                  %v1370 = vld [vmem:[%s878 + $0x794] sm:%s871]
                  %1371 = vst [vmem:[%s879 + $0x3d4] sm:%s871] %v1370
                  %v1372 = vld [vmem:[%s878 + $0x798] sm:%s871]
                  %1373 = vst [vmem:[%s879 + $0x3d8] sm:%s871] %v1372
                  %v1374 = vld [vmem:[%s878 + $0x79c] sm:%s871]
                  %1375 = vst [vmem:[%s879 + $0x3dc] sm:%s871] %v1374
                  %v1376 = vld [vmem:[%s878 + $0x7c0] sm:%s871]
                  %1377 = vst [vmem:[%s879 + $0x3e0] sm:%s871] %v1376
                  %v1378 = vld [vmem:[%s878 + $0x7c4] sm:%s871]
                  %1379 = vst [vmem:[%s879 + $0x3e4] sm:%s871] %v1378
                  %v1380 = vld [vmem:[%s878 + $0x7c8] sm:%s871]
                  %1381 = vst [vmem:[%s879 + $0x3e8] sm:%s871] %v1380
                  %v1382 = vld [vmem:[%s878 + $0x7cc] sm:%s871]
                  %1383 = vst [vmem:[%s879 + $0x3ec] sm:%s871] %v1382
                  %v1384 = vld [vmem:[%s878 + $0x7d0] sm:%s871]
                  %1385 = vst [vmem:[%s879 + $0x3f0] sm:%s871] %v1384
                  %v1386 = vld [vmem:[%s878 + $0x7d4] sm:%s871]
                  %1387 = vst [vmem:[%s879 + $0x3f4] sm:%s871] %v1386
                  %v1388 = vld [vmem:[%s878 + $0x7d8] sm:%s871]
                  %1389 = vst [vmem:[%s879 + $0x3f8] sm:%s871] %v1388
                  %v1390 = vld [vmem:[%s878 + $0x7dc] sm:%s871]
                  %1391 = vst [vmem:[%s879 + $0x3fc] sm:%s871] %v1390
                $region87: #{gliclass_biencoder_forward.4} parent=74 // loop_footer
                  %s877 = sadd.s32 1, %s873
                $region88: #{gliclass_biencoder_forward.4} parent=74 // loop_footer_branch
                  %872 = sbr.rel target = $region84
                $region89: #{gliclass_biencoder_forward.4} parent=74 // loop_exit
                  _
              $region75: #{gliclass_biencoder_forward.4} parent=59 // pred_fallthru
                _
            $region60: #{gliclass_biencoder_forward.4} parent=55 // pred_fallthru
              _
            // Predicated region
            $region61: #{gliclass_biencoder_forward.4} parent=55 // pred_check
              _
            $region62: #{gliclass_biencoder_forward.4} parent=55 // pred_check_branch
              %337 = sbr.rel (0) target = $region64
            $region63: #{gliclass_biencoder_forward.4} parent=55 // pred_region
              %s339 = ssub.s32 16, 1
              loop: start=0, step=1, limit=1
              $region65: #{gliclass_biencoder_forward.4} parent=63 // loop_pre_header
                _
              $region66: #{gliclass_biencoder_forward.4} parent=63 // loop_header
                %s341 = sphi 0, %s345
                %p342 = scmp.ge.s32.totalorder %s341, 1
                %s346 = sphi %s331, %s331
                %s347 = sphi %s325, %s325
              $region67: #{gliclass_biencoder_forward.4} parent=63 // loop_header_branch
                %344 = sbr.rel (%p342) target = $region71
              $region68: #{gliclass_biencoder_forward.4} parent=63 // loop_body
                %v348 = vld [vmem:[%s346] sm:%s339]
                %349 = vst [vmem:[%s347] sm:%s339] %v348
                %v350 = vld [vmem:[%s346 + $0x4] sm:%s339]
                %351 = vst [vmem:[%s347 + $0x4] sm:%s339] %v350
                %v352 = vld [vmem:[%s346 + $0x8] sm:%s339]
                %353 = vst [vmem:[%s347 + $0x8] sm:%s339] %v352
                %v354 = vld [vmem:[%s346 + $0xc] sm:%s339]
                %355 = vst [vmem:[%s347 + $0xc] sm:%s339] %v354
                %v356 = vld [vmem:[%s346 + $0x10] sm:%s339]
                %357 = vst [vmem:[%s347 + $0x10] sm:%s339] %v356
                %v358 = vld [vmem:[%s346 + $0x14] sm:%s339]
                %359 = vst [vmem:[%s347 + $0x14] sm:%s339] %v358
                %v360 = vld [vmem:[%s346 + $0x18] sm:%s339]
                %361 = vst [vmem:[%s347 + $0x18] sm:%s339] %v360
                %v362 = vld [vmem:[%s346 + $0x1c] sm:%s339]
                %363 = vst [vmem:[%s347 + $0x1c] sm:%s339] %v362
                %v364 = vld [vmem:[%s346 + $0x40] sm:%s339]
                %365 = vst [vmem:[%s347 + $0x20] sm:%s339] %v364
                %v366 = vld [vmem:[%s346 + $0x44] sm:%s339]
                %367 = vst [vmem:[%s347 + $0x24] sm:%s339] %v366
                %v368 = vld [vmem:[%s346 + $0x48] sm:%s339]
                %369 = vst [vmem:[%s347 + $0x28] sm:%s339] %v368
                %v370 = vld [vmem:[%s346 + $0x4c] sm:%s339]
                %371 = vst [vmem:[%s347 + $0x2c] sm:%s339] %v370
                %v372 = vld [vmem:[%s346 + $0x50] sm:%s339]
                %373 = vst [vmem:[%s347 + $0x30] sm:%s339] %v372
                %v374 = vld [vmem:[%s346 + $0x54] sm:%s339]
                %375 = vst [vmem:[%s347 + $0x34] sm:%s339] %v374
                %v376 = vld [vmem:[%s346 + $0x58] sm:%s339]
                %377 = vst [vmem:[%s347 + $0x38] sm:%s339] %v376
                %v378 = vld [vmem:[%s346 + $0x5c] sm:%s339]
                %379 = vst [vmem:[%s347 + $0x3c] sm:%s339] %v378
                %v380 = vld [vmem:[%s346 + $0x80] sm:%s339]
                %381 = vst [vmem:[%s347 + $0x40] sm:%s339] %v380
                %v382 = vld [vmem:[%s346 + $0x84] sm:%s339]
                %383 = vst [vmem:[%s347 + $0x44] sm:%s339] %v382
                %v384 = vld [vmem:[%s346 + $0x88] sm:%s339]
                %385 = vst [vmem:[%s347 + $0x48] sm:%s339] %v384
                %v386 = vld [vmem:[%s346 + $0x8c] sm:%s339]
                %387 = vst [vmem:[%s347 + $0x4c] sm:%s339] %v386
                %v388 = vld [vmem:[%s346 + $0x90] sm:%s339]
                %389 = vst [vmem:[%s347 + $0x50] sm:%s339] %v388
                %v390 = vld [vmem:[%s346 + $0x94] sm:%s339]
                %391 = vst [vmem:[%s347 + $0x54] sm:%s339] %v390
                %v392 = vld [vmem:[%s346 + $0x98] sm:%s339]
                %393 = vst [vmem:[%s347 + $0x58] sm:%s339] %v392
                %v394 = vld [vmem:[%s346 + $0x9c] sm:%s339]
                %395 = vst [vmem:[%s347 + $0x5c] sm:%s339] %v394
                %v396 = vld [vmem:[%s346 + $0xc0] sm:%s339]
                %397 = vst [vmem:[%s347 + $0x60] sm:%s339] %v396
                %v398 = vld [vmem:[%s346 + $0xc4] sm:%s339]
                %399 = vst [vmem:[%s347 + $0x64] sm:%s339] %v398
                %v400 = vld [vmem:[%s346 + $0xc8] sm:%s339]
                %401 = vst [vmem:[%s347 + $0x68] sm:%s339] %v400
                %v402 = vld [vmem:[%s346 + $0xcc] sm:%s339]
                %403 = vst [vmem:[%s347 + $0x6c] sm:%s339] %v402
                %v404 = vld [vmem:[%s346 + $0xd0] sm:%s339]
                %405 = vst [vmem:[%s347 + $0x70] sm:%s339] %v404
                %v406 = vld [vmem:[%s346 + $0xd4] sm:%s339]
                %407 = vst [vmem:[%s347 + $0x74] sm:%s339] %v406
                %v408 = vld [vmem:[%s346 + $0xd8] sm:%s339]
                %409 = vst [vmem:[%s347 + $0x78] sm:%s339] %v408
                %v410 = vld [vmem:[%s346 + $0xdc] sm:%s339]
                %411 = vst [vmem:[%s347 + $0x7c] sm:%s339] %v410
                %v412 = vld [vmem:[%s346 + $0x100] sm:%s339]
                %413 = vst [vmem:[%s347 + $0x80] sm:%s339] %v412
                %v414 = vld [vmem:[%s346 + $0x104] sm:%s339]
                %415 = vst [vmem:[%s347 + $0x84] sm:%s339] %v414
                %v416 = vld [vmem:[%s346 + $0x108] sm:%s339]
                %417 = vst [vmem:[%s347 + $0x88] sm:%s339] %v416
                %v418 = vld [vmem:[%s346 + $0x10c] sm:%s339]
                %419 = vst [vmem:[%s347 + $0x8c] sm:%s339] %v418
                %v420 = vld [vmem:[%s346 + $0x110] sm:%s339]
                %421 = vst [vmem:[%s347 + $0x90] sm:%s339] %v420
                %v422 = vld [vmem:[%s346 + $0x114] sm:%s339]
                %423 = vst [vmem:[%s347 + $0x94] sm:%s339] %v422
                %v424 = vld [vmem:[%s346 + $0x118] sm:%s339]
                %425 = vst [vmem:[%s347 + $0x98] sm:%s339] %v424
                %v426 = vld [vmem:[%s346 + $0x11c] sm:%s339]
                %427 = vst [vmem:[%s347 + $0x9c] sm:%s339] %v426
                %v428 = vld [vmem:[%s346 + $0x140] sm:%s339]
                %429 = vst [vmem:[%s347 + $0xa0] sm:%s339] %v428
                %v430 = vld [vmem:[%s346 + $0x144] sm:%s339]
                %431 = vst [vmem:[%s347 + $0xa4] sm:%s339] %v430
                %v432 = vld [vmem:[%s346 + $0x148] sm:%s339]
                %433 = vst [vmem:[%s347 + $0xa8] sm:%s339] %v432
                %v434 = vld [vmem:[%s346 + $0x14c] sm:%s339]
                %435 = vst [vmem:[%s347 + $0xac] sm:%s339] %v434
                %v436 = vld [vmem:[%s346 + $0x150] sm:%s339]
                %437 = vst [vmem:[%s347 + $0xb0] sm:%s339] %v436
                %v438 = vld [vmem:[%s346 + $0x154] sm:%s339]
                %439 = vst [vmem:[%s347 + $0xb4] sm:%s339] %v438
                %v440 = vld [vmem:[%s346 + $0x158] sm:%s339]
                %441 = vst [vmem:[%s347 + $0xb8] sm:%s339] %v440
                %v442 = vld [vmem:[%s346 + $0x15c] sm:%s339]
                %443 = vst [vmem:[%s347 + $0xbc] sm:%s339] %v442
                %v444 = vld [vmem:[%s346 + $0x180] sm:%s339]
                %445 = vst [vmem:[%s347 + $0xc0] sm:%s339] %v444
                %v446 = vld [vmem:[%s346 + $0x184] sm:%s339]
                %447 = vst [vmem:[%s347 + $0xc4] sm:%s339] %v446
                %v448 = vld [vmem:[%s346 + $0x188] sm:%s339]
                %449 = vst [vmem:[%s347 + $0xc8] sm:%s339] %v448
                %v450 = vld [vmem:[%s346 + $0x18c] sm:%s339]
                %451 = vst [vmem:[%s347 + $0xcc] sm:%s339] %v450
                %v452 = vld [vmem:[%s346 + $0x190] sm:%s339]
                %453 = vst [vmem:[%s347 + $0xd0] sm:%s339] %v452
                %v454 = vld [vmem:[%s346 + $0x194] sm:%s339]
                %455 = vst [vmem:[%s347 + $0xd4] sm:%s339] %v454
                %v456 = vld [vmem:[%s346 + $0x198] sm:%s339]
                %457 = vst [vmem:[%s347 + $0xd8] sm:%s339] %v456
                %v458 = vld [vmem:[%s346 + $0x19c] sm:%s339]
                %459 = vst [vmem:[%s347 + $0xdc] sm:%s339] %v458
                %v460 = vld [vmem:[%s346 + $0x1c0] sm:%s339]
                %461 = vst [vmem:[%s347 + $0xe0] sm:%s339] %v460
                %v462 = vld [vmem:[%s346 + $0x1c4] sm:%s339]
                %463 = vst [vmem:[%s347 + $0xe4] sm:%s339] %v462
                %v464 = vld [vmem:[%s346 + $0x1c8] sm:%s339]
                %465 = vst [vmem:[%s347 + $0xe8] sm:%s339] %v464
                %v466 = vld [vmem:[%s346 + $0x1cc] sm:%s339]
                %467 = vst [vmem:[%s347 + $0xec] sm:%s339] %v466
                %v468 = vld [vmem:[%s346 + $0x1d0] sm:%s339]
                %469 = vst [vmem:[%s347 + $0xf0] sm:%s339] %v468
                %v470 = vld [vmem:[%s346 + $0x1d4] sm:%s339]
                %471 = vst [vmem:[%s347 + $0xf4] sm:%s339] %v470
                %v472 = vld [vmem:[%s346 + $0x1d8] sm:%s339]
                %473 = vst [vmem:[%s347 + $0xf8] sm:%s339] %v472
                %v474 = vld [vmem:[%s346 + $0x1dc] sm:%s339]
                %475 = vst [vmem:[%s347 + $0xfc] sm:%s339] %v474
                %v476 = vld [vmem:[%s346 + $0x200] sm:%s339]
                %477 = vst [vmem:[%s347 + $0x100] sm:%s339] %v476
                %v478 = vld [vmem:[%s346 + $0x204] sm:%s339]
                %479 = vst [vmem:[%s347 + $0x104] sm:%s339] %v478
                %v480 = vld [vmem:[%s346 + $0x208] sm:%s339]
                %481 = vst [vmem:[%s347 + $0x108] sm:%s339] %v480
                %v482 = vld [vmem:[%s346 + $0x20c] sm:%s339]
                %483 = vst [vmem:[%s347 + $0x10c] sm:%s339] %v482
                %v484 = vld [vmem:[%s346 + $0x210] sm:%s339]
                %485 = vst [vmem:[%s347 + $0x110] sm:%s339] %v484
                %v486 = vld [vmem:[%s346 + $0x214] sm:%s339]
                %487 = vst [vmem:[%s347 + $0x114] sm:%s339] %v486
                %v488 = vld [vmem:[%s346 + $0x218] sm:%s339]
                %489 = vst [vmem:[%s347 + $0x118] sm:%s339] %v488
                %v490 = vld [vmem:[%s346 + $0x21c] sm:%s339]
                %491 = vst [vmem:[%s347 + $0x11c] sm:%s339] %v490
                %v492 = vld [vmem:[%s346 + $0x240] sm:%s339]
                %493 = vst [vmem:[%s347 + $0x120] sm:%s339] %v492
                %v494 = vld [vmem:[%s346 + $0x244] sm:%s339]
                %495 = vst [vmem:[%s347 + $0x124] sm:%s339] %v494
                %v496 = vld [vmem:[%s346 + $0x248] sm:%s339]
                %497 = vst [vmem:[%s347 + $0x128] sm:%s339] %v496
                %v498 = vld [vmem:[%s346 + $0x24c] sm:%s339]
                %499 = vst [vmem:[%s347 + $0x12c] sm:%s339] %v498
                %v500 = vld [vmem:[%s346 + $0x250] sm:%s339]
                %501 = vst [vmem:[%s347 + $0x130] sm:%s339] %v500
                %v502 = vld [vmem:[%s346 + $0x254] sm:%s339]
                %503 = vst [vmem:[%s347 + $0x134] sm:%s339] %v502
                %v504 = vld [vmem:[%s346 + $0x258] sm:%s339]
                %505 = vst [vmem:[%s347 + $0x138] sm:%s339] %v504
                %v506 = vld [vmem:[%s346 + $0x25c] sm:%s339]
                %507 = vst [vmem:[%s347 + $0x13c] sm:%s339] %v506
                %v508 = vld [vmem:[%s346 + $0x280] sm:%s339]
                %509 = vst [vmem:[%s347 + $0x140] sm:%s339] %v508
                %v510 = vld [vmem:[%s346 + $0x284] sm:%s339]
                %511 = vst [vmem:[%s347 + $0x144] sm:%s339] %v510
                %v512 = vld [vmem:[%s346 + $0x288] sm:%s339]
                %513 = vst [vmem:[%s347 + $0x148] sm:%s339] %v512
                %v514 = vld [vmem:[%s346 + $0x28c] sm:%s339]
                %515 = vst [vmem:[%s347 + $0x14c] sm:%s339] %v514
                %v516 = vld [vmem:[%s346 + $0x290] sm:%s339]
                %517 = vst [vmem:[%s347 + $0x150] sm:%s339] %v516
                %v518 = vld [vmem:[%s346 + $0x294] sm:%s339]
                %519 = vst [vmem:[%s347 + $0x154] sm:%s339] %v518
                %v520 = vld [vmem:[%s346 + $0x298] sm:%s339]
                %521 = vst [vmem:[%s347 + $0x158] sm:%s339] %v520
                %v522 = vld [vmem:[%s346 + $0x29c] sm:%s339]
                %523 = vst [vmem:[%s347 + $0x15c] sm:%s339] %v522
                %v524 = vld [vmem:[%s346 + $0x2c0] sm:%s339]
                %525 = vst [vmem:[%s347 + $0x160] sm:%s339] %v524
                %v526 = vld [vmem:[%s346 + $0x2c4] sm:%s339]
                %527 = vst [vmem:[%s347 + $0x164] sm:%s339] %v526
                %v528 = vld [vmem:[%s346 + $0x2c8] sm:%s339]
                %529 = vst [vmem:[%s347 + $0x168] sm:%s339] %v528
                %v530 = vld [vmem:[%s346 + $0x2cc] sm:%s339]
                %531 = vst [vmem:[%s347 + $0x16c] sm:%s339] %v530
                %v532 = vld [vmem:[%s346 + $0x2d0] sm:%s339]
                %533 = vst [vmem:[%s347 + $0x170] sm:%s339] %v532
                %v534 = vld [vmem:[%s346 + $0x2d4] sm:%s339]
                %535 = vst [vmem:[%s347 + $0x174] sm:%s339] %v534
                %v536 = vld [vmem:[%s346 + $0x2d8] sm:%s339]
                %537 = vst [vmem:[%s347 + $0x178] sm:%s339] %v536
                %v538 = vld [vmem:[%s346 + $0x2dc] sm:%s339]
                %539 = vst [vmem:[%s347 + $0x17c] sm:%s339] %v538
                %v540 = vld [vmem:[%s346 + $0x300] sm:%s339]
                %541 = vst [vmem:[%s347 + $0x180] sm:%s339] %v540
                %v542 = vld [vmem:[%s346 + $0x304] sm:%s339]
                %543 = vst [vmem:[%s347 + $0x184] sm:%s339] %v542
                %v544 = vld [vmem:[%s346 + $0x308] sm:%s339]
                %545 = vst [vmem:[%s347 + $0x188] sm:%s339] %v544
                %v546 = vld [vmem:[%s346 + $0x30c] sm:%s339]
                %547 = vst [vmem:[%s347 + $0x18c] sm:%s339] %v546
                %v548 = vld [vmem:[%s346 + $0x310] sm:%s339]
                %549 = vst [vmem:[%s347 + $0x190] sm:%s339] %v548
                %v550 = vld [vmem:[%s346 + $0x314] sm:%s339]
                %551 = vst [vmem:[%s347 + $0x194] sm:%s339] %v550
                %v552 = vld [vmem:[%s346 + $0x318] sm:%s339]
                %553 = vst [vmem:[%s347 + $0x198] sm:%s339] %v552
                %v554 = vld [vmem:[%s346 + $0x31c] sm:%s339]
                %555 = vst [vmem:[%s347 + $0x19c] sm:%s339] %v554
                %v556 = vld [vmem:[%s346 + $0x340] sm:%s339]
                %557 = vst [vmem:[%s347 + $0x1a0] sm:%s339] %v556
                %v558 = vld [vmem:[%s346 + $0x344] sm:%s339]
                %559 = vst [vmem:[%s347 + $0x1a4] sm:%s339] %v558
                %v560 = vld [vmem:[%s346 + $0x348] sm:%s339]
                %561 = vst [vmem:[%s347 + $0x1a8] sm:%s339] %v560
                %v562 = vld [vmem:[%s346 + $0x34c] sm:%s339]
                %563 = vst [vmem:[%s347 + $0x1ac] sm:%s339] %v562
                %v564 = vld [vmem:[%s346 + $0x350] sm:%s339]
                %565 = vst [vmem:[%s347 + $0x1b0] sm:%s339] %v564
                %v566 = vld [vmem:[%s346 + $0x354] sm:%s339]
                %567 = vst [vmem:[%s347 + $0x1b4] sm:%s339] %v566
                %v568 = vld [vmem:[%s346 + $0x358] sm:%s339]
                %569 = vst [vmem:[%s347 + $0x1b8] sm:%s339] %v568
                %v570 = vld [vmem:[%s346 + $0x35c] sm:%s339]
                %571 = vst [vmem:[%s347 + $0x1bc] sm:%s339] %v570
                %v572 = vld [vmem:[%s346 + $0x380] sm:%s339]
                %573 = vst [vmem:[%s347 + $0x1c0] sm:%s339] %v572
                %v574 = vld [vmem:[%s346 + $0x384] sm:%s339]
                %575 = vst [vmem:[%s347 + $0x1c4] sm:%s339] %v574
                %v576 = vld [vmem:[%s346 + $0x388] sm:%s339]
                %577 = vst [vmem:[%s347 + $0x1c8] sm:%s339] %v576
                %v578 = vld [vmem:[%s346 + $0x38c] sm:%s339]
                %579 = vst [vmem:[%s347 + $0x1cc] sm:%s339] %v578
                %v580 = vld [vmem:[%s346 + $0x390] sm:%s339]
                %581 = vst [vmem:[%s347 + $0x1d0] sm:%s339] %v580
                %v582 = vld [vmem:[%s346 + $0x394] sm:%s339]
                %583 = vst [vmem:[%s347 + $0x1d4] sm:%s339] %v582
                %v584 = vld [vmem:[%s346 + $0x398] sm:%s339]
                %585 = vst [vmem:[%s347 + $0x1d8] sm:%s339] %v584
                %v586 = vld [vmem:[%s346 + $0x39c] sm:%s339]
                %587 = vst [vmem:[%s347 + $0x1dc] sm:%s339] %v586
                %v588 = vld [vmem:[%s346 + $0x3c0] sm:%s339]
                %589 = vst [vmem:[%s347 + $0x1e0] sm:%s339] %v588
                %v590 = vld [vmem:[%s346 + $0x3c4] sm:%s339]
                %591 = vst [vmem:[%s347 + $0x1e4] sm:%s339] %v590
                %v592 = vld [vmem:[%s346 + $0x3c8] sm:%s339]
                %593 = vst [vmem:[%s347 + $0x1e8] sm:%s339] %v592
                %v594 = vld [vmem:[%s346 + $0x3cc] sm:%s339]
                %595 = vst [vmem:[%s347 + $0x1ec] sm:%s339] %v594
                %v596 = vld [vmem:[%s346 + $0x3d0] sm:%s339]
                %597 = vst [vmem:[%s347 + $0x1f0] sm:%s339] %v596
                %v598 = vld [vmem:[%s346 + $0x3d4] sm:%s339]
                %599 = vst [vmem:[%s347 + $0x1f4] sm:%s339] %v598
                %v600 = vld [vmem:[%s346 + $0x3d8] sm:%s339]
                %601 = vst [vmem:[%s347 + $0x1f8] sm:%s339] %v600
                %v602 = vld [vmem:[%s346 + $0x3dc] sm:%s339]
                %603 = vst [vmem:[%s347 + $0x1fc] sm:%s339] %v602
                %v604 = vld [vmem:[%s346 + $0x400] sm:%s339]
                %605 = vst [vmem:[%s347 + $0x200] sm:%s339] %v604
                %v606 = vld [vmem:[%s346 + $0x404] sm:%s339]
                %607 = vst [vmem:[%s347 + $0x204] sm:%s339] %v606
                %v608 = vld [vmem:[%s346 + $0x408] sm:%s339]
                %609 = vst [vmem:[%s347 + $0x208] sm:%s339] %v608
                %v610 = vld [vmem:[%s346 + $0x40c] sm:%s339]
                %611 = vst [vmem:[%s347 + $0x20c] sm:%s339] %v610
                %v612 = vld [vmem:[%s346 + $0x410] sm:%s339]
                %613 = vst [vmem:[%s347 + $0x210] sm:%s339] %v612
                %v614 = vld [vmem:[%s346 + $0x414] sm:%s339]
                %615 = vst [vmem:[%s347 + $0x214] sm:%s339] %v614
                %v616 = vld [vmem:[%s346 + $0x418] sm:%s339]
                %617 = vst [vmem:[%s347 + $0x218] sm:%s339] %v616
                %v618 = vld [vmem:[%s346 + $0x41c] sm:%s339]
                %619 = vst [vmem:[%s347 + $0x21c] sm:%s339] %v618
                %v620 = vld [vmem:[%s346 + $0x440] sm:%s339]
                %621 = vst [vmem:[%s347 + $0x220] sm:%s339] %v620
                %v622 = vld [vmem:[%s346 + $0x444] sm:%s339]
                %623 = vst [vmem:[%s347 + $0x224] sm:%s339] %v622
                %v624 = vld [vmem:[%s346 + $0x448] sm:%s339]
                %625 = vst [vmem:[%s347 + $0x228] sm:%s339] %v624
                %v626 = vld [vmem:[%s346 + $0x44c] sm:%s339]
                %627 = vst [vmem:[%s347 + $0x22c] sm:%s339] %v626
                %v628 = vld [vmem:[%s346 + $0x450] sm:%s339]
                %629 = vst [vmem:[%s347 + $0x230] sm:%s339] %v628
                %v630 = vld [vmem:[%s346 + $0x454] sm:%s339]
                %631 = vst [vmem:[%s347 + $0x234] sm:%s339] %v630
                %v632 = vld [vmem:[%s346 + $0x458] sm:%s339]
                %633 = vst [vmem:[%s347 + $0x238] sm:%s339] %v632
                %v634 = vld [vmem:[%s346 + $0x45c] sm:%s339]
                %635 = vst [vmem:[%s347 + $0x23c] sm:%s339] %v634
                %v636 = vld [vmem:[%s346 + $0x480] sm:%s339]
                %637 = vst [vmem:[%s347 + $0x240] sm:%s339] %v636
                %v638 = vld [vmem:[%s346 + $0x484] sm:%s339]
                %639 = vst [vmem:[%s347 + $0x244] sm:%s339] %v638
                %v640 = vld [vmem:[%s346 + $0x488] sm:%s339]
                %641 = vst [vmem:[%s347 + $0x248] sm:%s339] %v640
                %v642 = vld [vmem:[%s346 + $0x48c] sm:%s339]
                %643 = vst [vmem:[%s347 + $0x24c] sm:%s339] %v642
                %v644 = vld [vmem:[%s346 + $0x490] sm:%s339]
                %645 = vst [vmem:[%s347 + $0x250] sm:%s339] %v644
                %v646 = vld [vmem:[%s346 + $0x494] sm:%s339]
                %647 = vst [vmem:[%s347 + $0x254] sm:%s339] %v646
                %v648 = vld [vmem:[%s346 + $0x498] sm:%s339]
                %649 = vst [vmem:[%s347 + $0x258] sm:%s339] %v648
                %v650 = vld [vmem:[%s346 + $0x49c] sm:%s339]
                %651 = vst [vmem:[%s347 + $0x25c] sm:%s339] %v650
                %v652 = vld [vmem:[%s346 + $0x4c0] sm:%s339]
                %653 = vst [vmem:[%s347 + $0x260] sm:%s339] %v652
                %v654 = vld [vmem:[%s346 + $0x4c4] sm:%s339]
                %655 = vst [vmem:[%s347 + $0x264] sm:%s339] %v654
                %v656 = vld [vmem:[%s346 + $0x4c8] sm:%s339]
                %657 = vst [vmem:[%s347 + $0x268] sm:%s339] %v656
                %v658 = vld [vmem:[%s346 + $0x4cc] sm:%s339]
                %659 = vst [vmem:[%s347 + $0x26c] sm:%s339] %v658
                %v660 = vld [vmem:[%s346 + $0x4d0] sm:%s339]
                %661 = vst [vmem:[%s347 + $0x270] sm:%s339] %v660
                %v662 = vld [vmem:[%s346 + $0x4d4] sm:%s339]
                %663 = vst [vmem:[%s347 + $0x274] sm:%s339] %v662
                %v664 = vld [vmem:[%s346 + $0x4d8] sm:%s339]
                %665 = vst [vmem:[%s347 + $0x278] sm:%s339] %v664
                %v666 = vld [vmem:[%s346 + $0x4dc] sm:%s339]
                %667 = vst [vmem:[%s347 + $0x27c] sm:%s339] %v666
                %v668 = vld [vmem:[%s346 + $0x500] sm:%s339]
                %669 = vst [vmem:[%s347 + $0x280] sm:%s339] %v668
                %v670 = vld [vmem:[%s346 + $0x504] sm:%s339]
                %671 = vst [vmem:[%s347 + $0x284] sm:%s339] %v670
                %v672 = vld [vmem:[%s346 + $0x508] sm:%s339]
                %673 = vst [vmem:[%s347 + $0x288] sm:%s339] %v672
                %v674 = vld [vmem:[%s346 + $0x50c] sm:%s339]
                %675 = vst [vmem:[%s347 + $0x28c] sm:%s339] %v674
                %v676 = vld [vmem:[%s346 + $0x510] sm:%s339]
                %677 = vst [vmem:[%s347 + $0x290] sm:%s339] %v676
                %v678 = vld [vmem:[%s346 + $0x514] sm:%s339]
                %679 = vst [vmem:[%s347 + $0x294] sm:%s339] %v678
                %v680 = vld [vmem:[%s346 + $0x518] sm:%s339]
                %681 = vst [vmem:[%s347 + $0x298] sm:%s339] %v680
                %v682 = vld [vmem:[%s346 + $0x51c] sm:%s339]
                %683 = vst [vmem:[%s347 + $0x29c] sm:%s339] %v682
                %v684 = vld [vmem:[%s346 + $0x540] sm:%s339]
                %685 = vst [vmem:[%s347 + $0x2a0] sm:%s339] %v684
                %v686 = vld [vmem:[%s346 + $0x544] sm:%s339]
                %687 = vst [vmem:[%s347 + $0x2a4] sm:%s339] %v686
                %v688 = vld [vmem:[%s346 + $0x548] sm:%s339]
                %689 = vst [vmem:[%s347 + $0x2a8] sm:%s339] %v688
                %v690 = vld [vmem:[%s346 + $0x54c] sm:%s339]
                %691 = vst [vmem:[%s347 + $0x2ac] sm:%s339] %v690
                %v692 = vld [vmem:[%s346 + $0x550] sm:%s339]
                %693 = vst [vmem:[%s347 + $0x2b0] sm:%s339] %v692
                %v694 = vld [vmem:[%s346 + $0x554] sm:%s339]
                %695 = vst [vmem:[%s347 + $0x2b4] sm:%s339] %v694
                %v696 = vld [vmem:[%s346 + $0x558] sm:%s339]
                %697 = vst [vmem:[%s347 + $0x2b8] sm:%s339] %v696
                %v698 = vld [vmem:[%s346 + $0x55c] sm:%s339]
                %699 = vst [vmem:[%s347 + $0x2bc] sm:%s339] %v698
                %v700 = vld [vmem:[%s346 + $0x580] sm:%s339]
                %701 = vst [vmem:[%s347 + $0x2c0] sm:%s339] %v700
                %v702 = vld [vmem:[%s346 + $0x584] sm:%s339]
                %703 = vst [vmem:[%s347 + $0x2c4] sm:%s339] %v702
                %v704 = vld [vmem:[%s346 + $0x588] sm:%s339]
                %705 = vst [vmem:[%s347 + $0x2c8] sm:%s339] %v704
                %v706 = vld [vmem:[%s346 + $0x58c] sm:%s339]
                %707 = vst [vmem:[%s347 + $0x2cc] sm:%s339] %v706
                %v708 = vld [vmem:[%s346 + $0x590] sm:%s339]
                %709 = vst [vmem:[%s347 + $0x2d0] sm:%s339] %v708
                %v710 = vld [vmem:[%s346 + $0x594] sm:%s339]
                %711 = vst [vmem:[%s347 + $0x2d4] sm:%s339] %v710
                %v712 = vld [vmem:[%s346 + $0x598] sm:%s339]
                %713 = vst [vmem:[%s347 + $0x2d8] sm:%s339] %v712
                %v714 = vld [vmem:[%s346 + $0x59c] sm:%s339]
                %715 = vst [vmem:[%s347 + $0x2dc] sm:%s339] %v714
                %v716 = vld [vmem:[%s346 + $0x5c0] sm:%s339]
                %717 = vst [vmem:[%s347 + $0x2e0] sm:%s339] %v716
                %v718 = vld [vmem:[%s346 + $0x5c4] sm:%s339]
                %719 = vst [vmem:[%s347 + $0x2e4] sm:%s339] %v718
                %v720 = vld [vmem:[%s346 + $0x5c8] sm:%s339]
                %721 = vst [vmem:[%s347 + $0x2e8] sm:%s339] %v720
                %v722 = vld [vmem:[%s346 + $0x5cc] sm:%s339]
                %723 = vst [vmem:[%s347 + $0x2ec] sm:%s339] %v722
                %v724 = vld [vmem:[%s346 + $0x5d0] sm:%s339]
                %725 = vst [vmem:[%s347 + $0x2f0] sm:%s339] %v724
                %v726 = vld [vmem:[%s346 + $0x5d4] sm:%s339]
                %727 = vst [vmem:[%s347 + $0x2f4] sm:%s339] %v726
                %v728 = vld [vmem:[%s346 + $0x5d8] sm:%s339]
                %729 = vst [vmem:[%s347 + $0x2f8] sm:%s339] %v728
                %v730 = vld [vmem:[%s346 + $0x5dc] sm:%s339]
                %731 = vst [vmem:[%s347 + $0x2fc] sm:%s339] %v730
                %v732 = vld [vmem:[%s346 + $0x600] sm:%s339]
                %733 = vst [vmem:[%s347 + $0x300] sm:%s339] %v732
                %v734 = vld [vmem:[%s346 + $0x604] sm:%s339]
                %735 = vst [vmem:[%s347 + $0x304] sm:%s339] %v734
                %v736 = vld [vmem:[%s346 + $0x608] sm:%s339]
                %737 = vst [vmem:[%s347 + $0x308] sm:%s339] %v736
                %v738 = vld [vmem:[%s346 + $0x60c] sm:%s339]
                %739 = vst [vmem:[%s347 + $0x30c] sm:%s339] %v738
                %v740 = vld [vmem:[%s346 + $0x610] sm:%s339]
                %741 = vst [vmem:[%s347 + $0x310] sm:%s339] %v740
                %v742 = vld [vmem:[%s346 + $0x614] sm:%s339]
                %743 = vst [vmem:[%s347 + $0x314] sm:%s339] %v742
                %v744 = vld [vmem:[%s346 + $0x618] sm:%s339]
                %745 = vst [vmem:[%s347 + $0x318] sm:%s339] %v744
                %v746 = vld [vmem:[%s346 + $0x61c] sm:%s339]
                %747 = vst [vmem:[%s347 + $0x31c] sm:%s339] %v746
                %v748 = vld [vmem:[%s346 + $0x640] sm:%s339]
                %749 = vst [vmem:[%s347 + $0x320] sm:%s339] %v748
                %v750 = vld [vmem:[%s346 + $0x644] sm:%s339]
                %751 = vst [vmem:[%s347 + $0x324] sm:%s339] %v750
                %v752 = vld [vmem:[%s346 + $0x648] sm:%s339]
                %753 = vst [vmem:[%s347 + $0x328] sm:%s339] %v752
                %v754 = vld [vmem:[%s346 + $0x64c] sm:%s339]
                %755 = vst [vmem:[%s347 + $0x32c] sm:%s339] %v754
                %v756 = vld [vmem:[%s346 + $0x650] sm:%s339]
                %757 = vst [vmem:[%s347 + $0x330] sm:%s339] %v756
                %v758 = vld [vmem:[%s346 + $0x654] sm:%s339]
                %759 = vst [vmem:[%s347 + $0x334] sm:%s339] %v758
                %v760 = vld [vmem:[%s346 + $0x658] sm:%s339]
                %761 = vst [vmem:[%s347 + $0x338] sm:%s339] %v760
                %v762 = vld [vmem:[%s346 + $0x65c] sm:%s339]
                %763 = vst [vmem:[%s347 + $0x33c] sm:%s339] %v762
                %v764 = vld [vmem:[%s346 + $0x680] sm:%s339]
                %765 = vst [vmem:[%s347 + $0x340] sm:%s339] %v764
                %v766 = vld [vmem:[%s346 + $0x684] sm:%s339]
                %767 = vst [vmem:[%s347 + $0x344] sm:%s339] %v766
                %v768 = vld [vmem:[%s346 + $0x688] sm:%s339]
                %769 = vst [vmem:[%s347 + $0x348] sm:%s339] %v768
                %v770 = vld [vmem:[%s346 + $0x68c] sm:%s339]
                %771 = vst [vmem:[%s347 + $0x34c] sm:%s339] %v770
                %v772 = vld [vmem:[%s346 + $0x690] sm:%s339]
                %773 = vst [vmem:[%s347 + $0x350] sm:%s339] %v772
                %v774 = vld [vmem:[%s346 + $0x694] sm:%s339]
                %775 = vst [vmem:[%s347 + $0x354] sm:%s339] %v774
                %v776 = vld [vmem:[%s346 + $0x698] sm:%s339]
                %777 = vst [vmem:[%s347 + $0x358] sm:%s339] %v776
                %v778 = vld [vmem:[%s346 + $0x69c] sm:%s339]
                %779 = vst [vmem:[%s347 + $0x35c] sm:%s339] %v778
                %v780 = vld [vmem:[%s346 + $0x6c0] sm:%s339]
                %781 = vst [vmem:[%s347 + $0x360] sm:%s339] %v780
                %v782 = vld [vmem:[%s346 + $0x6c4] sm:%s339]
                %783 = vst [vmem:[%s347 + $0x364] sm:%s339] %v782
                %v784 = vld [vmem:[%s346 + $0x6c8] sm:%s339]
                %785 = vst [vmem:[%s347 + $0x368] sm:%s339] %v784
                %v786 = vld [vmem:[%s346 + $0x6cc] sm:%s339]
                %787 = vst [vmem:[%s347 + $0x36c] sm:%s339] %v786
                %v788 = vld [vmem:[%s346 + $0x6d0] sm:%s339]
                %789 = vst [vmem:[%s347 + $0x370] sm:%s339] %v788
                %v790 = vld [vmem:[%s346 + $0x6d4] sm:%s339]
                %791 = vst [vmem:[%s347 + $0x374] sm:%s339] %v790
                %v792 = vld [vmem:[%s346 + $0x6d8] sm:%s339]
                %793 = vst [vmem:[%s347 + $0x378] sm:%s339] %v792
                %v794 = vld [vmem:[%s346 + $0x6dc] sm:%s339]
                %795 = vst [vmem:[%s347 + $0x37c] sm:%s339] %v794
                %v796 = vld [vmem:[%s346 + $0x700] sm:%s339]
                %797 = vst [vmem:[%s347 + $0x380] sm:%s339] %v796
                %v798 = vld [vmem:[%s346 + $0x704] sm:%s339]
                %799 = vst [vmem:[%s347 + $0x384] sm:%s339] %v798
                %v800 = vld [vmem:[%s346 + $0x708] sm:%s339]
                %801 = vst [vmem:[%s347 + $0x388] sm:%s339] %v800
                %v802 = vld [vmem:[%s346 + $0x70c] sm:%s339]
                %803 = vst [vmem:[%s347 + $0x38c] sm:%s339] %v802
                %v804 = vld [vmem:[%s346 + $0x710] sm:%s339]
                %805 = vst [vmem:[%s347 + $0x390] sm:%s339] %v804
                %v806 = vld [vmem:[%s346 + $0x714] sm:%s339]
                %807 = vst [vmem:[%s347 + $0x394] sm:%s339] %v806
                %v808 = vld [vmem:[%s346 + $0x718] sm:%s339]
                %809 = vst [vmem:[%s347 + $0x398] sm:%s339] %v808
                %v810 = vld [vmem:[%s346 + $0x71c] sm:%s339]
                %811 = vst [vmem:[%s347 + $0x39c] sm:%s339] %v810
                %v812 = vld [vmem:[%s346 + $0x740] sm:%s339]
                %813 = vst [vmem:[%s347 + $0x3a0] sm:%s339] %v812
                %v814 = vld [vmem:[%s346 + $0x744] sm:%s339]
                %815 = vst [vmem:[%s347 + $0x3a4] sm:%s339] %v814
                %v816 = vld [vmem:[%s346 + $0x748] sm:%s339]
                %817 = vst [vmem:[%s347 + $0x3a8] sm:%s339] %v816
                %v818 = vld [vmem:[%s346 + $0x74c] sm:%s339]
                %819 = vst [vmem:[%s347 + $0x3ac] sm:%s339] %v818
                %v820 = vld [vmem:[%s346 + $0x750] sm:%s339]
                %821 = vst [vmem:[%s347 + $0x3b0] sm:%s339] %v820
                %v822 = vld [vmem:[%s346 + $0x754] sm:%s339]
                %823 = vst [vmem:[%s347 + $0x3b4] sm:%s339] %v822
                %v824 = vld [vmem:[%s346 + $0x758] sm:%s339]
                %825 = vst [vmem:[%s347 + $0x3b8] sm:%s339] %v824
                %v826 = vld [vmem:[%s346 + $0x75c] sm:%s339]
                %827 = vst [vmem:[%s347 + $0x3bc] sm:%s339] %v826
                %v828 = vld [vmem:[%s346 + $0x780] sm:%s339]
                %829 = vst [vmem:[%s347 + $0x3c0] sm:%s339] %v828
                %v830 = vld [vmem:[%s346 + $0x784] sm:%s339]
                %831 = vst [vmem:[%s347 + $0x3c4] sm:%s339] %v830
                %v832 = vld [vmem:[%s346 + $0x788] sm:%s339]
                %833 = vst [vmem:[%s347 + $0x3c8] sm:%s339] %v832
                %v834 = vld [vmem:[%s346 + $0x78c] sm:%s339]
                %835 = vst [vmem:[%s347 + $0x3cc] sm:%s339] %v834
                %v836 = vld [vmem:[%s346 + $0x790] sm:%s339]
                %837 = vst [vmem:[%s347 + $0x3d0] sm:%s339] %v836
                %v838 = vld [vmem:[%s346 + $0x794] sm:%s339]
                %839 = vst [vmem:[%s347 + $0x3d4] sm:%s339] %v838
                %v840 = vld [vmem:[%s346 + $0x798] sm:%s339]
                %841 = vst [vmem:[%s347 + $0x3d8] sm:%s339] %v840
                %v842 = vld [vmem:[%s346 + $0x79c] sm:%s339]
                %843 = vst [vmem:[%s347 + $0x3dc] sm:%s339] %v842
                %v844 = vld [vmem:[%s346 + $0x7c0] sm:%s339]
                %845 = vst [vmem:[%s347 + $0x3e0] sm:%s339] %v844
                %v846 = vld [vmem:[%s346 + $0x7c4] sm:%s339]
                %847 = vst [vmem:[%s347 + $0x3e4] sm:%s339] %v846
                %v848 = vld [vmem:[%s346 + $0x7c8] sm:%s339]
                %849 = vst [vmem:[%s347 + $0x3e8] sm:%s339] %v848
                %v850 = vld [vmem:[%s346 + $0x7cc] sm:%s339]
                %851 = vst [vmem:[%s347 + $0x3ec] sm:%s339] %v850
                %v852 = vld [vmem:[%s346 + $0x7d0] sm:%s339]
                %853 = vst [vmem:[%s347 + $0x3f0] sm:%s339] %v852
                %v854 = vld [vmem:[%s346 + $0x7d4] sm:%s339]
                %855 = vst [vmem:[%s347 + $0x3f4] sm:%s339] %v854
                %v856 = vld [vmem:[%s346 + $0x7d8] sm:%s339]
                %857 = vst [vmem:[%s347 + $0x3f8] sm:%s339] %v856
                %v858 = vld [vmem:[%s346 + $0x7dc] sm:%s339]
                %859 = vst [vmem:[%s347 + $0x3fc] sm:%s339] %v858
              $region69: #{gliclass_biencoder_forward.4} parent=63 // loop_footer
                %s345 = sadd.s32 1, %s341
              $region70: #{gliclass_biencoder_forward.4} parent=63 // loop_footer_branch
                %340 = sbr.rel target = $region66
              $region71: #{gliclass_biencoder_forward.4} parent=63 // loop_exit
                _
            $region64: #{gliclass_biencoder_forward.4} parent=55 // pred_fallthru
              _
          $region56: #{gliclass_biencoder_forward.4} parent=51 // pred_fallthru
            _
          %1392 = vnop
        $region52: #{gliclass_biencoder_forward.4} parent=47 // pred_fallthru
          _
        // Predicated region
        $region90: #{gliclass_biencoder_forward.4} parent=47 // pred_check
          %p1393 = pneg %p76
        $region91: #{gliclass_biencoder_forward.4} parent=47 // pred_check_branch
          %1395 = sbr.rel (%p1393) target = $region93
        $region92: #{gliclass_biencoder_forward.4} parent=47 // pred_region
          %s1396 = smul.u32 4, %s23
          %p1397 = scmp.lt.s32.totalorder %s1396, 15
          %s1398 = scalar_select %p1397, %s1396, 15
          %s1399 = smul.addr %s1398, 8
          %s1400 = scalar_lea.vmem %s1, %s1399
          %s1401 = smul.u32 4, %s23
        $region93: #{gliclass_biencoder_forward.4} parent=47 // pred_fallthru
          _
      $region48: #{gliclass_biencoder_forward.4} parent=5 // pred_fallthru
        _
      %p1402 = scmp.le.s32.totalorder 1, %s16
      %p1403 = scmp.lt.s32.totalorder %s16, 9
      %p1404 = pnand %p1402, %p1403
      %p1405 = pneg %p1404
      // Predicated region
      $region94: #{gliclass_biencoder_forward.4} parent=5 // pred_check
        _
      $region95: #{gliclass_biencoder_forward.4} parent=5 // pred_check_branch
        %1407 = sbr.rel (%p1404) target = $region97
      $region96: #{gliclass_biencoder_forward.4} parent=5 // pred_region
        %s1408 = ssub.s32 %s16, 1
        %s1409 = sand.u32 %s43, 1
        %s1410 = sand.u32 %s43, 1
        %s1411 = smul.addr %s1410, 1024
        %s1412 = scalar_lea.vmem [#allocation3], %s1411
        // Predicated region
        $region98: #{gliclass_biencoder_forward.4} parent=96 // pred_check
          %p1413 = pneg %p56
        $region99: #{gliclass_biencoder_forward.4} parent=96 // pred_check_branch
          %1415 = sbr.rel (%p1413) target = $region101
        $region100: #{gliclass_biencoder_forward.4} parent=96 // pred_region
          _
        $region101: #{gliclass_biencoder_forward.4} parent=96 // pred_fallthru
          _
        %s1416 = sand.u32 %s43, 1
        %s1417 = sand.u32 %s43, 1
        %s1418 = smul.addr %s1417, 1024
        %s1419 = scalar_lea.vmem [#allocation3], %s1418
        %p1420 = pneg %p56
        %p1421 = pneg %p53
        %s1422 = smul.u32 4, %s25
        %p1423 = scmp.lt.s32.totalorder %s1422, 15
        %s1424 = scalar_select %p1423, %s1422, 15
        %s1425 = smul.addr %s1424, 8
        %s1426 = scalar_lea.vmem %s1, %s1425
        %p1427 = pneg %p82
        %p1428 = pneg %p79
        %p1429 = pneg %p103
        %p1430 = pneg %p100
        %p1431 = pneg %p124
        %p1432 = pneg %p121
        %p1433 = pneg %p145
        %p1434 = pneg %p142
        %p1435 = pneg %p166
        %p1436 = pneg %p163
        %p1437 = pneg %p187
        %p1438 = pneg %p184
        %p1439 = pneg %p208
        %p1440 = pneg %p205
        %p1441 = pneg %p229
        %p1442 = pneg %p226
        %p1443 = pneg %p250
        %p1444 = pneg %p247
        %p1445 = pneg %p276
        %p1446 = pneg %p273
        %s1447 = smul.u32 4, %s25
        %p1448 = scmp.lt.s32.totalorder %s1447, 15
        %s1449 = scalar_select %p1448, %s1447, 15
        %s1450 = smul.addr %s1449, 8
        %s1451 = scalar_lea.vmem %s10, %s1450
        %s1452 = smul.u32 32, %s25
        %s1453 = smul.u32 8, %s26
        %s1454 = smul.u32 4, %s25
        %p1455 = scmp.lt.s32.totalorder %s1454, 15
        %s1456 = scalar_select %p1455, %s1454, 15
        %s1457 = smul.addr %s1456, 8
        %s1458 = scalar_lea.vmem %s1, %s1457
        %s1459 = smul.u32 4, %s25
        %s1460 = smul.u32 4, %s25
        %p1461 = scmp.lt.s32.totalorder %s1460, 15
        %s1462 = scalar_select %p1461, %s1460, 15
        %s1463 = smul.addr %s1462, 8
        %s1464 = scalar_lea.vmem %s10, %s1463
        %s1465 = smul.u32 4, %s25
        %p1467 = scmp.eq.s32.totalorder %s26, 0
        // Predicated region
        $region102: #{gliclass_biencoder_forward.4} parent=96 // pred_check
          %p1468 = pneg %p1467
        $region103: #{gliclass_biencoder_forward.4} parent=96 // pred_check_branch
          %1470 = sbr.rel (%p1468) target = $region105
        $region104: #{gliclass_biencoder_forward.4} parent=96 // pred_region
          %1471 = vst [vmem:[#allocation2] sm:$0xff] 0.0
          %1472 = vst [vmem:[#allocation2 + $0x8] sm:$0xff] 0.0
          %1473 = vst [vmem:[#allocation2 + $0x10] sm:$0xff] 0.0
          %1474 = vst [vmem:[#allocation2 + $0x18] sm:$0xff] 0.0
        $region105: #{gliclass_biencoder_forward.4} parent=96 // pred_fallthru
          _
        %v1475 = vld [vmem:[%s1412] sm:$0xf]
        %v1476 = vld [vmem:[%s1412 + $0x4] sm:$0xf]
        %v1477 = vld [vmem:[%s1412 + $0x8] sm:$0xf]
        %v1478 = vld [vmem:[%s1412 + $0xc] sm:$0xf]
        %v1479 = vld [vmem:[%s1412 + $0x10] sm:$0xf]
        %v1480 = vld [vmem:[%s1412 + $0x14] sm:$0xf]
        %v1481 = vld [vmem:[%s1412 + $0x18] sm:$0xf]
        %v1482 = vld [vmem:[%s1412 + $0x1c] sm:$0xf]
        %v1483 = vld [vmem:[%s1412 + $0x20] sm:$0xf]
        %v1484 = vld [vmem:[%s1412 + $0x24] sm:$0xf]
        %v1485 = vld [vmem:[%s1412 + $0x28] sm:$0xf]
        %v1486 = vld [vmem:[%s1412 + $0x2c] sm:$0xf]
        %v1487 = vld [vmem:[%s1412 + $0x30] sm:$0xf]
        %v1488 = vld [vmem:[%s1412 + $0x34] sm:$0xf]
        %v1489 = vld [vmem:[%s1412 + $0x38] sm:$0xf]
        %v1490 = vld [vmem:[%s1412 + $0x3c] sm:$0xf]
        %v1491 = vld [vmem:[%s1412 + $0x40] sm:$0xf]
        %v1492 = vld [vmem:[%s1412 + $0x44] sm:$0xf]
        %v1493 = vld [vmem:[%s1412 + $0x48] sm:$0xf]
        %v1494 = vld [vmem:[%s1412 + $0x4c] sm:$0xf]
        %v1495 = vld [vmem:[%s1412 + $0x50] sm:$0xf]
        %v1496 = vld [vmem:[%s1412 + $0x54] sm:$0xf]
        %v1497 = vld [vmem:[%s1412 + $0x58] sm:$0xf]
        %v1498 = vld [vmem:[%s1412 + $0x5c] sm:$0xf]
        %v1499 = vld [vmem:[%s1412 + $0x60] sm:$0xf]
        %v1500 = vld [vmem:[%s1412 + $0x64] sm:$0xf]
        %v1501 = vld [vmem:[%s1412 + $0x68] sm:$0xf]
        %v1502 = vld [vmem:[%s1412 + $0x6c] sm:$0xf]
        %v1503 = vld [vmem:[%s1412 + $0x70] sm:$0xf]
        %v1504 = vld [vmem:[%s1412 + $0x74] sm:$0xf]
        %v1505 = vld [vmem:[%s1412 + $0x78] sm:$0xf]
        %v1506 = vld [vmem:[%s1412 + $0x7c] sm:$0xf]
        %v1507 = vld [vmem:[%s1412 + $0x80] sm:$0xf]
        %v1508 = vld [vmem:[%s1412 + $0x84] sm:$0xf]
        %v1509 = vld [vmem:[%s1412 + $0x88] sm:$0xf]
        %v1510 = vld [vmem:[%s1412 + $0x8c] sm:$0xf]
        %v1511 = vld [vmem:[%s1412 + $0x90] sm:$0xf]
        %v1512 = vld [vmem:[%s1412 + $0x94] sm:$0xf]
        %v1513 = vld [vmem:[%s1412 + $0x98] sm:$0xf]
        %v1514 = vld [vmem:[%s1412 + $0x9c] sm:$0xf]
        %v1515 = vld [vmem:[%s1412 + $0xa0] sm:$0xf]
        %v1516 = vld [vmem:[%s1412 + $0xa4] sm:$0xf]
        %v1517 = vld [vmem:[%s1412 + $0xa8] sm:$0xf]
        %v1518 = vld [vmem:[%s1412 + $0xac] sm:$0xf]
        %v1519 = vld [vmem:[%s1412 + $0xb0] sm:$0xf]
        %v1520 = vld [vmem:[%s1412 + $0xb4] sm:$0xf]
        %v1521 = vld [vmem:[%s1412 + $0xb8] sm:$0xf]
        %v1522 = vld [vmem:[%s1412 + $0xbc] sm:$0xf]
        %v1523 = vld [vmem:[%s1412 + $0xc0] sm:$0xf]
        %v1524 = vld [vmem:[%s1412 + $0xc4] sm:$0xf]
        %v1525 = vld [vmem:[%s1412 + $0xc8] sm:$0xf]
        %v1526 = vld [vmem:[%s1412 + $0xcc] sm:$0xf]
        %v1527 = vld [vmem:[%s1412 + $0xd0] sm:$0xf]
        %v1528 = vld [vmem:[%s1412 + $0xd4] sm:$0xf]
        %v1529 = vld [vmem:[%s1412 + $0xd8] sm:$0xf]
        %v1530 = vld [vmem:[%s1412 + $0xdc] sm:$0xf]
        %v1531 = vld [vmem:[%s1412 + $0xe0] sm:$0xf]
        %v1532 = vld [vmem:[%s1412 + $0xe4] sm:$0xf]
        %v1533 = vld [vmem:[%s1412 + $0xe8] sm:$0xf]
        %v1534 = vld [vmem:[%s1412 + $0xec] sm:$0xf]
        %v1535 = vld [vmem:[%s1412 + $0xf0] sm:$0xf]
        %v1536 = vld [vmem:[%s1412 + $0xf4] sm:$0xf]
        %v1537 = vld [vmem:[%s1412 + $0xf8] sm:$0xf]
        %v1538 = vld [vmem:[%s1412 + $0xfc] sm:$0xf]
        %v1539 = vld [vmem:[%s1412 + $0x100] sm:$0xf]
        %v1540 = vld [vmem:[%s1412 + $0x104] sm:$0xf]
        %v1541 = vld [vmem:[%s1412 + $0x108] sm:$0xf]
        %v1542 = vld [vmem:[%s1412 + $0x10c] sm:$0xf]
        %v1543 = vld [vmem:[%s1412 + $0x110] sm:$0xf]
        %v1544 = vld [vmem:[%s1412 + $0x114] sm:$0xf]
        %v1545 = vld [vmem:[%s1412 + $0x118] sm:$0xf]
        %v1546 = vld [vmem:[%s1412 + $0x11c] sm:$0xf]
        %v1547 = vld [vmem:[%s1412 + $0x120] sm:$0xf]
        %v1548 = vld [vmem:[%s1412 + $0x124] sm:$0xf]
        %v1549 = vld [vmem:[%s1412 + $0x128] sm:$0xf]
        %v1550 = vld [vmem:[%s1412 + $0x12c] sm:$0xf]
        %v1551 = vld [vmem:[%s1412 + $0x130] sm:$0xf]
        %v1552 = vld [vmem:[%s1412 + $0x134] sm:$0xf]
        %v1553 = vld [vmem:[%s1412 + $0x138] sm:$0xf]
        %v1554 = vld [vmem:[%s1412 + $0x13c] sm:$0xf]
        %v1555 = vld [vmem:[%s1412 + $0x140] sm:$0xf]
        %v1556 = vld [vmem:[%s1412 + $0x144] sm:$0xf]
        %v1557 = vld [vmem:[%s1412 + $0x148] sm:$0xf]
        %v1558 = vld [vmem:[%s1412 + $0x14c] sm:$0xf]
        %v1559 = vld [vmem:[%s1412 + $0x150] sm:$0xf]
        %v1560 = vld [vmem:[%s1412 + $0x154] sm:$0xf]
        %v1561 = vld [vmem:[%s1412 + $0x158] sm:$0xf]
        %v1562 = vld [vmem:[%s1412 + $0x15c] sm:$0xf]
        %v1563 = vld [vmem:[%s1412 + $0x160] sm:$0xf]
        %v1564 = vld [vmem:[%s1412 + $0x164] sm:$0xf]
        %v1565 = vld [vmem:[%s1412 + $0x168] sm:$0xf]
        %v1566 = vld [vmem:[%s1412 + $0x16c] sm:$0xf]
        %v1567 = vld [vmem:[%s1412 + $0x170] sm:$0xf]
        %v1568 = vld [vmem:[%s1412 + $0x174] sm:$0xf]
        %v1569 = vld [vmem:[%s1412 + $0x178] sm:$0xf]
        %v1570 = vld [vmem:[%s1412 + $0x17c] sm:$0xf]
        %v1571 = vld [vmem:[%s1412 + $0x180] sm:$0xf]
        %v1572 = vld [vmem:[%s1412 + $0x184] sm:$0xf]
        %v1573 = vld [vmem:[%s1412 + $0x188] sm:$0xf]
        %v1574 = vld [vmem:[%s1412 + $0x18c] sm:$0xf]
        %v1575 = vld [vmem:[%s1412 + $0x190] sm:$0xf]
        %v1576 = vld [vmem:[%s1412 + $0x194] sm:$0xf]
        %v1577 = vld [vmem:[%s1412 + $0x198] sm:$0xf]
        %v1578 = vld [vmem:[%s1412 + $0x19c] sm:$0xf]
        %v1579 = vld [vmem:[%s1412 + $0x1a0] sm:$0xf]
        %v1580 = vld [vmem:[%s1412 + $0x1a4] sm:$0xf]
        %v1581 = vld [vmem:[%s1412 + $0x1a8] sm:$0xf]
        %v1582 = vld [vmem:[%s1412 + $0x1ac] sm:$0xf]
        %v1583 = vld [vmem:[%s1412 + $0x1b0] sm:$0xf]
        %v1584 = vld [vmem:[%s1412 + $0x1b4] sm:$0xf]
        %v1585 = vld [vmem:[%s1412 + $0x1b8] sm:$0xf]
        %v1586 = vld [vmem:[%s1412 + $0x1bc] sm:$0xf]
        %v1587 = vld [vmem:[%s1412 + $0x1c0] sm:$0xf]
        %v1588 = vld [vmem:[%s1412 + $0x1c4] sm:$0xf]
        %v1589 = vld [vmem:[%s1412 + $0x1c8] sm:$0xf]
        %v1590 = vld [vmem:[%s1412 + $0x1cc] sm:$0xf]
        %v1591 = vld [vmem:[%s1412 + $0x1d0] sm:$0xf]
        %v1592 = vld [vmem:[%s1412 + $0x1d4] sm:$0xf]
        %v1593 = vld [vmem:[%s1412 + $0x1d8] sm:$0xf]
        %v1594 = vld [vmem:[%s1412 + $0x1dc] sm:$0xf]
        %v1595 = vld [vmem:[%s1412 + $0x1e0] sm:$0xf]
        %v1596 = vld [vmem:[%s1412 + $0x1e4] sm:$0xf]
        %v1597 = vld [vmem:[%s1412 + $0x1e8] sm:$0xf]
        %v1598 = vld [vmem:[%s1412 + $0x1ec] sm:$0xf]
        %v1599 = vld [vmem:[%s1412 + $0x1f0] sm:$0xf]
        %v1600 = vld [vmem:[%s1412 + $0x1f4] sm:$0xf]
        %v1601 = vld [vmem:[%s1412 + $0x1f8] sm:$0xf]
        %v1602 = vld [vmem:[%s1412 + $0x1fc] sm:$0xf]
        %v1603 = vld [vmem:[%s1412 + $0x200] sm:$0xf]
        %v1604 = vld [vmem:[%s1412 + $0x204] sm:$0xf]
        %v1605 = vld [vmem:[%s1412 + $0x208] sm:$0xf]
        %v1606 = vld [vmem:[%s1412 + $0x20c] sm:$0xf]
        %v1607 = vld [vmem:[%s1412 + $0x210] sm:$0xf]
        %v1608 = vld [vmem:[%s1412 + $0x214] sm:$0xf]
        %v1609 = vld [vmem:[%s1412 + $0x218] sm:$0xf]
        %v1610 = vld [vmem:[%s1412 + $0x21c] sm:$0xf]
        %v1611 = vld [vmem:[%s1412 + $0x220] sm:$0xf]
        %v1612 = vld [vmem:[%s1412 + $0x224] sm:$0xf]
        %v1613 = vld [vmem:[%s1412 + $0x228] sm:$0xf]
        %v1614 = vld [vmem:[%s1412 + $0x22c] sm:$0xf]
        %v1615 = vld [vmem:[%s1412 + $0x230] sm:$0xf]
        %v1616 = vld [vmem:[%s1412 + $0x234] sm:$0xf]
        %v1617 = vld [vmem:[%s1412 + $0x238] sm:$0xf]
        %v1618 = vld [vmem:[%s1412 + $0x23c] sm:$0xf]
        %v1619 = vld [vmem:[%s1412 + $0x240] sm:$0xf]
        %v1620 = vld [vmem:[%s1412 + $0x244] sm:$0xf]
        %v1621 = vld [vmem:[%s1412 + $0x248] sm:$0xf]
        %v1622 = vld [vmem:[%s1412 + $0x24c] sm:$0xf]
        %v1623 = vld [vmem:[%s1412 + $0x250] sm:$0xf]
        %v1624 = vld [vmem:[%s1412 + $0x254] sm:$0xf]
        %v1625 = vld [vmem:[%s1412 + $0x258] sm:$0xf]
        %v1626 = vld [vmem:[%s1412 + $0x25c] sm:$0xf]
        %v1627 = vld [vmem:[%s1412 + $0x260] sm:$0xf]
        %v1628 = vld [vmem:[%s1412 + $0x264] sm:$0xf]
        %v1629 = vld [vmem:[%s1412 + $0x268] sm:$0xf]
        %v1630 = vld [vmem:[%s1412 + $0x26c] sm:$0xf]
        %v1631 = vld [vmem:[%s1412 + $0x270] sm:$0xf]
        %v1632 = vld [vmem:[%s1412 + $0x274] sm:$0xf]
        %v1633 = vld [vmem:[%s1412 + $0x278] sm:$0xf]
        %v1634 = vld [vmem:[%s1412 + $0x27c] sm:$0xf]
        %v1635 = vld [vmem:[%s1412 + $0x280] sm:$0xf]
        %v1636 = vld [vmem:[%s1412 + $0x284] sm:$0xf]
        %v1637 = vld [vmem:[%s1412 + $0x288] sm:$0xf]
        %v1638 = vld [vmem:[%s1412 + $0x28c] sm:$0xf]
        %v1639 = vld [vmem:[%s1412 + $0x290] sm:$0xf]
        %v1640 = vld [vmem:[%s1412 + $0x294] sm:$0xf]
        %v1641 = vld [vmem:[%s1412 + $0x298] sm:$0xf]
        %v1642 = vld [vmem:[%s1412 + $0x29c] sm:$0xf]
        %v1643 = vld [vmem:[%s1412 + $0x2a0] sm:$0xf]
        %v1644 = vld [vmem:[%s1412 + $0x2a4] sm:$0xf]
        %v1645 = vld [vmem:[%s1412 + $0x2a8] sm:$0xf]
        %v1646 = vld [vmem:[%s1412 + $0x2ac] sm:$0xf]
        %v1647 = vld [vmem:[%s1412 + $0x2b0] sm:$0xf]
        %v1648 = vld [vmem:[%s1412 + $0x2b4] sm:$0xf]
        %v1649 = vld [vmem:[%s1412 + $0x2b8] sm:$0xf]
        %v1650 = vld [vmem:[%s1412 + $0x2bc] sm:$0xf]
        %v1651 = vld [vmem:[%s1412 + $0x2c0] sm:$0xf]
        %v1652 = vld [vmem:[%s1412 + $0x2c4] sm:$0xf]
        %v1653 = vld [vmem:[%s1412 + $0x2c8] sm:$0xf]
        %v1654 = vld [vmem:[%s1412 + $0x2cc] sm:$0xf]
        %v1655 = vld [vmem:[%s1412 + $0x2d0] sm:$0xf]
        %v1656 = vld [vmem:[%s1412 + $0x2d4] sm:$0xf]
        %v1657 = vld [vmem:[%s1412 + $0x2d8] sm:$0xf]
        %v1658 = vld [vmem:[%s1412 + $0x2dc] sm:$0xf]
        %v1659 = vld [vmem:[%s1412 + $0x2e0] sm:$0xf]
        %v1660 = vld [vmem:[%s1412 + $0x2e4] sm:$0xf]
        %v1661 = vld [vmem:[%s1412 + $0x2e8] sm:$0xf]
        %v1662 = vld [vmem:[%s1412 + $0x2ec] sm:$0xf]
        %v1663 = vld [vmem:[%s1412 + $0x2f0] sm:$0xf]
        %v1664 = vld [vmem:[%s1412 + $0x2f4] sm:$0xf]
        %v1665 = vld [vmem:[%s1412 + $0x2f8] sm:$0xf]
        %v1666 = vld [vmem:[%s1412 + $0x2fc] sm:$0xf]
        %v1667 = vld [vmem:[%s1412 + $0x300] sm:$0xf]
        %v1668 = vld [vmem:[%s1412 + $0x304] sm:$0xf]
        %v1669 = vld [vmem:[%s1412 + $0x308] sm:$0xf]
        %v1670 = vld [vmem:[%s1412 + $0x30c] sm:$0xf]
        %v1671 = vld [vmem:[%s1412 + $0x310] sm:$0xf]
        %v1672 = vld [vmem:[%s1412 + $0x314] sm:$0xf]
        %v1673 = vld [vmem:[%s1412 + $0x318] sm:$0xf]
        %v1674 = vld [vmem:[%s1412 + $0x31c] sm:$0xf]
        %v1675 = vld [vmem:[%s1412 + $0x320] sm:$0xf]
        %v1676 = vld [vmem:[%s1412 + $0x324] sm:$0xf]
        %v1677 = vld [vmem:[%s1412 + $0x328] sm:$0xf]
        %v1678 = vld [vmem:[%s1412 + $0x32c] sm:$0xf]
        %v1679 = vld [vmem:[%s1412 + $0x330] sm:$0xf]
        %v1680 = vld [vmem:[%s1412 + $0x334] sm:$0xf]
        %v1681 = vld [vmem:[%s1412 + $0x338] sm:$0xf]
        %v1682 = vld [vmem:[%s1412 + $0x33c] sm:$0xf]
        %v1683 = vld [vmem:[%s1412 + $0x340] sm:$0xf]
        %v1684 = vld [vmem:[%s1412 + $0x344] sm:$0xf]
        %v1685 = vld [vmem:[%s1412 + $0x348] sm:$0xf]
        %v1686 = vld [vmem:[%s1412 + $0x34c] sm:$0xf]
        %v1687 = vld [vmem:[%s1412 + $0x350] sm:$0xf]
        %v1688 = vld [vmem:[%s1412 + $0x354] sm:$0xf]
        %v1689 = vld [vmem:[%s1412 + $0x358] sm:$0xf]
        %v1690 = vld [vmem:[%s1412 + $0x35c] sm:$0xf]
        %v1691 = vld [vmem:[%s1412 + $0x360] sm:$0xf]
        %v1692 = vld [vmem:[%s1412 + $0x364] sm:$0xf]
        %v1693 = vld [vmem:[%s1412 + $0x368] sm:$0xf]
        %v1694 = vld [vmem:[%s1412 + $0x36c] sm:$0xf]
        %v1695 = vld [vmem:[%s1412 + $0x370] sm:$0xf]
        %v1696 = vld [vmem:[%s1412 + $0x374] sm:$0xf]
        %v1697 = vld [vmem:[%s1412 + $0x378] sm:$0xf]
        %v1698 = vld [vmem:[%s1412 + $0x37c] sm:$0xf]
        %v1699 = vld [vmem:[%s1412 + $0x380] sm:$0xf]
        %v1700 = vld [vmem:[%s1412 + $0x384] sm:$0xf]
        %v1701 = vld [vmem:[%s1412 + $0x388] sm:$0xf]
        %v1702 = vld [vmem:[%s1412 + $0x38c] sm:$0xf]
        %v1703 = vld [vmem:[%s1412 + $0x390] sm:$0xf]
        %v1704 = vld [vmem:[%s1412 + $0x394] sm:$0xf]
        %v1705 = vld [vmem:[%s1412 + $0x398] sm:$0xf]
        %v1706 = vld [vmem:[%s1412 + $0x39c] sm:$0xf]
        %v1707 = vld [vmem:[%s1412 + $0x3a0] sm:$0xf]
        %v1708 = vld [vmem:[%s1412 + $0x3a4] sm:$0xf]
        %v1709 = vld [vmem:[%s1412 + $0x3a8] sm:$0xf]
        %v1710 = vld [vmem:[%s1412 + $0x3ac] sm:$0xf]
        %v1711 = vld [vmem:[%s1412 + $0x3b0] sm:$0xf]
        %v1712 = vld [vmem:[%s1412 + $0x3b4] sm:$0xf]
        %v1713 = vld [vmem:[%s1412 + $0x3b8] sm:$0xf]
        %v1714 = vld [vmem:[%s1412 + $0x3bc] sm:$0xf]
        %v1715 = vld [vmem:[%s1412 + $0x3c0] sm:$0xf]
        %v1716 = vld [vmem:[%s1412 + $0x3c4] sm:$0xf]
        %v1717 = vld [vmem:[%s1412 + $0x3c8] sm:$0xf]
        %v1718 = vld [vmem:[%s1412 + $0x3cc] sm:$0xf]
        %v1719 = vld [vmem:[%s1412 + $0x3d0] sm:$0xf]
        %v1720 = vld [vmem:[%s1412 + $0x3d4] sm:$0xf]
        %v1721 = vld [vmem:[%s1412 + $0x3d8] sm:$0xf]
        %v1722 = vld [vmem:[%s1412 + $0x3dc] sm:$0xf]
        %v1723 = vld [vmem:[%s1412 + $0x3e0] sm:$0xf]
        %v1724 = vld [vmem:[%s1412 + $0x3e4] sm:$0xf]
        %v1725 = vld [vmem:[%s1412 + $0x3e8] sm:$0xf]
        %v1726 = vld [vmem:[%s1412 + $0x3ec] sm:$0xf]
        %v1727 = vld [vmem:[%s1412 + $0x3f0] sm:$0xf]
        %v1728 = vld [vmem:[%s1412 + $0x3f4] sm:$0xf]
        %v1729 = vld [vmem:[%s1412 + $0x3f8] sm:$0xf]
        %v1730 = vld [vmem:[%s1412 + $0x3fc] sm:$0xf]
        %v1731 = vld [vmem:[%s2] sm:$0xf]
        %v1732 = vld [vmem:[%s2 + $0x4] sm:$0xf]
        %v1733 = vld [vmem:[%s2 + $0x8] sm:$0xf]
        %v1734 = vld [vmem:[%s2 + $0xc] sm:$0xf]
        %v1735 = vld [vmem:[%s2 + $0x10] sm:$0xf]
        %v1736 = vld [vmem:[%s2 + $0x14] sm:$0xf]
        %v1737 = vld [vmem:[%s2 + $0x18] sm:$0xf]
        %v1738 = vld [vmem:[%s2 + $0x1c] sm:$0xf]
        %v1739 = vld [vmem:[%s2 + $0x20] sm:$0xf]
        %v1740 = vld [vmem:[%s2 + $0x24] sm:$0xf]
        %v1741 = vld [vmem:[%s2 + $0x28] sm:$0xf]
        %v1742 = vld [vmem:[%s2 + $0x2c] sm:$0xf]
        %v1743 = vld [vmem:[%s2 + $0x30] sm:$0xf]
        %v1744 = vld [vmem:[%s2 + $0x34] sm:$0xf]
        %v1745 = vld [vmem:[%s2 + $0x38] sm:$0xf]
        %v1746 = vld [vmem:[%s2 + $0x3c] sm:$0xf]
        %v1747 = vld [vmem:[%s3] sm:$0x1]
        %v1749 = vlaneseq
        %v1750 = vshrl.u32 %v1749, 7
        %v1751 = vsub.s32 0, %v1750
        %v1752 = vrot.slane %v1747, %v1751
        %v2010 = vunpack.c.l.b16 %v1475
        %v2011 = vunpack.c.l.b16 %v1476
        %v2012 = vunpack.c.l.b16 %v1477
        %v2013 = vunpack.c.l.b16 %v1478
        %v2014 = vunpack.c.l.b16 %v1479
        %v2015 = vunpack.c.l.b16 %v1480
        %v2016 = vunpack.c.l.b16 %v1481
        %v2017 = vunpack.c.l.b16 %v1482
        %v2018 = vunpack.c.l.b16 %v1483
        %v2019 = vunpack.c.l.b16 %v1484
        %v2020 = vunpack.c.l.b16 %v1485
        %v2021 = vunpack.c.l.b16 %v1486
        %v2022 = vunpack.c.l.b16 %v1487
        %v2023 = vunpack.c.l.b16 %v1488
        %v2024 = vunpack.c.l.b16 %v1489
        %v2025 = vunpack.c.l.b16 %v1490
        %v2026 = vunpack.c.l.b16 %v1491
        %v2027 = vunpack.c.l.b16 %v1492
        %v2028 = vunpack.c.l.b16 %v1493
        %v2029 = vunpack.c.l.b16 %v1494
        %v2030 = vunpack.c.l.b16 %v1495
        %v2031 = vunpack.c.l.b16 %v1496
        %v2032 = vunpack.c.l.b16 %v1497
        %v2033 = vunpack.c.l.b16 %v1498
        %v2034 = vunpack.c.l.b16 %v1499
        %v2035 = vunpack.c.l.b16 %v1500
        %v2036 = vunpack.c.l.b16 %v1501
        %v2037 = vunpack.c.l.b16 %v1502
        %v2038 = vunpack.c.l.b16 %v1503
        %v2039 = vunpack.c.l.b16 %v1504
        %v2040 = vunpack.c.l.b16 %v1505
        %v2041 = vunpack.c.l.b16 %v1506
        %v2042 = vunpack.c.l.b16 %v1507
        %v2043 = vunpack.c.l.b16 %v1508
        %v2044 = vunpack.c.l.b16 %v1509
        %v2045 = vunpack.c.l.b16 %v1510
        %v2046 = vunpack.c.l.b16 %v1511
        %v2047 = vunpack.c.l.b16 %v1512
        %v2048 = vunpack.c.l.b16 %v1513
        %v2049 = vunpack.c.l.b16 %v1514
        %v2050 = vunpack.c.l.b16 %v1515
        %v2051 = vunpack.c.l.b16 %v1516
        %v2052 = vunpack.c.l.b16 %v1517
        %v2053 = vunpack.c.l.b16 %v1518
        %v2054 = vunpack.c.l.b16 %v1519
        %v2055 = vunpack.c.l.b16 %v1520
        %v2056 = vunpack.c.l.b16 %v1521
        %v2057 = vunpack.c.l.b16 %v1522
        %v2058 = vunpack.c.l.b16 %v1523
        %v2059 = vunpack.c.l.b16 %v1524
        %v2060 = vunpack.c.l.b16 %v1525
        %v2061 = vunpack.c.l.b16 %v1526
        %v2062 = vunpack.c.l.b16 %v1527
        %v2063 = vunpack.c.l.b16 %v1528
        %v2064 = vunpack.c.l.b16 %v1529
        %v2065 = vunpack.c.l.b16 %v1530
        %v2066 = vunpack.c.l.b16 %v1531
        %v2067 = vunpack.c.l.b16 %v1532
        %v2068 = vunpack.c.l.b16 %v1533
        %v2069 = vunpack.c.l.b16 %v1534
        %v2070 = vunpack.c.l.b16 %v1535
        %v2071 = vunpack.c.l.b16 %v1536
        %v2072 = vunpack.c.l.b16 %v1537
        %v2073 = vunpack.c.l.b16 %v1538
        %v2074 = vunpack.c.l.b16 %v1539
        %v2075 = vunpack.c.l.b16 %v1540
        %v2076 = vunpack.c.l.b16 %v1541
        %v2077 = vunpack.c.l.b16 %v1542
        %v2078 = vunpack.c.l.b16 %v1543
        %v2079 = vunpack.c.l.b16 %v1544
        %v2080 = vunpack.c.l.b16 %v1545
        %v2081 = vunpack.c.l.b16 %v1546
        %v2082 = vunpack.c.l.b16 %v1547
        %v2083 = vunpack.c.l.b16 %v1548
        %v2084 = vunpack.c.l.b16 %v1549
        %v2085 = vunpack.c.l.b16 %v1550
        %v2086 = vunpack.c.l.b16 %v1551
        %v2087 = vunpack.c.l.b16 %v1552
        %v2088 = vunpack.c.l.b16 %v1553
        %v2089 = vunpack.c.l.b16 %v1554
        %v2090 = vunpack.c.l.b16 %v1555
        %v2091 = vunpack.c.l.b16 %v1556
        %v2092 = vunpack.c.l.b16 %v1557
        %v2093 = vunpack.c.l.b16 %v1558
        %v2094 = vunpack.c.l.b16 %v1559
        %v2095 = vunpack.c.l.b16 %v1560
        %v2096 = vunpack.c.l.b16 %v1561
        %v2097 = vunpack.c.l.b16 %v1562
        %v2098 = vunpack.c.l.b16 %v1563
        %v2099 = vunpack.c.l.b16 %v1564
        %v2100 = vunpack.c.l.b16 %v1565
        %v2101 = vunpack.c.l.b16 %v1566
        %v2102 = vunpack.c.l.b16 %v1567
        %v2103 = vunpack.c.l.b16 %v1568
        %v2104 = vunpack.c.l.b16 %v1569
        %v2105 = vunpack.c.l.b16 %v1570
        %v2106 = vunpack.c.l.b16 %v1571
        %v2107 = vunpack.c.l.b16 %v1572
        %v2108 = vunpack.c.l.b16 %v1573
        %v2109 = vunpack.c.l.b16 %v1574
        %v2110 = vunpack.c.l.b16 %v1575
        %v2111 = vunpack.c.l.b16 %v1576
        %v2112 = vunpack.c.l.b16 %v1577
        %v2113 = vunpack.c.l.b16 %v1578
        %v2114 = vunpack.c.l.b16 %v1579
        %v2115 = vunpack.c.l.b16 %v1580
        %v2116 = vunpack.c.l.b16 %v1581
        %v2117 = vunpack.c.l.b16 %v1582
        %v2118 = vunpack.c.l.b16 %v1583
        %v2119 = vunpack.c.l.b16 %v1584
        %v2120 = vunpack.c.l.b16 %v1585
        %v2121 = vunpack.c.l.b16 %v1586
        %v2122 = vunpack.c.l.b16 %v1587
        %v2123 = vunpack.c.l.b16 %v1588
        %v2124 = vunpack.c.l.b16 %v1589
        %v2125 = vunpack.c.l.b16 %v1590
        %v2126 = vunpack.c.l.b16 %v1591
        %v2127 = vunpack.c.l.b16 %v1592
        %v2128 = vunpack.c.l.b16 %v1593
        %v2129 = vunpack.c.l.b16 %v1594
        %v2130 = vunpack.c.l.b16 %v1595
        %v2131 = vunpack.c.l.b16 %v1596
        %v2132 = vunpack.c.l.b16 %v1597
        %v2133 = vunpack.c.l.b16 %v1598
        %v2134 = vunpack.c.l.b16 %v1599
        %v2135 = vunpack.c.l.b16 %v1600
        %v2136 = vunpack.c.l.b16 %v1601
        %v2137 = vunpack.c.l.b16 %v1602
        %v2138 = vunpack.c.l.b16 %v1603
        %v2139 = vunpack.c.l.b16 %v1604
        %v2140 = vunpack.c.l.b16 %v1605
        %v2141 = vunpack.c.l.b16 %v1606
        %v2142 = vunpack.c.l.b16 %v1607
        %v2143 = vunpack.c.l.b16 %v1608
        %v2144 = vunpack.c.l.b16 %v1609
        %v2145 = vunpack.c.l.b16 %v1610
        %v2146 = vunpack.c.l.b16 %v1611
        %v2147 = vunpack.c.l.b16 %v1612
        %v2148 = vunpack.c.l.b16 %v1613
        %v2149 = vunpack.c.l.b16 %v1614
        %v2150 = vunpack.c.l.b16 %v1615
        %v2151 = vunpack.c.l.b16 %v1616
        %v2152 = vunpack.c.l.b16 %v1617
        %v2153 = vunpack.c.l.b16 %v1618
        %v2154 = vunpack.c.l.b16 %v1619
        %v2155 = vunpack.c.l.b16 %v1620
        %v2156 = vunpack.c.l.b16 %v1621
        %v2157 = vunpack.c.l.b16 %v1622
        %v2158 = vunpack.c.l.b16 %v1623
        %v2159 = vunpack.c.l.b16 %v1624
        %v2160 = vunpack.c.l.b16 %v1625
        %v2161 = vunpack.c.l.b16 %v1626
        %v2162 = vunpack.c.l.b16 %v1627
        %v2163 = vunpack.c.l.b16 %v1628
        %v2164 = vunpack.c.l.b16 %v1629
        %v2165 = vunpack.c.l.b16 %v1630
        %v2166 = vunpack.c.l.b16 %v1631
        %v2167 = vunpack.c.l.b16 %v1632
        %v2168 = vunpack.c.l.b16 %v1633
        %v2169 = vunpack.c.l.b16 %v1634
        %v2170 = vunpack.c.l.b16 %v1635
        %v2171 = vunpack.c.l.b16 %v1636
        %v2172 = vunpack.c.l.b16 %v1637
        %v2173 = vunpack.c.l.b16 %v1638
        %v2174 = vunpack.c.l.b16 %v1639
        %v2175 = vunpack.c.l.b16 %v1640
        %v2176 = vunpack.c.l.b16 %v1641
        %v2177 = vunpack.c.l.b16 %v1642
        %v2178 = vunpack.c.l.b16 %v1643
        %v2179 = vunpack.c.l.b16 %v1644
        %v2180 = vunpack.c.l.b16 %v1645
        %v2181 = vunpack.c.l.b16 %v1646
        %v2182 = vunpack.c.l.b16 %v1647
        %v2183 = vunpack.c.l.b16 %v1648
        %v2184 = vunpack.c.l.b16 %v1649
        %v2185 = vunpack.c.l.b16 %v1650
        %v2186 = vunpack.c.l.b16 %v1651
        %v2187 = vunpack.c.l.b16 %v1652
        %v2188 = vunpack.c.l.b16 %v1653
        %v2189 = vunpack.c.l.b16 %v1654
        %v2190 = vunpack.c.l.b16 %v1655
        %v2191 = vunpack.c.l.b16 %v1656
        %v2192 = vunpack.c.l.b16 %v1657
        %v2193 = vunpack.c.l.b16 %v1658
        %v2194 = vunpack.c.l.b16 %v1659
        %v2195 = vunpack.c.l.b16 %v1660
        %v2196 = vunpack.c.l.b16 %v1661
        %v2197 = vunpack.c.l.b16 %v1662
        %v2198 = vunpack.c.l.b16 %v1663
        %v2199 = vunpack.c.l.b16 %v1664
        %v2200 = vunpack.c.l.b16 %v1665
        %v2201 = vunpack.c.l.b16 %v1666
        %v2202 = vunpack.c.l.b16 %v1667
        %v2203 = vunpack.c.l.b16 %v1668
        %v2204 = vunpack.c.l.b16 %v1669
        %v2205 = vunpack.c.l.b16 %v1670
        %v2206 = vunpack.c.l.b16 %v1671
        %v2207 = vunpack.c.l.b16 %v1672
        %v2208 = vunpack.c.l.b16 %v1673
        %v2209 = vunpack.c.l.b16 %v1674
        %v2210 = vunpack.c.l.b16 %v1675
        %v2211 = vunpack.c.l.b16 %v1676
        %v2212 = vunpack.c.l.b16 %v1677
        %v2213 = vunpack.c.l.b16 %v1678
        %v2214 = vunpack.c.l.b16 %v1679
        %v2215 = vunpack.c.l.b16 %v1680
        %v2216 = vunpack.c.l.b16 %v1681
        %v2217 = vunpack.c.l.b16 %v1682
        %v2218 = vunpack.c.l.b16 %v1683
        %v2219 = vunpack.c.l.b16 %v1684
        %v2220 = vunpack.c.l.b16 %v1685
        %v2221 = vunpack.c.l.b16 %v1686
        %v2222 = vunpack.c.l.b16 %v1687
        %v2223 = vunpack.c.l.b16 %v1688
        %v2224 = vunpack.c.l.b16 %v1689
        %v2225 = vunpack.c.l.b16 %v1690
        %v2226 = vunpack.c.l.b16 %v1691
        %v2227 = vunpack.c.l.b16 %v1692
        %v2228 = vunpack.c.l.b16 %v1693
        %v2229 = vunpack.c.l.b16 %v1694
        %v2230 = vunpack.c.l.b16 %v1695
        %v2231 = vunpack.c.l.b16 %v1696
        %v2232 = vunpack.c.l.b16 %v1697
        %v2233 = vunpack.c.l.b16 %v1698
        %v2234 = vunpack.c.l.b16 %v1699
        %v2235 = vunpack.c.l.b16 %v1700
        %v2236 = vunpack.c.l.b16 %v1701
        %v2237 = vunpack.c.l.b16 %v1702
        %v2238 = vunpack.c.l.b16 %v1703
        %v2239 = vunpack.c.l.b16 %v1704
        %v2240 = vunpack.c.l.b16 %v1705
        %v2241 = vunpack.c.l.b16 %v1706
        %v2242 = vunpack.c.l.b16 %v1707
        %v2243 = vunpack.c.l.b16 %v1708
        %v2244 = vunpack.c.l.b16 %v1709
        %v2245 = vunpack.c.l.b16 %v1710
        %v2246 = vunpack.c.l.b16 %v1711
        %v2247 = vunpack.c.l.b16 %v1712
        %v2248 = vunpack.c.l.b16 %v1713
        %v2249 = vunpack.c.l.b16 %v1714
        %v2250 = vunpack.c.l.b16 %v1715
        %v2251 = vunpack.c.l.b16 %v1716
        %v2252 = vunpack.c.l.b16 %v1717
        %v2253 = vunpack.c.l.b16 %v1718
        %v2254 = vunpack.c.l.b16 %v1719
        %v2255 = vunpack.c.l.b16 %v1720
        %v2256 = vunpack.c.l.b16 %v1721
        %v2257 = vunpack.c.l.b16 %v1722
        %v2258 = vunpack.c.l.b16 %v1723
        %v2259 = vunpack.c.l.b16 %v1724
        %v2260 = vunpack.c.l.b16 %v1725
        %v2261 = vunpack.c.l.b16 %v1726
        %v2262 = vunpack.c.l.b16 %v1727
        %v2263 = vunpack.c.l.b16 %v1728
        %v2264 = vunpack.c.l.b16 %v1729
        %v2265 = vunpack.c.l.b16 %v1730
        %v2266 = vpack.c.b16 %v2011, %v2010
        %v2267 = vpack.c.b16 %v2013, %v2012
        %v2268 = vpack.c.b16 %v2015, %v2014
        %v2269 = vpack.c.b16 %v2017, %v2016
        %v2270 = vpack.c.b16 %v2019, %v2018
        %v2271 = vpack.c.b16 %v2021, %v2020
        %v2272 = vpack.c.b16 %v2023, %v2022
        %v2273 = vpack.c.b16 %v2025, %v2024
        %v2274 = vpack.c.b16 %v2027, %v2026
        %v2275 = vpack.c.b16 %v2029, %v2028
        %v2276 = vpack.c.b16 %v2031, %v2030
        %v2277 = vpack.c.b16 %v2033, %v2032
        %v2278 = vpack.c.b16 %v2035, %v2034
        %v2279 = vpack.c.b16 %v2037, %v2036
        %v2280 = vpack.c.b16 %v2039, %v2038
        %v2281 = vpack.c.b16 %v2041, %v2040
        %v2282 = vpack.c.b16 %v2043, %v2042
        %v2283 = vpack.c.b16 %v2045, %v2044
        %v2284 = vpack.c.b16 %v2047, %v2046
        %v2285 = vpack.c.b16 %v2049, %v2048
        %v2286 = vpack.c.b16 %v2051, %v2050
        %v2287 = vpack.c.b16 %v2053, %v2052
        %v2288 = vpack.c.b16 %v2055, %v2054
        %v2289 = vpack.c.b16 %v2057, %v2056
        %v2290 = vpack.c.b16 %v2059, %v2058
        %v2291 = vpack.c.b16 %v2061, %v2060
        %v2292 = vpack.c.b16 %v2063, %v2062
        %v2293 = vpack.c.b16 %v2065, %v2064
        %v2294 = vpack.c.b16 %v2067, %v2066
        %v2295 = vpack.c.b16 %v2069, %v2068
        %v2296 = vpack.c.b16 %v2071, %v2070
        %v2297 = vpack.c.b16 %v2073, %v2072
        %v2298 = vpack.c.b16 %v2075, %v2074
        %v2299 = vpack.c.b16 %v2077, %v2076
        %v2300 = vpack.c.b16 %v2079, %v2078
        %v2301 = vpack.c.b16 %v2081, %v2080
        %v2302 = vpack.c.b16 %v2083, %v2082
        %v2303 = vpack.c.b16 %v2085, %v2084
        %v2304 = vpack.c.b16 %v2087, %v2086
        %v2305 = vpack.c.b16 %v2089, %v2088
        %v2306 = vpack.c.b16 %v2091, %v2090
        %v2307 = vpack.c.b16 %v2093, %v2092
        %v2308 = vpack.c.b16 %v2095, %v2094
        %v2309 = vpack.c.b16 %v2097, %v2096
        %v2310 = vpack.c.b16 %v2099, %v2098
        %v2311 = vpack.c.b16 %v2101, %v2100
        %v2312 = vpack.c.b16 %v2103, %v2102
        %v2313 = vpack.c.b16 %v2105, %v2104
        %v2314 = vpack.c.b16 %v2107, %v2106
        %v2315 = vpack.c.b16 %v2109, %v2108
        %v2316 = vpack.c.b16 %v2111, %v2110
        %v2317 = vpack.c.b16 %v2113, %v2112
        %v2318 = vpack.c.b16 %v2115, %v2114
        %v2319 = vpack.c.b16 %v2117, %v2116
        %v2320 = vpack.c.b16 %v2119, %v2118
        %v2321 = vpack.c.b16 %v2121, %v2120
        %v2322 = vpack.c.b16 %v2123, %v2122
        %v2323 = vpack.c.b16 %v2125, %v2124
        %v2324 = vpack.c.b16 %v2127, %v2126
        %v2325 = vpack.c.b16 %v2129, %v2128
        %v2326 = vpack.c.b16 %v2131, %v2130
        %v2327 = vpack.c.b16 %v2133, %v2132
        %v2328 = vpack.c.b16 %v2135, %v2134
        %v2329 = vpack.c.b16 %v2137, %v2136
        %v2330 = vpack.c.b16 %v2139, %v2138
        %v2331 = vpack.c.b16 %v2141, %v2140
        %v2332 = vpack.c.b16 %v2143, %v2142
        %v2333 = vpack.c.b16 %v2145, %v2144
        %v2334 = vpack.c.b16 %v2147, %v2146
        %v2335 = vpack.c.b16 %v2149, %v2148
        %v2336 = vpack.c.b16 %v2151, %v2150
        %v2337 = vpack.c.b16 %v2153, %v2152
        %v2338 = vpack.c.b16 %v2155, %v2154
        %v2339 = vpack.c.b16 %v2157, %v2156
        %v2340 = vpack.c.b16 %v2159, %v2158
        %v2341 = vpack.c.b16 %v2161, %v2160
        %v2342 = vpack.c.b16 %v2163, %v2162
        %v2343 = vpack.c.b16 %v2165, %v2164
        %v2344 = vpack.c.b16 %v2167, %v2166
        %v2345 = vpack.c.b16 %v2169, %v2168
        %v2346 = vpack.c.b16 %v2171, %v2170
        %v2347 = vpack.c.b16 %v2173, %v2172
        %v2348 = vpack.c.b16 %v2175, %v2174
        %v2349 = vpack.c.b16 %v2177, %v2176
        %v2350 = vpack.c.b16 %v2179, %v2178
        %v2351 = vpack.c.b16 %v2181, %v2180
        %v2352 = vpack.c.b16 %v2183, %v2182
        %v2353 = vpack.c.b16 %v2185, %v2184
        %v2354 = vpack.c.b16 %v2187, %v2186
        %v2355 = vpack.c.b16 %v2189, %v2188
        %v2356 = vpack.c.b16 %v2191, %v2190
        %v2357 = vpack.c.b16 %v2193, %v2192
        %v2358 = vpack.c.b16 %v2195, %v2194
        %v2359 = vpack.c.b16 %v2197, %v2196
        %v2360 = vpack.c.b16 %v2199, %v2198
        %v2361 = vpack.c.b16 %v2201, %v2200
        %v2362 = vpack.c.b16 %v2203, %v2202
        %v2363 = vpack.c.b16 %v2205, %v2204
        %v2364 = vpack.c.b16 %v2207, %v2206
        %v2365 = vpack.c.b16 %v2209, %v2208
        %v2366 = vpack.c.b16 %v2211, %v2210
        %v2367 = vpack.c.b16 %v2213, %v2212
        %v2368 = vpack.c.b16 %v2215, %v2214
        %v2369 = vpack.c.b16 %v2217, %v2216
        %v2370 = vpack.c.b16 %v2219, %v2218
        %v2371 = vpack.c.b16 %v2221, %v2220
        %v2372 = vpack.c.b16 %v2223, %v2222
        %v2373 = vpack.c.b16 %v2225, %v2224
        %v2374 = vpack.c.b16 %v2227, %v2226
        %v2375 = vpack.c.b16 %v2229, %v2228
        %v2376 = vpack.c.b16 %v2231, %v2230
        %v2377 = vpack.c.b16 %v2233, %v2232
        %v2378 = vpack.c.b16 %v2235, %v2234
        %v2379 = vpack.c.b16 %v2237, %v2236
        %v2380 = vpack.c.b16 %v2239, %v2238
        %v2381 = vpack.c.b16 %v2241, %v2240
        %v2382 = vpack.c.b16 %v2243, %v2242
        %v2383 = vpack.c.b16 %v2245, %v2244
        %v2384 = vpack.c.b16 %v2247, %v2246
        %v2385 = vpack.c.b16 %v2249, %v2248
        %v2386 = vpack.c.b16 %v2251, %v2250
        %v2387 = vpack.c.b16 %v2253, %v2252
        %v2388 = vpack.c.b16 %v2255, %v2254
        %v2389 = vpack.c.b16 %v2257, %v2256
        %v2390 = vpack.c.b16 %v2259, %v2258
        %v2391 = vpack.c.b16 %v2261, %v2260
        %v2392 = vpack.c.b16 %v2263, %v2262
        %v2393 = vpack.c.b16 %v2265, %v2264
        %v2538 = vunpack.c.l.b16 %v1731
        %v2539 = vunpack.c.l.b16 %v1732
        %v2540 = vunpack.c.l.b16 %v1733
        %v2541 = vunpack.c.l.b16 %v1734
        %v2542 = vunpack.c.l.b16 %v1735
        %v2543 = vunpack.c.l.b16 %v1736
        %v2544 = vunpack.c.l.b16 %v1737
        %v2545 = vunpack.c.l.b16 %v1738
        %v2546 = vunpack.c.l.b16 %v1739
        %v2547 = vunpack.c.l.b16 %v1740
        %v2548 = vunpack.c.l.b16 %v1741
        %v2549 = vunpack.c.l.b16 %v1742
        %v2550 = vunpack.c.l.b16 %v1743
        %v2551 = vunpack.c.l.b16 %v1744
        %v2552 = vunpack.c.l.b16 %v1745
        %v2553 = vunpack.c.l.b16 %v1746
        %v2554 = vpack.c.b16 %v2539, %v2538
        %v2555 = vpack.c.b16 %v2541, %v2540
        %v2556 = vpack.c.b16 %v2543, %v2542
        %v2557 = vpack.c.b16 %v2545, %v2544
        %v2558 = vpack.c.b16 %v2547, %v2546
        %v2559 = vpack.c.b16 %v2549, %v2548
        %v2560 = vpack.c.b16 %v2551, %v2550
        %v2561 = vpack.c.b16 %v2553, %v2552
        %2570 = vmatprep.subr.bf16.mxu0 0
        %2571 = vmatpush1.bf16.msra.mxu0 %v2561
        %2572 = vmatprep.subr.bf16.mxu0 0
        %2573 = vmatpush1.bf16.msra.mxu0 %v2560
        %2574 = vmatprep.subr.bf16.mxu0 0
        %2575 = vmatpush1.bf16.msra.mxu0 %v2559
        %2576 = vmatprep.subr.bf16.mxu0 0
        %2577 = vmatpush1.bf16.msra.mxu0 %v2558
        %2578 = vmatprep.subr.bf16.mxu0 0
        %2579 = vmatpush1.bf16.msra.mxu0 %v2557
        %2580 = vmatprep.subr.bf16.mxu0 0
        %2581 = vmatpush1.bf16.msra.mxu0 %v2556
        %2582 = vmatprep.subr.bf16.mxu0 0
        %2583 = vmatpush1.bf16.msra.mxu0 %v2555
        %2584 = vmatprep.subr.bf16.mxu0 0
        %2585 = vmatpush1.bf16.msra.mxu0 %v2554
        %2586 = vmatprep.subr.bf16.mxu0 0
        %2587 = vmatpush2.bf16.msra.mxu0 0
        %2588 = vmatprep.subr.bf16.mxu0 0
        %2589 = vmatpush2.bf16.msra.mxu0 0
        %2590 = vmatprep.subr.bf16.mxu0 0
        %2591 = vmatpush2.bf16.msra.mxu0 0
        %2592 = vmatprep.subr.bf16.mxu0 0
        %2593 = vmatpush2.bf16.msra.mxu0 0
        %2594 = vmatprep.subr.bf16.mxu0 0
        %2595 = vmatpush2.bf16.msra.mxu0 0
        %2596 = vmatprep.subr.bf16.mxu0 0
        %2597 = vmatpush2.bf16.msra.mxu0 0
        %2598 = vmatprep.subr.bf16.mxu0 0
        %2599 = vmatpush2.bf16.msra.mxu0 0
        %2600 = vmatprep.subr.bf16.mxu0 0
        %2601 = vmatpush2.bf16.msra.mxu0 0
        %2602 = vmatprep.mubr.bf16.mxu0 0
        %2603 = vmatmul.mubr.bf16.gmra.mxu0 %v2266
        %v2604 = vpop.f32.mrf.mxu0
        %v2605 = vadd.f32 %v1752, %v2604
        %v2606 = vpop.f32.mrf.mxu0
        %v2607 = vpop.f32.mrf.mxu0
        %v2608 = vadd.f32 %v1752, %v2607
        %v2609 = vpop.f32.mrf.mxu0
        %2610 = vmatprep.mubr.bf16.mxu0 0
        %2611 = vmatmul.mubr.bf16.gmra.mxu0 %v2267
        %v2612 = vpop.f32.mrf.mxu0
        %v2613 = vadd.f32 %v1752, %v2612
        %v2614 = vpop.f32.mrf.mxu0
        %v2615 = vpop.f32.mrf.mxu0
        %v2616 = vadd.f32 %v1752, %v2615
        %v2617 = vpop.f32.mrf.mxu0
        %2618 = vmatprep.mubr.bf16.mxu0 0
        %2619 = vmatmul.mubr.bf16.gmra.mxu0 %v2268
        %v2620 = vpop.f32.mrf.mxu0
        %v2621 = vadd.f32 %v1752, %v2620
        %v2622 = vpop.f32.mrf.mxu0
        %v2623 = vpop.f32.mrf.mxu0
        %v2624 = vadd.f32 %v1752, %v2623
        %v2625 = vpop.f32.mrf.mxu0
        %2626 = vmatprep.mubr.bf16.mxu0 0
        %2627 = vmatmul.mubr.bf16.gmra.mxu0 %v2269
        %v2628 = vpop.f32.mrf.mxu0
        %v2629 = vadd.f32 %v1752, %v2628
        %v2630 = vpop.f32.mrf.mxu0
        %v2631 = vpop.f32.mrf.mxu0
        %v2632 = vadd.f32 %v1752, %v2631
        %v2633 = vpop.f32.mrf.mxu0
        %2634 = vmatprep.mubr.bf16.mxu0 0
        %2635 = vmatmul.mubr.bf16.gmra.mxu0 %v2270
        %v2636 = vpop.f32.mrf.mxu0
        %v2637 = vadd.f32 %v1752, %v2636
        %v2638 = vpop.f32.mrf.mxu0
        %v2639 = vpop.f32.mrf.mxu0
        %v2640 = vadd.f32 %v1752, %v2639
        %v2641 = vpop.f32.mrf.mxu0
        %2642 = vmatprep.mubr.bf16.mxu0 0
        %2643 = vmatmul.mubr.bf16.gmra.mxu0 %v2271
        %v2644 = vpop.f32.mrf.mxu0
        %v2645 = vadd.f32 %v1752, %v2644
        %v2646 = vpop.f32.mrf.mxu0
        %v2647 = vpop.f32.mrf.mxu0
        %v2648 = vadd.f32 %v1752, %v2647
        %v2649 = vpop.f32.mrf.mxu0
        %2650 = vmatprep.mubr.bf16.mxu0 0
        %2651 = vmatmul.mubr.bf16.gmra.mxu0 %v2272
        %v2652 = vpop.f32.mrf.mxu0
        %v2653 = vadd.f32 %v1752, %v2652
        %v2654 = vpop.f32.mrf.mxu0
        %v2655 = vpop.f32.mrf.mxu0
        %v2656 = vadd.f32 %v1752, %v2655
        %v2657 = vpop.f32.mrf.mxu0
        %2658 = vmatprep.mubr.bf16.mxu0 0
        %2659 = vmatmul.mubr.bf16.gmra.mxu0 %v2273
        %v2660 = vpop.f32.mrf.mxu0
        %v2661 = vadd.f32 %v1752, %v2660
        %v2662 = vpop.f32.mrf.mxu0
        %v2663 = vpop.f32.mrf.mxu0
        %v2664 = vadd.f32 %v1752, %v2663
        %v2665 = vpop.f32.mrf.mxu0
        %2666 = vmatprep.mubr.bf16.mxu0 0
        %2667 = vmatmul.mubr.bf16.gmra.mxu0 %v2274
        %v2668 = vpop.f32.mrf.mxu0
        %v2669 = vadd.f32 %v1752, %v2668
        %v2670 = vpop.f32.mrf.mxu0
        %v2671 = vpop.f32.mrf.mxu0
        %v2672 = vadd.f32 %v1752, %v2671
        %v2673 = vpop.f32.mrf.mxu0
        %2674 = vmatprep.mubr.bf16.mxu0 0
        %2675 = vmatmul.mubr.bf16.gmra.mxu0 %v2275
        %v2676 = vpop.f32.mrf.mxu0
        %v2677 = vadd.f32 %v1752, %v2676
        %v2678 = vpop.f32.mrf.mxu0
        %v2679 = vpop.f32.mrf.mxu0
        %v2680 = vadd.f32 %v1752, %v2679
        %v2681 = vpop.f32.mrf.mxu0
        %2682 = vmatprep.mubr.bf16.mxu0 0
        %2683 = vmatmul.mubr.bf16.gmra.mxu0 %v2276
        %v2684 = vpop.f32.mrf.mxu0
        %v2685 = vadd.f32 %v1752, %v2684
        %v2686 = vpop.f32.mrf.mxu0
        %v2687 = vpop.f32.mrf.mxu0
        %v2688 = vadd.f32 %v1752, %v2687
        %v2689 = vpop.f32.mrf.mxu0
        %2690 = vmatprep.mubr.bf16.mxu0 0
        %2691 = vmatmul.mubr.bf16.gmra.mxu0 %v2277
        %v2692 = vpop.f32.mrf.mxu0
        %v2693 = vadd.f32 %v1752, %v2692
        %v2694 = vpop.f32.mrf.mxu0
        %v2695 = vpop.f32.mrf.mxu0
        %v2696 = vadd.f32 %v1752, %v2695
        %v2697 = vpop.f32.mrf.mxu0
        %2698 = vmatprep.mubr.bf16.mxu0 0
        %2699 = vmatmul.mubr.bf16.gmra.mxu0 %v2278
        %v2700 = vpop.f32.mrf.mxu0
        %v2701 = vadd.f32 %v1752, %v2700
        %v2702 = vpop.f32.mrf.mxu0
        %v2703 = vpop.f32.mrf.mxu0
        %v2704 = vadd.f32 %v1752, %v2703
        %v2705 = vpop.f32.mrf.mxu0
        %2706 = vmatprep.mubr.bf16.mxu0 0
        %2707 = vmatmul.mubr.bf16.gmra.mxu0 %v2279
        %v2708 = vpop.f32.mrf.mxu0
        %v2709 = vadd.f32 %v1752, %v2708
        %v2710 = vpop.f32.mrf.mxu0
        %v2711 = vpop.f32.mrf.mxu0
        %v2712 = vadd.f32 %v1752, %v2711
        %v2713 = vpop.f32.mrf.mxu0
        %2714 = vmatprep.mubr.bf16.mxu0 0
        %2715 = vmatmul.mubr.bf16.gmra.mxu0 %v2280
        %v2716 = vpop.f32.mrf.mxu0
        %v2717 = vadd.f32 %v1752, %v2716
        %v2718 = vpop.f32.mrf.mxu0
        %v2719 = vpop.f32.mrf.mxu0
        %v2720 = vadd.f32 %v1752, %v2719
        %v2721 = vpop.f32.mrf.mxu0
        %2722 = vmatprep.mubr.bf16.mxu0 0
        %2723 = vmatmul.mubr.bf16.gmra.mxu0 %v2281
        %v2724 = vpop.f32.mrf.mxu0
        %v2725 = vadd.f32 %v1752, %v2724
        %v2726 = vpop.f32.mrf.mxu0
        %v2727 = vpop.f32.mrf.mxu0
        %v2728 = vadd.f32 %v1752, %v2727
        %v2729 = vpop.f32.mrf.mxu0
        %2730 = vmatprep.mubr.bf16.mxu0 0
        %2731 = vmatmul.mubr.bf16.gmra.mxu0 %v2282
        %v2732 = vpop.f32.mrf.mxu0
        %v2733 = vadd.f32 %v1752, %v2732
        %v2734 = vpop.f32.mrf.mxu0
        %v2735 = vpop.f32.mrf.mxu0
        %v2736 = vadd.f32 %v1752, %v2735
        %v2737 = vpop.f32.mrf.mxu0
        %2738 = vmatprep.mubr.bf16.mxu0 0
        %2739 = vmatmul.mubr.bf16.gmra.mxu0 %v2283
        %v2740 = vpop.f32.mrf.mxu0
        %v2741 = vadd.f32 %v1752, %v2740
        %v2742 = vpop.f32.mrf.mxu0
        %v2743 = vpop.f32.mrf.mxu0
        %v2744 = vadd.f32 %v1752, %v2743
        %v2745 = vpop.f32.mrf.mxu0
        %2746 = vmatprep.mubr.bf16.mxu0 0
        %2747 = vmatmul.mubr.bf16.gmra.mxu0 %v2284
        %v2748 = vpop.f32.mrf.mxu0
        %v2749 = vadd.f32 %v1752, %v2748
        %v2750 = vpop.f32.mrf.mxu0
        %v2751 = vpop.f32.mrf.mxu0
        %v2752 = vadd.f32 %v1752, %v2751
        %v2753 = vpop.f32.mrf.mxu0
        %2754 = vmatprep.mubr.bf16.mxu0 0
        %2755 = vmatmul.mubr.bf16.gmra.mxu0 %v2285
        %v2756 = vpop.f32.mrf.mxu0
        %v2757 = vadd.f32 %v1752, %v2756
        %v2758 = vpop.f32.mrf.mxu0
        %v2759 = vpop.f32.mrf.mxu0
        %v2760 = vadd.f32 %v1752, %v2759
        %v2761 = vpop.f32.mrf.mxu0
        %2762 = vmatprep.mubr.bf16.mxu0 0
        %2763 = vmatmul.mubr.bf16.gmra.mxu0 %v2286
        %v2764 = vpop.f32.mrf.mxu0
        %v2765 = vadd.f32 %v1752, %v2764
        %v2766 = vpop.f32.mrf.mxu0
        %v2767 = vpop.f32.mrf.mxu0
        %v2768 = vadd.f32 %v1752, %v2767
        %v2769 = vpop.f32.mrf.mxu0
        %2770 = vmatprep.mubr.bf16.mxu0 0
        %2771 = vmatmul.mubr.bf16.gmra.mxu0 %v2287
        %v2772 = vpop.f32.mrf.mxu0
        %v2773 = vadd.f32 %v1752, %v2772
        %v2774 = vpop.f32.mrf.mxu0
        %v2775 = vpop.f32.mrf.mxu0
        %v2776 = vadd.f32 %v1752, %v2775
        %v2777 = vpop.f32.mrf.mxu0
        %2778 = vmatprep.mubr.bf16.mxu0 0
        %2779 = vmatmul.mubr.bf16.gmra.mxu0 %v2288
        %v2780 = vpop.f32.mrf.mxu0
        %v2781 = vadd.f32 %v1752, %v2780
        %v2782 = vpop.f32.mrf.mxu0
        %v2783 = vpop.f32.mrf.mxu0
        %v2784 = vadd.f32 %v1752, %v2783
        %v2785 = vpop.f32.mrf.mxu0
        %2786 = vmatprep.mubr.bf16.mxu0 0
        %2787 = vmatmul.mubr.bf16.gmra.mxu0 %v2289
        %v2788 = vpop.f32.mrf.mxu0
        %v2789 = vadd.f32 %v1752, %v2788
        %v2790 = vpop.f32.mrf.mxu0
        %v2791 = vpop.f32.mrf.mxu0
        %v2792 = vadd.f32 %v1752, %v2791
        %v2793 = vpop.f32.mrf.mxu0
        %2794 = vmatprep.mubr.bf16.mxu0 0
        %2795 = vmatmul.mubr.bf16.gmra.mxu0 %v2290
        %v2796 = vpop.f32.mrf.mxu0
        %v2797 = vadd.f32 %v1752, %v2796
        %v2798 = vpop.f32.mrf.mxu0
        %v2799 = vpop.f32.mrf.mxu0
        %v2800 = vadd.f32 %v1752, %v2799
        %v2801 = vpop.f32.mrf.mxu0
        %2802 = vmatprep.mubr.bf16.mxu0 0
        %2803 = vmatmul.mubr.bf16.gmra.mxu0 %v2291
        %v2804 = vpop.f32.mrf.mxu0
        %v2805 = vadd.f32 %v1752, %v2804
        %v2806 = vpop.f32.mrf.mxu0
        %v2807 = vpop.f32.mrf.mxu0
        %v2808 = vadd.f32 %v1752, %v2807
        %v2809 = vpop.f32.mrf.mxu0
        %2810 = vmatprep.mubr.bf16.mxu0 0
        %2811 = vmatmul.mubr.bf16.gmra.mxu0 %v2292
        %v2812 = vpop.f32.mrf.mxu0
        %v2813 = vadd.f32 %v1752, %v2812
        %v2814 = vpop.f32.mrf.mxu0
        %v2815 = vpop.f32.mrf.mxu0
        %v2816 = vadd.f32 %v1752, %v2815
        %v2817 = vpop.f32.mrf.mxu0
        %2818 = vmatprep.mubr.bf16.mxu0 0
        %2819 = vmatmul.mubr.bf16.gmra.mxu0 %v2293
        %v2820 = vpop.f32.mrf.mxu0
        %v2821 = vadd.f32 %v1752, %v2820
        %v2822 = vpop.f32.mrf.mxu0
        %v2823 = vpop.f32.mrf.mxu0
        %v2824 = vadd.f32 %v1752, %v2823
        %v2825 = vpop.f32.mrf.mxu0
        %2826 = vmatprep.mubr.bf16.mxu0 0
        %2827 = vmatmul.mubr.bf16.gmra.mxu0 %v2294
        %v2828 = vpop.f32.mrf.mxu0
        %v2829 = vadd.f32 %v1752, %v2828
        %v2830 = vpop.f32.mrf.mxu0
        %v2831 = vpop.f32.mrf.mxu0
        %v2832 = vadd.f32 %v1752, %v2831
        %v2833 = vpop.f32.mrf.mxu0
        %2834 = vmatprep.mubr.bf16.mxu0 0
        %2835 = vmatmul.mubr.bf16.gmra.mxu0 %v2295
        %v2836 = vpop.f32.mrf.mxu0
        %v2837 = vadd.f32 %v1752, %v2836
        %v2838 = vpop.f32.mrf.mxu0
        %v2839 = vpop.f32.mrf.mxu0
        %v2840 = vadd.f32 %v1752, %v2839
        %v2841 = vpop.f32.mrf.mxu0
        %2842 = vmatprep.mubr.bf16.mxu0 0
        %2843 = vmatmul.mubr.bf16.gmra.mxu0 %v2296
        %v2844 = vpop.f32.mrf.mxu0
        %v2845 = vadd.f32 %v1752, %v2844
        %v2846 = vpop.f32.mrf.mxu0
        %v2847 = vpop.f32.mrf.mxu0
        %v2848 = vadd.f32 %v1752, %v2847
        %v2849 = vpop.f32.mrf.mxu0
        %2850 = vmatprep.mubr.bf16.mxu0 0
        %2851 = vmatmul.mubr.bf16.gmra.mxu0 %v2297
        %v2852 = vpop.f32.mrf.mxu0
        %v2853 = vadd.f32 %v1752, %v2852
        %v2854 = vpop.f32.mrf.mxu0
        %v2855 = vpop.f32.mrf.mxu0
        %v2856 = vadd.f32 %v1752, %v2855
        %v2857 = vpop.f32.mrf.mxu0
        %2858 = vmatprep.mubr.bf16.mxu0 0
        %2859 = vmatmul.mubr.bf16.gmra.mxu0 %v2298
        %v2860 = vpop.f32.mrf.mxu0
        %v2861 = vadd.f32 %v1752, %v2860
        %v2862 = vpop.f32.mrf.mxu0
        %v2863 = vpop.f32.mrf.mxu0
        %v2864 = vadd.f32 %v1752, %v2863
        %v2865 = vpop.f32.mrf.mxu0
        %2866 = vmatprep.mubr.bf16.mxu0 0
        %2867 = vmatmul.mubr.bf16.gmra.mxu0 %v2299
        %v2868 = vpop.f32.mrf.mxu0
        %v2869 = vadd.f32 %v1752, %v2868
        %v2870 = vpop.f32.mrf.mxu0
        %v2871 = vpop.f32.mrf.mxu0
        %v2872 = vadd.f32 %v1752, %v2871
        %v2873 = vpop.f32.mrf.mxu0
        %2874 = vmatprep.mubr.bf16.mxu0 0
        %2875 = vmatmul.mubr.bf16.gmra.mxu0 %v2300
        %v2876 = vpop.f32.mrf.mxu0
        %v2877 = vadd.f32 %v1752, %v2876
        %v2878 = vpop.f32.mrf.mxu0
        %v2879 = vpop.f32.mrf.mxu0
        %v2880 = vadd.f32 %v1752, %v2879
        %v2881 = vpop.f32.mrf.mxu0
        %2882 = vmatprep.mubr.bf16.mxu0 0
        %2883 = vmatmul.mubr.bf16.gmra.mxu0 %v2301
        %v2884 = vpop.f32.mrf.mxu0
        %v2885 = vadd.f32 %v1752, %v2884
        %v2886 = vpop.f32.mrf.mxu0
        %v2887 = vpop.f32.mrf.mxu0
        %v2888 = vadd.f32 %v1752, %v2887
        %v2889 = vpop.f32.mrf.mxu0
        %2890 = vmatprep.mubr.bf16.mxu0 0
        %2891 = vmatmul.mubr.bf16.gmra.mxu0 %v2302
        %v2892 = vpop.f32.mrf.mxu0
        %v2893 = vadd.f32 %v1752, %v2892
        %v2894 = vpop.f32.mrf.mxu0
        %v2895 = vpop.f32.mrf.mxu0
        %v2896 = vadd.f32 %v1752, %v2895
        %v2897 = vpop.f32.mrf.mxu0
        %2898 = vmatprep.mubr.bf16.mxu0 0
        %2899 = vmatmul.mubr.bf16.gmra.mxu0 %v2303
        %v2900 = vpop.f32.mrf.mxu0
        %v2901 = vadd.f32 %v1752, %v2900
        %v2902 = vpop.f32.mrf.mxu0
        %v2903 = vpop.f32.mrf.mxu0
        %v2904 = vadd.f32 %v1752, %v2903
        %v2905 = vpop.f32.mrf.mxu0
        %2906 = vmatprep.mubr.bf16.mxu0 0
        %2907 = vmatmul.mubr.bf16.gmra.mxu0 %v2304
        %v2908 = vpop.f32.mrf.mxu0
        %v2909 = vadd.f32 %v1752, %v2908
        %v2910 = vpop.f32.mrf.mxu0
        %v2911 = vpop.f32.mrf.mxu0
        %v2912 = vadd.f32 %v1752, %v2911
        %v2913 = vpop.f32.mrf.mxu0
        %2914 = vmatprep.mubr.bf16.mxu0 0
        %2915 = vmatmul.mubr.bf16.gmra.mxu0 %v2305
        %v2916 = vpop.f32.mrf.mxu0
        %v2917 = vadd.f32 %v1752, %v2916
        %v2918 = vpop.f32.mrf.mxu0
        %v2919 = vpop.f32.mrf.mxu0
        %v2920 = vadd.f32 %v1752, %v2919
        %v2921 = vpop.f32.mrf.mxu0
        %2922 = vmatprep.mubr.bf16.mxu0 0
        %2923 = vmatmul.mubr.bf16.gmra.mxu0 %v2306
        %v2924 = vpop.f32.mrf.mxu0
        %v2925 = vadd.f32 %v1752, %v2924
        %v2926 = vpop.f32.mrf.mxu0
        %v2927 = vpop.f32.mrf.mxu0
        %v2928 = vadd.f32 %v1752, %v2927
        %v2929 = vpop.f32.mrf.mxu0
        %2930 = vmatprep.mubr.bf16.mxu0 0
        %2931 = vmatmul.mubr.bf16.gmra.mxu0 %v2307
        %v2932 = vpop.f32.mrf.mxu0
        %v2933 = vadd.f32 %v1752, %v2932
        %v2934 = vpop.f32.mrf.mxu0
        %v2935 = vpop.f32.mrf.mxu0
        %v2936 = vadd.f32 %v1752, %v2935
        %v2937 = vpop.f32.mrf.mxu0
        %2938 = vmatprep.mubr.bf16.mxu0 0
        %2939 = vmatmul.mubr.bf16.gmra.mxu0 %v2308
        %v2940 = vpop.f32.mrf.mxu0
        %v2941 = vadd.f32 %v1752, %v2940
        %v2942 = vpop.f32.mrf.mxu0
        %v2943 = vpop.f32.mrf.mxu0
        %v2944 = vadd.f32 %v1752, %v2943
        %v2945 = vpop.f32.mrf.mxu0
        %2946 = vmatprep.mubr.bf16.mxu0 0
        %2947 = vmatmul.mubr.bf16.gmra.mxu0 %v2309
        %v2948 = vpop.f32.mrf.mxu0
        %v2949 = vadd.f32 %v1752, %v2948
        %v2950 = vpop.f32.mrf.mxu0
        %v2951 = vpop.f32.mrf.mxu0
        %v2952 = vadd.f32 %v1752, %v2951
        %v2953 = vpop.f32.mrf.mxu0
        %2954 = vmatprep.mubr.bf16.mxu0 0
        %2955 = vmatmul.mubr.bf16.gmra.mxu0 %v2310
        %v2956 = vpop.f32.mrf.mxu0
        %v2957 = vadd.f32 %v1752, %v2956
        %v2958 = vpop.f32.mrf.mxu0
        %v2959 = vpop.f32.mrf.mxu0
        %v2960 = vadd.f32 %v1752, %v2959
        %v2961 = vpop.f32.mrf.mxu0
        %2962 = vmatprep.mubr.bf16.mxu0 0
        %2963 = vmatmul.mubr.bf16.gmra.mxu0 %v2311
        %v2964 = vpop.f32.mrf.mxu0
        %v2965 = vadd.f32 %v1752, %v2964
        %v2966 = vpop.f32.mrf.mxu0
        %v2967 = vpop.f32.mrf.mxu0
        %v2968 = vadd.f32 %v1752, %v2967
        %v2969 = vpop.f32.mrf.mxu0
        %2970 = vmatprep.mubr.bf16.mxu0 0
        %2971 = vmatmul.mubr.bf16.gmra.mxu0 %v2312
        %v2972 = vpop.f32.mrf.mxu0
        %v2973 = vadd.f32 %v1752, %v2972
        %v2974 = vpop.f32.mrf.mxu0
        %v2975 = vpop.f32.mrf.mxu0
        %v2976 = vadd.f32 %v1752, %v2975
        %v2977 = vpop.f32.mrf.mxu0
        %2978 = vmatprep.mubr.bf16.mxu0 0
        %2979 = vmatmul.mubr.bf16.gmra.mxu0 %v2313
        %v2980 = vpop.f32.mrf.mxu0
        %v2981 = vadd.f32 %v1752, %v2980
        %v2982 = vpop.f32.mrf.mxu0
        %v2983 = vpop.f32.mrf.mxu0
        %v2984 = vadd.f32 %v1752, %v2983
        %v2985 = vpop.f32.mrf.mxu0
        %2986 = vmatprep.mubr.bf16.mxu0 0
        %2987 = vmatmul.mubr.bf16.gmra.mxu0 %v2314
        %v2988 = vpop.f32.mrf.mxu0
        %v2989 = vadd.f32 %v1752, %v2988
        %v2990 = vpop.f32.mrf.mxu0
        %v2991 = vpop.f32.mrf.mxu0
        %v2992 = vadd.f32 %v1752, %v2991
        %v2993 = vpop.f32.mrf.mxu0
        %2994 = vmatprep.mubr.bf16.mxu0 0
        %2995 = vmatmul.mubr.bf16.gmra.mxu0 %v2315
        %v2996 = vpop.f32.mrf.mxu0
        %v2997 = vadd.f32 %v1752, %v2996
        %v2998 = vpop.f32.mrf.mxu0
        %v2999 = vpop.f32.mrf.mxu0
        %v3000 = vadd.f32 %v1752, %v2999
        %v3001 = vpop.f32.mrf.mxu0
        %3002 = vmatprep.mubr.bf16.mxu0 0
        %3003 = vmatmul.mubr.bf16.gmra.mxu0 %v2316
        %v3004 = vpop.f32.mrf.mxu0
        %v3005 = vadd.f32 %v1752, %v3004
        %v3006 = vpop.f32.mrf.mxu0
        %v3007 = vpop.f32.mrf.mxu0
        %v3008 = vadd.f32 %v1752, %v3007
        %v3009 = vpop.f32.mrf.mxu0
        %3010 = vmatprep.mubr.bf16.mxu0 0
        %3011 = vmatmul.mubr.bf16.gmra.mxu0 %v2317
        %v3012 = vpop.f32.mrf.mxu0
        %v3013 = vadd.f32 %v1752, %v3012
        %v3014 = vpop.f32.mrf.mxu0
        %v3015 = vpop.f32.mrf.mxu0
        %v3016 = vadd.f32 %v1752, %v3015
        %v3017 = vpop.f32.mrf.mxu0
        %3018 = vmatprep.mubr.bf16.mxu0 0
        %3019 = vmatmul.mubr.bf16.gmra.mxu0 %v2318
        %v3020 = vpop.f32.mrf.mxu0
        %v3021 = vadd.f32 %v1752, %v3020
        %v3022 = vpop.f32.mrf.mxu0
        %v3023 = vpop.f32.mrf.mxu0
        %v3024 = vadd.f32 %v1752, %v3023
        %v3025 = vpop.f32.mrf.mxu0
        %3026 = vmatprep.mubr.bf16.mxu0 0
        %3027 = vmatmul.mubr.bf16.gmra.mxu0 %v2319
        %v3028 = vpop.f32.mrf.mxu0
        %v3029 = vadd.f32 %v1752, %v3028
        %v3030 = vpop.f32.mrf.mxu0
        %v3031 = vpop.f32.mrf.mxu0
        %v3032 = vadd.f32 %v1752, %v3031
        %v3033 = vpop.f32.mrf.mxu0
        %3034 = vmatprep.mubr.bf16.mxu0 0
        %3035 = vmatmul.mubr.bf16.gmra.mxu0 %v2320
        %v3036 = vpop.f32.mrf.mxu0
        %v3037 = vadd.f32 %v1752, %v3036
        %v3038 = vpop.f32.mrf.mxu0
        %v3039 = vpop.f32.mrf.mxu0
        %v3040 = vadd.f32 %v1752, %v3039
        %v3041 = vpop.f32.mrf.mxu0
        %3042 = vmatprep.mubr.bf16.mxu0 0
        %3043 = vmatmul.mubr.bf16.gmra.mxu0 %v2321
        %v3044 = vpop.f32.mrf.mxu0
        %v3045 = vadd.f32 %v1752, %v3044
        %v3046 = vpop.f32.mrf.mxu0
        %v3047 = vpop.f32.mrf.mxu0
        %v3048 = vadd.f32 %v1752, %v3047
        %v3049 = vpop.f32.mrf.mxu0
        %3050 = vmatprep.mubr.bf16.mxu0 0
        %3051 = vmatmul.mubr.bf16.gmra.mxu0 %v2322
        %v3052 = vpop.f32.mrf.mxu0
        %v3053 = vadd.f32 %v1752, %v3052
        %v3054 = vpop.f32.mrf.mxu0
        %v3055 = vpop.f32.mrf.mxu0
        %v3056 = vadd.f32 %v1752, %v3055
        %v3057 = vpop.f32.mrf.mxu0
        %3058 = vmatprep.mubr.bf16.mxu0 0
        %3059 = vmatmul.mubr.bf16.gmra.mxu0 %v2323
        %v3060 = vpop.f32.mrf.mxu0
        %v3061 = vadd.f32 %v1752, %v3060
        %v3062 = vpop.f32.mrf.mxu0
        %v3063 = vpop.f32.mrf.mxu0
        %v3064 = vadd.f32 %v1752, %v3063
        %v3065 = vpop.f32.mrf.mxu0
        %3066 = vmatprep.mubr.bf16.mxu0 0
        %3067 = vmatmul.mubr.bf16.gmra.mxu0 %v2324
        %v3068 = vpop.f32.mrf.mxu0
        %v3069 = vadd.f32 %v1752, %v3068
        %v3070 = vpop.f32.mrf.mxu0
        %v3071 = vpop.f32.mrf.mxu0
        %v3072 = vadd.f32 %v1752, %v3071
        %v3073 = vpop.f32.mrf.mxu0
        %3074 = vmatprep.mubr.bf16.mxu0 0
        %3075 = vmatmul.mubr.bf16.gmra.mxu0 %v2325
        %v3076 = vpop.f32.mrf.mxu0
        %v3077 = vadd.f32 %v1752, %v3076
        %v3078 = vpop.f32.mrf.mxu0
        %v3079 = vpop.f32.mrf.mxu0
        %v3080 = vadd.f32 %v1752, %v3079
        %v3081 = vpop.f32.mrf.mxu0
        %3082 = vmatprep.mubr.bf16.mxu0 0
        %3083 = vmatmul.mubr.bf16.gmra.mxu0 %v2326
        %v3084 = vpop.f32.mrf.mxu0
        %v3085 = vadd.f32 %v1752, %v3084
        %v3086 = vpop.f32.mrf.mxu0
        %v3087 = vpop.f32.mrf.mxu0
        %v3088 = vadd.f32 %v1752, %v3087
        %v3089 = vpop.f32.mrf.mxu0
        %3090 = vmatprep.mubr.bf16.mxu0 0
        %3091 = vmatmul.mubr.bf16.gmra.mxu0 %v2327
        %v3092 = vpop.f32.mrf.mxu0
        %v3093 = vadd.f32 %v1752, %v3092
        %v3094 = vpop.f32.mrf.mxu0
        %v3095 = vpop.f32.mrf.mxu0
        %v3096 = vadd.f32 %v1752, %v3095
        %v3097 = vpop.f32.mrf.mxu0
        %3098 = vmatprep.mubr.bf16.mxu0 0
        %3099 = vmatmul.mubr.bf16.gmra.mxu0 %v2328
        %v3100 = vpop.f32.mrf.mxu0
        %v3101 = vadd.f32 %v1752, %v3100
        %v3102 = vpop.f32.mrf.mxu0
        %v3103 = vpop.f32.mrf.mxu0
        %v3104 = vadd.f32 %v1752, %v3103
        %v3105 = vpop.f32.mrf.mxu0
        %3106 = vmatprep.mubr.bf16.mxu0 0
        %3107 = vmatmul.mubr.bf16.gmra.mxu0 %v2329
        %v3108 = vpop.f32.mrf.mxu0
        %v3109 = vadd.f32 %v1752, %v3108
        %v3110 = vpop.f32.mrf.mxu0
        %v3111 = vpop.f32.mrf.mxu0
        %v3112 = vadd.f32 %v1752, %v3111
        %v3113 = vpop.f32.mrf.mxu0
        %3114 = vmatprep.mubr.bf16.mxu0 0
        %3115 = vmatmul.mubr.bf16.gmra.mxu0 %v2330
        %v3116 = vpop.f32.mrf.mxu0
        %v3117 = vadd.f32 %v1752, %v3116
        %v3118 = vpop.f32.mrf.mxu0
        %v3119 = vpop.f32.mrf.mxu0
        %v3120 = vadd.f32 %v1752, %v3119
        %v3121 = vpop.f32.mrf.mxu0
        %3122 = vmatprep.mubr.bf16.mxu0 0
        %3123 = vmatmul.mubr.bf16.gmra.mxu0 %v2331
        %v3124 = vpop.f32.mrf.mxu0
        %v3125 = vadd.f32 %v1752, %v3124
        %v3126 = vpop.f32.mrf.mxu0
        %v3127 = vpop.f32.mrf.mxu0
        %v3128 = vadd.f32 %v1752, %v3127
        %v3129 = vpop.f32.mrf.mxu0
        %3130 = vmatprep.mubr.bf16.mxu0 0
        %3131 = vmatmul.mubr.bf16.gmra.mxu0 %v2332
        %v3132 = vpop.f32.mrf.mxu0
        %v3133 = vadd.f32 %v1752, %v3132
        %v3134 = vpop.f32.mrf.mxu0
        %v3135 = vpop.f32.mrf.mxu0
        %v3136 = vadd.f32 %v1752, %v3135
        %v3137 = vpop.f32.mrf.mxu0
        %3138 = vmatprep.mubr.bf16.mxu0 0
        %3139 = vmatmul.mubr.bf16.gmra.mxu0 %v2333
        %v3140 = vpop.f32.mrf.mxu0
        %v3141 = vadd.f32 %v1752, %v3140
        %v3142 = vpop.f32.mrf.mxu0
        %v3143 = vpop.f32.mrf.mxu0
        %v3144 = vadd.f32 %v1752, %v3143
        %v3145 = vpop.f32.mrf.mxu0
        %3146 = vmatprep.mubr.bf16.mxu0 0
        %3147 = vmatmul.mubr.bf16.gmra.mxu0 %v2334
        %v3148 = vpop.f32.mrf.mxu0
        %v3149 = vadd.f32 %v1752, %v3148
        %v3150 = vpop.f32.mrf.mxu0
        %v3151 = vpop.f32.mrf.mxu0
        %v3152 = vadd.f32 %v1752, %v3151
        %v3153 = vpop.f32.mrf.mxu0
        %3154 = vmatprep.mubr.bf16.mxu0 0
        %3155 = vmatmul.mubr.bf16.gmra.mxu0 %v2335
        %v3156 = vpop.f32.mrf.mxu0
        %v3157 = vadd.f32 %v1752, %v3156
        %v3158 = vpop.f32.mrf.mxu0
        %v3159 = vpop.f32.mrf.mxu0
        %v3160 = vadd.f32 %v1752, %v3159
        %v3161 = vpop.f32.mrf.mxu0
        %3162 = vmatprep.mubr.bf16.mxu0 0
        %3163 = vmatmul.mubr.bf16.gmra.mxu0 %v2336
        %v3164 = vpop.f32.mrf.mxu0
        %v3165 = vadd.f32 %v1752, %v3164
        %v3166 = vpop.f32.mrf.mxu0
        %v3167 = vpop.f32.mrf.mxu0
        %v3168 = vadd.f32 %v1752, %v3167
        %v3169 = vpop.f32.mrf.mxu0
        %3170 = vmatprep.mubr.bf16.mxu0 0
        %3171 = vmatmul.mubr.bf16.gmra.mxu0 %v2337
        %v3172 = vpop.f32.mrf.mxu0
        %v3173 = vadd.f32 %v1752, %v3172
        %v3174 = vpop.f32.mrf.mxu0
        %v3175 = vpop.f32.mrf.mxu0
        %v3176 = vadd.f32 %v1752, %v3175
        %v3177 = vpop.f32.mrf.mxu0
        %3178 = vmatprep.mubr.bf16.mxu0 0
        %3179 = vmatmul.mubr.bf16.gmra.mxu0 %v2338
        %v3180 = vpop.f32.mrf.mxu0
        %v3181 = vadd.f32 %v1752, %v3180
        %v3182 = vpop.f32.mrf.mxu0
        %v3183 = vpop.f32.mrf.mxu0
        %v3184 = vadd.f32 %v1752, %v3183
        %v3185 = vpop.f32.mrf.mxu0
        %3186 = vmatprep.mubr.bf16.mxu0 0
        %3187 = vmatmul.mubr.bf16.gmra.mxu0 %v2339
        %v3188 = vpop.f32.mrf.mxu0
        %v3189 = vadd.f32 %v1752, %v3188
        %v3190 = vpop.f32.mrf.mxu0
        %v3191 = vpop.f32.mrf.mxu0
        %v3192 = vadd.f32 %v1752, %v3191
        %v3193 = vpop.f32.mrf.mxu0
        %3194 = vmatprep.mubr.bf16.mxu0 0
        %3195 = vmatmul.mubr.bf16.gmra.mxu0 %v2340
        %v3196 = vpop.f32.mrf.mxu0
        %v3197 = vadd.f32 %v1752, %v3196
        %v3198 = vpop.f32.mrf.mxu0
        %v3199 = vpop.f32.mrf.mxu0
        %v3200 = vadd.f32 %v1752, %v3199
        %v3201 = vpop.f32.mrf.mxu0
        %3202 = vmatprep.mubr.bf16.mxu0 0
        %3203 = vmatmul.mubr.bf16.gmra.mxu0 %v2341
        %v3204 = vpop.f32.mrf.mxu0
        %v3205 = vadd.f32 %v1752, %v3204
        %v3206 = vpop.f32.mrf.mxu0
        %v3207 = vpop.f32.mrf.mxu0
        %v3208 = vadd.f32 %v1752, %v3207
        %v3209 = vpop.f32.mrf.mxu0
        %3210 = vmatprep.mubr.bf16.mxu0 0
        %3211 = vmatmul.mubr.bf16.gmra.mxu0 %v2342
        %v3212 = vpop.f32.mrf.mxu0
        %v3213 = vadd.f32 %v1752, %v3212
        %v3214 = vpop.f32.mrf.mxu0
        %v3215 = vpop.f32.mrf.mxu0
        %v3216 = vadd.f32 %v1752, %v3215
        %v3217 = vpop.f32.mrf.mxu0
        %3218 = vmatprep.mubr.bf16.mxu0 0
        %3219 = vmatmul.mubr.bf16.gmra.mxu0 %v2343
        %v3220 = vpop.f32.mrf.mxu0
        %v3221 = vadd.f32 %v1752, %v3220
        %v3222 = vpop.f32.mrf.mxu0
        %v3223 = vpop.f32.mrf.mxu0
        %v3224 = vadd.f32 %v1752, %v3223
        %v3225 = vpop.f32.mrf.mxu0
        %3226 = vmatprep.mubr.bf16.mxu0 0
        %3227 = vmatmul.mubr.bf16.gmra.mxu0 %v2344
        %v3228 = vpop.f32.mrf.mxu0
        %v3229 = vadd.f32 %v1752, %v3228
        %v3230 = vpop.f32.mrf.mxu0
        %v3231 = vpop.f32.mrf.mxu0
        %v3232 = vadd.f32 %v1752, %v3231
        %v3233 = vpop.f32.mrf.mxu0
        %3234 = vmatprep.mubr.bf16.mxu0 0
        %3235 = vmatmul.mubr.bf16.gmra.mxu0 %v2345
        %v3236 = vpop.f32.mrf.mxu0
        %v3237 = vadd.f32 %v1752, %v3236
        %v3238 = vpop.f32.mrf.mxu0
        %v3239 = vpop.f32.mrf.mxu0
        %v3240 = vadd.f32 %v1752, %v3239
        %v3241 = vpop.f32.mrf.mxu0
        %3242 = vmatprep.mubr.bf16.mxu0 0
        %3243 = vmatmul.mubr.bf16.gmra.mxu0 %v2346
        %v3244 = vpop.f32.mrf.mxu0
        %v3245 = vadd.f32 %v1752, %v3244
        %v3246 = vpop.f32.mrf.mxu0
        %v3247 = vpop.f32.mrf.mxu0
        %v3248 = vadd.f32 %v1752, %v3247
        %v3249 = vpop.f32.mrf.mxu0
        %3250 = vmatprep.mubr.bf16.mxu0 0
        %3251 = vmatmul.mubr.bf16.gmra.mxu0 %v2347
        %v3252 = vpop.f32.mrf.mxu0
        %v3253 = vadd.f32 %v1752, %v3252
        %v3254 = vpop.f32.mrf.mxu0
        %v3255 = vpop.f32.mrf.mxu0
        %v3256 = vadd.f32 %v1752, %v3255
        %v3257 = vpop.f32.mrf.mxu0
        %3258 = vmatprep.mubr.bf16.mxu0 0
        %3259 = vmatmul.mubr.bf16.gmra.mxu0 %v2348
        %v3260 = vpop.f32.mrf.mxu0
        %v3261 = vadd.f32 %v1752, %v3260
        %v3262 = vpop.f32.mrf.mxu0
        %v3263 = vpop.f32.mrf.mxu0
        %v3264 = vadd.f32 %v1752, %v3263
        %v3265 = vpop.f32.mrf.mxu0
        %3266 = vmatprep.mubr.bf16.mxu0 0
        %3267 = vmatmul.mubr.bf16.gmra.mxu0 %v2349
        %v3268 = vpop.f32.mrf.mxu0
        %v3269 = vadd.f32 %v1752, %v3268
        %v3270 = vpop.f32.mrf.mxu0
        %v3271 = vpop.f32.mrf.mxu0
        %v3272 = vadd.f32 %v1752, %v3271
        %v3273 = vpop.f32.mrf.mxu0
        %3274 = vmatprep.mubr.bf16.mxu0 0
        %3275 = vmatmul.mubr.bf16.gmra.mxu0 %v2350
        %v3276 = vpop.f32.mrf.mxu0
        %v3277 = vadd.f32 %v1752, %v3276
        %v3278 = vpop.f32.mrf.mxu0
        %v3279 = vpop.f32.mrf.mxu0
        %v3280 = vadd.f32 %v1752, %v3279
        %v3281 = vpop.f32.mrf.mxu0
        %3282 = vmatprep.mubr.bf16.mxu0 0
        %3283 = vmatmul.mubr.bf16.gmra.mxu0 %v2351
        %v3284 = vpop.f32.mrf.mxu0
        %v3285 = vadd.f32 %v1752, %v3284
        %v3286 = vpop.f32.mrf.mxu0
        %v3287 = vpop.f32.mrf.mxu0
        %v3288 = vadd.f32 %v1752, %v3287
        %v3289 = vpop.f32.mrf.mxu0
        %3290 = vmatprep.mubr.bf16.mxu0 0
        %3291 = vmatmul.mubr.bf16.gmra.mxu0 %v2352
        %v3292 = vpop.f32.mrf.mxu0
        %v3293 = vadd.f32 %v1752, %v3292
        %v3294 = vpop.f32.mrf.mxu0
        %v3295 = vpop.f32.mrf.mxu0
        %v3296 = vadd.f32 %v1752, %v3295
        %v3297 = vpop.f32.mrf.mxu0
        %3298 = vmatprep.mubr.bf16.mxu0 0
        %3299 = vmatmul.mubr.bf16.gmra.mxu0 %v2353
        %v3300 = vpop.f32.mrf.mxu0
        %v3301 = vadd.f32 %v1752, %v3300
        %v3302 = vpop.f32.mrf.mxu0
        %v3303 = vpop.f32.mrf.mxu0
        %v3304 = vadd.f32 %v1752, %v3303
        %v3305 = vpop.f32.mrf.mxu0
        %3306 = vmatprep.mubr.bf16.mxu0 0
        %3307 = vmatmul.mubr.bf16.gmra.mxu0 %v2354
        %v3308 = vpop.f32.mrf.mxu0
        %v3309 = vadd.f32 %v1752, %v3308
        %v3310 = vpop.f32.mrf.mxu0
        %v3311 = vpop.f32.mrf.mxu0
        %v3312 = vadd.f32 %v1752, %v3311
        %v3313 = vpop.f32.mrf.mxu0
        %3314 = vmatprep.mubr.bf16.mxu0 0
        %3315 = vmatmul.mubr.bf16.gmra.mxu0 %v2355
        %v3316 = vpop.f32.mrf.mxu0
        %v3317 = vadd.f32 %v1752, %v3316
        %v3318 = vpop.f32.mrf.mxu0
        %v3319 = vpop.f32.mrf.mxu0
        %v3320 = vadd.f32 %v1752, %v3319
        %v3321 = vpop.f32.mrf.mxu0
        %3322 = vmatprep.mubr.bf16.mxu0 0
        %3323 = vmatmul.mubr.bf16.gmra.mxu0 %v2356
        %v3324 = vpop.f32.mrf.mxu0
        %v3325 = vadd.f32 %v1752, %v3324
        %v3326 = vpop.f32.mrf.mxu0
        %v3327 = vpop.f32.mrf.mxu0
        %v3328 = vadd.f32 %v1752, %v3327
        %v3329 = vpop.f32.mrf.mxu0
        %3330 = vmatprep.mubr.bf16.mxu0 0
        %3331 = vmatmul.mubr.bf16.gmra.mxu0 %v2357
        %v3332 = vpop.f32.mrf.mxu0
        %v3333 = vadd.f32 %v1752, %v3332
        %v3334 = vpop.f32.mrf.mxu0
        %v3335 = vpop.f32.mrf.mxu0
        %v3336 = vadd.f32 %v1752, %v3335
        %v3337 = vpop.f32.mrf.mxu0
        %3338 = vmatprep.mubr.bf16.mxu0 0
        %3339 = vmatmul.mubr.bf16.gmra.mxu0 %v2358
        %v3340 = vpop.f32.mrf.mxu0
        %v3341 = vadd.f32 %v1752, %v3340
        %v3342 = vpop.f32.mrf.mxu0
        %v3343 = vpop.f32.mrf.mxu0
        %v3344 = vadd.f32 %v1752, %v3343
        %v3345 = vpop.f32.mrf.mxu0
        %3346 = vmatprep.mubr.bf16.mxu0 0
        %3347 = vmatmul.mubr.bf16.gmra.mxu0 %v2359
        %v3348 = vpop.f32.mrf.mxu0
        %v3349 = vadd.f32 %v1752, %v3348
        %v3350 = vpop.f32.mrf.mxu0
        %v3351 = vpop.f32.mrf.mxu0
        %v3352 = vadd.f32 %v1752, %v3351
        %v3353 = vpop.f32.mrf.mxu0
        %3354 = vmatprep.mubr.bf16.mxu0 0
        %3355 = vmatmul.mubr.bf16.gmra.mxu0 %v2360
        %v3356 = vpop.f32.mrf.mxu0
        %v3357 = vadd.f32 %v1752, %v3356
        %v3358 = vpop.f32.mrf.mxu0
        %v3359 = vpop.f32.mrf.mxu0
        %v3360 = vadd.f32 %v1752, %v3359
        %v3361 = vpop.f32.mrf.mxu0
        %3362 = vmatprep.mubr.bf16.mxu0 0
        %3363 = vmatmul.mubr.bf16.gmra.mxu0 %v2361
        %v3364 = vpop.f32.mrf.mxu0
        %v3365 = vadd.f32 %v1752, %v3364
        %v3366 = vpop.f32.mrf.mxu0
        %v3367 = vpop.f32.mrf.mxu0
        %v3368 = vadd.f32 %v1752, %v3367
        %v3369 = vpop.f32.mrf.mxu0
        %3370 = vmatprep.mubr.bf16.mxu0 0
        %3371 = vmatmul.mubr.bf16.gmra.mxu0 %v2362
        %v3372 = vpop.f32.mrf.mxu0
        %v3373 = vadd.f32 %v1752, %v3372
        %v3374 = vpop.f32.mrf.mxu0
        %v3375 = vpop.f32.mrf.mxu0
        %v3376 = vadd.f32 %v1752, %v3375
        %v3377 = vpop.f32.mrf.mxu0
        %3378 = vmatprep.mubr.bf16.mxu0 0
        %3379 = vmatmul.mubr.bf16.gmra.mxu0 %v2363
        %v3380 = vpop.f32.mrf.mxu0
        %v3381 = vadd.f32 %v1752, %v3380
        %v3382 = vpop.f32.mrf.mxu0
        %v3383 = vpop.f32.mrf.mxu0
        %v3384 = vadd.f32 %v1752, %v3383
        %v3385 = vpop.f32.mrf.mxu0
        %3386 = vmatprep.mubr.bf16.mxu0 0
        %3387 = vmatmul.mubr.bf16.gmra.mxu0 %v2364
        %v3388 = vpop.f32.mrf.mxu0
        %v3389 = vadd.f32 %v1752, %v3388
        %v3390 = vpop.f32.mrf.mxu0
        %v3391 = vpop.f32.mrf.mxu0
        %v3392 = vadd.f32 %v1752, %v3391
        %v3393 = vpop.f32.mrf.mxu0
        %3394 = vmatprep.mubr.bf16.mxu0 0
        %3395 = vmatmul.mubr.bf16.gmra.mxu0 %v2365
        %v3396 = vpop.f32.mrf.mxu0
        %v3397 = vadd.f32 %v1752, %v3396
        %v3398 = vpop.f32.mrf.mxu0
        %v3399 = vpop.f32.mrf.mxu0
        %v3400 = vadd.f32 %v1752, %v3399
        %v3401 = vpop.f32.mrf.mxu0
        %3402 = vmatprep.mubr.bf16.mxu0 0
        %3403 = vmatmul.mubr.bf16.gmra.mxu0 %v2366
        %v3404 = vpop.f32.mrf.mxu0
        %v3405 = vadd.f32 %v1752, %v3404
        %v3406 = vpop.f32.mrf.mxu0
        %v3407 = vpop.f32.mrf.mxu0
        %v3408 = vadd.f32 %v1752, %v3407
        %v3409 = vpop.f32.mrf.mxu0
        %3410 = vmatprep.mubr.bf16.mxu0 0
        %3411 = vmatmul.mubr.bf16.gmra.mxu0 %v2367
        %v3412 = vpop.f32.mrf.mxu0
        %v3413 = vadd.f32 %v1752, %v3412
        %v3414 = vpop.f32.mrf.mxu0
        %v3415 = vpop.f32.mrf.mxu0
        %v3416 = vadd.f32 %v1752, %v3415
        %v3417 = vpop.f32.mrf.mxu0
        %3418 = vmatprep.mubr.bf16.mxu0 0
        %3419 = vmatmul.mubr.bf16.gmra.mxu0 %v2368
        %v3420 = vpop.f32.mrf.mxu0
        %v3421 = vadd.f32 %v1752, %v3420
        %v3422 = vpop.f32.mrf.mxu0
        %v3423 = vpop.f32.mrf.mxu0
        %v3424 = vadd.f32 %v1752, %v3423
        %v3425 = vpop.f32.mrf.mxu0
        %3426 = vmatprep.mubr.bf16.mxu0 0
        %3427 = vmatmul.mubr.bf16.gmra.mxu0 %v2369
        %v3428 = vpop.f32.mrf.mxu0
        %v3429 = vadd.f32 %v1752, %v3428
        %v3430 = vpop.f32.mrf.mxu0
        %v3431 = vpop.f32.mrf.mxu0
        %v3432 = vadd.f32 %v1752, %v3431
        %v3433 = vpop.f32.mrf.mxu0
        %3434 = vmatprep.mubr.bf16.mxu0 0
        %3435 = vmatmul.mubr.bf16.gmra.mxu0 %v2370
        %v3436 = vpop.f32.mrf.mxu0
        %v3437 = vadd.f32 %v1752, %v3436
        %v3438 = vpop.f32.mrf.mxu0
        %v3439 = vpop.f32.mrf.mxu0
        %v3440 = vadd.f32 %v1752, %v3439
        %v3441 = vpop.f32.mrf.mxu0
        %3442 = vmatprep.mubr.bf16.mxu0 0
        %3443 = vmatmul.mubr.bf16.gmra.mxu0 %v2371
        %v3444 = vpop.f32.mrf.mxu0
        %v3445 = vadd.f32 %v1752, %v3444
        %v3446 = vpop.f32.mrf.mxu0
        %v3447 = vpop.f32.mrf.mxu0
        %v3448 = vadd.f32 %v1752, %v3447
        %v3449 = vpop.f32.mrf.mxu0
        %3450 = vmatprep.mubr.bf16.mxu0 0
        %3451 = vmatmul.mubr.bf16.gmra.mxu0 %v2372
        %v3452 = vpop.f32.mrf.mxu0
        %v3453 = vadd.f32 %v1752, %v3452
        %v3454 = vpop.f32.mrf.mxu0
        %v3455 = vpop.f32.mrf.mxu0
        %v3456 = vadd.f32 %v1752, %v3455
        %v3457 = vpop.f32.mrf.mxu0
        %3458 = vmatprep.mubr.bf16.mxu0 0
        %3459 = vmatmul.mubr.bf16.gmra.mxu0 %v2373
        %v3460 = vpop.f32.mrf.mxu0
        %v3461 = vadd.f32 %v1752, %v3460
        %v3462 = vpop.f32.mrf.mxu0
        %v3463 = vpop.f32.mrf.mxu0
        %v3464 = vadd.f32 %v1752, %v3463
        %v3465 = vpop.f32.mrf.mxu0
        %3466 = vmatprep.mubr.bf16.mxu0 0
        %3467 = vmatmul.mubr.bf16.gmra.mxu0 %v2374
        %v3468 = vpop.f32.mrf.mxu0
        %v3469 = vadd.f32 %v1752, %v3468
        %v3470 = vpop.f32.mrf.mxu0
        %v3471 = vpop.f32.mrf.mxu0
        %v3472 = vadd.f32 %v1752, %v3471
        %v3473 = vpop.f32.mrf.mxu0
        %3474 = vmatprep.mubr.bf16.mxu0 0
        %3475 = vmatmul.mubr.bf16.gmra.mxu0 %v2375
        %v3476 = vpop.f32.mrf.mxu0
        %v3477 = vadd.f32 %v1752, %v3476
        %v3478 = vpop.f32.mrf.mxu0
        %v3479 = vpop.f32.mrf.mxu0
        %v3480 = vadd.f32 %v1752, %v3479
        %v3481 = vpop.f32.mrf.mxu0
        %3482 = vmatprep.mubr.bf16.mxu0 0
        %3483 = vmatmul.mubr.bf16.gmra.mxu0 %v2376
        %v3484 = vpop.f32.mrf.mxu0
        %v3485 = vadd.f32 %v1752, %v3484
        %v3486 = vpop.f32.mrf.mxu0
        %v3487 = vpop.f32.mrf.mxu0
        %v3488 = vadd.f32 %v1752, %v3487
        %v3489 = vpop.f32.mrf.mxu0
        %3490 = vmatprep.mubr.bf16.mxu0 0
        %3491 = vmatmul.mubr.bf16.gmra.mxu0 %v2377
        %v3492 = vpop.f32.mrf.mxu0
        %v3493 = vadd.f32 %v1752, %v3492
        %v3494 = vpop.f32.mrf.mxu0
        %v3495 = vpop.f32.mrf.mxu0
        %v3496 = vadd.f32 %v1752, %v3495
        %v3497 = vpop.f32.mrf.mxu0
        %3498 = vmatprep.mubr.bf16.mxu0 0
        %3499 = vmatmul.mubr.bf16.gmra.mxu0 %v2378
        %v3500 = vpop.f32.mrf.mxu0
        %v3501 = vadd.f32 %v1752, %v3500
        %v3502 = vpop.f32.mrf.mxu0
        %v3503 = vpop.f32.mrf.mxu0
        %v3504 = vadd.f32 %v1752, %v3503
        %v3505 = vpop.f32.mrf.mxu0
        %3506 = vmatprep.mubr.bf16.mxu0 0
        %3507 = vmatmul.mubr.bf16.gmra.mxu0 %v2379
        %v3508 = vpop.f32.mrf.mxu0
        %v3509 = vadd.f32 %v1752, %v3508
        %v3510 = vpop.f32.mrf.mxu0
        %v3511 = vpop.f32.mrf.mxu0
        %v3512 = vadd.f32 %v1752, %v3511
        %v3513 = vpop.f32.mrf.mxu0
        %3514 = vmatprep.mubr.bf16.mxu0 0
        %3515 = vmatmul.mubr.bf16.gmra.mxu0 %v2380
        %v3516 = vpop.f32.mrf.mxu0
        %v3517 = vadd.f32 %v1752, %v3516
        %v3518 = vpop.f32.mrf.mxu0
        %v3519 = vpop.f32.mrf.mxu0
        %v3520 = vadd.f32 %v1752, %v3519
        %v3521 = vpop.f32.mrf.mxu0
        %3522 = vmatprep.mubr.bf16.mxu0 0
        %3523 = vmatmul.mubr.bf16.gmra.mxu0 %v2381
        %v3524 = vpop.f32.mrf.mxu0
        %v3525 = vadd.f32 %v1752, %v3524
        %v3526 = vpop.f32.mrf.mxu0
        %v3527 = vpop.f32.mrf.mxu0
        %v3528 = vadd.f32 %v1752, %v3527
        %v3529 = vpop.f32.mrf.mxu0
        %3530 = vmatprep.mubr.bf16.mxu0 0
        %3531 = vmatmul.mubr.bf16.gmra.mxu0 %v2382
        %v3532 = vpop.f32.mrf.mxu0
        %v3533 = vadd.f32 %v1752, %v3532
        %v3534 = vpop.f32.mrf.mxu0
        %v3535 = vpop.f32.mrf.mxu0
        %v3536 = vadd.f32 %v1752, %v3535
        %v3537 = vpop.f32.mrf.mxu0
        %3538 = vmatprep.mubr.bf16.mxu0 0
        %3539 = vmatmul.mubr.bf16.gmra.mxu0 %v2383
        %v3540 = vpop.f32.mrf.mxu0
        %v3541 = vadd.f32 %v1752, %v3540
        %v3542 = vpop.f32.mrf.mxu0
        %v3543 = vpop.f32.mrf.mxu0
        %v3544 = vadd.f32 %v1752, %v3543
        %v3545 = vpop.f32.mrf.mxu0
        %3546 = vmatprep.mubr.bf16.mxu0 0
        %3547 = vmatmul.mubr.bf16.gmra.mxu0 %v2384
        %v3548 = vpop.f32.mrf.mxu0
        %v3549 = vadd.f32 %v1752, %v3548
        %v3550 = vpop.f32.mrf.mxu0
        %v3551 = vpop.f32.mrf.mxu0
        %v3552 = vadd.f32 %v1752, %v3551
        %v3553 = vpop.f32.mrf.mxu0
        %3554 = vmatprep.mubr.bf16.mxu0 0
        %3555 = vmatmul.mubr.bf16.gmra.mxu0 %v2385
        %v3556 = vpop.f32.mrf.mxu0
        %v3557 = vadd.f32 %v1752, %v3556
        %v3558 = vpop.f32.mrf.mxu0
        %v3559 = vpop.f32.mrf.mxu0
        %v3560 = vadd.f32 %v1752, %v3559
        %v3561 = vpop.f32.mrf.mxu0
        %3562 = vmatprep.mubr.bf16.mxu0 0
        %3563 = vmatmul.mubr.bf16.gmra.mxu0 %v2386
        %v3564 = vpop.f32.mrf.mxu0
        %v3565 = vadd.f32 %v1752, %v3564
        %v3566 = vpop.f32.mrf.mxu0
        %v3567 = vpop.f32.mrf.mxu0
        %v3568 = vadd.f32 %v1752, %v3567
        %v3569 = vpop.f32.mrf.mxu0
        %3570 = vmatprep.mubr.bf16.mxu0 0
        %3571 = vmatmul.mubr.bf16.gmra.mxu0 %v2387
        %v3572 = vpop.f32.mrf.mxu0
        %v3573 = vadd.f32 %v1752, %v3572
        %v3574 = vpop.f32.mrf.mxu0
        %v3575 = vpop.f32.mrf.mxu0
        %v3576 = vadd.f32 %v1752, %v3575
        %v3577 = vpop.f32.mrf.mxu0
        %3578 = vmatprep.mubr.bf16.mxu0 0
        %3579 = vmatmul.mubr.bf16.gmra.mxu0 %v2388
        %v3580 = vpop.f32.mrf.mxu0
        %v3581 = vadd.f32 %v1752, %v3580
        %v3582 = vpop.f32.mrf.mxu0
        %v3583 = vpop.f32.mrf.mxu0
        %v3584 = vadd.f32 %v1752, %v3583
        %v3585 = vpop.f32.mrf.mxu0
        %3586 = vmatprep.mubr.bf16.mxu0 0
        %3587 = vmatmul.mubr.bf16.gmra.mxu0 %v2389
        %v3588 = vpop.f32.mrf.mxu0
        %v3589 = vadd.f32 %v1752, %v3588
        %v3590 = vpop.f32.mrf.mxu0
        %v3591 = vpop.f32.mrf.mxu0
        %v3592 = vadd.f32 %v1752, %v3591
        %v3593 = vpop.f32.mrf.mxu0
        %3594 = vmatprep.mubr.bf16.mxu0 0
        %3595 = vmatmul.mubr.bf16.gmra.mxu0 %v2390
        %v3596 = vpop.f32.mrf.mxu0
        %v3597 = vadd.f32 %v1752, %v3596
        %v3598 = vpop.f32.mrf.mxu0
        %v3599 = vpop.f32.mrf.mxu0
        %v3600 = vadd.f32 %v1752, %v3599
        %v3601 = vpop.f32.mrf.mxu0
        %3602 = vmatprep.mubr.bf16.mxu0 0
        %3603 = vmatmul.mubr.bf16.gmra.mxu0 %v2391
        %v3604 = vpop.f32.mrf.mxu0
        %v3605 = vadd.f32 %v1752, %v3604
        %v3606 = vpop.f32.mrf.mxu0
        %v3607 = vpop.f32.mrf.mxu0
        %v3608 = vadd.f32 %v1752, %v3607
        %v3609 = vpop.f32.mrf.mxu0
        %3610 = vmatprep.mubr.bf16.mxu0 0
        %3611 = vmatmul.mubr.bf16.gmra.mxu0 %v2392
        %v3612 = vpop.f32.mrf.mxu0
        %v3613 = vadd.f32 %v1752, %v3612
        %v3614 = vpop.f32.mrf.mxu0
        %v3615 = vpop.f32.mrf.mxu0
        %v3616 = vadd.f32 %v1752, %v3615
        %v3617 = vpop.f32.mrf.mxu0
        %3618 = vmatprep.mubr.bf16.mxu0 0
        %3619 = vmatmul.mubr.bf16.gmra.mxu0 %v2393
        %v3620 = vpop.f32.mrf.mxu0
        %v3621 = vadd.f32 %v1752, %v3620
        %v3622 = vpop.f32.mrf.mxu0
        %v3623 = vpop.f32.mrf.mxu0
        %v3624 = vadd.f32 %v1752, %v3623
        %v3625 = vpop.f32.mrf.mxu0
        %3626 = vdwg.mxu0
        %v3627 = vtanh.pop %v2605
        %v3628 = vtanh.pop %v2608
        %v3629 = vtanh.pop %v2613
        %v3630 = vtanh.pop %v2616
        %v3631 = vtanh.pop %v2621
        %v3632 = vtanh.pop %v2624
        %v3633 = vtanh.pop %v2629
        %v3634 = vtanh.pop %v2632
        %v3635 = vtanh.pop %v2637
        %v3636 = vtanh.pop %v2640
        %v3637 = vtanh.pop %v2645
        %v3638 = vtanh.pop %v2648
        %v3639 = vtanh.pop %v2653
        %v3640 = vtanh.pop %v2656
        %v3641 = vtanh.pop %v2661
        %v3642 = vtanh.pop %v2664
        %v3643 = vtanh.pop %v2669
        %v3644 = vtanh.pop %v2672
        %v3645 = vtanh.pop %v2677
        %v3646 = vtanh.pop %v2680
        %v3647 = vtanh.pop %v2685
        %v3648 = vtanh.pop %v2688
        %v3649 = vtanh.pop %v2693
        %v3650 = vtanh.pop %v2696
        %v3651 = vtanh.pop %v2701
        %v3652 = vtanh.pop %v2704
        %v3653 = vtanh.pop %v2709
        %v3654 = vtanh.pop %v2712
        %v3655 = vtanh.pop %v2717
        %v3656 = vtanh.pop %v2720
        %v3657 = vtanh.pop %v2725
        %v3658 = vtanh.pop %v2728
        %v3659 = vtanh.pop %v2733
        %v3660 = vtanh.pop %v2736
        %v3661 = vtanh.pop %v2741
        %v3662 = vtanh.pop %v2744
        %v3663 = vtanh.pop %v2749
        %v3664 = vtanh.pop %v2752
        %v3665 = vtanh.pop %v2757
        %v3666 = vtanh.pop %v2760
        %v3667 = vtanh.pop %v2765
        %v3668 = vtanh.pop %v2768
        %v3669 = vtanh.pop %v2773
        %v3670 = vtanh.pop %v2776
        %v3671 = vtanh.pop %v2781
        %v3672 = vtanh.pop %v2784
        %v3673 = vtanh.pop %v2789
        %v3674 = vtanh.pop %v2792
        %v3675 = vtanh.pop %v2797
        %v3676 = vtanh.pop %v2800
        %v3677 = vtanh.pop %v2805
        %v3678 = vtanh.pop %v2808
        %v3679 = vtanh.pop %v2813
        %v3680 = vtanh.pop %v2816
        %v3681 = vtanh.pop %v2821
        %v3682 = vtanh.pop %v2824
        %v3683 = vtanh.pop %v2829
        %v3684 = vtanh.pop %v2832
        %v3685 = vtanh.pop %v2837
        %v3686 = vtanh.pop %v2840
        %v3687 = vtanh.pop %v2845
        %v3688 = vtanh.pop %v2848
        %v3689 = vtanh.pop %v2853
        %v3690 = vtanh.pop %v2856
        %v3691 = vtanh.pop %v2861
        %v3692 = vtanh.pop %v2864
        %v3693 = vtanh.pop %v2869
        %v3694 = vtanh.pop %v2872
        %v3695 = vtanh.pop %v2877
        %v3696 = vtanh.pop %v2880
        %v3697 = vtanh.pop %v2885
        %v3698 = vtanh.pop %v2888
        %v3699 = vtanh.pop %v2893
        %v3700 = vtanh.pop %v2896
        %v3701 = vtanh.pop %v2901
        %v3702 = vtanh.pop %v2904
        %v3703 = vtanh.pop %v2909
        %v3704 = vtanh.pop %v2912
        %v3705 = vtanh.pop %v2917
        %v3706 = vtanh.pop %v2920
        %v3707 = vtanh.pop %v2925
        %v3708 = vtanh.pop %v2928
        %v3709 = vtanh.pop %v2933
        %v3710 = vtanh.pop %v2936
        %v3711 = vtanh.pop %v2941
        %v3712 = vtanh.pop %v2944
        %v3713 = vtanh.pop %v2949
        %v3714 = vtanh.pop %v2952
        %v3715 = vtanh.pop %v2957
        %v3716 = vtanh.pop %v2960
        %v3717 = vtanh.pop %v2965
        %v3718 = vtanh.pop %v2968
        %v3719 = vtanh.pop %v2973
        %v3720 = vtanh.pop %v2976
        %v3721 = vtanh.pop %v2981
        %v3722 = vtanh.pop %v2984
        %v3723 = vtanh.pop %v2989
        %v3724 = vtanh.pop %v2992
        %v3725 = vtanh.pop %v2997
        %v3726 = vtanh.pop %v3000
        %v3727 = vtanh.pop %v3005
        %v3728 = vtanh.pop %v3008
        %v3729 = vtanh.pop %v3013
        %v3730 = vtanh.pop %v3016
        %v3731 = vtanh.pop %v3021
        %v3732 = vtanh.pop %v3024
        %v3733 = vtanh.pop %v3029
        %v3734 = vtanh.pop %v3032
        %v3735 = vtanh.pop %v3037
        %v3736 = vtanh.pop %v3040
        %v3737 = vtanh.pop %v3045
        %v3738 = vtanh.pop %v3048
        %v3739 = vtanh.pop %v3053
        %v3740 = vtanh.pop %v3056
        %v3741 = vtanh.pop %v3061
        %v3742 = vtanh.pop %v3064
        %v3743 = vtanh.pop %v3069
        %v3744 = vtanh.pop %v3072
        %v3745 = vtanh.pop %v3077
        %v3746 = vtanh.pop %v3080
        %v3747 = vtanh.pop %v3085
        %v3748 = vtanh.pop %v3088
        %v3749 = vtanh.pop %v3093
        %v3750 = vtanh.pop %v3096
        %v3751 = vtanh.pop %v3101
        %v3752 = vtanh.pop %v3104
        %v3753 = vtanh.pop %v3109
        %v3754 = vtanh.pop %v3112
        %v3755 = vtanh.pop %v3117
        %v3756 = vtanh.pop %v3120
        %v3757 = vtanh.pop %v3125
        %v3758 = vtanh.pop %v3128
        %v3759 = vtanh.pop %v3133
        %v3760 = vtanh.pop %v3136
        %v3761 = vtanh.pop %v3141
        %v3762 = vtanh.pop %v3144
        %v3763 = vtanh.pop %v3149
        %v3764 = vtanh.pop %v3152
        %v3765 = vtanh.pop %v3157
        %v3766 = vtanh.pop %v3160
        %v3767 = vtanh.pop %v3165
        %v3768 = vtanh.pop %v3168
        %v3769 = vtanh.pop %v3173
        %v3770 = vtanh.pop %v3176
        %v3771 = vtanh.pop %v3181
        %v3772 = vtanh.pop %v3184
        %v3773 = vtanh.pop %v3189
        %v3774 = vtanh.pop %v3192
        %v3775 = vtanh.pop %v3197
        %v3776 = vtanh.pop %v3200
        %v3777 = vtanh.pop %v3205
        %v3778 = vtanh.pop %v3208
        %v3779 = vtanh.pop %v3213
        %v3780 = vtanh.pop %v3216
        %v3781 = vtanh.pop %v3221
        %v3782 = vtanh.pop %v3224
        %v3783 = vtanh.pop %v3229
        %v3784 = vtanh.pop %v3232
        %v3785 = vtanh.pop %v3237
        %v3786 = vtanh.pop %v3240
        %v3787 = vtanh.pop %v3245
        %v3788 = vtanh.pop %v3248
        %v3789 = vtanh.pop %v3253
        %v3790 = vtanh.pop %v3256
        %v3791 = vtanh.pop %v3261
        %v3792 = vtanh.pop %v3264
        %v3793 = vtanh.pop %v3269
        %v3794 = vtanh.pop %v3272
        %v3795 = vtanh.pop %v3277
        %v3796 = vtanh.pop %v3280
        %v3797 = vtanh.pop %v3285
        %v3798 = vtanh.pop %v3288
        %v3799 = vtanh.pop %v3293
        %v3800 = vtanh.pop %v3296
        %v3801 = vtanh.pop %v3301
        %v3802 = vtanh.pop %v3304
        %v3803 = vtanh.pop %v3309
        %v3804 = vtanh.pop %v3312
        %v3805 = vtanh.pop %v3317
        %v3806 = vtanh.pop %v3320
        %v3807 = vtanh.pop %v3325
        %v3808 = vtanh.pop %v3328
        %v3809 = vtanh.pop %v3333
        %v3810 = vtanh.pop %v3336
        %v3811 = vtanh.pop %v3341
        %v3812 = vtanh.pop %v3344
        %v3813 = vtanh.pop %v3349
        %v3814 = vtanh.pop %v3352
        %v3815 = vtanh.pop %v3357
        %v3816 = vtanh.pop %v3360
        %v3817 = vtanh.pop %v3365
        %v3818 = vtanh.pop %v3368
        %v3819 = vtanh.pop %v3373
        %v3820 = vtanh.pop %v3376
        %v3821 = vtanh.pop %v3381
        %v3822 = vtanh.pop %v3384
        %v3823 = vtanh.pop %v3389
        %v3824 = vtanh.pop %v3392
        %v3825 = vtanh.pop %v3397
        %v3826 = vtanh.pop %v3400
        %v3827 = vtanh.pop %v3405
        %v3828 = vtanh.pop %v3408
        %v3829 = vtanh.pop %v3413
        %v3830 = vtanh.pop %v3416
        %v3831 = vtanh.pop %v3421
        %v3832 = vtanh.pop %v3424
        %v3833 = vtanh.pop %v3429
        %v3834 = vtanh.pop %v3432
        %v3835 = vtanh.pop %v3437
        %v3836 = vtanh.pop %v3440
        %v3837 = vtanh.pop %v3445
        %v3838 = vtanh.pop %v3448
        %v3839 = vtanh.pop %v3453
        %v3840 = vtanh.pop %v3456
        %v3841 = vtanh.pop %v3461
        %v3842 = vtanh.pop %v3464
        %v3843 = vtanh.pop %v3469
        %v3844 = vtanh.pop %v3472
        %v3845 = vtanh.pop %v3477
        %v3846 = vtanh.pop %v3480
        %v3847 = vtanh.pop %v3485
        %v3848 = vtanh.pop %v3488
        %v3849 = vtanh.pop %v3493
        %v3850 = vtanh.pop %v3496
        %v3851 = vtanh.pop %v3501
        %v3852 = vtanh.pop %v3504
        %v3853 = vtanh.pop %v3509
        %v3854 = vtanh.pop %v3512
        %v3855 = vtanh.pop %v3517
        %v3856 = vtanh.pop %v3520
        %v3857 = vtanh.pop %v3525
        %v3858 = vtanh.pop %v3528
        %v3859 = vtanh.pop %v3533
        %v3860 = vtanh.pop %v3536
        %v3861 = vtanh.pop %v3541
        %v3862 = vtanh.pop %v3544
        %v3863 = vtanh.pop %v3549
        %v3864 = vtanh.pop %v3552
        %v3865 = vtanh.pop %v3557
        %v3866 = vtanh.pop %v3560
        %v3867 = vtanh.pop %v3565
        %v3868 = vtanh.pop %v3568
        %v3869 = vtanh.pop %v3573
        %v3870 = vtanh.pop %v3576
        %v3871 = vtanh.pop %v3581
        %v3872 = vtanh.pop %v3584
        %v3873 = vtanh.pop %v3589
        %v3874 = vtanh.pop %v3592
        %v3875 = vtanh.pop %v3597
        %v3876 = vtanh.pop %v3600
        %v3877 = vtanh.pop %v3605
        %v3878 = vtanh.pop %v3608
        %v3879 = vtanh.pop %v3613
        %v3880 = vtanh.pop %v3616
        %v3881 = vtanh.pop %v3621
        %v3882 = vtanh.pop %v3624
        %v3883 = vld [vmem:[#allocation2] sm:$0xff]
        %v3884 = vld [vmem:[#allocation2 + $0x8] sm:$0xff]
        %v3885 = vld [vmem:[#allocation2 + $0x10] sm:$0xff]
        %v3886 = vld [vmem:[#allocation2 + $0x18] sm:$0xff]
        %v3887 = vadd.f32 %v3627, %v3628
        %v3888 = vadd.f32 %v3887, %v3629
        %v3889 = vadd.f32 %v3888, %v3630
        %v3890 = vadd.f32 %v3889, %v3631
        %v3891 = vadd.f32 %v3890, %v3632
        %v3892 = vadd.f32 %v3891, %v3633
        %v3893 = vadd.f32 %v3892, %v3634
        %v3894 = vrot.slane %v3893, 4
        %v3895 = vadd.f32 %v3893, %v3894
        %v3896 = vrot.slane %v3895, 2
        %v3897 = vadd.f32 %v3895, %v3896
        %v3898 = vrot.slane %v3897, 1
        %v3899 = vadd.f32 %v3897, %v3898
        %v3900 = vadd.f32 %v3635, %v3636
        %v3901 = vadd.f32 %v3900, %v3637
        %v3902 = vadd.f32 %v3901, %v3638
        %v3903 = vadd.f32 %v3902, %v3639
        %v3904 = vadd.f32 %v3903, %v3640
        %v3905 = vadd.f32 %v3904, %v3641
        %v3906 = vadd.f32 %v3905, %v3642
        %v3907 = vrot.slane %v3906, 4
        %v3908 = vadd.f32 %v3906, %v3907
        %v3909 = vrot.slane %v3908, 2
        %v3910 = vadd.f32 %v3908, %v3909
        %v3911 = vrot.slane %v3910, 1
        %v3912 = vadd.f32 %v3910, %v3911
        %v3913 = vadd.f32 %v3643, %v3644
        %v3914 = vadd.f32 %v3913, %v3645
        %v3915 = vadd.f32 %v3914, %v3646
        %v3916 = vadd.f32 %v3915, %v3647
        %v3917 = vadd.f32 %v3916, %v3648
        %v3918 = vadd.f32 %v3917, %v3649
        %v3919 = vadd.f32 %v3918, %v3650
        %v3920 = vrot.slane %v3919, 4
        %v3921 = vadd.f32 %v3919, %v3920
        %v3922 = vrot.slane %v3921, 2
        %v3923 = vadd.f32 %v3921, %v3922
        %v3924 = vrot.slane %v3923, 1
        %v3925 = vadd.f32 %v3923, %v3924
        %v3926 = vadd.f32 %v3651, %v3652
        %v3927 = vadd.f32 %v3926, %v3653
        %v3928 = vadd.f32 %v3927, %v3654
        %v3929 = vadd.f32 %v3928, %v3655
        %v3930 = vadd.f32 %v3929, %v3656
        %v3931 = vadd.f32 %v3930, %v3657
        %v3932 = vadd.f32 %v3931, %v3658
        %v3933 = vrot.slane %v3932, 4
        %v3934 = vadd.f32 %v3932, %v3933
        %v3935 = vrot.slane %v3934, 2
        %v3936 = vadd.f32 %v3934, %v3935
        %v3937 = vrot.slane %v3936, 1
        %v3938 = vadd.f32 %v3936, %v3937
        %v3939 = vadd.f32 %v3659, %v3660
        %v3940 = vadd.f32 %v3939, %v3661
        %v3941 = vadd.f32 %v3940, %v3662
        %v3942 = vadd.f32 %v3941, %v3663
        %v3943 = vadd.f32 %v3942, %v3664
        %v3944 = vadd.f32 %v3943, %v3665
        %v3945 = vadd.f32 %v3944, %v3666
        %v3946 = vrot.slane %v3945, 4
        %v3947 = vadd.f32 %v3945, %v3946
        %v3948 = vrot.slane %v3947, 2
        %v3949 = vadd.f32 %v3947, %v3948
        %v3950 = vrot.slane %v3949, 1
        %v3951 = vadd.f32 %v3949, %v3950
        %v3952 = vadd.f32 %v3667, %v3668
        %v3953 = vadd.f32 %v3952, %v3669
        %v3954 = vadd.f32 %v3953, %v3670
        %v3955 = vadd.f32 %v3954, %v3671
        %v3956 = vadd.f32 %v3955, %v3672
        %v3957 = vadd.f32 %v3956, %v3673
        %v3958 = vadd.f32 %v3957, %v3674
        %v3959 = vrot.slane %v3958, 4
        %v3960 = vadd.f32 %v3958, %v3959
        %v3961 = vrot.slane %v3960, 2
        %v3962 = vadd.f32 %v3960, %v3961
        %v3963 = vrot.slane %v3962, 1
        %v3964 = vadd.f32 %v3962, %v3963
        %v3965 = vadd.f32 %v3675, %v3676
        %v3966 = vadd.f32 %v3965, %v3677
        %v3967 = vadd.f32 %v3966, %v3678
        %v3968 = vadd.f32 %v3967, %v3679
        %v3969 = vadd.f32 %v3968, %v3680
        %v3970 = vadd.f32 %v3969, %v3681
        %v3971 = vadd.f32 %v3970, %v3682
        %v3972 = vrot.slane %v3971, 4
        %v3973 = vadd.f32 %v3971, %v3972
        %v3974 = vrot.slane %v3973, 2
        %v3975 = vadd.f32 %v3973, %v3974
        %v3976 = vrot.slane %v3975, 1
        %v3977 = vadd.f32 %v3975, %v3976
        %v3978 = vadd.f32 %v3683, %v3684
        %v3979 = vadd.f32 %v3978, %v3685
        %v3980 = vadd.f32 %v3979, %v3686
        %v3981 = vadd.f32 %v3980, %v3687
        %v3982 = vadd.f32 %v3981, %v3688
        %v3983 = vadd.f32 %v3982, %v3689
        %v3984 = vadd.f32 %v3983, %v3690
        %v3985 = vrot.slane %v3984, 4
        %v3986 = vadd.f32 %v3984, %v3985
        %v3987 = vrot.slane %v3986, 2
        %v3988 = vadd.f32 %v3986, %v3987
        %v3989 = vrot.slane %v3988, 1
        %v3990 = vadd.f32 %v3988, %v3989
        %v3991 = vadd.f32 %v3691, %v3692
        %v3992 = vadd.f32 %v3991, %v3693
        %v3993 = vadd.f32 %v3992, %v3694
        %v3994 = vadd.f32 %v3993, %v3695
        %v3995 = vadd.f32 %v3994, %v3696
        %v3996 = vadd.f32 %v3995, %v3697
        %v3997 = vadd.f32 %v3996, %v3698
        %v3998 = vrot.slane %v3997, 4
        %v3999 = vadd.f32 %v3997, %v3998
        %v4000 = vrot.slane %v3999, 2
        %v4001 = vadd.f32 %v3999, %v4000
        %v4002 = vrot.slane %v4001, 1
        %v4003 = vadd.f32 %v4001, %v4002
        %v4004 = vadd.f32 %v3699, %v3700
        %v4005 = vadd.f32 %v4004, %v3701
        %v4006 = vadd.f32 %v4005, %v3702
        %v4007 = vadd.f32 %v4006, %v3703
        %v4008 = vadd.f32 %v4007, %v3704
        %v4009 = vadd.f32 %v4008, %v3705
        %v4010 = vadd.f32 %v4009, %v3706
        %v4011 = vrot.slane %v4010, 4
        %v4012 = vadd.f32 %v4010, %v4011
        %v4013 = vrot.slane %v4012, 2
        %v4014 = vadd.f32 %v4012, %v4013
        %v4015 = vrot.slane %v4014, 1
        %v4016 = vadd.f32 %v4014, %v4015
        %v4017 = vadd.f32 %v3707, %v3708
        %v4018 = vadd.f32 %v4017, %v3709
        %v4019 = vadd.f32 %v4018, %v3710
        %v4020 = vadd.f32 %v4019, %v3711
        %v4021 = vadd.f32 %v4020, %v3712
        %v4022 = vadd.f32 %v4021, %v3713
        %v4023 = vadd.f32 %v4022, %v3714
        %v4024 = vrot.slane %v4023, 4
        %v4025 = vadd.f32 %v4023, %v4024
        %v4026 = vrot.slane %v4025, 2
        %v4027 = vadd.f32 %v4025, %v4026
        %v4028 = vrot.slane %v4027, 1
        %v4029 = vadd.f32 %v4027, %v4028
        %v4030 = vadd.f32 %v3715, %v3716
        %v4031 = vadd.f32 %v4030, %v3717
        %v4032 = vadd.f32 %v4031, %v3718
        %v4033 = vadd.f32 %v4032, %v3719
        %v4034 = vadd.f32 %v4033, %v3720
        %v4035 = vadd.f32 %v4034, %v3721
        %v4036 = vadd.f32 %v4035, %v3722
        %v4037 = vrot.slane %v4036, 4
        %v4038 = vadd.f32 %v4036, %v4037
        %v4039 = vrot.slane %v4038, 2
        %v4040 = vadd.f32 %v4038, %v4039
        %v4041 = vrot.slane %v4040, 1
        %v4042 = vadd.f32 %v4040, %v4041
        %v4043 = vadd.f32 %v3723, %v3724
        %v4044 = vadd.f32 %v4043, %v3725
        %v4045 = vadd.f32 %v4044, %v3726
        %v4046 = vadd.f32 %v4045, %v3727
        %v4047 = vadd.f32 %v4046, %v3728
        %v4048 = vadd.f32 %v4047, %v3729
        %v4049 = vadd.f32 %v4048, %v3730
        %v4050 = vrot.slane %v4049, 4
        %v4051 = vadd.f32 %v4049, %v4050
        %v4052 = vrot.slane %v4051, 2
        %v4053 = vadd.f32 %v4051, %v4052
        %v4054 = vrot.slane %v4053, 1
        %v4055 = vadd.f32 %v4053, %v4054
        %v4056 = vadd.f32 %v3731, %v3732
        %v4057 = vadd.f32 %v4056, %v3733
        %v4058 = vadd.f32 %v4057, %v3734
        %v4059 = vadd.f32 %v4058, %v3735
        %v4060 = vadd.f32 %v4059, %v3736
        %v4061 = vadd.f32 %v4060, %v3737
        %v4062 = vadd.f32 %v4061, %v3738
        %v4063 = vrot.slane %v4062, 4
        %v4064 = vadd.f32 %v4062, %v4063
        %v4065 = vrot.slane %v4064, 2
        %v4066 = vadd.f32 %v4064, %v4065
        %v4067 = vrot.slane %v4066, 1
        %v4068 = vadd.f32 %v4066, %v4067
        %v4069 = vadd.f32 %v3739, %v3740
        %v4070 = vadd.f32 %v4069, %v3741
        %v4071 = vadd.f32 %v4070, %v3742
        %v4072 = vadd.f32 %v4071, %v3743
        %v4073 = vadd.f32 %v4072, %v3744
        %v4074 = vadd.f32 %v4073, %v3745
        %v4075 = vadd.f32 %v4074, %v3746
        %v4076 = vrot.slane %v4075, 4
        %v4077 = vadd.f32 %v4075, %v4076
        %v4078 = vrot.slane %v4077, 2
        %v4079 = vadd.f32 %v4077, %v4078
        %v4080 = vrot.slane %v4079, 1
        %v4081 = vadd.f32 %v4079, %v4080
        %v4082 = vadd.f32 %v3747, %v3748
        %v4083 = vadd.f32 %v4082, %v3749
        %v4084 = vadd.f32 %v4083, %v3750
        %v4085 = vadd.f32 %v4084, %v3751
        %v4086 = vadd.f32 %v4085, %v3752
        %v4087 = vadd.f32 %v4086, %v3753
        %v4088 = vadd.f32 %v4087, %v3754
        %v4089 = vrot.slane %v4088, 4
        %v4090 = vadd.f32 %v4088, %v4089
        %v4091 = vrot.slane %v4090, 2
        %v4092 = vadd.f32 %v4090, %v4091
        %v4093 = vrot.slane %v4092, 1
        %v4094 = vadd.f32 %v4092, %v4093
        %v4095 = vadd.f32 %v3755, %v3756
        %v4096 = vadd.f32 %v4095, %v3757
        %v4097 = vadd.f32 %v4096, %v3758
        %v4098 = vadd.f32 %v4097, %v3759
        %v4099 = vadd.f32 %v4098, %v3760
        %v4100 = vadd.f32 %v4099, %v3761
        %v4101 = vadd.f32 %v4100, %v3762
        %v4102 = vrot.slane %v4101, 4
        %v4103 = vadd.f32 %v4101, %v4102
        %v4104 = vrot.slane %v4103, 2
        %v4105 = vadd.f32 %v4103, %v4104
        %v4106 = vrot.slane %v4105, 1
        %v4107 = vadd.f32 %v4105, %v4106
        %v4108 = vadd.f32 %v3763, %v3764
        %v4109 = vadd.f32 %v4108, %v3765
        %v4110 = vadd.f32 %v4109, %v3766
        %v4111 = vadd.f32 %v4110, %v3767
        %v4112 = vadd.f32 %v4111, %v3768
        %v4113 = vadd.f32 %v4112, %v3769
        %v4114 = vadd.f32 %v4113, %v3770
        %v4115 = vrot.slane %v4114, 4
        %v4116 = vadd.f32 %v4114, %v4115
        %v4117 = vrot.slane %v4116, 2
        %v4118 = vadd.f32 %v4116, %v4117
        %v4119 = vrot.slane %v4118, 1
        %v4120 = vadd.f32 %v4118, %v4119
        %v4121 = vadd.f32 %v3771, %v3772
        %v4122 = vadd.f32 %v4121, %v3773
        %v4123 = vadd.f32 %v4122, %v3774
        %v4124 = vadd.f32 %v4123, %v3775
        %v4125 = vadd.f32 %v4124, %v3776
        %v4126 = vadd.f32 %v4125, %v3777
        %v4127 = vadd.f32 %v4126, %v3778
        %v4128 = vrot.slane %v4127, 4
        %v4129 = vadd.f32 %v4127, %v4128
        %v4130 = vrot.slane %v4129, 2
        %v4131 = vadd.f32 %v4129, %v4130
        %v4132 = vrot.slane %v4131, 1
        %v4133 = vadd.f32 %v4131, %v4132
        %v4134 = vadd.f32 %v3779, %v3780
        %v4135 = vadd.f32 %v4134, %v3781
        %v4136 = vadd.f32 %v4135, %v3782
        %v4137 = vadd.f32 %v4136, %v3783
        %v4138 = vadd.f32 %v4137, %v3784
        %v4139 = vadd.f32 %v4138, %v3785
        %v4140 = vadd.f32 %v4139, %v3786
        %v4141 = vrot.slane %v4140, 4
        %v4142 = vadd.f32 %v4140, %v4141
        %v4143 = vrot.slane %v4142, 2
        %v4144 = vadd.f32 %v4142, %v4143
        %v4145 = vrot.slane %v4144, 1
        %v4146 = vadd.f32 %v4144, %v4145
        %v4147 = vadd.f32 %v3787, %v3788
        %v4148 = vadd.f32 %v4147, %v3789
        %v4149 = vadd.f32 %v4148, %v3790
        %v4150 = vadd.f32 %v4149, %v3791
        %v4151 = vadd.f32 %v4150, %v3792
        %v4152 = vadd.f32 %v4151, %v3793
        %v4153 = vadd.f32 %v4152, %v3794
        %v4154 = vrot.slane %v4153, 4
        %v4155 = vadd.f32 %v4153, %v4154
        %v4156 = vrot.slane %v4155, 2
        %v4157 = vadd.f32 %v4155, %v4156
        %v4158 = vrot.slane %v4157, 1
        %v4159 = vadd.f32 %v4157, %v4158
        %v4160 = vadd.f32 %v3795, %v3796
        %v4161 = vadd.f32 %v4160, %v3797
        %v4162 = vadd.f32 %v4161, %v3798
        %v4163 = vadd.f32 %v4162, %v3799
        %v4164 = vadd.f32 %v4163, %v3800
        %v4165 = vadd.f32 %v4164, %v3801
        %v4166 = vadd.f32 %v4165, %v3802
        %v4167 = vrot.slane %v4166, 4
        %v4168 = vadd.f32 %v4166, %v4167
        %v4169 = vrot.slane %v4168, 2
        %v4170 = vadd.f32 %v4168, %v4169
        %v4171 = vrot.slane %v4170, 1
        %v4172 = vadd.f32 %v4170, %v4171
        %v4173 = vadd.f32 %v3803, %v3804
        %v4174 = vadd.f32 %v4173, %v3805
        %v4175 = vadd.f32 %v4174, %v3806
        %v4176 = vadd.f32 %v4175, %v3807
        %v4177 = vadd.f32 %v4176, %v3808
        %v4178 = vadd.f32 %v4177, %v3809
        %v4179 = vadd.f32 %v4178, %v3810
        %v4180 = vrot.slane %v4179, 4
        %v4181 = vadd.f32 %v4179, %v4180
        %v4182 = vrot.slane %v4181, 2
        %v4183 = vadd.f32 %v4181, %v4182
        %v4184 = vrot.slane %v4183, 1
        %v4185 = vadd.f32 %v4183, %v4184
        %v4186 = vadd.f32 %v3811, %v3812
        %v4187 = vadd.f32 %v4186, %v3813
        %v4188 = vadd.f32 %v4187, %v3814
        %v4189 = vadd.f32 %v4188, %v3815
        %v4190 = vadd.f32 %v4189, %v3816
        %v4191 = vadd.f32 %v4190, %v3817
        %v4192 = vadd.f32 %v4191, %v3818
        %v4193 = vrot.slane %v4192, 4
        %v4194 = vadd.f32 %v4192, %v4193
        %v4195 = vrot.slane %v4194, 2
        %v4196 = vadd.f32 %v4194, %v4195
        %v4197 = vrot.slane %v4196, 1
        %v4198 = vadd.f32 %v4196, %v4197
        %v4199 = vadd.f32 %v3819, %v3820
        %v4200 = vadd.f32 %v4199, %v3821
        %v4201 = vadd.f32 %v4200, %v3822
        %v4202 = vadd.f32 %v4201, %v3823
        %v4203 = vadd.f32 %v4202, %v3824
        %v4204 = vadd.f32 %v4203, %v3825
        %v4205 = vadd.f32 %v4204, %v3826
        %v4206 = vrot.slane %v4205, 4
        %v4207 = vadd.f32 %v4205, %v4206
        %v4208 = vrot.slane %v4207, 2
        %v4209 = vadd.f32 %v4207, %v4208
        %v4210 = vrot.slane %v4209, 1
        %v4211 = vadd.f32 %v4209, %v4210
        %v4212 = vadd.f32 %v3827, %v3828
        %v4213 = vadd.f32 %v4212, %v3829
        %v4214 = vadd.f32 %v4213, %v3830
        %v4215 = vadd.f32 %v4214, %v3831
        %v4216 = vadd.f32 %v4215, %v3832
        %v4217 = vadd.f32 %v4216, %v3833
        %v4218 = vadd.f32 %v4217, %v3834
        %v4219 = vrot.slane %v4218, 4
        %v4220 = vadd.f32 %v4218, %v4219
        %v4221 = vrot.slane %v4220, 2
        %v4222 = vadd.f32 %v4220, %v4221
        %v4223 = vrot.slane %v4222, 1
        %v4224 = vadd.f32 %v4222, %v4223
        %v4225 = vadd.f32 %v3835, %v3836
        %v4226 = vadd.f32 %v4225, %v3837
        %v4227 = vadd.f32 %v4226, %v3838
        %v4228 = vadd.f32 %v4227, %v3839
        %v4229 = vadd.f32 %v4228, %v3840
        %v4230 = vadd.f32 %v4229, %v3841
        %v4231 = vadd.f32 %v4230, %v3842
        %v4232 = vrot.slane %v4231, 4
        %v4233 = vadd.f32 %v4231, %v4232
        %v4234 = vrot.slane %v4233, 2
        %v4235 = vadd.f32 %v4233, %v4234
        %v4236 = vrot.slane %v4235, 1
        %v4237 = vadd.f32 %v4235, %v4236
        %v4238 = vadd.f32 %v3843, %v3844
        %v4239 = vadd.f32 %v4238, %v3845
        %v4240 = vadd.f32 %v4239, %v3846
        %v4241 = vadd.f32 %v4240, %v3847
        %v4242 = vadd.f32 %v4241, %v3848
        %v4243 = vadd.f32 %v4242, %v3849
        %v4244 = vadd.f32 %v4243, %v3850
        %v4245 = vrot.slane %v4244, 4
        %v4246 = vadd.f32 %v4244, %v4245
        %v4247 = vrot.slane %v4246, 2
        %v4248 = vadd.f32 %v4246, %v4247
        %v4249 = vrot.slane %v4248, 1
        %v4250 = vadd.f32 %v4248, %v4249
        %v4251 = vadd.f32 %v3851, %v3852
        %v4252 = vadd.f32 %v4251, %v3853
        %v4253 = vadd.f32 %v4252, %v3854
        %v4254 = vadd.f32 %v4253, %v3855
        %v4255 = vadd.f32 %v4254, %v3856
        %v4256 = vadd.f32 %v4255, %v3857
        %v4257 = vadd.f32 %v4256, %v3858
        %v4258 = vrot.slane %v4257, 4
        %v4259 = vadd.f32 %v4257, %v4258
        %v4260 = vrot.slane %v4259, 2
        %v4261 = vadd.f32 %v4259, %v4260
        %v4262 = vrot.slane %v4261, 1
        %v4263 = vadd.f32 %v4261, %v4262
        %v4264 = vadd.f32 %v3859, %v3860
        %v4265 = vadd.f32 %v4264, %v3861
        %v4266 = vadd.f32 %v4265, %v3862
        %v4267 = vadd.f32 %v4266, %v3863
        %v4268 = vadd.f32 %v4267, %v3864
        %v4269 = vadd.f32 %v4268, %v3865
        %v4270 = vadd.f32 %v4269, %v3866
        %v4271 = vrot.slane %v4270, 4
        %v4272 = vadd.f32 %v4270, %v4271
        %v4273 = vrot.slane %v4272, 2
        %v4274 = vadd.f32 %v4272, %v4273
        %v4275 = vrot.slane %v4274, 1
        %v4276 = vadd.f32 %v4274, %v4275
        %v4277 = vadd.f32 %v3867, %v3868
        %v4278 = vadd.f32 %v4277, %v3869
        %v4279 = vadd.f32 %v4278, %v3870
        %v4280 = vadd.f32 %v4279, %v3871
        %v4281 = vadd.f32 %v4280, %v3872
        %v4282 = vadd.f32 %v4281, %v3873
        %v4283 = vadd.f32 %v4282, %v3874
        %v4284 = vrot.slane %v4283, 4
        %v4285 = vadd.f32 %v4283, %v4284
        %v4286 = vrot.slane %v4285, 2
        %v4287 = vadd.f32 %v4285, %v4286
        %v4288 = vrot.slane %v4287, 1
        %v4289 = vadd.f32 %v4287, %v4288
        %v4290 = vadd.f32 %v3875, %v3876
        %v4291 = vadd.f32 %v4290, %v3877
        %v4292 = vadd.f32 %v4291, %v3878
        %v4293 = vadd.f32 %v4292, %v3879
        %v4294 = vadd.f32 %v4293, %v3880
        %v4295 = vadd.f32 %v4294, %v3881
        %v4296 = vadd.f32 %v4295, %v3882
        %v4297 = vrot.slane %v4296, 4
        %v4298 = vadd.f32 %v4296, %v4297
        %v4299 = vrot.slane %v4298, 2
        %v4300 = vadd.f32 %v4298, %v4299
        %v4301 = vrot.slane %v4300, 1
        %v4302 = vadd.f32 %v4300, %v4301
        %vm4335 = vcmask 1041409
        %v4336 = vsel %vm4335, %v3912, %v3899
        %vm4337 = vcmask 1042434
        %v4338 = vsel %vm4337, %v3925, %v4336
        %vm4339 = vcmask 1043459
        %v4340 = vsel %vm4339, %v3938, %v4338
        %vm4341 = vcmask 1044484
        %v4342 = vsel %vm4341, %v3951, %v4340
        %vm4343 = vcmask 1045509
        %v4344 = vsel %vm4343, %v3964, %v4342
        %vm4345 = vcmask 1046534
        %v4346 = vsel %vm4345, %v3977, %v4344
        %vm4347 = vcmask 1047559
        %v4348 = vsel %vm4347, %v3990, %v4346
        %v4349 = vsel %vm4335, %v4016, %v4003
        %v4350 = vsel %vm4337, %v4029, %v4349
        %v4351 = vsel %vm4339, %v4042, %v4350
        %v4352 = vsel %vm4341, %v4055, %v4351
        %v4353 = vsel %vm4343, %v4068, %v4352
        %v4354 = vsel %vm4345, %v4081, %v4353
        %v4355 = vsel %vm4347, %v4094, %v4354
        %v4356 = vsel %vm4335, %v4120, %v4107
        %v4357 = vsel %vm4337, %v4133, %v4356
        %v4358 = vsel %vm4339, %v4146, %v4357
        %v4359 = vsel %vm4341, %v4159, %v4358
        %v4360 = vsel %vm4343, %v4172, %v4359
        %v4361 = vsel %vm4345, %v4185, %v4360
        %v4362 = vsel %vm4347, %v4198, %v4361
        %v4363 = vsel %vm4335, %v4224, %v4211
        %v4364 = vsel %vm4337, %v4237, %v4363
        %v4365 = vsel %vm4339, %v4250, %v4364
        %v4366 = vsel %vm4341, %v4263, %v4365
        %v4367 = vsel %vm4343, %v4276, %v4366
        %v4368 = vsel %vm4345, %v4289, %v4367
        %v4369 = vsel %vm4347, %v4302, %v4368
        %v4374 = vadd.f32 %v3883, %v4348
        %v4375 = vadd.f32 %v3884, %v4355
        %v4376 = vadd.f32 %v3885, %v4362
        %v4377 = vadd.f32 %v3886, %v4369
        %4378 = vst [vmem:[#allocation2] sm:$0xff] %v4374
        %4379 = vst [vmem:[#allocation2 + $0x8] sm:$0xff] %v4375
        %4380 = vst [vmem:[#allocation2 + $0x10] sm:$0xff] %v4376
        %4381 = vst [vmem:[#allocation2 + $0x18] sm:$0xff] %v4377
        %p4382 = scmp.eq.s32.totalorder %s26, 1
        // Predicated region
        $region106: #{gliclass_biencoder_forward.4} parent=96 // pred_check
          %p4383 = pneg %p4382
        $region107: #{gliclass_biencoder_forward.4} parent=96 // pred_check_branch
          %4385 = sbr.rel (%p4383) target = $region109
        $region108: #{gliclass_biencoder_forward.4} parent=96 // pred_region
          %v4386 = vld [vmem:[#allocation2] sm:$0xff]
          %v4387 = vld [vmem:[#allocation2 + $0x8] sm:$0xff]
          %v4388 = vld [vmem:[#allocation2 + $0x10] sm:$0xff]
          %v4389 = vld [vmem:[#allocation2 + $0x18] sm:$0xff]
          %v4390 = vmul.f32 %v4386, 0.0078125
          %v4391 = vmul.f32 %v4387, 0.0078125
          %v4392 = vmul.f32 %v4388, 0.0078125
          %v4393 = vmul.f32 %v4389, 0.0078125
          %v4394 = vld [vmem:[%s1458] sm:$0xff]
          %v4395 = vld [vmem:[%s1458 + $0x8] sm:$0xff]
          %v4396 = vld [vmem:[%s1458 + $0x10] sm:$0xff]
          %v4397 = vld [vmem:[%s1458 + $0x18] sm:$0xff]
          %4399 = vset.pattern.permute.xlu0 0
          %4400 = vperm.xlu0 %4399, %v4394
          %v4401 = vpop.permute.xlu0 %4400
          %4404 = vset.pattern.permute.xlu0 0
          %4405 = vperm.xlu0 %4404, %v4395
          %v4406 = vpop.permute.xlu0 %4405
          %4409 = vset.pattern.permute.xlu0 0
          %4410 = vperm.xlu0 %4409, %v4396
          %v4411 = vpop.permute.xlu0 %4410
          %4414 = vset.pattern.permute.xlu0 0
          %4415 = vperm.xlu0 %4414, %v4397
          %v4416 = vpop.permute.xlu0 %4415
          %v4418 = vmul.f32 %v4390, %v4401
          %v4419 = vmul.f32 %v4391, %v4406
          %v4420 = vmul.f32 %v4392, %v4411
          %v4421 = vmul.f32 %v4393, %v4416
          %v4422 = vpack.c.bf16 %v4419, %v4418
          %v4423 = vpack.c.bf16 %v4421, %v4420
          %v4424 = vld [vmem:[%s4] sm:$0xf]
          %v4425 = vld [vmem:[%s4 + $0x4] sm:$0xf]
          %v4426 = vld [vmem:[%s4 + $0x8] sm:$0xf]
          %v4427 = vld [vmem:[%s4 + $0xc] sm:$0xf]
          %v4428 = vld [vmem:[%s4 + $0x10] sm:$0xf]
          %v4429 = vld [vmem:[%s4 + $0x14] sm:$0xf]
          %v4430 = vld [vmem:[%s4 + $0x18] sm:$0xf]
          %v4431 = vld [vmem:[%s4 + $0x1c] sm:$0xf]
          %v4432 = vld [vmem:[%s4 + $0x20] sm:$0xf]
          %v4433 = vld [vmem:[%s4 + $0x24] sm:$0xf]
          %v4434 = vld [vmem:[%s4 + $0x28] sm:$0xf]
          %v4435 = vld [vmem:[%s4 + $0x2c] sm:$0xf]
          %v4436 = vld [vmem:[%s4 + $0x30] sm:$0xf]
          %v4437 = vld [vmem:[%s4 + $0x34] sm:$0xf]
          %v4438 = vld [vmem:[%s4 + $0x38] sm:$0xf]
          %v4439 = vld [vmem:[%s4 + $0x3c] sm:$0xf]
          %v4440 = vld [vmem:[%s5] sm:$0x1]
          %v4442 = vlaneseq
          %v4443 = vshrl.u32 %v4442, 7
          %v4444 = vsub.s32 0, %v4443
          %v4445 = vrot.slane %v4440, %v4444
          %v4463 = vunpack.c.l.b16 %v4424
          %v4464 = vunpack.c.l.b16 %v4425
          %v4465 = vunpack.c.l.b16 %v4426
          %v4466 = vunpack.c.l.b16 %v4427
          %v4467 = vunpack.c.l.b16 %v4428
          %v4468 = vunpack.c.l.b16 %v4429
          %v4469 = vunpack.c.l.b16 %v4430
          %v4470 = vunpack.c.l.b16 %v4431
          %v4471 = vunpack.c.l.b16 %v4432
          %v4472 = vunpack.c.l.b16 %v4433
          %v4473 = vunpack.c.l.b16 %v4434
          %v4474 = vunpack.c.l.b16 %v4435
          %v4475 = vunpack.c.l.b16 %v4436
          %v4476 = vunpack.c.l.b16 %v4437
          %v4477 = vunpack.c.l.b16 %v4438
          %v4478 = vunpack.c.l.b16 %v4439
          %v4479 = vpack.c.b16 %v4464, %v4463
          %v4480 = vpack.c.b16 %v4466, %v4465
          %v4481 = vpack.c.b16 %v4468, %v4467
          %v4482 = vpack.c.b16 %v4470, %v4469
          %v4483 = vpack.c.b16 %v4472, %v4471
          %v4484 = vpack.c.b16 %v4474, %v4473
          %v4485 = vpack.c.b16 %v4476, %v4475
          %v4486 = vpack.c.b16 %v4478, %v4477
          %4495 = vmatprep.subr.bf16.mxu0 0
          %4496 = vmatpush1.bf16.msra.mxu0 %v4486
          %4497 = vmatprep.subr.bf16.mxu0 0
          %4498 = vmatpush1.bf16.msra.mxu0 %v4485
          %4499 = vmatprep.subr.bf16.mxu0 0
          %4500 = vmatpush1.bf16.msra.mxu0 %v4484
          %4501 = vmatprep.subr.bf16.mxu0 0
          %4502 = vmatpush1.bf16.msra.mxu0 %v4483
          %4503 = vmatprep.subr.bf16.mxu0 0
          %4504 = vmatpush1.bf16.msra.mxu0 %v4482
          %4505 = vmatprep.subr.bf16.mxu0 0
          %4506 = vmatpush1.bf16.msra.mxu0 %v4481
          %4507 = vmatprep.subr.bf16.mxu0 0
          %4508 = vmatpush1.bf16.msra.mxu0 %v4480
          %4509 = vmatprep.subr.bf16.mxu0 0
          %4510 = vmatpush1.bf16.msra.mxu0 %v4479
          %4511 = vmatprep.subr.bf16.mxu0 0
          %4512 = vmatpush2.bf16.msra.mxu0 0
          %4513 = vmatprep.subr.bf16.mxu0 0
          %4514 = vmatpush2.bf16.msra.mxu0 0
          %4515 = vmatprep.subr.bf16.mxu0 0
          %4516 = vmatpush2.bf16.msra.mxu0 0
          %4517 = vmatprep.subr.bf16.mxu0 0
          %4518 = vmatpush2.bf16.msra.mxu0 0
          %4519 = vmatprep.subr.bf16.mxu0 0
          %4520 = vmatpush2.bf16.msra.mxu0 0
          %4521 = vmatprep.subr.bf16.mxu0 0
          %4522 = vmatpush2.bf16.msra.mxu0 0
          %4523 = vmatprep.subr.bf16.mxu0 0
          %4524 = vmatpush2.bf16.msra.mxu0 0
          %4525 = vmatprep.subr.bf16.mxu0 0
          %4526 = vmatpush2.bf16.msra.mxu0 0
          %4527 = vmatprep.mubr.bf16.mxu0 0
          %4528 = vmatmul.mubr.bf16.gmra.mxu0 %v4422
          %v4529 = vpop.f32.mrf.mxu0
          %v4530 = vadd.f32 %v4445, %v4529
          %v4531 = vpop.f32.mrf.mxu0
          %v4532 = vpop.f32.mrf.mxu0
          %v4533 = vadd.f32 %v4445, %v4532
          %v4534 = vpop.f32.mrf.mxu0
          %4535 = vmatprep.mubr.bf16.mxu0 0
          %4536 = vmatmul.mubr.bf16.gmra.mxu0 %v4423
          %v4537 = vpop.f32.mrf.mxu0
          %v4538 = vadd.f32 %v4445, %v4537
          %v4539 = vpop.f32.mrf.mxu0
          %v4540 = vpop.f32.mrf.mxu0
          %v4541 = vadd.f32 %v4445, %v4540
          %v4542 = vpop.f32.mrf.mxu0
          %4543 = vdwg.mxu0
          %v4544 = vpack.c.bf16 %v4533, %v4530
          %v4545 = vpack.c.bf16 %v4541, %v4538
          %v4546 = vld [vmem:[%s6] sm:$0xff]
          %v4547 = vld [vmem:[%s6 + $0x8] sm:$0xff]
          %v4548 = vld [vmem:[%s6 + $0x10] sm:$0xff]
          %v4549 = vld [vmem:[%s6 + $0x18] sm:$0xff]
          %v4550 = vld [vmem:[%s6 + $0x20] sm:$0xff]
          %v4551 = vld [vmem:[%s6 + $0x28] sm:$0xff]
          %v4552 = vld [vmem:[%s6 + $0x30] sm:$0xff]
          %v4553 = vld [vmem:[%s6 + $0x38] sm:$0xff]
          %v4554 = vld [vmem:[%s6 + $0x40] sm:$0xff]
          %v4555 = vld [vmem:[%s6 + $0x48] sm:$0xff]
          %v4556 = vld [vmem:[%s6 + $0x50] sm:$0xff]
          %v4557 = vld [vmem:[%s6 + $0x58] sm:$0xff]
          %v4558 = vld [vmem:[%s6 + $0x60] sm:$0xff]
          %v4559 = vld [vmem:[%s6 + $0x68] sm:$0xff]
          %v4560 = vld [vmem:[%s6 + $0x70] sm:$0xff]
          %v4561 = vld [vmem:[%s6 + $0x78] sm:$0xff]
          %v4562 = vld [vmem:[%s7] sm:$0x3]
          %v4564 = vlaneseq
          %v4565 = vshrl.u32 %v4564, 7
          %v4566 = vsub.s32 0, %v4565
          %v4567 = vrot.slane %v4562, %v4566
          %v4568 = vlaneseq
          %v4569 = vshrl.u32 %v4568, 7
          %v4570 = vsub.s32 1, %v4569
          %v4571 = vrot.slane %v4562, %v4570
          %v4590 = vunpack.c.l.b16 %v4546
          %v4591 = vunpack.c.h.b16 %v4546
          %v4592 = vunpack.c.l.b16 %v4547
          %v4593 = vunpack.c.h.b16 %v4547
          %v4594 = vunpack.c.l.b16 %v4548
          %v4595 = vunpack.c.h.b16 %v4548
          %v4596 = vunpack.c.l.b16 %v4549
          %v4597 = vunpack.c.h.b16 %v4549
          %v4598 = vunpack.c.l.b16 %v4550
          %v4599 = vunpack.c.h.b16 %v4550
          %v4600 = vunpack.c.l.b16 %v4551
          %v4601 = vunpack.c.h.b16 %v4551
          %v4602 = vunpack.c.l.b16 %v4552
          %v4603 = vunpack.c.h.b16 %v4552
          %v4604 = vunpack.c.l.b16 %v4553
          %v4605 = vunpack.c.h.b16 %v4553
          %v4606 = vunpack.c.l.b16 %v4554
          %v4607 = vunpack.c.h.b16 %v4554
          %v4608 = vunpack.c.l.b16 %v4555
          %v4609 = vunpack.c.h.b16 %v4555
          %v4610 = vunpack.c.l.b16 %v4556
          %v4611 = vunpack.c.h.b16 %v4556
          %v4612 = vunpack.c.l.b16 %v4557
          %v4613 = vunpack.c.h.b16 %v4557
          %v4614 = vunpack.c.l.b16 %v4558
          %v4615 = vunpack.c.h.b16 %v4558
          %v4616 = vunpack.c.l.b16 %v4559
          %v4617 = vunpack.c.h.b16 %v4559
          %v4618 = vunpack.c.l.b16 %v4560
          %v4619 = vunpack.c.h.b16 %v4560
          %v4620 = vunpack.c.l.b16 %v4561
          %v4621 = vunpack.c.h.b16 %v4561
          %v4622 = vpack.c.b16 %v4592, %v4590
          %v4623 = vpack.c.b16 %v4593, %v4591
          %v4624 = vpack.c.b16 %v4596, %v4594
          %v4625 = vpack.c.b16 %v4597, %v4595
          %v4626 = vpack.c.b16 %v4600, %v4598
          %v4627 = vpack.c.b16 %v4601, %v4599
          %v4628 = vpack.c.b16 %v4604, %v4602
          %v4629 = vpack.c.b16 %v4605, %v4603
          %v4630 = vpack.c.b16 %v4608, %v4606
          %v4631 = vpack.c.b16 %v4609, %v4607
          %v4632 = vpack.c.b16 %v4612, %v4610
          %v4633 = vpack.c.b16 %v4613, %v4611
          %v4634 = vpack.c.b16 %v4616, %v4614
          %v4635 = vpack.c.b16 %v4617, %v4615
          %v4636 = vpack.c.b16 %v4620, %v4618
          %v4637 = vpack.c.b16 %v4621, %v4619
          %4654 = vmatprep.subr.bf16.mxu0 %v4637
          %4655 = vmatpush1.bf16.msra.mxu0 %v4636
          %4656 = vmatprep.subr.bf16.mxu0 %v4635
          %4657 = vmatpush1.bf16.msra.mxu0 %v4634
          %4658 = vmatprep.subr.bf16.mxu0 %v4633
          %4659 = vmatpush1.bf16.msra.mxu0 %v4632
          %4660 = vmatprep.subr.bf16.mxu0 %v4631
          %4661 = vmatpush1.bf16.msra.mxu0 %v4630
          %4662 = vmatprep.subr.bf16.mxu0 %v4629
          %4663 = vmatpush1.bf16.msra.mxu0 %v4628
          %4664 = vmatprep.subr.bf16.mxu0 %v4627
          %4665 = vmatpush1.bf16.msra.mxu0 %v4626
          %4666 = vmatprep.subr.bf16.mxu0 %v4625
          %4667 = vmatpush1.bf16.msra.mxu0 %v4624
          %4668 = vmatprep.subr.bf16.mxu0 %v4623
          %4669 = vmatpush1.bf16.msra.mxu0 %v4622
          %4670 = vmatprep.subr.bf16.mxu0 0
          %4671 = vmatpush2.bf16.msra.mxu0 0
          %4672 = vmatprep.subr.bf16.mxu0 0
          %4673 = vmatpush2.bf16.msra.mxu0 0
          %4674 = vmatprep.subr.bf16.mxu0 0
          %4675 = vmatpush2.bf16.msra.mxu0 0
          %4676 = vmatprep.subr.bf16.mxu0 0
          %4677 = vmatpush2.bf16.msra.mxu0 0
          %4678 = vmatprep.subr.bf16.mxu0 0
          %4679 = vmatpush2.bf16.msra.mxu0 0
          %4680 = vmatprep.subr.bf16.mxu0 0
          %4681 = vmatpush2.bf16.msra.mxu0 0
          %4682 = vmatprep.subr.bf16.mxu0 0
          %4683 = vmatpush2.bf16.msra.mxu0 0
          %4684 = vmatprep.subr.bf16.mxu0 0
          %4685 = vmatpush2.bf16.msra.mxu0 0
          %4686 = vmatprep.mubr.bf16.mxu0 0
          %4687 = vmatmul.mubr.bf16.gmra.mxu0 %v4544
          %v4688 = vpop.f32.mrf.mxu0
          %v4689 = vadd.f32 %v4567, %v4688
          %v4690 = vpop.f32.mrf.mxu0
          %v4691 = vadd.f32 %v4571, %v4690
          %v4692 = vpop.f32.mrf.mxu0
          %v4693 = vadd.f32 %v4567, %v4692
          %v4694 = vpop.f32.mrf.mxu0
          %v4695 = vadd.f32 %v4571, %v4694
          %4696 = vmatprep.mubr.bf16.mxu0 0
          %4697 = vmatmul.mubr.bf16.gmra.mxu0 %v4545
          %v4698 = vpop.f32.mrf.mxu0
          %v4699 = vadd.f32 %v4567, %v4698
          %v4700 = vpop.f32.mrf.mxu0
          %v4701 = vadd.f32 %v4571, %v4700
          %v4702 = vpop.f32.mrf.mxu0
          %v4703 = vadd.f32 %v4567, %v4702
          %v4704 = vpop.f32.mrf.mxu0
          %v4705 = vadd.f32 %v4571, %v4704
          %4706 = vdwg.mxu0
          %v4707 = vmax.f32 %v4689, 0.0
          %v4708 = vmax.f32 %v4691, 0.0
          %v4709 = vmax.f32 %v4693, 0.0
          %v4710 = vmax.f32 %v4695, 0.0
          %v4711 = vmax.f32 %v4699, 0.0
          %v4712 = vmax.f32 %v4701, 0.0
          %v4713 = vmax.f32 %v4703, 0.0
          %v4714 = vmax.f32 %v4705, 0.0
          %v4715 = vpack.c.bf16 %v4709, %v4707
          %v4716 = vpack.c.bf16 %v4710, %v4708
          %v4717 = vpack.c.bf16 %v4713, %v4711
          %v4718 = vpack.c.bf16 %v4714, %v4712
          %v4719 = vld [vmem:[%s8] sm:$0xf]
          %v4720 = vld [vmem:[%s8 + $0x4] sm:$0xf]
          %v4721 = vld [vmem:[%s8 + $0x8] sm:$0xf]
          %v4722 = vld [vmem:[%s8 + $0xc] sm:$0xf]
          %v4723 = vld [vmem:[%s8 + $0x10] sm:$0xf]
          %v4724 = vld [vmem:[%s8 + $0x14] sm:$0xf]
          %v4725 = vld [vmem:[%s8 + $0x18] sm:$0xf]
          %v4726 = vld [vmem:[%s8 + $0x1c] sm:$0xf]
          %v4727 = vld [vmem:[%s8 + $0x20] sm:$0xf]
          %v4728 = vld [vmem:[%s8 + $0x24] sm:$0xf]
          %v4729 = vld [vmem:[%s8 + $0x28] sm:$0xf]
          %v4730 = vld [vmem:[%s8 + $0x2c] sm:$0xf]
          %v4731 = vld [vmem:[%s8 + $0x30] sm:$0xf]
          %v4732 = vld [vmem:[%s8 + $0x34] sm:$0xf]
          %v4733 = vld [vmem:[%s8 + $0x38] sm:$0xf]
          %v4734 = vld [vmem:[%s8 + $0x3c] sm:$0xf]
          %v4735 = vld [vmem:[%s8 + $0x40] sm:$0xf]
          %v4736 = vld [vmem:[%s8 + $0x44] sm:$0xf]
          %v4737 = vld [vmem:[%s8 + $0x48] sm:$0xf]
          %v4738 = vld [vmem:[%s8 + $0x4c] sm:$0xf]
          %v4739 = vld [vmem:[%s8 + $0x50] sm:$0xf]
          %v4740 = vld [vmem:[%s8 + $0x54] sm:$0xf]
          %v4741 = vld [vmem:[%s8 + $0x58] sm:$0xf]
          %v4742 = vld [vmem:[%s8 + $0x5c] sm:$0xf]
          %v4743 = vld [vmem:[%s8 + $0x60] sm:$0xf]
          %v4744 = vld [vmem:[%s8 + $0x64] sm:$0xf]
          %v4745 = vld [vmem:[%s8 + $0x68] sm:$0xf]
          %v4746 = vld [vmem:[%s8 + $0x6c] sm:$0xf]
          %v4747 = vld [vmem:[%s8 + $0x70] sm:$0xf]
          %v4748 = vld [vmem:[%s8 + $0x74] sm:$0xf]
          %v4749 = vld [vmem:[%s8 + $0x78] sm:$0xf]
          %v4750 = vld [vmem:[%s8 + $0x7c] sm:$0xf]
          %v4751 = vld [vmem:[%s9] sm:$0x1]
          %v4753 = vlaneseq
          %v4754 = vshrl.u32 %v4753, 7
          %v4755 = vsub.s32 0, %v4754
          %v4756 = vrot.slane %v4751, %v4755
          %v4790 = vunpack.c.l.b16 %v4719
          %v4791 = vunpack.c.l.b16 %v4720
          %v4792 = vunpack.c.l.b16 %v4721
          %v4793 = vunpack.c.l.b16 %v4722
          %v4794 = vunpack.c.l.b16 %v4723
          %v4795 = vunpack.c.l.b16 %v4724
          %v4796 = vunpack.c.l.b16 %v4725
          %v4797 = vunpack.c.l.b16 %v4726
          %v4798 = vunpack.c.l.b16 %v4727
          %v4799 = vunpack.c.l.b16 %v4728
          %v4800 = vunpack.c.l.b16 %v4729
          %v4801 = vunpack.c.l.b16 %v4730
          %v4802 = vunpack.c.l.b16 %v4731
          %v4803 = vunpack.c.l.b16 %v4732
          %v4804 = vunpack.c.l.b16 %v4733
          %v4805 = vunpack.c.l.b16 %v4734
          %v4806 = vunpack.c.l.b16 %v4735
          %v4807 = vunpack.c.l.b16 %v4736
          %v4808 = vunpack.c.l.b16 %v4737
          %v4809 = vunpack.c.l.b16 %v4738
          %v4810 = vunpack.c.l.b16 %v4739
          %v4811 = vunpack.c.l.b16 %v4740
          %v4812 = vunpack.c.l.b16 %v4741
          %v4813 = vunpack.c.l.b16 %v4742
          %v4814 = vunpack.c.l.b16 %v4743
          %v4815 = vunpack.c.l.b16 %v4744
          %v4816 = vunpack.c.l.b16 %v4745
          %v4817 = vunpack.c.l.b16 %v4746
          %v4818 = vunpack.c.l.b16 %v4747
          %v4819 = vunpack.c.l.b16 %v4748
          %v4820 = vunpack.c.l.b16 %v4749
          %v4821 = vunpack.c.l.b16 %v4750
          %v4822 = vpack.c.b16 %v4791, %v4790
          %v4823 = vpack.c.b16 %v4793, %v4792
          %v4824 = vpack.c.b16 %v4795, %v4794
          %v4825 = vpack.c.b16 %v4797, %v4796
          %v4826 = vpack.c.b16 %v4799, %v4798
          %v4827 = vpack.c.b16 %v4801, %v4800
          %v4828 = vpack.c.b16 %v4803, %v4802
          %v4829 = vpack.c.b16 %v4805, %v4804
          %v4830 = vpack.c.b16 %v4807, %v4806
          %v4831 = vpack.c.b16 %v4809, %v4808
          %v4832 = vpack.c.b16 %v4811, %v4810
          %v4833 = vpack.c.b16 %v4813, %v4812
          %v4834 = vpack.c.b16 %v4815, %v4814
          %v4835 = vpack.c.b16 %v4817, %v4816
          %v4836 = vpack.c.b16 %v4819, %v4818
          %v4837 = vpack.c.b16 %v4821, %v4820
          %4854 = vmatprep.subr.bf16.mxu0 0
          %4855 = vmatpush1.bf16.msra.mxu0 %v4829
          %4856 = vmatprep.subr.bf16.mxu0 0
          %4857 = vmatpush1.bf16.msra.mxu0 %v4828
          %4858 = vmatprep.subr.bf16.mxu0 0
          %4859 = vmatpush1.bf16.msra.mxu0 %v4827
          %4860 = vmatprep.subr.bf16.mxu0 0
          %4861 = vmatpush1.bf16.msra.mxu0 %v4826
          %4862 = vmatprep.subr.bf16.mxu0 0
          %4863 = vmatpush1.bf16.msra.mxu0 %v4825
          %4864 = vmatprep.subr.bf16.mxu0 0
          %4865 = vmatpush1.bf16.msra.mxu0 %v4824
          %4866 = vmatprep.subr.bf16.mxu0 0
          %4867 = vmatpush1.bf16.msra.mxu0 %v4823
          %4868 = vmatprep.subr.bf16.mxu0 0
          %4869 = vmatpush1.bf16.msra.mxu0 %v4822
          %4870 = vmatprep.subr.bf16.mxu0 0
          %4871 = vmatpush2.bf16.msra.mxu0 %v4837
          %4872 = vmatprep.subr.bf16.mxu0 0
          %4873 = vmatpush2.bf16.msra.mxu0 %v4836
          %4874 = vmatprep.subr.bf16.mxu0 0
          %4875 = vmatpush2.bf16.msra.mxu0 %v4835
          %4876 = vmatprep.subr.bf16.mxu0 0
          %4877 = vmatpush2.bf16.msra.mxu0 %v4834
          %4878 = vmatprep.subr.bf16.mxu0 0
          %4879 = vmatpush2.bf16.msra.mxu0 %v4833
          %4880 = vmatprep.subr.bf16.mxu0 0
          %4881 = vmatpush2.bf16.msra.mxu0 %v4832
          %4882 = vmatprep.subr.bf16.mxu0 0
          %4883 = vmatpush2.bf16.msra.mxu0 %v4831
          %4884 = vmatprep.subr.bf16.mxu0 0
          %4885 = vmatpush2.bf16.msra.mxu0 %v4830
          %4886 = vmatprep.mubr.bf16.mxu0 %v4716
          %4887 = vmatmul.mubr.bf16.gmra.mxu0 %v4715
          %v4888 = vpop.f32.mrf.mxu0
          %v4889 = vadd.f32 %v4756, %v4888
          %v4890 = vpop.f32.mrf.mxu0
          %v4891 = vpop.f32.mrf.mxu0
          %v4892 = vadd.f32 %v4756, %v4891
          %v4893 = vpop.f32.mrf.mxu0
          %4894 = vmatprep.mubr.bf16.mxu0 %v4718
          %4895 = vmatmul.mubr.bf16.gmra.mxu0 %v4717
          %v4896 = vpop.f32.mrf.mxu0
          %v4897 = vadd.f32 %v4756, %v4896
          %v4898 = vpop.f32.mrf.mxu0
          %v4899 = vpop.f32.mrf.mxu0
          %v4900 = vadd.f32 %v4756, %v4899
          %v4901 = vpop.f32.mrf.mxu0
          %4902 = vdwg.mxu0
          %v4903 = vmul.f32 %v4889, %v4889
          %v4904 = vmul.f32 %v4892, %v4892
          %v4905 = vmul.f32 %v4897, %v4897
          %v4906 = vmul.f32 %v4900, %v4900
          %4907 = vadd.xlane.f32.xlu0 %v4903
          %v4908 = vpop.xlane.xlu0 %4907
          %4909 = vadd.xlane.f32.xlu0 %v4904
          %v4910 = vpop.xlane.xlu0 %4909
          %4911 = vadd.xlane.f32.xlu0 %v4905
          %v4912 = vpop.xlane.xlu0 %4911
          %4913 = vadd.xlane.f32.xlu0 %v4906
          %v4914 = vpop.xlane.xlu0 %4913
          %v4915 = vmax.f32 %v4908, 1e-16
          %v4916 = vmax.f32 %v4910, 1e-16
          %v4917 = vmax.f32 %v4912, 1e-16
          %v4918 = vmax.f32 %v4914, 1e-16
          %v4919 = vrsqrt.pop %v4915
          %v4920 = vrsqrt.pop %v4916
          %v4921 = vrsqrt.pop %v4917
          %v4922 = vrsqrt.pop %v4918
          %v4923 = vmul.f32 %v4889, %v4919
          %v4924 = vmul.f32 %v4892, %v4920
          %v4925 = vmul.f32 %v4897, %v4921
          %v4926 = vmul.f32 %v4900, %v4922
          %4927 = vst [vmem:[%s1464] sm:$0xff] %v4923
          %4928 = vst [vmem:[%s1464 + $0x8] sm:$0xff] %v4924
          %4929 = vst [vmem:[%s1464 + $0x10] sm:$0xff] %v4925
          %4930 = vst [vmem:[%s1464 + $0x18] sm:$0xff] %v4926
        $region109: #{gliclass_biencoder_forward.4} parent=96 // pred_fallthru
          _
        %s4931 = smul.u32 4, %s25
        %p4932 = scmp.lt.s32.totalorder %s4931, 15
        %s4933 = scalar_select %p4932, %s4931, 15
        %s4934 = smul.addr %s4933, 8
        %s4935 = scalar_lea.vmem %s10, %s4934
        // Predicated region
        $region110: #{gliclass_biencoder_forward.4} parent=96 // pred_check
          %p4936 = pneg %p273
        $region111: #{gliclass_biencoder_forward.4} parent=96 // pred_check_branch
          %4938 = sbr.rel (%p4936) target = $region113
        $region112: #{gliclass_biencoder_forward.4} parent=96 // pred_region
          %s4939 = smul.u32 4, %s25
        $region113: #{gliclass_biencoder_forward.4} parent=96 // pred_fallthru
          _
      $region97: #{gliclass_biencoder_forward.4} parent=5 // pred_fallthru
        _
      %p4940 = scmp.le.s32.totalorder 2, %s16
      // Predicated region
      $region114: #{gliclass_biencoder_forward.4} parent=5 // pred_check
        %p4941 = pneg %p4940
      $region115: #{gliclass_biencoder_forward.4} parent=5 // pred_check_branch
        %4943 = sbr.rel (%p4941) target = $region117
      $region116: #{gliclass_biencoder_forward.4} parent=5 // pred_region
        %s4944 = ssub.s32 %s16, 2
        // Predicated region
        $region118: #{gliclass_biencoder_forward.4} parent=116 // pred_check
          %p4945 = pneg %p279
        $region119: #{gliclass_biencoder_forward.4} parent=116 // pred_check_branch
          %4947 = sbr.rel (%p4945) target = $region121
        $region120: #{gliclass_biencoder_forward.4} parent=116 // pred_region
          %s4948 = smul.u32 4, %s27
          %p4949 = scmp.lt.s32.totalorder %s4948, 15
          %s4950 = scalar_select %p4949, %s4948, 15
          %s4951 = smul.addr %s4950, 8
          %s4952 = scalar_lea.vmem %s10, %s4951
        $region121: #{gliclass_biencoder_forward.4} parent=116 // pred_fallthru
          _
      $region117: #{gliclass_biencoder_forward.4} parent=5 // pred_fallthru
        _
    $region6: #{gliclass_biencoder_forward.4} parent=1 // loop_footer
      %s20 = sadd.s32 1, %s16
    $region7: #{gliclass_biencoder_forward.4} parent=1 // loop_footer_branch
      %15 = sbr.rel target = $region3
    $region8: #{gliclass_biencoder_forward.4} parent=1 // loop_exit
      _

</llo_original>
